<compile_context>
chip_gen: v5e
topology: v5e:2x2
jax: 0.10.0
libtpu: 0.0.40
codegen_flags: <defaults>
</compile_context>

<pallas_src>
import functools

import jax
import jax.numpy as jnp
from jax.experimental import pallas as pl
from jax.experimental.pallas import tpu as pltpu

# keeps the pure-JAX reference (which uses plain `@`) at f32 accuracy; the kernel
# itself does NOT rely on this — it passes precision=HIGHEST explicitly.
jax.config.update("jax_default_matmul_precision", "float32")


# ----------------------------- kernel helpers -----------------------------
def _sigmoid(x):
    # logistic via tanh: one EUP op, no VPU divide on the serial LSTM chain
    return 0.5 * jnp.tanh(0.5 * x) + 0.5


def _softmax_last(x):
    m = jnp.max(x, axis=-1, keepdims=True)
    e = jnp.exp(x - m)
    # NOTE: pl.reciprocal(..., approx=True) is available here if the accuracy
    # budget allows; exact divide kept to preserve the 1e-3 f32 match.
    return e / jnp.sum(e, axis=-1, keepdims=True)


def _mm(x, w):
    """(B, K) @ (K, N), weight already transposed to (K, N)."""
    k = w.shape[0]
    if k == 1:                       # (B,1)@(1,N): pure broadcast multiply, no MXU
        return x * w
    if k < 8:                        # tiny contraction: VPU mul + sublane reduce
        return jnp.sum(x[:, :, None] * w[None, :, :], axis=1)
    return jnp.dot(x, w, precision=jax.lax.Precision.HIGHEST,
                   preferred_element_type=jnp.float32)


def _rowdot(x, w_rows):
    """(B, K) · (N, K) -> (B, N); N == 1 stays on the VPU/XLU (mul + lane reduce)."""
    if w_rows.shape[0] == 1:
        return jnp.sum(x * w_rows, axis=-1, keepdims=True)
    return jax.lax.dot_general(
        x, w_rows, (((1,), (1,)), ((), ())),
        precision=jax.lax.Precision.HIGHEST, preferred_element_type=jnp.float32)


def _lstm_gates(gates, c, hidden):
    """PyTorch nn.LSTM cell update from pre-activation gates (order i, f, g, o)."""
    i = _sigmoid(gates[:, 0:hidden])
    f = _sigmoid(gates[:, hidden:2 * hidden])
    g = jnp.tanh(gates[:, 2 * hidden:3 * hidden])
    o = _sigmoid(gates[:, 3 * hidden:4 * hidden])
    c_new = f * c + i * g
    return o * jnp.tanh(c_new), c_new


# ------------------------------- the kernel -------------------------------
def darnn_kernel(
        enc_in_ref, y_hist_ref,
        # encoder params
        we_ih_ref, we_hh_ref, be_ref,
        wae_h_ref, wae_c_ref, wae_t_ref, bae_ref,
        # decoder params
        wdhh_a1_ref, wa1_c_ref, wa1_e_ref, ba1_ref, wa2_ref, ba2_ref,
        wfc_ctx_ref, wfc_y_ref, bfc_ref,
        wd_ih_ref, bd_ref,
        wff_h_ref, wff_c_ref, bff_ref,
        out_ref,
        *, Tm1, He, Hd):
    f32 = jnp.float32
    enc_in = enc_in_ref[...]                         # (B, Tm1, n_in)
    y_hist = y_hist_ref[...]                         # (B, Tm1, out_feats)
    B = enc_in.shape[0]

    # ---- hoist all weight loads / broadcasts out of the unrolled loops ----
    we_ih_b = we_ih_ref[...][None, :, :]             # (1, n_in, 4He)
    we_hh = we_hh_ref[...]                           # (He, 4He)
    be = be_ref[...]                                 # (1, 4He)
    wae_h = wae_h_ref[...]                           # (1, He) row
    wae_c = wae_c_ref[...]                           # (1, He) row
    wae_t_b = wae_t_ref[...][None, :, :]             # (1, Tm1, 1)
    bae = bae_ref[...]                               # (1, 1)
    wdhh_a1 = wdhh_a1_ref[...]                       # (Hd, 4Hd + He) fused
    wa1_c = wa1_c_ref[...]                           # (Hd, He)
    wa1_e = wa1_e_ref[...]                           # (He, He)
    ba1 = ba1_ref[...]                               # (1, He)
    wa2_b = wa2_ref[...][None, :, :]                 # (1, 1, He)
    ba2 = ba2_ref[...]                               # (1, 1)
    wfc_ctx = wfc_ctx_ref[...]                       # (out_feats, He) rows
    wfc_y = wfc_y_ref[...]                           # (out_feats, out_feats) rows
    bfc = bfc_ref[...]                               # (1, out_feats)
    wd_ih = wd_ih_ref[...]                           # (out_feats, 4Hd)
    bd = bd_ref[...]                                 # (1, 4Hd)

    # loop-invariant time term of the encoder input attention (+ its bias), hoisted
    score_t = jnp.sum(enc_in * wae_t_b, axis=1) + bae        # (B, n_in)
    # one-hot time mask used to keep input_encoded register-resident
    t_iota = jax.lax.broadcasted_iota(jnp.int32, (1, Tm1, 1), 1)

    # ------------------ Encoder: input attention + LSTM ------------------
    h = jnp.zeros((B, He), f32)
    c = jnp.zeros((B, He), f32)
    input_encoded = jnp.zeros((B, Tm1, He), f32)
    for t in range(Tm1):
        # attn_linear(cat(h, c, input.permute(0,2,1))), weight pre-split into rows
        score_hc = jnp.sum(h * wae_h + c * wae_c, axis=-1, keepdims=True)
        attn_w = _softmax_last(score_hc + score_t)               # (B, n_in)
        weighted = attn_w * enc_in[:, t, :]                      # (B, n_in)
        # gates = weighted @ We_ih^T (tiny K -> VPU) + h @ We_hh^T (MXU) + bias
        gates = (jnp.sum(weighted[:, :, None] * we_ih_b, axis=1)
                 + _mm(h, we_hh) + be)
        h, c = _lstm_gates(gates, c, He)
        input_encoded = input_encoded + jnp.where(t_iota == t, h[:, None, :], 0.0)

    # TODO(synk): nn.Dropout(p=0.01) applied as identity (eval mode); training-mode
    # stochastic masking is intentionally not implemented.

    # ----------------- Decoder: temporal attention + LSTM -----------------
    # encoder-state contribution to the first attention Linear is loop-invariant
    enc_a1 = jnp.dot(input_encoded.reshape(B * Tm1, He), wa1_e,
                     precision=jax.lax.Precision.HIGHEST,
                     preferred_element_type=f32).reshape(B, Tm1, He)
    hd = jnp.zeros((B, Hd), f32)
    cd = jnp.zeros((B, Hd), f32)
    context = jnp.zeros((B, He), f32)
    for t in range(Tm1):
        # one fused MXU push: hd @ [Wd_hh^T | W_a1_h^T]
        hg = _mm(hd, wdhh_a1)                                    # (B, 4Hd + He)
        hc = hg[:, 4 * Hd:] + _mm(cd, wa1_c) + ba1               # (B, He)
        z = jnp.tanh(enc_a1 + hc[:, None, :])                    # (B, Tm1, He)
        score = jnp.sum(z * wa2_b, axis=2) + ba2                 # (B, Tm1)
        attn = _softmax_last(score)                              # (B, Tm1)
        # bmm(attn.unsqueeze(1), input_encoded)[:, 0, :]
        context = jnp.sum(attn[:, :, None] * input_encoded, axis=1)      # (B, He)
        y_tilde = (_rowdot(context, wfc_ctx)
                   + _rowdot(y_hist[:, t, :], wfc_y) + bfc)      # (B, out_feats)
        gates = _mm(y_tilde, wd_ih) + hg[:, :4 * Hd] + bd        # (B, 4Hd)
        hd, cd = _lstm_gates(gates, cd, Hd)

    # fc_final(cat(hidden[0], context))
    out_ref[...] = (_rowdot(hd, wff_h_ref[...]) + _rowdot(context, wff_c_ref[...])
                    + bff_ref[...])


# ------------------------------ JAX wrapper ------------------------------
def darnn_forward_pallas(x, p, He, Hd, T, out_feats=1, batch_tile=64):
    B, Tm1, n_ts = x.shape
    assert Tm1 == T - 1
    n_in = n_ts - 1
    enc_in = x[:, :, 1:].astype(jnp.float32)       # driving series (B, Tm1, n_in)
    y_hist = x[:, :, 0:1].astype(jnp.float32)      # target history (B, Tm1, 1)

    # batch tiling: one grid axis over batch tiles (marked "parallel" so v7x can
    # shard tiles across its two TensorCores); weights are replicated per tile.
    B_tile = B if B <= batch_tile else batch_tile
    B_pad = ((B + B_tile - 1) // B_tile) * B_tile
    if B_pad != B:
        enc_in = jnp.pad(enc_in, ((0, B_pad - B), (0, 0), (0, 0)))
        y_hist = jnp.pad(y_hist, ((0, B_pad - B), (0, 0), (0, 0)))

    ff_out = p["W_ff"].shape[0]
    weights = (
        # encoder LSTM (transposed) + fused bias
        p["We_ih"].T, p["We_hh"].T, (p["be_ih"] + p["be_hh"]).reshape(1, -1),
        # encoder attention linear, split over [hidden | cell | time] (rows / column)
        p["W_attn_e"][:, :He], p["W_attn_e"][:, He:2 * He],
        p["W_attn_e"][:, 2 * He:].T, p["b_attn_e"].reshape(1, 1),
        # decoder: [Wd_hh^T | W_a1_h^T] fused, plus the cell / encoder parts
        jnp.concatenate([p["Wd_hh"].T, p["W_a1"][:, :Hd].T], axis=1),
        p["W_a1"][:, Hd:2 * Hd].T, p["W_a1"][:, 2 * Hd:].T,
        p["b_a1"].reshape(1, -1), p["W_a2"], p["b_a2"].reshape(1, 1),
        # fc: Linear(He + out_feats -> out_feats), split over [context | y] (rows)
        p["W_fc"][:, :He], p["W_fc"][:, He:], p["b_fc"].reshape(1, -1),
        # decoder LSTM input weight (transposed) + fused bias
        p["Wd_ih"].T, (p["bd_ih"] + p["bd_hh"]).reshape(1, -1),
        # fc_final: Linear(Hd + He -> out), split over [hidden | context] (rows)
        p["W_ff"][:, :Hd], p["W_ff"][:, Hd:], p["b_ff"].reshape(1, -1),
    )

    data_specs = [
        pl.BlockSpec((B_tile, Tm1, n_in), lambda b: (b, 0, 0)),
        pl.BlockSpec((B_tile, Tm1, y_hist.shape[-1]), lambda b: (b, 0, 0)),
    ]
    weight_specs = [
        pl.BlockSpec(w.shape, lambda b, _nd=w.ndim: (0,) * _nd) for w in weights
    ]

    kernel = functools.partial(darnn_kernel, Tm1=Tm1, He=He, Hd=Hd)
    out = pl.pallas_call(
        kernel,
        grid=(B_pad // B_tile,),
        in_specs=data_specs + weight_specs,
        out_specs=pl.BlockSpec((B_tile, ff_out), lambda b: (b, 0)),
        out_shape=jax.ShapeDtypeStruct((B_pad, ff_out), jnp.float32),
        compiler_params=pltpu.CompilerParams(dimension_semantics=("parallel",)),
    )(enc_in, y_hist, *weights)
    return out[:B]


# --------------------- deterministic parameter setup ---------------------
def make_darnn_params(key, n_time_series, He, T, Hd, out_feats=1):
    n_in = n_time_series - 1
    Tm1 = T - 1
    ks = jax.random.split(key, 18)

    def u(k, shape, scale):
        return jax.random.uniform(k, shape, jnp.float32, -scale, scale)

    se, sd = 1.0 / (He ** 0.5), 1.0 / (Hd ** 0.5)
    p = {}
    # Encoder nn.LSTM(input_size=n_in, hidden_size=He)  (PyTorch layout (4H, in)/(4H, H))
    p["We_ih"] = u(ks[0], (4 * He, n_in), se)
    p["We_hh"] = u(ks[1], (4 * He, He), se)
    p["be_ih"] = u(ks[2], (4 * He,), se)
    p["be_hh"] = u(ks[3], (4 * He,), se)
    # Encoder attn_linear: Linear(2*He + T-1, 1)
    sa = 1.0 / ((2 * He + Tm1) ** 0.5)
    p["W_attn_e"] = u(ks[4], (1, 2 * He + Tm1), sa)
    p["b_attn_e"] = u(ks[5], (1,), sa)
    # Decoder attn_layer: Linear(2*Hd + He, He) -> Tanh -> Linear(He, 1)
    s1 = 1.0 / ((2 * Hd + He) ** 0.5)
    p["W_a1"] = u(ks[6], (He, 2 * Hd + He), s1)
    p["b_a1"] = u(ks[7], (He,), s1)
    s2 = 1.0 / (He ** 0.5)
    p["W_a2"] = u(ks[8], (1, He), s2)
    p["b_a2"] = u(ks[9], (1,), s2)
    # Decoder nn.LSTM(input_size=out_feats, hidden_size=Hd)
    p["Wd_ih"] = u(ks[10], (4 * Hd, out_feats), sd)
    p["Wd_hh"] = u(ks[11], (4 * Hd, Hd), sd)
    p["bd_ih"] = u(ks[12], (4 * Hd,), sd)
    p["bd_hh"] = u(ks[13], (4 * Hd,), sd)
    # fc: Linear(He + out_feats, out_feats); weight re-initialised with normal_()
    p["W_fc"] = jax.random.normal(ks[14], (out_feats, He + out_feats), jnp.float32)
    p["b_fc"] = u(ks[15], (out_feats,), 1.0 / ((He + out_feats) ** 0.5))
    # fc_final: Linear(Hd + He, out_feats)   (probabilistic=False -> out_feats outputs)
    sff = 1.0 / ((Hd + He) ** 0.5)
    p["W_ff"] = u(ks[16], (out_feats, Hd + He), sff)
    p["b_ff"] = u(ks[17], (out_feats,), sff)
    return p


# ---------------- pure-JAX literal reference (for validation) ----------------
def darnn_forward_reference(x, p, He, Hd, T, out_feats=1):
    B, Tm1, n_ts = x.shape
    n_in = n_ts - 1
    enc_in = x[:, :, 1:]
    y_hist = x[:, :, 0:1]

    def lstm(xx, h, c, w_ih, w_hh, b_ih, b_hh, H):
        g = xx @ w_ih.T + b_ih + h @ w_hh.T + b_hh
        i, f = jax.nn.sigmoid(g[:, :H]), jax.nn.sigmoid(g[:, H:2 * H])
        gg, o = jnp.tanh(g[:, 2 * H:3 * H]), jax.nn.sigmoid(g[:, 3 * H:])
        c = f * c + i * gg
        return o * jnp.tanh(c), c

    h = jnp.zeros((B, He)); c = jnp.zeros((B, He))
    inp_perm = jnp.transpose(enc_in, (0, 2, 1))
    encs = []
    for t in range(Tm1):
        xcat = jnp.concatenate([jnp.broadcast_to(h[:, None, :], (B, n_in, He)),
                                jnp.broadcast_to(c[:, None, :], (B, n_in, He)),
                                inp_perm], axis=2)
        logits = xcat.reshape(-1, 2 * He + Tm1) @ p["W_attn_e"].T + p["b_attn_e"]
        attn = jax.nn.softmax(logits.reshape(B, n_in), axis=1)
        weighted = attn * enc_in[:, t, :]
        h, c = lstm(weighted, h, c, p["We_ih"], p["We_hh"], p["be_ih"], p["be_hh"], He)
        encs.append(h)
    input_encoded = jnp.stack(encs, axis=1)

    hd = jnp.zeros((B, Hd)); cd = jnp.zeros((B, Hd)); context = jnp.zeros((B, He))
    for t in range(Tm1):
        xcat = jnp.concatenate([jnp.broadcast_to(hd[:, None, :], (B, Tm1, Hd)),
                                jnp.broadcast_to(cd[:, None, :], (B, Tm1, Hd)),
                                input_encoded], axis=2)
        z = jnp.tanh(xcat.reshape(-1, 2 * Hd + He) @ p["W_a1"].T + p["b_a1"])
        logits = z @ p["W_a2"].T + p["b_a2"]
        attn = jax.nn.softmax(logits.reshape(B, Tm1), axis=1)
        context = jnp.einsum("bt,bth->bh", attn, input_encoded)
        y_tilde = jnp.concatenate([context, y_hist[:, t]], axis=1) @ p["W_fc"].T + p["b_fc"]
        hd, cd = lstm(y_tilde, hd, cd, p["Wd_ih"], p["Wd_hh"], p["bd_ih"], p["bd_hh"], Hd)
    return jnp.concatenate([hd, context], axis=1) @ p["W_ff"].T + p["b_ff"]


if __name__ == "__main__":
    B = 2
    n_time_series = 5     # 1 target + 4 driving series
    He = 32               # hidden_size_encoder
    Hd = 32               # decoder_hidden_size
    T = 9                 # forecast_history => sequence length T-1 = 8
    out_feats = 1         # probabilistic=False, final_act=None

    key = jax.random.PRNGKey(0)
    kx, kp = jax.random.split(key)
    x = jax.random.normal(kx, (B, T - 1, n_time_series), jnp.float32)
    params = make_darnn_params(kp, n_time_series, He, T, Hd, out_feats)

    y = darnn_forward_pallas(x, params, He, Hd, T, out_feats)
    y = jax.block_until_ready(y)

    y_ref = darnn_forward_reference(x, params, He, Hd, T, out_feats)
    assert y.shape == (B, out_feats)
    assert jnp.allclose(y, y_ref, atol=1e-3, rtol=1e-3), (y, y_ref)
    print("KERNEL_OK")
</pallas_src>

<mosaic_0001>
module attributes {stable_mosaic.version = 11 : i64} {
  func.func @darnn_kernel(%arg0: i32, %arg1: memref<2x8x4xf32, #tpu.memory_space<vmem>>, %arg2: memref<2x8x1xf32, #tpu.memory_space<vmem>>, %arg3: memref<4x128xf32, #tpu.memory_space<vmem>>, %arg4: memref<32x128xf32, #tpu.memory_space<vmem>>, %arg5: memref<1x128xf32, #tpu.memory_space<vmem>>, %arg6: memref<1x32xf32, #tpu.memory_space<vmem>>, %arg7: memref<1x32xf32, #tpu.memory_space<vmem>>, %arg8: memref<8x1xf32, #tpu.memory_space<vmem>>, %arg9: memref<1x1xf32, #tpu.memory_space<vmem>>, %arg10: memref<32x160xf32, #tpu.memory_space<vmem>>, %arg11: memref<32x32xf32, #tpu.memory_space<vmem>>, %arg12: memref<32x32xf32, #tpu.memory_space<vmem>>, %arg13: memref<1x32xf32, #tpu.memory_space<vmem>>, %arg14: memref<1x32xf32, #tpu.memory_space<vmem>>, %arg15: memref<1x1xf32, #tpu.memory_space<vmem>>, %arg16: memref<1x32xf32, #tpu.memory_space<vmem>>, %arg17: memref<1x1xf32, #tpu.memory_space<vmem>>, %arg18: memref<1x1xf32, #tpu.memory_space<vmem>>, %arg19: memref<1x128xf32, #tpu.memory_space<vmem>>, %arg20: memref<1x128xf32, #tpu.memory_space<vmem>>, %arg21: memref<1x32xf32, #tpu.memory_space<vmem>>, %arg22: memref<1x32xf32, #tpu.memory_space<vmem>>, %arg23: memref<1x1xf32, #tpu.memory_space<vmem>>, %arg24: memref<2x1xf32, #tpu.memory_space<vmem>>) attributes {dimension_semantics = [#tpu.dimension_semantics<parallel>], iteration_bounds = array<i64: 1>, scalar_prefetch = 0 : i64, scratch_operands = 0 : i64, tpu.core_type = #tpu.core_type<tc>, window_params = [{transform_indices = @transform_0, window_bounds = array<i64: 2, 8, 4>}, {transform_indices = @transform_1, window_bounds = array<i64: 2, 8, 1>}, {pipeline_mode = #tpu.pipeline_mode<synchronous>, transform_indices = @transform_2, window_bounds = array<i64: 4, 128>}, {pipeline_mode = #tpu.pipeline_mode<synchronous>, transform_indices = @transform_3, window_bounds = array<i64: 32, 128>}, {pipeline_mode = #tpu.pipeline_mode<synchronous>, transform_indices = @transform_4, window_bounds = array<i64: 1, 128>}, {pipeline_mode = #tpu.pipeline_mode<synchronous>, transform_indices = @transform_5, window_bounds = array<i64: 1, 32>}, {pipeline_mode = #tpu.pipeline_mode<synchronous>, transform_indices = @transform_6, window_bounds = array<i64: 1, 32>}, {pipeline_mode = #tpu.pipeline_mode<synchronous>, transform_indices = @transform_7, window_bounds = array<i64: 8, 1>}, {pipeline_mode = #tpu.pipeline_mode<synchronous>, transform_indices = @transform_8, window_bounds = array<i64: 1, 1>}, {pipeline_mode = #tpu.pipeline_mode<synchronous>, transform_indices = @transform_9, window_bounds = array<i64: 32, 160>}, {pipeline_mode = #tpu.pipeline_mode<synchronous>, transform_indices = @transform_10, window_bounds = array<i64: 32, 32>}, {pipeline_mode = #tpu.pipeline_mode<synchronous>, transform_indices = @transform_11, window_bounds = array<i64: 32, 32>}, {pipeline_mode = #tpu.pipeline_mode<synchronous>, transform_indices = @transform_12, window_bounds = array<i64: 1, 32>}, {pipeline_mode = #tpu.pipeline_mode<synchronous>, transform_indices = @transform_13, window_bounds = array<i64: 1, 32>}, {pipeline_mode = #tpu.pipeline_mode<synchronous>, transform_indices = @transform_14, window_bounds = array<i64: 1, 1>}, {pipeline_mode = #tpu.pipeline_mode<synchronous>, transform_indices = @transform_15, window_bounds = array<i64: 1, 32>}, {pipeline_mode = #tpu.pipeline_mode<synchronous>, transform_indices = @transform_16, window_bounds = array<i64: 1, 1>}, {pipeline_mode = #tpu.pipeline_mode<synchronous>, transform_indices = @transform_17, window_bounds = array<i64: 1, 1>}, {pipeline_mode = #tpu.pipeline_mode<synchronous>, transform_indices = @transform_18, window_bounds = array<i64: 1, 128>}, {pipeline_mode = #tpu.pipeline_mode<synchronous>, transform_indices = @transform_19, window_bounds = array<i64: 1, 128>}, {pipeline_mode = #tpu.pipeline_mode<synchronous>, transform_indices = @transform_20, window_bounds = array<i64: 1, 32>}, {pipeline_mode = #tpu.pipeline_mode<synchronous>, transform_indices = @transform_21, window_bounds = array<i64: 1, 32>}, {pipeline_mode = #tpu.pipeline_mode<synchronous>, transform_indices = @transform_22, window_bounds = array<i64: 1, 1>}, {transform_indices = @transform_23, window_bounds = array<i64: 2, 1>}]} {
    %c0 = arith.constant 0 : index
    %c0_0 = arith.constant 0 : index
    %c0_1 = arith.constant 0 : index
    %0 = vector.load %arg1[%c0, %c0_0, %c0_1] : memref<2x8x4xf32, #tpu.memory_space<vmem>>, vector<2x8x4xf32>
    %c0_2 = arith.constant 0 : index
    %c0_3 = arith.constant 0 : index
    %c0_4 = arith.constant 0 : index
    %1 = vector.load %arg2[%c0_2, %c0_3, %c0_4] : memref<2x8x1xf32, #tpu.memory_space<vmem>>, vector<2x8x1xf32>
    %c0_5 = arith.constant 0 : index
    %c0_6 = arith.constant 0 : index
    %2 = vector.load %arg3[%c0_5, %c0_6] : memref<4x128xf32, #tpu.memory_space<vmem>>, vector<4x128xf32>
    %3 = vector.shape_cast %2 : vector<4x128xf32> to vector<1x4x128xf32>
    %c0_7 = arith.constant 0 : index
    %c0_8 = arith.constant 0 : index
    %4 = vector.load %arg4[%c0_7, %c0_8] : memref<32x128xf32, #tpu.memory_space<vmem>>, vector<32x128xf32>
    %c0_9 = arith.constant 0 : index
    %c0_10 = arith.constant 0 : index
    %5 = vector.load %arg5[%c0_9, %c0_10] : memref<1x128xf32, #tpu.memory_space<vmem>>, vector<1x128xf32>
    %c0_11 = arith.constant 0 : index
    %c0_12 = arith.constant 0 : index
    %6 = vector.load %arg6[%c0_11, %c0_12] : memref<1x32xf32, #tpu.memory_space<vmem>>, vector<1x32xf32>
    %c0_13 = arith.constant 0 : index
    %c0_14 = arith.constant 0 : index
    %7 = vector.load %arg7[%c0_13, %c0_14] : memref<1x32xf32, #tpu.memory_space<vmem>>, vector<1x32xf32>
    %c0_15 = arith.constant 0 : index
    %c0_16 = arith.constant 0 : index
    %8 = vector.load %arg8[%c0_15, %c0_16] : memref<8x1xf32, #tpu.memory_space<vmem>>, vector<8x1xf32>
    %9 = vector.shape_cast %8 : vector<8x1xf32> to vector<1x8x1xf32>
    %c0_17 = arith.constant 0 : index
    %c0_18 = arith.constant 0 : index
    %10 = vector.load %arg9[%c0_17, %c0_18] : memref<1x1xf32, #tpu.memory_space<vmem>>, vector<1x1xf32>
    %c0_19 = arith.constant 0 : index
    %c0_20 = arith.constant 0 : index
    %11 = vector.load %arg10[%c0_19, %c0_20] : memref<32x160xf32, #tpu.memory_space<vmem>>, vector<32x160xf32>
    %c0_21 = arith.constant 0 : index
    %c0_22 = arith.constant 0 : index
    %12 = vector.load %arg11[%c0_21, %c0_22] : memref<32x32xf32, #tpu.memory_space<vmem>>, vector<32x32xf32>
    %c0_23 = arith.constant 0 : index
    %c0_24 = arith.constant 0 : index
    %13 = vector.load %arg12[%c0_23, %c0_24] : memref<32x32xf32, #tpu.memory_space<vmem>>, vector<32x32xf32>
    %c0_25 = arith.constant 0 : index
    %c0_26 = arith.constant 0 : index
    %14 = vector.load %arg13[%c0_25, %c0_26] : memref<1x32xf32, #tpu.memory_space<vmem>>, vector<1x32xf32>
    %c0_27 = arith.constant 0 : index
    %c0_28 = arith.constant 0 : index
    %15 = vector.load %arg14[%c0_27, %c0_28] : memref<1x32xf32, #tpu.memory_space<vmem>>, vector<1x32xf32>
    %16 = vector.shape_cast %15 : vector<1x32xf32> to vector<1x1x32xf32>
    %c0_29 = arith.constant 0 : index
    %c0_30 = arith.constant 0 : index
    %17 = vector.load %arg15[%c0_29, %c0_30] : memref<1x1xf32, #tpu.memory_space<vmem>>, vector<1x1xf32>
    %c0_31 = arith.constant 0 : index
    %c0_32 = arith.constant 0 : index
    %18 = vector.load %arg16[%c0_31, %c0_32] : memref<1x32xf32, #tpu.memory_space<vmem>>, vector<1x32xf32>
    %c0_33 = arith.constant 0 : index
    %c0_34 = arith.constant 0 : index
    %19 = vector.load %arg17[%c0_33, %c0_34] : memref<1x1xf32, #tpu.memory_space<vmem>>, vector<1x1xf32>
    %c0_35 = arith.constant 0 : index
    %c0_36 = arith.constant 0 : index
    %20 = vector.load %arg18[%c0_35, %c0_36] : memref<1x1xf32, #tpu.memory_space<vmem>>, vector<1x1xf32>
    %c0_37 = arith.constant 0 : index
    %c0_38 = arith.constant 0 : index
    %21 = vector.load %arg19[%c0_37, %c0_38] : memref<1x128xf32, #tpu.memory_space<vmem>>, vector<1x128xf32>
    %c0_39 = arith.constant 0 : index
    %c0_40 = arith.constant 0 : index
    %22 = vector.load %arg20[%c0_39, %c0_40] : memref<1x128xf32, #tpu.memory_space<vmem>>, vector<1x128xf32>
    %23 = vector.broadcast %9 : vector<1x8x1xf32> to vector<2x8x4xf32>
    %24 = arith.mulf %0, %23 : vector<2x8x4xf32>
    %cst = arith.constant dense<0.000000e+00> : vector<2x4xf32>
    %25 = vector.multi_reduction <add>, %24, %cst [1] : vector<2x8x4xf32> to vector<2x4xf32>
    %26 = vector.broadcast %10 : vector<1x1xf32> to vector<2x4xf32>
    %27 = arith.addf %25, %26 : vector<2x4xf32>
    %28 = tpu.iota {dimensions = array<i32: 1>} : vector<1x8x1xi32>
    %cst_41 = arith.constant 0.000000e+00 : f32
    %29 = vector.broadcast %cst_41 : f32 to vector<2x32xf32>
    %cst_42 = arith.constant 0.000000e+00 : f32
    %30 = vector.broadcast %cst_42 : f32 to vector<2x32xf32>
    %cst_43 = arith.constant 0.000000e+00 : f32
    %31 = vector.broadcast %cst_43 : f32 to vector<2x8x32xf32>
    %32 = vector.broadcast %6 : vector<1x32xf32> to vector<2x32xf32>
    %33 = arith.mulf %29, %32 : vector<2x32xf32>
    %34 = vector.broadcast %7 : vector<1x32xf32> to vector<2x32xf32>
    %35 = arith.mulf %30, %34 : vector<2x32xf32>
    %36 = arith.addf %33, %35 : vector<2x32xf32>
    %cst_44 = arith.constant dense<0.000000e+00> : vector<2xf32>
    %37 = vector.multi_reduction <add>, %36, %cst_44 [1] : vector<2x32xf32> to vector<2xf32>
    %38 = vector.shape_cast %37 : vector<2xf32> to vector<2x1xf32>
    %39 = vector.broadcast %38 : vector<2x1xf32> to vector<2x4xf32>
    %40 = arith.addf %39, %27 : vector<2x4xf32>
    %cst_45 = arith.constant dense<0xFF800000> : vector<2xf32>
    %41 = vector.multi_reduction <maximumf>, %40, %cst_45 [1] : vector<2x4xf32> to vector<2xf32>
    %42 = vector.shape_cast %41 : vector<2xf32> to vector<2x1xf32>
    %43 = vector.broadcast %42 : vector<2x1xf32> to vector<2x4xf32>
    %44 = arith.subf %40, %43 : vector<2x4xf32>
    %45 = math.exp %44 : vector<2x4xf32>
    %cst_46 = arith.constant dense<0.000000e+00> : vector<2xf32>
    %46 = vector.multi_reduction <add>, %45, %cst_46 [1] : vector<2x4xf32> to vector<2xf32>
    %47 = vector.shape_cast %46 : vector<2xf32> to vector<2x1xf32>
    %48 = vector.broadcast %47 : vector<2x1xf32> to vector<2x4xf32>
    %49 = arith.divf %45, %48 : vector<2x4xf32>
    %50 = vector.extract_strided_slice %0 {offsets = [0, 0, 0], sizes = [2, 1, 4], strides = [1, 1, 1]} : vector<2x8x4xf32> to vector<2x1x4xf32>
    %51 = vector.shape_cast %50 : vector<2x1x4xf32> to vector<2x4xf32>
    %52 = arith.mulf %49, %51 : vector<2x4xf32>
    %53 = vector.shape_cast %52 : vector<2x4xf32> to vector<2x4x1xf32>
    %54 = vector.broadcast %53 : vector<2x4x1xf32> to vector<2x4x128xf32>
    %55 = vector.broadcast %3 : vector<1x4x128xf32> to vector<2x4x128xf32>
    %56 = arith.mulf %54, %55 : vector<2x4x128xf32>
    %cst_47 = arith.constant dense<0.000000e+00> : vector<2x128xf32>
    %57 = vector.multi_reduction <add>, %56, %cst_47 [1] : vector<2x4x128xf32> to vector<2x128xf32>
    %cst_48 = arith.constant dense<0.000000e+00> : vector<2x128xf32>
    %58 = tpu.matmul %29, %4, %cst_48 {dimension_numbers = #tpu.dot_dimension_numbers<[1], [0], [0], [1], [0, 0, 1, 1], [], []>, precision = #tpu.contract_precision<fp32>} : vector<2x32xf32>, vector<32x128xf32>, vector<2x128xf32> -> vector<2x128xf32>
    %59 = arith.addf %57, %58 : vector<2x128xf32>
    %60 = vector.broadcast %5 : vector<1x128xf32> to vector<2x128xf32>
    %61 = arith.addf %59, %60 : vector<2x128xf32>
    %62 = vector.extract_strided_slice %61 {offsets = [0, 0], sizes = [2, 32], strides = [1, 1]} : vector<2x128xf32> to vector<2x32xf32>
    %cst_49 = arith.constant 5.000000e-01 : f32
    %63 = vector.broadcast %cst_49 : f32 to vector<2x32xf32>
    %64 = arith.mulf %63, %62 : vector<2x32xf32>
    %65 = math.tanh %64 : vector<2x32xf32>
    %cst_50 = arith.constant 5.000000e-01 : f32
    %66 = vector.broadcast %cst_50 : f32 to vector<2x32xf32>
    %67 = arith.mulf %66, %65 : vector<2x32xf32>
    %cst_51 = arith.constant 5.000000e-01 : f32
    %68 = vector.broadcast %cst_51 : f32 to vector<2x32xf32>
    %69 = arith.addf %67, %68 : vector<2x32xf32>
    %70 = vector.extract_strided_slice %61 {offsets = [0, 32], sizes = [2, 32], strides = [1, 1]} : vector<2x128xf32> to vector<2x32xf32>
    %cst_52 = arith.constant 5.000000e-01 : f32
    %71 = vector.broadcast %cst_52 : f32 to vector<2x32xf32>
    %72 = arith.mulf %71, %70 : vector<2x32xf32>
    %73 = math.tanh %72 : vector<2x32xf32>
    %cst_53 = arith.constant 5.000000e-01 : f32
    %74 = vector.broadcast %cst_53 : f32 to vector<2x32xf32>
    %75 = arith.mulf %74, %73 : vector<2x32xf32>
    %cst_54 = arith.constant 5.000000e-01 : f32
    %76 = vector.broadcast %cst_54 : f32 to vector<2x32xf32>
    %77 = arith.addf %75, %76 : vector<2x32xf32>
    %78 = vector.extract_strided_slice %61 {offsets = [0, 64], sizes = [2, 32], strides = [1, 1]} : vector<2x128xf32> to vector<2x32xf32>
    %79 = math.tanh %78 : vector<2x32xf32>
    %80 = vector.extract_strided_slice %61 {offsets = [0, 96], sizes = [2, 32], strides = [1, 1]} : vector<2x128xf32> to vector<2x32xf32>
    %cst_55 = arith.constant 5.000000e-01 : f32
    %81 = vector.broadcast %cst_55 : f32 to vector<2x32xf32>
    %82 = arith.mulf %81, %80 : vector<2x32xf32>
    %83 = math.tanh %82 : vector<2x32xf32>
    %cst_56 = arith.constant 5.000000e-01 : f32
    %84 = vector.broadcast %cst_56 : f32 to vector<2x32xf32>
    %85 = arith.mulf %84, %83 : vector<2x32xf32>
    %cst_57 = arith.constant 5.000000e-01 : f32
    %86 = vector.broadcast %cst_57 : f32 to vector<2x32xf32>
    %87 = arith.addf %85, %86 : vector<2x32xf32>
    %88 = arith.mulf %77, %30 : vector<2x32xf32>
    %89 = arith.mulf %69, %79 : vector<2x32xf32>
    %90 = arith.addf %88, %89 : vector<2x32xf32>
    %91 = math.tanh %90 : vector<2x32xf32>
    %92 = arith.mulf %87, %91 : vector<2x32xf32>
    %c0_i32 = arith.constant 0 : i32
    %93 = vector.broadcast %c0_i32 : i32 to vector<1x8x1xi32>
    %94 = arith.cmpi eq, %28, %93 : vector<1x8x1xi32>
    %95 = vector.shape_cast %92 : vector<2x32xf32> to vector<2x1x32xf32>
    %cst_58 = arith.constant 0.000000e+00 : f32
    %96 = vector.shape_cast %94 : vector<1x8x1xi1> to vector<1x8x1xi1>
    %97 = vector.broadcast %96 : vector<1x8x1xi1> to vector<2x8x32xi1>
    %98 = vector.shape_cast %95 : vector<2x1x32xf32> to vector<2x1x32xf32>
    %99 = vector.broadcast %98 : vector<2x1x32xf32> to vector<2x8x32xf32>
    %100 = vector.broadcast %cst_58 : f32 to vector<2x8x32xf32>
    %101 = arith.select %97, %99, %100 : vector<2x8x32xi1>, vector<2x8x32xf32>
    %102 = arith.addf %31, %101 : vector<2x8x32xf32>
    %103 = vector.broadcast %6 : vector<1x32xf32> to vector<2x32xf32>
    %104 = arith.mulf %92, %103 : vector<2x32xf32>
    %105 = vector.broadcast %7 : vector<1x32xf32> to vector<2x32xf32>
    %106 = arith.mulf %90, %105 : vector<2x32xf32>
    %107 = arith.addf %104, %106 : vector<2x32xf32>
    %cst_59 = arith.constant dense<0.000000e+00> : vector<2xf32>
    %108 = vector.multi_reduction <add>, %107, %cst_59 [1] : vector<2x32xf32> to vector<2xf32>
    %109 = vector.shape_cast %108 : vector<2xf32> to vector<2x1xf32>
    %110 = vector.broadcast %109 : vector<2x1xf32> to vector<2x4xf32>
    %111 = arith.addf %110, %27 : vector<2x4xf32>
    %cst_60 = arith.constant dense<0xFF800000> : vector<2xf32>
    %112 = vector.multi_reduction <maximumf>, %111, %cst_60 [1] : vector<2x4xf32> to vector<2xf32>
    %113 = vector.shape_cast %112 : vector<2xf32> to vector<2x1xf32>
    %114 = vector.broadcast %113 : vector<2x1xf32> to vector<2x4xf32>
    %115 = arith.subf %111, %114 : vector<2x4xf32>
    %116 = math.exp %115 : vector<2x4xf32>
    %cst_61 = arith.constant dense<0.000000e+00> : vector<2xf32>
    %117 = vector.multi_reduction <add>, %116, %cst_61 [1] : vector<2x4xf32> to vector<2xf32>
    %118 = vector.shape_cast %117 : vector<2xf32> to vector<2x1xf32>
    %119 = vector.broadcast %118 : vector<2x1xf32> to vector<2x4xf32>
    %120 = arith.divf %116, %119 : vector<2x4xf32>
    %121 = vector.extract_strided_slice %0 {offsets = [0, 1, 0], sizes = [2, 1, 4], strides = [1, 1, 1]} : vector<2x8x4xf32> to vector<2x1x4xf32>
    %122 = vector.shape_cast %121 : vector<2x1x4xf32> to vector<2x4xf32>
    %123 = arith.mulf %120, %122 : vector<2x4xf32>
    %124 = vector.shape_cast %123 : vector<2x4xf32> to vector<2x4x1xf32>
    %125 = vector.broadcast %124 : vector<2x4x1xf32> to vector<2x4x128xf32>
    %126 = vector.broadcast %3 : vector<1x4x128xf32> to vector<2x4x128xf32>
    %127 = arith.mulf %125, %126 : vector<2x4x128xf32>
    %cst_62 = arith.constant dense<0.000000e+00> : vector<2x128xf32>
    %128 = vector.multi_reduction <add>, %127, %cst_62 [1] : vector<2x4x128xf32> to vector<2x128xf32>
    %cst_63 = arith.constant dense<0.000000e+00> : vector<2x128xf32>
    %129 = tpu.matmul %92, %4, %cst_63 {dimension_numbers = #tpu.dot_dimension_numbers<[1], [0], [0], [1], [0, 0, 1, 1], [], []>, precision = #tpu.contract_precision<fp32>} : vector<2x32xf32>, vector<32x128xf32>, vector<2x128xf32> -> vector<2x128xf32>
    %130 = arith.addf %128, %129 : vector<2x128xf32>
    %131 = vector.broadcast %5 : vector<1x128xf32> to vector<2x128xf32>
    %132 = arith.addf %130, %131 : vector<2x128xf32>
    %133 = vector.extract_strided_slice %132 {offsets = [0, 0], sizes = [2, 32], strides = [1, 1]} : vector<2x128xf32> to vector<2x32xf32>
    %cst_64 = arith.constant 5.000000e-01 : f32
    %134 = vector.broadcast %cst_64 : f32 to vector<2x32xf32>
    %135 = arith.mulf %134, %133 : vector<2x32xf32>
    %136 = math.tanh %135 : vector<2x32xf32>
    %cst_65 = arith.constant 5.000000e-01 : f32
    %137 = vector.broadcast %cst_65 : f32 to vector<2x32xf32>
    %138 = arith.mulf %137, %136 : vector<2x32xf32>
    %cst_66 = arith.constant 5.000000e-01 : f32
    %139 = vector.broadcast %cst_66 : f32 to vector<2x32xf32>
    %140 = arith.addf %138, %139 : vector<2x32xf32>
    %141 = vector.extract_strided_slice %132 {offsets = [0, 32], sizes = [2, 32], strides = [1, 1]} : vector<2x128xf32> to vector<2x32xf32>
    %cst_67 = arith.constant 5.000000e-01 : f32
    %142 = vector.broadcast %cst_67 : f32 to vector<2x32xf32>
    %143 = arith.mulf %142, %141 : vector<2x32xf32>
    %144 = math.tanh %143 : vector<2x32xf32>
    %cst_68 = arith.constant 5.000000e-01 : f32
    %145 = vector.broadcast %cst_68 : f32 to vector<2x32xf32>
    %146 = arith.mulf %145, %144 : vector<2x32xf32>
    %cst_69 = arith.constant 5.000000e-01 : f32
    %147 = vector.broadcast %cst_69 : f32 to vector<2x32xf32>
    %148 = arith.addf %146, %147 : vector<2x32xf32>
    %149 = vector.extract_strided_slice %132 {offsets = [0, 64], sizes = [2, 32], strides = [1, 1]} : vector<2x128xf32> to vector<2x32xf32>
    %150 = math.tanh %149 : vector<2x32xf32>
    %151 = vector.extract_strided_slice %132 {offsets = [0, 96], sizes = [2, 32], strides = [1, 1]} : vector<2x128xf32> to vector<2x32xf32>
    %cst_70 = arith.constant 5.000000e-01 : f32
    %152 = vector.broadcast %cst_70 : f32 to vector<2x32xf32>
    %153 = arith.mulf %152, %151 : vector<2x32xf32>
    %154 = math.tanh %153 : vector<2x32xf32>
    %cst_71 = arith.constant 5.000000e-01 : f32
    %155 = vector.broadcast %cst_71 : f32 to vector<2x32xf32>
    %156 = arith.mulf %155, %154 : vector<2x32xf32>
    %cst_72 = arith.constant 5.000000e-01 : f32
    %157 = vector.broadcast %cst_72 : f32 to vector<2x32xf32>
    %158 = arith.addf %156, %157 : vector<2x32xf32>
    %159 = arith.mulf %148, %90 : vector<2x32xf32>
    %160 = arith.mulf %140, %150 : vector<2x32xf32>
    %161 = arith.addf %159, %160 : vector<2x32xf32>
    %162 = math.tanh %161 : vector<2x32xf32>
    %163 = arith.mulf %158, %162 : vector<2x32xf32>
    %c1_i32 = arith.constant 1 : i32
    %164 = vector.broadcast %c1_i32 : i32 to vector<1x8x1xi32>
    %165 = arith.cmpi eq, %28, %164 : vector<1x8x1xi32>
    %166 = vector.shape_cast %163 : vector<2x32xf32> to vector<2x1x32xf32>
    %cst_73 = arith.constant 0.000000e+00 : f32
    %167 = vector.shape_cast %165 : vector<1x8x1xi1> to vector<1x8x1xi1>
    %168 = vector.broadcast %167 : vector<1x8x1xi1> to vector<2x8x32xi1>
    %169 = vector.shape_cast %166 : vector<2x1x32xf32> to vector<2x1x32xf32>
    %170 = vector.broadcast %169 : vector<2x1x32xf32> to vector<2x8x32xf32>
    %171 = vector.broadcast %cst_73 : f32 to vector<2x8x32xf32>
    %172 = arith.select %168, %170, %171 : vector<2x8x32xi1>, vector<2x8x32xf32>
    %173 = arith.addf %102, %172 : vector<2x8x32xf32>
    %174 = vector.broadcast %6 : vector<1x32xf32> to vector<2x32xf32>
    %175 = arith.mulf %163, %174 : vector<2x32xf32>
    %176 = vector.broadcast %7 : vector<1x32xf32> to vector<2x32xf32>
    %177 = arith.mulf %161, %176 : vector<2x32xf32>
    %178 = arith.addf %175, %177 : vector<2x32xf32>
    %cst_74 = arith.constant dense<0.000000e+00> : vector<2xf32>
    %179 = vector.multi_reduction <add>, %178, %cst_74 [1] : vector<2x32xf32> to vector<2xf32>
    %180 = vector.shape_cast %179 : vector<2xf32> to vector<2x1xf32>
    %181 = vector.broadcast %180 : vector<2x1xf32> to vector<2x4xf32>
    %182 = arith.addf %181, %27 : vector<2x4xf32>
    %cst_75 = arith.constant dense<0xFF800000> : vector<2xf32>
    %183 = vector.multi_reduction <maximumf>, %182, %cst_75 [1] : vector<2x4xf32> to vector<2xf32>
    %184 = vector.shape_cast %183 : vector<2xf32> to vector<2x1xf32>
    %185 = vector.broadcast %184 : vector<2x1xf32> to vector<2x4xf32>
    %186 = arith.subf %182, %185 : vector<2x4xf32>
    %187 = math.exp %186 : vector<2x4xf32>
    %cst_76 = arith.constant dense<0.000000e+00> : vector<2xf32>
    %188 = vector.multi_reduction <add>, %187, %cst_76 [1] : vector<2x4xf32> to vector<2xf32>
    %189 = vector.shape_cast %188 : vector<2xf32> to vector<2x1xf32>
    %190 = vector.broadcast %189 : vector<2x1xf32> to vector<2x4xf32>
    %191 = arith.divf %187, %190 : vector<2x4xf32>
    %192 = vector.extract_strided_slice %0 {offsets = [0, 2, 0], sizes = [2, 1, 4], strides = [1, 1, 1]} : vector<2x8x4xf32> to vector<2x1x4xf32>
    %193 = vector.shape_cast %192 : vector<2x1x4xf32> to vector<2x4xf32>
    %194 = arith.mulf %191, %193 : vector<2x4xf32>
    %195 = vector.shape_cast %194 : vector<2x4xf32> to vector<2x4x1xf32>
    %196 = vector.broadcast %195 : vector<2x4x1xf32> to vector<2x4x128xf32>
    %197 = vector.broadcast %3 : vector<1x4x128xf32> to vector<2x4x128xf32>
    %198 = arith.mulf %196, %197 : vector<2x4x128xf32>
    %cst_77 = arith.constant dense<0.000000e+00> : vector<2x128xf32>
    %199 = vector.multi_reduction <add>, %198, %cst_77 [1] : vector<2x4x128xf32> to vector<2x128xf32>
    %cst_78 = arith.constant dense<0.000000e+00> : vector<2x128xf32>
    %200 = tpu.matmul %163, %4, %cst_78 {dimension_numbers = #tpu.dot_dimension_numbers<[1], [0], [0], [1], [0, 0, 1, 1], [], []>, precision = #tpu.contract_precision<fp32>} : vector<2x32xf32>, vector<32x128xf32>, vector<2x128xf32> -> vector<2x128xf32>
    %201 = arith.addf %199, %200 : vector<2x128xf32>
    %202 = vector.broadcast %5 : vector<1x128xf32> to vector<2x128xf32>
    %203 = arith.addf %201, %202 : vector<2x128xf32>
    %204 = vector.extract_strided_slice %203 {offsets = [0, 0], sizes = [2, 32], strides = [1, 1]} : vector<2x128xf32> to vector<2x32xf32>
    %cst_79 = arith.constant 5.000000e-01 : f32
    %205 = vector.broadcast %cst_79 : f32 to vector<2x32xf32>
    %206 = arith.mulf %205, %204 : vector<2x32xf32>
    %207 = math.tanh %206 : vector<2x32xf32>
    %cst_80 = arith.constant 5.000000e-01 : f32
    %208 = vector.broadcast %cst_80 : f32 to vector<2x32xf32>
    %209 = arith.mulf %208, %207 : vector<2x32xf32>
    %cst_81 = arith.constant 5.000000e-01 : f32
    %210 = vector.broadcast %cst_81 : f32 to vector<2x32xf32>
    %211 = arith.addf %209, %210 : vector<2x32xf32>
    %212 = vector.extract_strided_slice %203 {offsets = [0, 32], sizes = [2, 32], strides = [1, 1]} : vector<2x128xf32> to vector<2x32xf32>
    %cst_82 = arith.constant 5.000000e-01 : f32
    %213 = vector.broadcast %cst_82 : f32 to vector<2x32xf32>
    %214 = arith.mulf %213, %212 : vector<2x32xf32>
    %215 = math.tanh %214 : vector<2x32xf32>
    %cst_83 = arith.constant 5.000000e-01 : f32
    %216 = vector.broadcast %cst_83 : f32 to vector<2x32xf32>
    %217 = arith.mulf %216, %215 : vector<2x32xf32>
    %cst_84 = arith.constant 5.000000e-01 : f32
    %218 = vector.broadcast %cst_84 : f32 to vector<2x32xf32>
    %219 = arith.addf %217, %218 : vector<2x32xf32>
    %220 = vector.extract_strided_slice %203 {offsets = [0, 64], sizes = [2, 32], strides = [1, 1]} : vector<2x128xf32> to vector<2x32xf32>
    %221 = math.tanh %220 : vector<2x32xf32>
    %222 = vector.extract_strided_slice %203 {offsets = [0, 96], sizes = [2, 32], strides = [1, 1]} : vector<2x128xf32> to vector<2x32xf32>
    %cst_85 = arith.constant 5.000000e-01 : f32
    %223 = vector.broadcast %cst_85 : f32 to vector<2x32xf32>
    %224 = arith.mulf %223, %222 : vector<2x32xf32>
    %225 = math.tanh %224 : vector<2x32xf32>
    %cst_86 = arith.constant 5.000000e-01 : f32
    %226 = vector.broadcast %cst_86 : f32 to vector<2x32xf32>
    %227 = arith.mulf %226, %225 : vector<2x32xf32>
    %cst_87 = arith.constant 5.000000e-01 : f32
    %228 = vector.broadcast %cst_87 : f32 to vector<2x32xf32>
    %229 = arith.addf %227, %228 : vector<2x32xf32>
    %230 = arith.mulf %219, %161 : vector<2x32xf32>
    %231 = arith.mulf %211, %221 : vector<2x32xf32>
    %232 = arith.addf %230, %231 : vector<2x32xf32>
    %233 = math.tanh %232 : vector<2x32xf32>
    %234 = arith.mulf %229, %233 : vector<2x32xf32>
    %c2_i32 = arith.constant 2 : i32
    %235 = vector.broadcast %c2_i32 : i32 to vector<1x8x1xi32>
    %236 = arith.cmpi eq, %28, %235 : vector<1x8x1xi32>
    %237 = vector.shape_cast %234 : vector<2x32xf32> to vector<2x1x32xf32>
    %cst_88 = arith.constant 0.000000e+00 : f32
    %238 = vector.shape_cast %236 : vector<1x8x1xi1> to vector<1x8x1xi1>
    %239 = vector.broadcast %238 : vector<1x8x1xi1> to vector<2x8x32xi1>
    %240 = vector.shape_cast %237 : vector<2x1x32xf32> to vector<2x1x32xf32>
    %241 = vector.broadcast %240 : vector<2x1x32xf32> to vector<2x8x32xf32>
    %242 = vector.broadcast %cst_88 : f32 to vector<2x8x32xf32>
    %243 = arith.select %239, %241, %242 : vector<2x8x32xi1>, vector<2x8x32xf32>
    %244 = arith.addf %173, %243 : vector<2x8x32xf32>
    %245 = vector.broadcast %6 : vector<1x32xf32> to vector<2x32xf32>
    %246 = arith.mulf %234, %245 : vector<2x32xf32>
    %247 = vector.broadcast %7 : vector<1x32xf32> to vector<2x32xf32>
    %248 = arith.mulf %232, %247 : vector<2x32xf32>
    %249 = arith.addf %246, %248 : vector<2x32xf32>
    %cst_89 = arith.constant dense<0.000000e+00> : vector<2xf32>
    %250 = vector.multi_reduction <add>, %249, %cst_89 [1] : vector<2x32xf32> to vector<2xf32>
    %251 = vector.shape_cast %250 : vector<2xf32> to vector<2x1xf32>
    %252 = vector.broadcast %251 : vector<2x1xf32> to vector<2x4xf32>
    %253 = arith.addf %252, %27 : vector<2x4xf32>
    %cst_90 = arith.constant dense<0xFF800000> : vector<2xf32>
    %254 = vector.multi_reduction <maximumf>, %253, %cst_90 [1] : vector<2x4xf32> to vector<2xf32>
    %255 = vector.shape_cast %254 : vector<2xf32> to vector<2x1xf32>
    %256 = vector.broadcast %255 : vector<2x1xf32> to vector<2x4xf32>
    %257 = arith.subf %253, %256 : vector<2x4xf32>
    %258 = math.exp %257 : vector<2x4xf32>
    %cst_91 = arith.constant dense<0.000000e+00> : vector<2xf32>
    %259 = vector.multi_reduction <add>, %258, %cst_91 [1] : vector<2x4xf32> to vector<2xf32>
    %260 = vector.shape_cast %259 : vector<2xf32> to vector<2x1xf32>
    %261 = vector.broadcast %260 : vector<2x1xf32> to vector<2x4xf32>
    %262 = arith.divf %258, %261 : vector<2x4xf32>
    %263 = vector.extract_strided_slice %0 {offsets = [0, 3, 0], sizes = [2, 1, 4], strides = [1, 1, 1]} : vector<2x8x4xf32> to vector<2x1x4xf32>
    %264 = vector.shape_cast %263 : vector<2x1x4xf32> to vector<2x4xf32>
    %265 = arith.mulf %262, %264 : vector<2x4xf32>
    %266 = vector.shape_cast %265 : vector<2x4xf32> to vector<2x4x1xf32>
    %267 = vector.broadcast %266 : vector<2x4x1xf32> to vector<2x4x128xf32>
    %268 = vector.broadcast %3 : vector<1x4x128xf32> to vector<2x4x128xf32>
    %269 = arith.mulf %267, %268 : vector<2x4x128xf32>
    %cst_92 = arith.constant dense<0.000000e+00> : vector<2x128xf32>
    %270 = vector.multi_reduction <add>, %269, %cst_92 [1] : vector<2x4x128xf32> to vector<2x128xf32>
    %cst_93 = arith.constant dense<0.000000e+00> : vector<2x128xf32>
    %271 = tpu.matmul %234, %4, %cst_93 {dimension_numbers = #tpu.dot_dimension_numbers<[1], [0], [0], [1], [0, 0, 1, 1], [], []>, precision = #tpu.contract_precision<fp32>} : vector<2x32xf32>, vector<32x128xf32>, vector<2x128xf32> -> vector<2x128xf32>
    %272 = arith.addf %270, %271 : vector<2x128xf32>
    %273 = vector.broadcast %5 : vector<1x128xf32> to vector<2x128xf32>
    %274 = arith.addf %272, %273 : vector<2x128xf32>
    %275 = vector.extract_strided_slice %274 {offsets = [0, 0], sizes = [2, 32], strides = [1, 1]} : vector<2x128xf32> to vector<2x32xf32>
    %cst_94 = arith.constant 5.000000e-01 : f32
    %276 = vector.broadcast %cst_94 : f32 to vector<2x32xf32>
    %277 = arith.mulf %276, %275 : vector<2x32xf32>
    %278 = math.tanh %277 : vector<2x32xf32>
    %cst_95 = arith.constant 5.000000e-01 : f32
    %279 = vector.broadcast %cst_95 : f32 to vector<2x32xf32>
    %280 = arith.mulf %279, %278 : vector<2x32xf32>
    %cst_96 = arith.constant 5.000000e-01 : f32
    %281 = vector.broadcast %cst_96 : f32 to vector<2x32xf32>
    %282 = arith.addf %280, %281 : vector<2x32xf32>
    %283 = vector.extract_strided_slice %274 {offsets = [0, 32], sizes = [2, 32], strides = [1, 1]} : vector<2x128xf32> to vector<2x32xf32>
    %cst_97 = arith.constant 5.000000e-01 : f32
    %284 = vector.broadcast %cst_97 : f32 to vector<2x32xf32>
    %285 = arith.mulf %284, %283 : vector<2x32xf32>
    %286 = math.tanh %285 : vector<2x32xf32>
    %cst_98 = arith.constant 5.000000e-01 : f32
    %287 = vector.broadcast %cst_98 : f32 to vector<2x32xf32>
    %288 = arith.mulf %287, %286 : vector<2x32xf32>
    %cst_99 = arith.constant 5.000000e-01 : f32
    %289 = vector.broadcast %cst_99 : f32 to vector<2x32xf32>
    %290 = arith.addf %288, %289 : vector<2x32xf32>
    %291 = vector.extract_strided_slice %274 {offsets = [0, 64], sizes = [2, 32], strides = [1, 1]} : vector<2x128xf32> to vector<2x32xf32>
    %292 = math.tanh %291 : vector<2x32xf32>
    %293 = vector.extract_strided_slice %274 {offsets = [0, 96], sizes = [2, 32], strides = [1, 1]} : vector<2x128xf32> to vector<2x32xf32>
    %cst_100 = arith.constant 5.000000e-01 : f32
    %294 = vector.broadcast %cst_100 : f32 to vector<2x32xf32>
    %295 = arith.mulf %294, %293 : vector<2x32xf32>
    %296 = math.tanh %295 : vector<2x32xf32>
    %cst_101 = arith.constant 5.000000e-01 : f32
    %297 = vector.broadcast %cst_101 : f32 to vector<2x32xf32>
    %298 = arith.mulf %297, %296 : vector<2x32xf32>
    %cst_102 = arith.constant 5.000000e-01 : f32
    %299 = vector.broadcast %cst_102 : f32 to vector<2x32xf32>
    %300 = arith.addf %298, %299 : vector<2x32xf32>
    %301 = arith.mulf %290, %232 : vector<2x32xf32>
    %302 = arith.mulf %282, %292 : vector<2x32xf32>
    %303 = arith.addf %301, %302 : vector<2x32xf32>
    %304 = math.tanh %303 : vector<2x32xf32>
    %305 = arith.mulf %300, %304 : vector<2x32xf32>
    %c3_i32 = arith.constant 3 : i32
    %306 = vector.broadcast %c3_i32 : i32 to vector<1x8x1xi32>
    %307 = arith.cmpi eq, %28, %306 : vector<1x8x1xi32>
    %308 = vector.shape_cast %305 : vector<2x32xf32> to vector<2x1x32xf32>
    %cst_103 = arith.constant 0.000000e+00 : f32
    %309 = vector.shape_cast %307 : vector<1x8x1xi1> to vector<1x8x1xi1>
    %310 = vector.broadcast %309 : vector<1x8x1xi1> to vector<2x8x32xi1>
    %311 = vector.shape_cast %308 : vector<2x1x32xf32> to vector<2x1x32xf32>
    %312 = vector.broadcast %311 : vector<2x1x32xf32> to vector<2x8x32xf32>
    %313 = vector.broadcast %cst_103 : f32 to vector<2x8x32xf32>
    %314 = arith.select %310, %312, %313 : vector<2x8x32xi1>, vector<2x8x32xf32>
    %315 = arith.addf %244, %314 : vector<2x8x32xf32>
    %316 = vector.broadcast %6 : vector<1x32xf32> to vector<2x32xf32>
    %317 = arith.mulf %305, %316 : vector<2x32xf32>
    %318 = vector.broadcast %7 : vector<1x32xf32> to vector<2x32xf32>
    %319 = arith.mulf %303, %318 : vector<2x32xf32>
    %320 = arith.addf %317, %319 : vector<2x32xf32>
    %cst_104 = arith.constant dense<0.000000e+00> : vector<2xf32>
    %321 = vector.multi_reduction <add>, %320, %cst_104 [1] : vector<2x32xf32> to vector<2xf32>
    %322 = vector.shape_cast %321 : vector<2xf32> to vector<2x1xf32>
    %323 = vector.broadcast %322 : vector<2x1xf32> to vector<2x4xf32>
    %324 = arith.addf %323, %27 : vector<2x4xf32>
    %cst_105 = arith.constant dense<0xFF800000> : vector<2xf32>
    %325 = vector.multi_reduction <maximumf>, %324, %cst_105 [1] : vector<2x4xf32> to vector<2xf32>
    %326 = vector.shape_cast %325 : vector<2xf32> to vector<2x1xf32>
    %327 = vector.broadcast %326 : vector<2x1xf32> to vector<2x4xf32>
    %328 = arith.subf %324, %327 : vector<2x4xf32>
    %329 = math.exp %328 : vector<2x4xf32>
    %cst_106 = arith.constant dense<0.000000e+00> : vector<2xf32>
    %330 = vector.multi_reduction <add>, %329, %cst_106 [1] : vector<2x4xf32> to vector<2xf32>
    %331 = vector.shape_cast %330 : vector<2xf32> to vector<2x1xf32>
    %332 = vector.broadcast %331 : vector<2x1xf32> to vector<2x4xf32>
    %333 = arith.divf %329, %332 : vector<2x4xf32>
    %334 = vector.extract_strided_slice %0 {offsets = [0, 4, 0], sizes = [2, 1, 4], strides = [1, 1, 1]} : vector<2x8x4xf32> to vector<2x1x4xf32>
    %335 = vector.shape_cast %334 : vector<2x1x4xf32> to vector<2x4xf32>
    %336 = arith.mulf %333, %335 : vector<2x4xf32>
    %337 = vector.shape_cast %336 : vector<2x4xf32> to vector<2x4x1xf32>
    %338 = vector.broadcast %337 : vector<2x4x1xf32> to vector<2x4x128xf32>
    %339 = vector.broadcast %3 : vector<1x4x128xf32> to vector<2x4x128xf32>
    %340 = arith.mulf %338, %339 : vector<2x4x128xf32>
    %cst_107 = arith.constant dense<0.000000e+00> : vector<2x128xf32>
    %341 = vector.multi_reduction <add>, %340, %cst_107 [1] : vector<2x4x128xf32> to vector<2x128xf32>
    %cst_108 = arith.constant dense<0.000000e+00> : vector<2x128xf32>
    %342 = tpu.matmul %305, %4, %cst_108 {dimension_numbers = #tpu.dot_dimension_numbers<[1], [0], [0], [1], [0, 0, 1, 1], [], []>, precision = #tpu.contract_precision<fp32>} : vector<2x32xf32>, vector<32x128xf32>, vector<2x128xf32> -> vector<2x128xf32>
    %343 = arith.addf %341, %342 : vector<2x128xf32>
    %344 = vector.broadcast %5 : vector<1x128xf32> to vector<2x128xf32>
    %345 = arith.addf %343, %344 : vector<2x128xf32>
    %346 = vector.extract_strided_slice %345 {offsets = [0, 0], sizes = [2, 32], strides = [1, 1]} : vector<2x128xf32> to vector<2x32xf32>
    %cst_109 = arith.constant 5.000000e-01 : f32
    %347 = vector.broadcast %cst_109 : f32 to vector<2x32xf32>
    %348 = arith.mulf %347, %346 : vector<2x32xf32>
    %349 = math.tanh %348 : vector<2x32xf32>
    %cst_110 = arith.constant 5.000000e-01 : f32
    %350 = vector.broadcast %cst_110 : f32 to vector<2x32xf32>
    %351 = arith.mulf %350, %349 : vector<2x32xf32>
    %cst_111 = arith.constant 5.000000e-01 : f32
    %352 = vector.broadcast %cst_111 : f32 to vector<2x32xf32>
    %353 = arith.addf %351, %352 : vector<2x32xf32>
    %354 = vector.extract_strided_slice %345 {offsets = [0, 32], sizes = [2, 32], strides = [1, 1]} : vector<2x128xf32> to vector<2x32xf32>
    %cst_112 = arith.constant 5.000000e-01 : f32
    %355 = vector.broadcast %cst_112 : f32 to vector<2x32xf32>
    %356 = arith.mulf %355, %354 : vector<2x32xf32>
    %357 = math.tanh %356 : vector<2x32xf32>
    %cst_113 = arith.constant 5.000000e-01 : f32
    %358 = vector.broadcast %cst_113 : f32 to vector<2x32xf32>
    %359 = arith.mulf %358, %357 : vector<2x32xf32>
    %cst_114 = arith.constant 5.000000e-01 : f32
    %360 = vector.broadcast %cst_114 : f32 to vector<2x32xf32>
    %361 = arith.addf %359, %360 : vector<2x32xf32>
    %362 = vector.extract_strided_slice %345 {offsets = [0, 64], sizes = [2, 32], strides = [1, 1]} : vector<2x128xf32> to vector<2x32xf32>
    %363 = math.tanh %362 : vector<2x32xf32>
    %364 = vector.extract_strided_slice %345 {offsets = [0, 96], sizes = [2, 32], strides = [1, 1]} : vector<2x128xf32> to vector<2x32xf32>
    %cst_115 = arith.constant 5.000000e-01 : f32
    %365 = vector.broadcast %cst_115 : f32 to vector<2x32xf32>
    %366 = arith.mulf %365, %364 : vector<2x32xf32>
    %367 = math.tanh %366 : vector<2x32xf32>
    %cst_116 = arith.constant 5.000000e-01 : f32
    %368 = vector.broadcast %cst_116 : f32 to vector<2x32xf32>
    %369 = arith.mulf %368, %367 : vector<2x32xf32>
    %cst_117 = arith.constant 5.000000e-01 : f32
    %370 = vector.broadcast %cst_117 : f32 to vector<2x32xf32>
    %371 = arith.addf %369, %370 : vector<2x32xf32>
    %372 = arith.mulf %361, %303 : vector<2x32xf32>
    %373 = arith.mulf %353, %363 : vector<2x32xf32>
    %374 = arith.addf %372, %373 : vector<2x32xf32>
    %375 = math.tanh %374 : vector<2x32xf32>
    %376 = arith.mulf %371, %375 : vector<2x32xf32>
    %c4_i32 = arith.constant 4 : i32
    %377 = vector.broadcast %c4_i32 : i32 to vector<1x8x1xi32>
    %378 = arith.cmpi eq, %28, %377 : vector<1x8x1xi32>
    %379 = vector.shape_cast %376 : vector<2x32xf32> to vector<2x1x32xf32>
    %cst_118 = arith.constant 0.000000e+00 : f32
    %380 = vector.shape_cast %378 : vector<1x8x1xi1> to vector<1x8x1xi1>
    %381 = vector.broadcast %380 : vector<1x8x1xi1> to vector<2x8x32xi1>
    %382 = vector.shape_cast %379 : vector<2x1x32xf32> to vector<2x1x32xf32>
    %383 = vector.broadcast %382 : vector<2x1x32xf32> to vector<2x8x32xf32>
    %384 = vector.broadcast %cst_118 : f32 to vector<2x8x32xf32>
    %385 = arith.select %381, %383, %384 : vector<2x8x32xi1>, vector<2x8x32xf32>
    %386 = arith.addf %315, %385 : vector<2x8x32xf32>
    %387 = vector.broadcast %6 : vector<1x32xf32> to vector<2x32xf32>
    %388 = arith.mulf %376, %387 : vector<2x32xf32>
    %389 = vector.broadcast %7 : vector<1x32xf32> to vector<2x32xf32>
    %390 = arith.mulf %374, %389 : vector<2x32xf32>
    %391 = arith.addf %388, %390 : vector<2x32xf32>
    %cst_119 = arith.constant dense<0.000000e+00> : vector<2xf32>
    %392 = vector.multi_reduction <add>, %391, %cst_119 [1] : vector<2x32xf32> to vector<2xf32>
    %393 = vector.shape_cast %392 : vector<2xf32> to vector<2x1xf32>
    %394 = vector.broadcast %393 : vector<2x1xf32> to vector<2x4xf32>
    %395 = arith.addf %394, %27 : vector<2x4xf32>
    %cst_120 = arith.constant dense<0xFF800000> : vector<2xf32>
    %396 = vector.multi_reduction <maximumf>, %395, %cst_120 [1] : vector<2x4xf32> to vector<2xf32>
    %397 = vector.shape_cast %396 : vector<2xf32> to vector<2x1xf32>
    %398 = vector.broadcast %397 : vector<2x1xf32> to vector<2x4xf32>
    %399 = arith.subf %395, %398 : vector<2x4xf32>
    %400 = math.exp %399 : vector<2x4xf32>
    %cst_121 = arith.constant dense<0.000000e+00> : vector<2xf32>
    %401 = vector.multi_reduction <add>, %400, %cst_121 [1] : vector<2x4xf32> to vector<2xf32>
    %402 = vector.shape_cast %401 : vector<2xf32> to vector<2x1xf32>
    %403 = vector.broadcast %402 : vector<2x1xf32> to vector<2x4xf32>
    %404 = arith.divf %400, %403 : vector<2x4xf32>
    %405 = vector.extract_strided_slice %0 {offsets = [0, 5, 0], sizes = [2, 1, 4], strides = [1, 1, 1]} : vector<2x8x4xf32> to vector<2x1x4xf32>
    %406 = vector.shape_cast %405 : vector<2x1x4xf32> to vector<2x4xf32>
    %407 = arith.mulf %404, %406 : vector<2x4xf32>
    %408 = vector.shape_cast %407 : vector<2x4xf32> to vector<2x4x1xf32>
    %409 = vector.broadcast %408 : vector<2x4x1xf32> to vector<2x4x128xf32>
    %410 = vector.broadcast %3 : vector<1x4x128xf32> to vector<2x4x128xf32>
    %411 = arith.mulf %409, %410 : vector<2x4x128xf32>
    %cst_122 = arith.constant dense<0.000000e+00> : vector<2x128xf32>
    %412 = vector.multi_reduction <add>, %411, %cst_122 [1] : vector<2x4x128xf32> to vector<2x128xf32>
    %cst_123 = arith.constant dense<0.000000e+00> : vector<2x128xf32>
    %413 = tpu.matmul %376, %4, %cst_123 {dimension_numbers = #tpu.dot_dimension_numbers<[1], [0], [0], [1], [0, 0, 1, 1], [], []>, precision = #tpu.contract_precision<fp32>} : vector<2x32xf32>, vector<32x128xf32>, vector<2x128xf32> -> vector<2x128xf32>
    %414 = arith.addf %412, %413 : vector<2x128xf32>
    %415 = vector.broadcast %5 : vector<1x128xf32> to vector<2x128xf32>
    %416 = arith.addf %414, %415 : vector<2x128xf32>
    %417 = vector.extract_strided_slice %416 {offsets = [0, 0], sizes = [2, 32], strides = [1, 1]} : vector<2x128xf32> to vector<2x32xf32>
    %cst_124 = arith.constant 5.000000e-01 : f32
    %418 = vector.broadcast %cst_124 : f32 to vector<2x32xf32>
    %419 = arith.mulf %418, %417 : vector<2x32xf32>
    %420 = math.tanh %419 : vector<2x32xf32>
    %cst_125 = arith.constant 5.000000e-01 : f32
    %421 = vector.broadcast %cst_125 : f32 to vector<2x32xf32>
    %422 = arith.mulf %421, %420 : vector<2x32xf32>
    %cst_126 = arith.constant 5.000000e-01 : f32
    %423 = vector.broadcast %cst_126 : f32 to vector<2x32xf32>
    %424 = arith.addf %422, %423 : vector<2x32xf32>
    %425 = vector.extract_strided_slice %416 {offsets = [0, 32], sizes = [2, 32], strides = [1, 1]} : vector<2x128xf32> to vector<2x32xf32>
    %cst_127 = arith.constant 5.000000e-01 : f32
    %426 = vector.broadcast %cst_127 : f32 to vector<2x32xf32>
    %427 = arith.mulf %426, %425 : vector<2x32xf32>
    %428 = math.tanh %427 : vector<2x32xf32>
    %cst_128 = arith.constant 5.000000e-01 : f32
    %429 = vector.broadcast %cst_128 : f32 to vector<2x32xf32>
    %430 = arith.mulf %429, %428 : vector<2x32xf32>
    %cst_129 = arith.constant 5.000000e-01 : f32
    %431 = vector.broadcast %cst_129 : f32 to vector<2x32xf32>
    %432 = arith.addf %430, %431 : vector<2x32xf32>
    %433 = vector.extract_strided_slice %416 {offsets = [0, 64], sizes = [2, 32], strides = [1, 1]} : vector<2x128xf32> to vector<2x32xf32>
    %434 = math.tanh %433 : vector<2x32xf32>
    %435 = vector.extract_strided_slice %416 {offsets = [0, 96], sizes = [2, 32], strides = [1, 1]} : vector<2x128xf32> to vector<2x32xf32>
    %cst_130 = arith.constant 5.000000e-01 : f32
    %436 = vector.broadcast %cst_130 : f32 to vector<2x32xf32>
    %437 = arith.mulf %436, %435 : vector<2x32xf32>
    %438 = math.tanh %437 : vector<2x32xf32>
    %cst_131 = arith.constant 5.000000e-01 : f32
    %439 = vector.broadcast %cst_131 : f32 to vector<2x32xf32>
    %440 = arith.mulf %439, %438 : vector<2x32xf32>
    %cst_132 = arith.constant 5.000000e-01 : f32
    %441 = vector.broadcast %cst_132 : f32 to vector<2x32xf32>
    %442 = arith.addf %440, %441 : vector<2x32xf32>
    %443 = arith.mulf %432, %374 : vector<2x32xf32>
    %444 = arith.mulf %424, %434 : vector<2x32xf32>
    %445 = arith.addf %443, %444 : vector<2x32xf32>
    %446 = math.tanh %445 : vector<2x32xf32>
    %447 = arith.mulf %442, %446 : vector<2x32xf32>
    %c5_i32 = arith.constant 5 : i32
    %448 = vector.broadcast %c5_i32 : i32 to vector<1x8x1xi32>
    %449 = arith.cmpi eq, %28, %448 : vector<1x8x1xi32>
    %450 = vector.shape_cast %447 : vector<2x32xf32> to vector<2x1x32xf32>
    %cst_133 = arith.constant 0.000000e+00 : f32
    %451 = vector.shape_cast %449 : vector<1x8x1xi1> to vector<1x8x1xi1>
    %452 = vector.broadcast %451 : vector<1x8x1xi1> to vector<2x8x32xi1>
    %453 = vector.shape_cast %450 : vector<2x1x32xf32> to vector<2x1x32xf32>
    %454 = vector.broadcast %453 : vector<2x1x32xf32> to vector<2x8x32xf32>
    %455 = vector.broadcast %cst_133 : f32 to vector<2x8x32xf32>
    %456 = arith.select %452, %454, %455 : vector<2x8x32xi1>, vector<2x8x32xf32>
    %457 = arith.addf %386, %456 : vector<2x8x32xf32>
    %458 = vector.broadcast %6 : vector<1x32xf32> to vector<2x32xf32>
    %459 = arith.mulf %447, %458 : vector<2x32xf32>
    %460 = vector.broadcast %7 : vector<1x32xf32> to vector<2x32xf32>
    %461 = arith.mulf %445, %460 : vector<2x32xf32>
    %462 = arith.addf %459, %461 : vector<2x32xf32>
    %cst_134 = arith.constant dense<0.000000e+00> : vector<2xf32>
    %463 = vector.multi_reduction <add>, %462, %cst_134 [1] : vector<2x32xf32> to vector<2xf32>
    %464 = vector.shape_cast %463 : vector<2xf32> to vector<2x1xf32>
    %465 = vector.broadcast %464 : vector<2x1xf32> to vector<2x4xf32>
    %466 = arith.addf %465, %27 : vector<2x4xf32>
    %cst_135 = arith.constant dense<0xFF800000> : vector<2xf32>
    %467 = vector.multi_reduction <maximumf>, %466, %cst_135 [1] : vector<2x4xf32> to vector<2xf32>
    %468 = vector.shape_cast %467 : vector<2xf32> to vector<2x1xf32>
    %469 = vector.broadcast %468 : vector<2x1xf32> to vector<2x4xf32>
    %470 = arith.subf %466, %469 : vector<2x4xf32>
    %471 = math.exp %470 : vector<2x4xf32>
    %cst_136 = arith.constant dense<0.000000e+00> : vector<2xf32>
    %472 = vector.multi_reduction <add>, %471, %cst_136 [1] : vector<2x4xf32> to vector<2xf32>
    %473 = vector.shape_cast %472 : vector<2xf32> to vector<2x1xf32>
    %474 = vector.broadcast %473 : vector<2x1xf32> to vector<2x4xf32>
    %475 = arith.divf %471, %474 : vector<2x4xf32>
    %476 = vector.extract_strided_slice %0 {offsets = [0, 6, 0], sizes = [2, 1, 4], strides = [1, 1, 1]} : vector<2x8x4xf32> to vector<2x1x4xf32>
    %477 = vector.shape_cast %476 : vector<2x1x4xf32> to vector<2x4xf32>
    %478 = arith.mulf %475, %477 : vector<2x4xf32>
    %479 = vector.shape_cast %478 : vector<2x4xf32> to vector<2x4x1xf32>
    %480 = vector.broadcast %479 : vector<2x4x1xf32> to vector<2x4x128xf32>
    %481 = vector.broadcast %3 : vector<1x4x128xf32> to vector<2x4x128xf32>
    %482 = arith.mulf %480, %481 : vector<2x4x128xf32>
    %cst_137 = arith.constant dense<0.000000e+00> : vector<2x128xf32>
    %483 = vector.multi_reduction <add>, %482, %cst_137 [1] : vector<2x4x128xf32> to vector<2x128xf32>
    %cst_138 = arith.constant dense<0.000000e+00> : vector<2x128xf32>
    %484 = tpu.matmul %447, %4, %cst_138 {dimension_numbers = #tpu.dot_dimension_numbers<[1], [0], [0], [1], [0, 0, 1, 1], [], []>, precision = #tpu.contract_precision<fp32>} : vector<2x32xf32>, vector<32x128xf32>, vector<2x128xf32> -> vector<2x128xf32>
    %485 = arith.addf %483, %484 : vector<2x128xf32>
    %486 = vector.broadcast %5 : vector<1x128xf32> to vector<2x128xf32>
    %487 = arith.addf %485, %486 : vector<2x128xf32>
    %488 = vector.extract_strided_slice %487 {offsets = [0, 0], sizes = [2, 32], strides = [1, 1]} : vector<2x128xf32> to vector<2x32xf32>
    %cst_139 = arith.constant 5.000000e-01 : f32
    %489 = vector.broadcast %cst_139 : f32 to vector<2x32xf32>
    %490 = arith.mulf %489, %488 : vector<2x32xf32>
    %491 = math.tanh %490 : vector<2x32xf32>
    %cst_140 = arith.constant 5.000000e-01 : f32
    %492 = vector.broadcast %cst_140 : f32 to vector<2x32xf32>
    %493 = arith.mulf %492, %491 : vector<2x32xf32>
    %cst_141 = arith.constant 5.000000e-01 : f32
    %494 = vector.broadcast %cst_141 : f32 to vector<2x32xf32>
    %495 = arith.addf %493, %494 : vector<2x32xf32>
    %496 = vector.extract_strided_slice %487 {offsets = [0, 32], sizes = [2, 32], strides = [1, 1]} : vector<2x128xf32> to vector<2x32xf32>
    %cst_142 = arith.constant 5.000000e-01 : f32
    %497 = vector.broadcast %cst_142 : f32 to vector<2x32xf32>
    %498 = arith.mulf %497, %496 : vector<2x32xf32>
    %499 = math.tanh %498 : vector<2x32xf32>
    %cst_143 = arith.constant 5.000000e-01 : f32
    %500 = vector.broadcast %cst_143 : f32 to vector<2x32xf32>
    %501 = arith.mulf %500, %499 : vector<2x32xf32>
    %cst_144 = arith.constant 5.000000e-01 : f32
    %502 = vector.broadcast %cst_144 : f32 to vector<2x32xf32>
    %503 = arith.addf %501, %502 : vector<2x32xf32>
    %504 = vector.extract_strided_slice %487 {offsets = [0, 64], sizes = [2, 32], strides = [1, 1]} : vector<2x128xf32> to vector<2x32xf32>
    %505 = math.tanh %504 : vector<2x32xf32>
    %506 = vector.extract_strided_slice %487 {offsets = [0, 96], sizes = [2, 32], strides = [1, 1]} : vector<2x128xf32> to vector<2x32xf32>
    %cst_145 = arith.constant 5.000000e-01 : f32
    %507 = vector.broadcast %cst_145 : f32 to vector<2x32xf32>
    %508 = arith.mulf %507, %506 : vector<2x32xf32>
    %509 = math.tanh %508 : vector<2x32xf32>
    %cst_146 = arith.constant 5.000000e-01 : f32
    %510 = vector.broadcast %cst_146 : f32 to vector<2x32xf32>
    %511 = arith.mulf %510, %509 : vector<2x32xf32>
    %cst_147 = arith.constant 5.000000e-01 : f32
    %512 = vector.broadcast %cst_147 : f32 to vector<2x32xf32>
    %513 = arith.addf %511, %512 : vector<2x32xf32>
    %514 = arith.mulf %503, %445 : vector<2x32xf32>
    %515 = arith.mulf %495, %505 : vector<2x32xf32>
    %516 = arith.addf %514, %515 : vector<2x32xf32>
    %517 = math.tanh %516 : vector<2x32xf32>
    %518 = arith.mulf %513, %517 : vector<2x32xf32>
    %c6_i32 = arith.constant 6 : i32
    %519 = vector.broadcast %c6_i32 : i32 to vector<1x8x1xi32>
    %520 = arith.cmpi eq, %28, %519 : vector<1x8x1xi32>
    %521 = vector.shape_cast %518 : vector<2x32xf32> to vector<2x1x32xf32>
    %cst_148 = arith.constant 0.000000e+00 : f32
    %522 = vector.shape_cast %520 : vector<1x8x1xi1> to vector<1x8x1xi1>
    %523 = vector.broadcast %522 : vector<1x8x1xi1> to vector<2x8x32xi1>
    %524 = vector.shape_cast %521 : vector<2x1x32xf32> to vector<2x1x32xf32>
    %525 = vector.broadcast %524 : vector<2x1x32xf32> to vector<2x8x32xf32>
    %526 = vector.broadcast %cst_148 : f32 to vector<2x8x32xf32>
    %527 = arith.select %523, %525, %526 : vector<2x8x32xi1>, vector<2x8x32xf32>
    %528 = arith.addf %457, %527 : vector<2x8x32xf32>
    %529 = vector.broadcast %6 : vector<1x32xf32> to vector<2x32xf32>
    %530 = arith.mulf %518, %529 : vector<2x32xf32>
    %531 = vector.broadcast %7 : vector<1x32xf32> to vector<2x32xf32>
    %532 = arith.mulf %516, %531 : vector<2x32xf32>
    %533 = arith.addf %530, %532 : vector<2x32xf32>
    %cst_149 = arith.constant dense<0.000000e+00> : vector<2xf32>
    %534 = vector.multi_reduction <add>, %533, %cst_149 [1] : vector<2x32xf32> to vector<2xf32>
    %535 = vector.shape_cast %534 : vector<2xf32> to vector<2x1xf32>
    %536 = vector.broadcast %535 : vector<2x1xf32> to vector<2x4xf32>
    %537 = arith.addf %536, %27 : vector<2x4xf32>
    %cst_150 = arith.constant dense<0xFF800000> : vector<2xf32>
    %538 = vector.multi_reduction <maximumf>, %537, %cst_150 [1] : vector<2x4xf32> to vector<2xf32>
    %539 = vector.shape_cast %538 : vector<2xf32> to vector<2x1xf32>
    %540 = vector.broadcast %539 : vector<2x1xf32> to vector<2x4xf32>
    %541 = arith.subf %537, %540 : vector<2x4xf32>
    %542 = math.exp %541 : vector<2x4xf32>
    %cst_151 = arith.constant dense<0.000000e+00> : vector<2xf32>
    %543 = vector.multi_reduction <add>, %542, %cst_151 [1] : vector<2x4xf32> to vector<2xf32>
    %544 = vector.shape_cast %543 : vector<2xf32> to vector<2x1xf32>
    %545 = vector.broadcast %544 : vector<2x1xf32> to vector<2x4xf32>
    %546 = arith.divf %542, %545 : vector<2x4xf32>
    %547 = vector.extract_strided_slice %0 {offsets = [0, 7, 0], sizes = [2, 1, 4], strides = [1, 1, 1]} : vector<2x8x4xf32> to vector<2x1x4xf32>
    %548 = vector.shape_cast %547 : vector<2x1x4xf32> to vector<2x4xf32>
    %549 = arith.mulf %546, %548 : vector<2x4xf32>
    %550 = vector.shape_cast %549 : vector<2x4xf32> to vector<2x4x1xf32>
    %551 = vector.broadcast %550 : vector<2x4x1xf32> to vector<2x4x128xf32>
    %552 = vector.broadcast %3 : vector<1x4x128xf32> to vector<2x4x128xf32>
    %553 = arith.mulf %551, %552 : vector<2x4x128xf32>
    %cst_152 = arith.constant dense<0.000000e+00> : vector<2x128xf32>
    %554 = vector.multi_reduction <add>, %553, %cst_152 [1] : vector<2x4x128xf32> to vector<2x128xf32>
    %cst_153 = arith.constant dense<0.000000e+00> : vector<2x128xf32>
    %555 = tpu.matmul %518, %4, %cst_153 {dimension_numbers = #tpu.dot_dimension_numbers<[1], [0], [0], [1], [0, 0, 1, 1], [], []>, precision = #tpu.contract_precision<fp32>} : vector<2x32xf32>, vector<32x128xf32>, vector<2x128xf32> -> vector<2x128xf32>
    %556 = arith.addf %554, %555 : vector<2x128xf32>
    %557 = vector.broadcast %5 : vector<1x128xf32> to vector<2x128xf32>
    %558 = arith.addf %556, %557 : vector<2x128xf32>
    %559 = vector.extract_strided_slice %558 {offsets = [0, 0], sizes = [2, 32], strides = [1, 1]} : vector<2x128xf32> to vector<2x32xf32>
    %cst_154 = arith.constant 5.000000e-01 : f32
    %560 = vector.broadcast %cst_154 : f32 to vector<2x32xf32>
    %561 = arith.mulf %560, %559 : vector<2x32xf32>
    %562 = math.tanh %561 : vector<2x32xf32>
    %cst_155 = arith.constant 5.000000e-01 : f32
    %563 = vector.broadcast %cst_155 : f32 to vector<2x32xf32>
    %564 = arith.mulf %563, %562 : vector<2x32xf32>
    %cst_156 = arith.constant 5.000000e-01 : f32
    %565 = vector.broadcast %cst_156 : f32 to vector<2x32xf32>
    %566 = arith.addf %564, %565 : vector<2x32xf32>
    %567 = vector.extract_strided_slice %558 {offsets = [0, 32], sizes = [2, 32], strides = [1, 1]} : vector<2x128xf32> to vector<2x32xf32>
    %cst_157 = arith.constant 5.000000e-01 : f32
    %568 = vector.broadcast %cst_157 : f32 to vector<2x32xf32>
    %569 = arith.mulf %568, %567 : vector<2x32xf32>
    %570 = math.tanh %569 : vector<2x32xf32>
    %cst_158 = arith.constant 5.000000e-01 : f32
    %571 = vector.broadcast %cst_158 : f32 to vector<2x32xf32>
    %572 = arith.mulf %571, %570 : vector<2x32xf32>
    %cst_159 = arith.constant 5.000000e-01 : f32
    %573 = vector.broadcast %cst_159 : f32 to vector<2x32xf32>
    %574 = arith.addf %572, %573 : vector<2x32xf32>
    %575 = vector.extract_strided_slice %558 {offsets = [0, 64], sizes = [2, 32], strides = [1, 1]} : vector<2x128xf32> to vector<2x32xf32>
    %576 = math.tanh %575 : vector<2x32xf32>
    %577 = vector.extract_strided_slice %558 {offsets = [0, 96], sizes = [2, 32], strides = [1, 1]} : vector<2x128xf32> to vector<2x32xf32>
    %cst_160 = arith.constant 5.000000e-01 : f32
    %578 = vector.broadcast %cst_160 : f32 to vector<2x32xf32>
    %579 = arith.mulf %578, %577 : vector<2x32xf32>
    %580 = math.tanh %579 : vector<2x32xf32>
    %cst_161 = arith.constant 5.000000e-01 : f32
    %581 = vector.broadcast %cst_161 : f32 to vector<2x32xf32>
    %582 = arith.mulf %581, %580 : vector<2x32xf32>
    %cst_162 = arith.constant 5.000000e-01 : f32
    %583 = vector.broadcast %cst_162 : f32 to vector<2x32xf32>
    %584 = arith.addf %582, %583 : vector<2x32xf32>
    %585 = arith.mulf %574, %516 : vector<2x32xf32>
    %586 = arith.mulf %566, %576 : vector<2x32xf32>
    %587 = arith.addf %585, %586 : vector<2x32xf32>
    %588 = math.tanh %587 : vector<2x32xf32>
    %589 = arith.mulf %584, %588 : vector<2x32xf32>
    %c7_i32 = arith.constant 7 : i32
    %590 = vector.broadcast %c7_i32 : i32 to vector<1x8x1xi32>
    %591 = arith.cmpi eq, %28, %590 : vector<1x8x1xi32>
    %592 = vector.shape_cast %589 : vector<2x32xf32> to vector<2x1x32xf32>
    %cst_163 = arith.constant 0.000000e+00 : f32
    %593 = vector.shape_cast %591 : vector<1x8x1xi1> to vector<1x8x1xi1>
    %594 = vector.broadcast %593 : vector<1x8x1xi1> to vector<2x8x32xi1>
    %595 = vector.shape_cast %592 : vector<2x1x32xf32> to vector<2x1x32xf32>
    %596 = vector.broadcast %595 : vector<2x1x32xf32> to vector<2x8x32xf32>
    %597 = vector.broadcast %cst_163 : f32 to vector<2x8x32xf32>
    %598 = arith.select %594, %596, %597 : vector<2x8x32xi1>, vector<2x8x32xf32>
    %599 = arith.addf %528, %598 : vector<2x8x32xf32>
    %600 = vector.shape_cast %599 : vector<2x8x32xf32> to vector<16x32xf32>
    %cst_164 = arith.constant dense<0.000000e+00> : vector<16x32xf32>
    %601 = tpu.matmul %600, %13, %cst_164 {dimension_numbers = #tpu.dot_dimension_numbers<[1], [0], [0], [1], [0, 0, 1, 1], [], []>, precision = #tpu.contract_precision<fp32>} : vector<16x32xf32>, vector<32x32xf32>, vector<16x32xf32> -> vector<16x32xf32>
    %602 = vector.shape_cast %601 : vector<16x32xf32> to vector<2x8x32xf32>
    %cst_165 = arith.constant 0.000000e+00 : f32
    %603 = vector.broadcast %cst_165 : f32 to vector<2x32xf32>
    %cst_166 = arith.constant 0.000000e+00 : f32
    %604 = vector.broadcast %cst_166 : f32 to vector<2x32xf32>
    %cst_167 = arith.constant dense<0.000000e+00> : vector<2x160xf32>
    %605 = tpu.matmul %603, %11, %cst_167 {dimension_numbers = #tpu.dot_dimension_numbers<[1], [0], [0], [1], [0, 0, 1, 1], [], []>, precision = #tpu.contract_precision<fp32>} : vector<2x32xf32>, vector<32x160xf32>, vector<2x160xf32> -> vector<2x160xf32>
    %606 = vector.extract_strided_slice %605 {offsets = [0, 128], sizes = [2, 32], strides = [1, 1]} : vector<2x160xf32> to vector<2x32xf32>
    %cst_168 = arith.constant dense<0.000000e+00> : vector<2x32xf32>
    %607 = tpu.matmul %604, %12, %cst_168 {dimension_numbers = #tpu.dot_dimension_numbers<[1], [0], [0], [1], [0, 0, 1, 1], [], []>, precision = #tpu.contract_precision<fp32>} : vector<2x32xf32>, vector<32x32xf32>, vector<2x32xf32> -> vector<2x32xf32>
    %608 = arith.addf %606, %607 : vector<2x32xf32>
    %609 = vector.broadcast %14 : vector<1x32xf32> to vector<2x32xf32>
    %610 = arith.addf %608, %609 : vector<2x32xf32>
    %611 = vector.shape_cast %610 : vector<2x32xf32> to vector<2x1x32xf32>
    %612 = vector.broadcast %611 : vector<2x1x32xf32> to vector<2x8x32xf32>
    %613 = arith.addf %602, %612 : vector<2x8x32xf32>
    %614 = math.tanh %613 : vector<2x8x32xf32>
    %615 = vector.broadcast %16 : vector<1x1x32xf32> to vector<2x8x32xf32>
    %616 = arith.mulf %614, %615 : vector<2x8x32xf32>
    %cst_169 = arith.constant dense<0.000000e+00> : vector<2x8xf32>
    %617 = vector.multi_reduction <add>, %616, %cst_169 [2] : vector<2x8x32xf32> to vector<2x8xf32>
    %618 = vector.broadcast %17 : vector<1x1xf32> to vector<2x8xf32>
    %619 = arith.addf %617, %618 : vector<2x8xf32>
    %cst_170 = arith.constant dense<0xFF800000> : vector<2xf32>
    %620 = vector.multi_reduction <maximumf>, %619, %cst_170 [1] : vector<2x8xf32> to vector<2xf32>
    %621 = vector.shape_cast %620 : vector<2xf32> to vector<2x1xf32>
    %622 = vector.broadcast %621 : vector<2x1xf32> to vector<2x8xf32>
    %623 = arith.subf %619, %622 : vector<2x8xf32>
    %624 = math.exp %623 : vector<2x8xf32>
    %cst_171 = arith.constant dense<0.000000e+00> : vector<2xf32>
    %625 = vector.multi_reduction <add>, %624, %cst_171 [1] : vector<2x8xf32> to vector<2xf32>
    %626 = vector.shape_cast %625 : vector<2xf32> to vector<2x1xf32>
    %627 = vector.broadcast %626 : vector<2x1xf32> to vector<2x8xf32>
    %628 = arith.divf %624, %627 : vector<2x8xf32>
    %629 = vector.shape_cast %628 : vector<2x8xf32> to vector<2x8x1xf32>
    %630 = vector.broadcast %629 : vector<2x8x1xf32> to vector<2x8x32xf32>
    %631 = arith.mulf %630, %599 : vector<2x8x32xf32>
    %cst_172 = arith.constant dense<0.000000e+00> : vector<2x32xf32>
    %632 = vector.multi_reduction <add>, %631, %cst_172 [1] : vector<2x8x32xf32> to vector<2x32xf32>
    %633 = vector.broadcast %18 : vector<1x32xf32> to vector<2x32xf32>
    %634 = arith.mulf %632, %633 : vector<2x32xf32>
    %cst_173 = arith.constant dense<0.000000e+00> : vector<2xf32>
    %635 = vector.multi_reduction <add>, %634, %cst_173 [1] : vector<2x32xf32> to vector<2xf32>
    %636 = vector.shape_cast %635 : vector<2xf32> to vector<2x1xf32>
    %637 = vector.extract_strided_slice %1 {offsets = [0, 0, 0], sizes = [2, 1, 1], strides = [1, 1, 1]} : vector<2x8x1xf32> to vector<2x1x1xf32>
    %638 = vector.shape_cast %637 : vector<2x1x1xf32> to vector<2x1xf32>
    %639 = vector.broadcast %19 : vector<1x1xf32> to vector<2x1xf32>
    %640 = arith.mulf %638, %639 : vector<2x1xf32>
    %cst_174 = arith.constant dense<0.000000e+00> : vector<2xf32>
    %641 = vector.multi_reduction <add>, %640, %cst_174 [1] : vector<2x1xf32> to vector<2xf32>
    %642 = vector.shape_cast %641 : vector<2xf32> to vector<2x1xf32>
    %643 = arith.addf %636, %642 : vector<2x1xf32>
    %644 = vector.broadcast %20 : vector<1x1xf32> to vector<2x1xf32>
    %645 = arith.addf %643, %644 : vector<2x1xf32>
    %646 = vector.broadcast %645 : vector<2x1xf32> to vector<2x128xf32>
    %647 = vector.broadcast %21 : vector<1x128xf32> to vector<2x128xf32>
    %648 = arith.mulf %646, %647 : vector<2x128xf32>
    %649 = vector.extract_strided_slice %605 {offsets = [0, 0], sizes = [2, 128], strides = [1, 1]} : vector<2x160xf32> to vector<2x128xf32>
    %650 = arith.addf %648, %649 : vector<2x128xf32>
    %651 = vector.broadcast %22 : vector<1x128xf32> to vector<2x128xf32>
    %652 = arith.addf %650, %651 : vector<2x128xf32>
    %653 = vector.extract_strided_slice %652 {offsets = [0, 0], sizes = [2, 32], strides = [1, 1]} : vector<2x128xf32> to vector<2x32xf32>
    %cst_175 = arith.constant 5.000000e-01 : f32
    %654 = vector.broadcast %cst_175 : f32 to vector<2x32xf32>
    %655 = arith.mulf %654, %653 : vector<2x32xf32>
    %656 = math.tanh %655 : vector<2x32xf32>
    %cst_176 = arith.constant 5.000000e-01 : f32
    %657 = vector.broadcast %cst_176 : f32 to vector<2x32xf32>
    %658 = arith.mulf %657, %656 : vector<2x32xf32>
    %cst_177 = arith.constant 5.000000e-01 : f32
    %659 = vector.broadcast %cst_177 : f32 to vector<2x32xf32>
    %660 = arith.addf %658, %659 : vector<2x32xf32>
    %661 = vector.extract_strided_slice %652 {offsets = [0, 32], sizes = [2, 32], strides = [1, 1]} : vector<2x128xf32> to vector<2x32xf32>
    %cst_178 = arith.constant 5.000000e-01 : f32
    %662 = vector.broadcast %cst_178 : f32 to vector<2x32xf32>
    %663 = arith.mulf %662, %661 : vector<2x32xf32>
    %664 = math.tanh %663 : vector<2x32xf32>
    %cst_179 = arith.constant 5.000000e-01 : f32
    %665 = vector.broadcast %cst_179 : f32 to vector<2x32xf32>
    %666 = arith.mulf %665, %664 : vector<2x32xf32>
    %cst_180 = arith.constant 5.000000e-01 : f32
    %667 = vector.broadcast %cst_180 : f32 to vector<2x32xf32>
    %668 = arith.addf %666, %667 : vector<2x32xf32>
    %669 = vector.extract_strided_slice %652 {offsets = [0, 64], sizes = [2, 32], strides = [1, 1]} : vector<2x128xf32> to vector<2x32xf32>
    %670 = math.tanh %669 : vector<2x32xf32>
    %671 = vector.extract_strided_slice %652 {offsets = [0, 96], sizes = [2, 32], strides = [1, 1]} : vector<2x128xf32> to vector<2x32xf32>
    %cst_181 = arith.constant 5.000000e-01 : f32
    %672 = vector.broadcast %cst_181 : f32 to vector<2x32xf32>
    %673 = arith.mulf %672, %671 : vector<2x32xf32>
    %674 = math.tanh %673 : vector<2x32xf32>
    %cst_182 = arith.constant 5.000000e-01 : f32
    %675 = vector.broadcast %cst_182 : f32 to vector<2x32xf32>
    %676 = arith.mulf %675, %674 : vector<2x32xf32>
    %cst_183 = arith.constant 5.000000e-01 : f32
    %677 = vector.broadcast %cst_183 : f32 to vector<2x32xf32>
    %678 = arith.addf %676, %677 : vector<2x32xf32>
    %679 = arith.mulf %668, %604 : vector<2x32xf32>
    %680 = arith.mulf %660, %670 : vector<2x32xf32>
    %681 = arith.addf %679, %680 : vector<2x32xf32>
    %682 = math.tanh %681 : vector<2x32xf32>
    %683 = arith.mulf %678, %682 : vector<2x32xf32>
    %cst_184 = arith.constant dense<0.000000e+00> : vector<2x160xf32>
    %684 = tpu.matmul %683, %11, %cst_184 {dimension_numbers = #tpu.dot_dimension_numbers<[1], [0], [0], [1], [0, 0, 1, 1], [], []>, precision = #tpu.contract_precision<fp32>} : vector<2x32xf32>, vector<32x160xf32>, vector<2x160xf32> -> vector<2x160xf32>
    %685 = vector.extract_strided_slice %684 {offsets = [0, 128], sizes = [2, 32], strides = [1, 1]} : vector<2x160xf32> to vector<2x32xf32>
    %cst_185 = arith.constant dense<0.000000e+00> : vector<2x32xf32>
    %686 = tpu.matmul %681, %12, %cst_185 {dimension_numbers = #tpu.dot_dimension_numbers<[1], [0], [0], [1], [0, 0, 1, 1], [], []>, precision = #tpu.contract_precision<fp32>} : vector<2x32xf32>, vector<32x32xf32>, vector<2x32xf32> -> vector<2x32xf32>
    %687 = arith.addf %685, %686 : vector<2x32xf32>
    %688 = vector.broadcast %14 : vector<1x32xf32> to vector<2x32xf32>
    %689 = arith.addf %687, %688 : vector<2x32xf32>
    %690 = vector.shape_cast %689 : vector<2x32xf32> to vector<2x1x32xf32>
    %691 = vector.broadcast %690 : vector<2x1x32xf32> to vector<2x8x32xf32>
    %692 = arith.addf %602, %691 : vector<2x8x32xf32>
    %693 = math.tanh %692 : vector<2x8x32xf32>
    %694 = vector.broadcast %16 : vector<1x1x32xf32> to vector<2x8x32xf32>
    %695 = arith.mulf %693, %694 : vector<2x8x32xf32>
    %cst_186 = arith.constant dense<0.000000e+00> : vector<2x8xf32>
    %696 = vector.multi_reduction <add>, %695, %cst_186 [2] : vector<2x8x32xf32> to vector<2x8xf32>
    %697 = vector.broadcast %17 : vector<1x1xf32> to vector<2x8xf32>
    %698 = arith.addf %696, %697 : vector<2x8xf32>
    %cst_187 = arith.constant dense<0xFF800000> : vector<2xf32>
    %699 = vector.multi_reduction <maximumf>, %698, %cst_187 [1] : vector<2x8xf32> to vector<2xf32>
    %700 = vector.shape_cast %699 : vector<2xf32> to vector<2x1xf32>
    %701 = vector.broadcast %700 : vector<2x1xf32> to vector<2x8xf32>
    %702 = arith.subf %698, %701 : vector<2x8xf32>
    %703 = math.exp %702 : vector<2x8xf32>
    %cst_188 = arith.constant dense<0.000000e+00> : vector<2xf32>
    %704 = vector.multi_reduction <add>, %703, %cst_188 [1] : vector<2x8xf32> to vector<2xf32>
    %705 = vector.shape_cast %704 : vector<2xf32> to vector<2x1xf32>
    %706 = vector.broadcast %705 : vector<2x1xf32> to vector<2x8xf32>
    %707 = arith.divf %703, %706 : vector<2x8xf32>
    %708 = vector.shape_cast %707 : vector<2x8xf32> to vector<2x8x1xf32>
    %709 = vector.broadcast %708 : vector<2x8x1xf32> to vector<2x8x32xf32>
    %710 = arith.mulf %709, %599 : vector<2x8x32xf32>
    %cst_189 = arith.constant dense<0.000000e+00> : vector<2x32xf32>
    %711 = vector.multi_reduction <add>, %710, %cst_189 [1] : vector<2x8x32xf32> to vector<2x32xf32>
    %712 = vector.broadcast %18 : vector<1x32xf32> to vector<2x32xf32>
    %713 = arith.mulf %711, %712 : vector<2x32xf32>
    %cst_190 = arith.constant dense<0.000000e+00> : vector<2xf32>
    %714 = vector.multi_reduction <add>, %713, %cst_190 [1] : vector<2x32xf32> to vector<2xf32>
    %715 = vector.shape_cast %714 : vector<2xf32> to vector<2x1xf32>
    %716 = vector.extract_strided_slice %1 {offsets = [0, 1, 0], sizes = [2, 1, 1], strides = [1, 1, 1]} : vector<2x8x1xf32> to vector<2x1x1xf32>
    %717 = vector.shape_cast %716 : vector<2x1x1xf32> to vector<2x1xf32>
    %718 = vector.broadcast %19 : vector<1x1xf32> to vector<2x1xf32>
    %719 = arith.mulf %717, %718 : vector<2x1xf32>
    %cst_191 = arith.constant dense<0.000000e+00> : vector<2xf32>
    %720 = vector.multi_reduction <add>, %719, %cst_191 [1] : vector<2x1xf32> to vector<2xf32>
    %721 = vector.shape_cast %720 : vector<2xf32> to vector<2x1xf32>
    %722 = arith.addf %715, %721 : vector<2x1xf32>
    %723 = vector.broadcast %20 : vector<1x1xf32> to vector<2x1xf32>
    %724 = arith.addf %722, %723 : vector<2x1xf32>
    %725 = vector.broadcast %724 : vector<2x1xf32> to vector<2x128xf32>
    %726 = vector.broadcast %21 : vector<1x128xf32> to vector<2x128xf32>
    %727 = arith.mulf %725, %726 : vector<2x128xf32>
    %728 = vector.extract_strided_slice %684 {offsets = [0, 0], sizes = [2, 128], strides = [1, 1]} : vector<2x160xf32> to vector<2x128xf32>
    %729 = arith.addf %727, %728 : vector<2x128xf32>
    %730 = vector.broadcast %22 : vector<1x128xf32> to vector<2x128xf32>
    %731 = arith.addf %729, %730 : vector<2x128xf32>
    %732 = vector.extract_strided_slice %731 {offsets = [0, 0], sizes = [2, 32], strides = [1, 1]} : vector<2x128xf32> to vector<2x32xf32>
    %cst_192 = arith.constant 5.000000e-01 : f32
    %733 = vector.broadcast %cst_192 : f32 to vector<2x32xf32>
    %734 = arith.mulf %733, %732 : vector<2x32xf32>
    %735 = math.tanh %734 : vector<2x32xf32>
    %cst_193 = arith.constant 5.000000e-01 : f32
    %736 = vector.broadcast %cst_193 : f32 to vector<2x32xf32>
    %737 = arith.mulf %736, %735 : vector<2x32xf32>
    %cst_194 = arith.constant 5.000000e-01 : f32
    %738 = vector.broadcast %cst_194 : f32 to vector<2x32xf32>
    %739 = arith.addf %737, %738 : vector<2x32xf32>
    %740 = vector.extract_strided_slice %731 {offsets = [0, 32], sizes = [2, 32], strides = [1, 1]} : vector<2x128xf32> to vector<2x32xf32>
    %cst_195 = arith.constant 5.000000e-01 : f32
    %741 = vector.broadcast %cst_195 : f32 to vector<2x32xf32>
    %742 = arith.mulf %741, %740 : vector<2x32xf32>
    %743 = math.tanh %742 : vector<2x32xf32>
    %cst_196 = arith.constant 5.000000e-01 : f32
    %744 = vector.broadcast %cst_196 : f32 to vector<2x32xf32>
    %745 = arith.mulf %744, %743 : vector<2x32xf32>
    %cst_197 = arith.constant 5.000000e-01 : f32
    %746 = vector.broadcast %cst_197 : f32 to vector<2x32xf32>
    %747 = arith.addf %745, %746 : vector<2x32xf32>
    %748 = vector.extract_strided_slice %731 {offsets = [0, 64], sizes = [2, 32], strides = [1, 1]} : vector<2x128xf32> to vector<2x32xf32>
    %749 = math.tanh %748 : vector<2x32xf32>
    %750 = vector.extract_strided_slice %731 {offsets = [0, 96], sizes = [2, 32], strides = [1, 1]} : vector<2x128xf32> to vector<2x32xf32>
    %cst_198 = arith.constant 5.000000e-01 : f32
    %751 = vector.broadcast %cst_198 : f32 to vector<2x32xf32>
    %752 = arith.mulf %751, %750 : vector<2x32xf32>
    %753 = math.tanh %752 : vector<2x32xf32>
    %cst_199 = arith.constant 5.000000e-01 : f32
    %754 = vector.broadcast %cst_199 : f32 to vector<2x32xf32>
    %755 = arith.mulf %754, %753 : vector<2x32xf32>
    %cst_200 = arith.constant 5.000000e-01 : f32
    %756 = vector.broadcast %cst_200 : f32 to vector<2x32xf32>
    %757 = arith.addf %755, %756 : vector<2x32xf32>
    %758 = arith.mulf %747, %681 : vector<2x32xf32>
    %759 = arith.mulf %739, %749 : vector<2x32xf32>
    %760 = arith.addf %758, %759 : vector<2x32xf32>
    %761 = math.tanh %760 : vector<2x32xf32>
    %762 = arith.mulf %757, %761 : vector<2x32xf32>
    %cst_201 = arith.constant dense<0.000000e+00> : vector<2x160xf32>
    %763 = tpu.matmul %762, %11, %cst_201 {dimension_numbers = #tpu.dot_dimension_numbers<[1], [0], [0], [1], [0, 0, 1, 1], [], []>, precision = #tpu.contract_precision<fp32>} : vector<2x32xf32>, vector<32x160xf32>, vector<2x160xf32> -> vector<2x160xf32>
    %764 = vector.extract_strided_slice %763 {offsets = [0, 128], sizes = [2, 32], strides = [1, 1]} : vector<2x160xf32> to vector<2x32xf32>
    %cst_202 = arith.constant dense<0.000000e+00> : vector<2x32xf32>
    %765 = tpu.matmul %760, %12, %cst_202 {dimension_numbers = #tpu.dot_dimension_numbers<[1], [0], [0], [1], [0, 0, 1, 1], [], []>, precision = #tpu.contract_precision<fp32>} : vector<2x32xf32>, vector<32x32xf32>, vector<2x32xf32> -> vector<2x32xf32>
    %766 = arith.addf %764, %765 : vector<2x32xf32>
    %767 = vector.broadcast %14 : vector<1x32xf32> to vector<2x32xf32>
    %768 = arith.addf %766, %767 : vector<2x32xf32>
    %769 = vector.shape_cast %768 : vector<2x32xf32> to vector<2x1x32xf32>
    %770 = vector.broadcast %769 : vector<2x1x32xf32> to vector<2x8x32xf32>
    %771 = arith.addf %602, %770 : vector<2x8x32xf32>
    %772 = math.tanh %771 : vector<2x8x32xf32>
    %773 = vector.broadcast %16 : vector<1x1x32xf32> to vector<2x8x32xf32>
    %774 = arith.mulf %772, %773 : vector<2x8x32xf32>
    %cst_203 = arith.constant dense<0.000000e+00> : vector<2x8xf32>
    %775 = vector.multi_reduction <add>, %774, %cst_203 [2] : vector<2x8x32xf32> to vector<2x8xf32>
    %776 = vector.broadcast %17 : vector<1x1xf32> to vector<2x8xf32>
    %777 = arith.addf %775, %776 : vector<2x8xf32>
    %cst_204 = arith.constant dense<0xFF800000> : vector<2xf32>
    %778 = vector.multi_reduction <maximumf>, %777, %cst_204 [1] : vector<2x8xf32> to vector<2xf32>
    %779 = vector.shape_cast %778 : vector<2xf32> to vector<2x1xf32>
    %780 = vector.broadcast %779 : vector<2x1xf32> to vector<2x8xf32>
    %781 = arith.subf %777, %780 : vector<2x8xf32>
    %782 = math.exp %781 : vector<2x8xf32>
    %cst_205 = arith.constant dense<0.000000e+00> : vector<2xf32>
    %783 = vector.multi_reduction <add>, %782, %cst_205 [1] : vector<2x8xf32> to vector<2xf32>
    %784 = vector.shape_cast %783 : vector<2xf32> to vector<2x1xf32>
    %785 = vector.broadcast %784 : vector<2x1xf32> to vector<2x8xf32>
    %786 = arith.divf %782, %785 : vector<2x8xf32>
    %787 = vector.shape_cast %786 : vector<2x8xf32> to vector<2x8x1xf32>
    %788 = vector.broadcast %787 : vector<2x8x1xf32> to vector<2x8x32xf32>
    %789 = arith.mulf %788, %599 : vector<2x8x32xf32>
    %cst_206 = arith.constant dense<0.000000e+00> : vector<2x32xf32>
    %790 = vector.multi_reduction <add>, %789, %cst_206 [1] : vector<2x8x32xf32> to vector<2x32xf32>
    %791 = vector.broadcast %18 : vector<1x32xf32> to vector<2x32xf32>
    %792 = arith.mulf %790, %791 : vector<2x32xf32>
    %cst_207 = arith.constant dense<0.000000e+00> : vector<2xf32>
    %793 = vector.multi_reduction <add>, %792, %cst_207 [1] : vector<2x32xf32> to vector<2xf32>
    %794 = vector.shape_cast %793 : vector<2xf32> to vector<2x1xf32>
    %795 = vector.extract_strided_slice %1 {offsets = [0, 2, 0], sizes = [2, 1, 1], strides = [1, 1, 1]} : vector<2x8x1xf32> to vector<2x1x1xf32>
    %796 = vector.shape_cast %795 : vector<2x1x1xf32> to vector<2x1xf32>
    %797 = vector.broadcast %19 : vector<1x1xf32> to vector<2x1xf32>
    %798 = arith.mulf %796, %797 : vector<2x1xf32>
    %cst_208 = arith.constant dense<0.000000e+00> : vector<2xf32>
    %799 = vector.multi_reduction <add>, %798, %cst_208 [1] : vector<2x1xf32> to vector<2xf32>
    %800 = vector.shape_cast %799 : vector<2xf32> to vector<2x1xf32>
    %801 = arith.addf %794, %800 : vector<2x1xf32>
    %802 = vector.broadcast %20 : vector<1x1xf32> to vector<2x1xf32>
    %803 = arith.addf %801, %802 : vector<2x1xf32>
    %804 = vector.broadcast %803 : vector<2x1xf32> to vector<2x128xf32>
    %805 = vector.broadcast %21 : vector<1x128xf32> to vector<2x128xf32>
    %806 = arith.mulf %804, %805 : vector<2x128xf32>
    %807 = vector.extract_strided_slice %763 {offsets = [0, 0], sizes = [2, 128], strides = [1, 1]} : vector<2x160xf32> to vector<2x128xf32>
    %808 = arith.addf %806, %807 : vector<2x128xf32>
    %809 = vector.broadcast %22 : vector<1x128xf32> to vector<2x128xf32>
    %810 = arith.addf %808, %809 : vector<2x128xf32>
    %811 = vector.extract_strided_slice %810 {offsets = [0, 0], sizes = [2, 32], strides = [1, 1]} : vector<2x128xf32> to vector<2x32xf32>
    %cst_209 = arith.constant 5.000000e-01 : f32
    %812 = vector.broadcast %cst_209 : f32 to vector<2x32xf32>
    %813 = arith.mulf %812, %811 : vector<2x32xf32>
    %814 = math.tanh %813 : vector<2x32xf32>
    %cst_210 = arith.constant 5.000000e-01 : f32
    %815 = vector.broadcast %cst_210 : f32 to vector<2x32xf32>
    %816 = arith.mulf %815, %814 : vector<2x32xf32>
    %cst_211 = arith.constant 5.000000e-01 : f32
    %817 = vector.broadcast %cst_211 : f32 to vector<2x32xf32>
    %818 = arith.addf %816, %817 : vector<2x32xf32>
    %819 = vector.extract_strided_slice %810 {offsets = [0, 32], sizes = [2, 32], strides = [1, 1]} : vector<2x128xf32> to vector<2x32xf32>
    %cst_212 = arith.constant 5.000000e-01 : f32
    %820 = vector.broadcast %cst_212 : f32 to vector<2x32xf32>
    %821 = arith.mulf %820, %819 : vector<2x32xf32>
    %822 = math.tanh %821 : vector<2x32xf32>
    %cst_213 = arith.constant 5.000000e-01 : f32
    %823 = vector.broadcast %cst_213 : f32 to vector<2x32xf32>
    %824 = arith.mulf %823, %822 : vector<2x32xf32>
    %cst_214 = arith.constant 5.000000e-01 : f32
    %825 = vector.broadcast %cst_214 : f32 to vector<2x32xf32>
    %826 = arith.addf %824, %825 : vector<2x32xf32>
    %827 = vector.extract_strided_slice %810 {offsets = [0, 64], sizes = [2, 32], strides = [1, 1]} : vector<2x128xf32> to vector<2x32xf32>
    %828 = math.tanh %827 : vector<2x32xf32>
    %829 = vector.extract_strided_slice %810 {offsets = [0, 96], sizes = [2, 32], strides = [1, 1]} : vector<2x128xf32> to vector<2x32xf32>
    %cst_215 = arith.constant 5.000000e-01 : f32
    %830 = vector.broadcast %cst_215 : f32 to vector<2x32xf32>
    %831 = arith.mulf %830, %829 : vector<2x32xf32>
    %832 = math.tanh %831 : vector<2x32xf32>
    %cst_216 = arith.constant 5.000000e-01 : f32
    %833 = vector.broadcast %cst_216 : f32 to vector<2x32xf32>
    %834 = arith.mulf %833, %832 : vector<2x32xf32>
    %cst_217 = arith.constant 5.000000e-01 : f32
    %835 = vector.broadcast %cst_217 : f32 to vector<2x32xf32>
    %836 = arith.addf %834, %835 : vector<2x32xf32>
    %837 = arith.mulf %826, %760 : vector<2x32xf32>
    %838 = arith.mulf %818, %828 : vector<2x32xf32>
    %839 = arith.addf %837, %838 : vector<2x32xf32>
    %840 = math.tanh %839 : vector<2x32xf32>
    %841 = arith.mulf %836, %840 : vector<2x32xf32>
    %cst_218 = arith.constant dense<0.000000e+00> : vector<2x160xf32>
    %842 = tpu.matmul %841, %11, %cst_218 {dimension_numbers = #tpu.dot_dimension_numbers<[1], [0], [0], [1], [0, 0, 1, 1], [], []>, precision = #tpu.contract_precision<fp32>} : vector<2x32xf32>, vector<32x160xf32>, vector<2x160xf32> -> vector<2x160xf32>
    %843 = vector.extract_strided_slice %842 {offsets = [0, 128], sizes = [2, 32], strides = [1, 1]} : vector<2x160xf32> to vector<2x32xf32>
    %cst_219 = arith.constant dense<0.000000e+00> : vector<2x32xf32>
    %844 = tpu.matmul %839, %12, %cst_219 {dimension_numbers = #tpu.dot_dimension_numbers<[1], [0], [0], [1], [0, 0, 1, 1], [], []>, precision = #tpu.contract_precision<fp32>} : vector<2x32xf32>, vector<32x32xf32>, vector<2x32xf32> -> vector<2x32xf32>
    %845 = arith.addf %843, %844 : vector<2x32xf32>
    %846 = vector.broadcast %14 : vector<1x32xf32> to vector<2x32xf32>
    %847 = arith.addf %845, %846 : vector<2x32xf32>
    %848 = vector.shape_cast %847 : vector<2x32xf32> to vector<2x1x32xf32>
    %849 = vector.broadcast %848 : vector<2x1x32xf32> to vector<2x8x32xf32>
    %850 = arith.addf %602, %849 : vector<2x8x32xf32>
    %851 = math.tanh %850 : vector<2x8x32xf32>
    %852 = vector.broadcast %16 : vector<1x1x32xf32> to vector<2x8x32xf32>
    %853 = arith.mulf %851, %852 : vector<2x8x32xf32>
    %cst_220 = arith.constant dense<0.000000e+00> : vector<2x8xf32>
    %854 = vector.multi_reduction <add>, %853, %cst_220 [2] : vector<2x8x32xf32> to vector<2x8xf32>
    %855 = vector.broadcast %17 : vector<1x1xf32> to vector<2x8xf32>
    %856 = arith.addf %854, %855 : vector<2x8xf32>
    %cst_221 = arith.constant dense<0xFF800000> : vector<2xf32>
    %857 = vector.multi_reduction <maximumf>, %856, %cst_221 [1] : vector<2x8xf32> to vector<2xf32>
    %858 = vector.shape_cast %857 : vector<2xf32> to vector<2x1xf32>
    %859 = vector.broadcast %858 : vector<2x1xf32> to vector<2x8xf32>
    %860 = arith.subf %856, %859 : vector<2x8xf32>
    %861 = math.exp %860 : vector<2x8xf32>
    %cst_222 = arith.constant dense<0.000000e+00> : vector<2xf32>
    %862 = vector.multi_reduction <add>, %861, %cst_222 [1] : vector<2x8xf32> to vector<2xf32>
    %863 = vector.shape_cast %862 : vector<2xf32> to vector<2x1xf32>
    %864 = vector.broadcast %863 : vector<2x1xf32> to vector<2x8xf32>
    %865 = arith.divf %861, %864 : vector<2x8xf32>
    %866 = vector.shape_cast %865 : vector<2x8xf32> to vector<2x8x1xf32>
    %867 = vector.broadcast %866 : vector<2x8x1xf32> to vector<2x8x32xf32>
    %868 = arith.mulf %867, %599 : vector<2x8x32xf32>
    %cst_223 = arith.constant dense<0.000000e+00> : vector<2x32xf32>
    %869 = vector.multi_reduction <add>, %868, %cst_223 [1] : vector<2x8x32xf32> to vector<2x32xf32>
    %870 = vector.broadcast %18 : vector<1x32xf32> to vector<2x32xf32>
    %871 = arith.mulf %869, %870 : vector<2x32xf32>
    %cst_224 = arith.constant dense<0.000000e+00> : vector<2xf32>
    %872 = vector.multi_reduction <add>, %871, %cst_224 [1] : vector<2x32xf32> to vector<2xf32>
    %873 = vector.shape_cast %872 : vector<2xf32> to vector<2x1xf32>
    %874 = vector.extract_strided_slice %1 {offsets = [0, 3, 0], sizes = [2, 1, 1], strides = [1, 1, 1]} : vector<2x8x1xf32> to vector<2x1x1xf32>
    %875 = vector.shape_cast %874 : vector<2x1x1xf32> to vector<2x1xf32>
    %876 = vector.broadcast %19 : vector<1x1xf32> to vector<2x1xf32>
    %877 = arith.mulf %875, %876 : vector<2x1xf32>
    %cst_225 = arith.constant dense<0.000000e+00> : vector<2xf32>
    %878 = vector.multi_reduction <add>, %877, %cst_225 [1] : vector<2x1xf32> to vector<2xf32>
    %879 = vector.shape_cast %878 : vector<2xf32> to vector<2x1xf32>
    %880 = arith.addf %873, %879 : vector<2x1xf32>
    %881 = vector.broadcast %20 : vector<1x1xf32> to vector<2x1xf32>
    %882 = arith.addf %880, %881 : vector<2x1xf32>
    %883 = vector.broadcast %882 : vector<2x1xf32> to vector<2x128xf32>
    %884 = vector.broadcast %21 : vector<1x128xf32> to vector<2x128xf32>
    %885 = arith.mulf %883, %884 : vector<2x128xf32>
    %886 = vector.extract_strided_slice %842 {offsets = [0, 0], sizes = [2, 128], strides = [1, 1]} : vector<2x160xf32> to vector<2x128xf32>
    %887 = arith.addf %885, %886 : vector<2x128xf32>
    %888 = vector.broadcast %22 : vector<1x128xf32> to vector<2x128xf32>
    %889 = arith.addf %887, %888 : vector<2x128xf32>
    %890 = vector.extract_strided_slice %889 {offsets = [0, 0], sizes = [2, 32], strides = [1, 1]} : vector<2x128xf32> to vector<2x32xf32>
    %cst_226 = arith.constant 5.000000e-01 : f32
    %891 = vector.broadcast %cst_226 : f32 to vector<2x32xf32>
    %892 = arith.mulf %891, %890 : vector<2x32xf32>
    %893 = math.tanh %892 : vector<2x32xf32>
    %cst_227 = arith.constant 5.000000e-01 : f32
    %894 = vector.broadcast %cst_227 : f32 to vector<2x32xf32>
    %895 = arith.mulf %894, %893 : vector<2x32xf32>
    %cst_228 = arith.constant 5.000000e-01 : f32
    %896 = vector.broadcast %cst_228 : f32 to vector<2x32xf32>
    %897 = arith.addf %895, %896 : vector<2x32xf32>
    %898 = vector.extract_strided_slice %889 {offsets = [0, 32], sizes = [2, 32], strides = [1, 1]} : vector<2x128xf32> to vector<2x32xf32>
    %cst_229 = arith.constant 5.000000e-01 : f32
    %899 = vector.broadcast %cst_229 : f32 to vector<2x32xf32>
    %900 = arith.mulf %899, %898 : vector<2x32xf32>
    %901 = math.tanh %900 : vector<2x32xf32>
    %cst_230 = arith.constant 5.000000e-01 : f32
    %902 = vector.broadcast %cst_230 : f32 to vector<2x32xf32>
    %903 = arith.mulf %902, %901 : vector<2x32xf32>
    %cst_231 = arith.constant 5.000000e-01 : f32
    %904 = vector.broadcast %cst_231 : f32 to vector<2x32xf32>
    %905 = arith.addf %903, %904 : vector<2x32xf32>
    %906 = vector.extract_strided_slice %889 {offsets = [0, 64], sizes = [2, 32], strides = [1, 1]} : vector<2x128xf32> to vector<2x32xf32>
    %907 = math.tanh %906 : vector<2x32xf32>
    %908 = vector.extract_strided_slice %889 {offsets = [0, 96], sizes = [2, 32], strides = [1, 1]} : vector<2x128xf32> to vector<2x32xf32>
    %cst_232 = arith.constant 5.000000e-01 : f32
    %909 = vector.broadcast %cst_232 : f32 to vector<2x32xf32>
    %910 = arith.mulf %909, %908 : vector<2x32xf32>
    %911 = math.tanh %910 : vector<2x32xf32>
    %cst_233 = arith.constant 5.000000e-01 : f32
    %912 = vector.broadcast %cst_233 : f32 to vector<2x32xf32>
    %913 = arith.mulf %912, %911 : vector<2x32xf32>
    %cst_234 = arith.constant 5.000000e-01 : f32
    %914 = vector.broadcast %cst_234 : f32 to vector<2x32xf32>
    %915 = arith.addf %913, %914 : vector<2x32xf32>
    %916 = arith.mulf %905, %839 : vector<2x32xf32>
    %917 = arith.mulf %897, %907 : vector<2x32xf32>
    %918 = arith.addf %916, %917 : vector<2x32xf32>
    %919 = math.tanh %918 : vector<2x32xf32>
    %920 = arith.mulf %915, %919 : vector<2x32xf32>
    %cst_235 = arith.constant dense<0.000000e+00> : vector<2x160xf32>
    %921 = tpu.matmul %920, %11, %cst_235 {dimension_numbers = #tpu.dot_dimension_numbers<[1], [0], [0], [1], [0, 0, 1, 1], [], []>, precision = #tpu.contract_precision<fp32>} : vector<2x32xf32>, vector<32x160xf32>, vector<2x160xf32> -> vector<2x160xf32>
    %922 = vector.extract_strided_slice %921 {offsets = [0, 128], sizes = [2, 32], strides = [1, 1]} : vector<2x160xf32> to vector<2x32xf32>
    %cst_236 = arith.constant dense<0.000000e+00> : vector<2x32xf32>
    %923 = tpu.matmul %918, %12, %cst_236 {dimension_numbers = #tpu.dot_dimension_numbers<[1], [0], [0], [1], [0, 0, 1, 1], [], []>, precision = #tpu.contract_precision<fp32>} : vector<2x32xf32>, vector<32x32xf32>, vector<2x32xf32> -> vector<2x32xf32>
    %924 = arith.addf %922, %923 : vector<2x32xf32>
    %925 = vector.broadcast %14 : vector<1x32xf32> to vector<2x32xf32>
    %926 = arith.addf %924, %925 : vector<2x32xf32>
    %927 = vector.shape_cast %926 : vector<2x32xf32> to vector<2x1x32xf32>
    %928 = vector.broadcast %927 : vector<2x1x32xf32> to vector<2x8x32xf32>
    %929 = arith.addf %602, %928 : vector<2x8x32xf32>
    %930 = math.tanh %929 : vector<2x8x32xf32>
    %931 = vector.broadcast %16 : vector<1x1x32xf32> to vector<2x8x32xf32>
    %932 = arith.mulf %930, %931 : vector<2x8x32xf32>
    %cst_237 = arith.constant dense<0.000000e+00> : vector<2x8xf32>
    %933 = vector.multi_reduction <add>, %932, %cst_237 [2] : vector<2x8x32xf32> to vector<2x8xf32>
    %934 = vector.broadcast %17 : vector<1x1xf32> to vector<2x8xf32>
    %935 = arith.addf %933, %934 : vector<2x8xf32>
    %cst_238 = arith.constant dense<0xFF800000> : vector<2xf32>
    %936 = vector.multi_reduction <maximumf>, %935, %cst_238 [1] : vector<2x8xf32> to vector<2xf32>
    %937 = vector.shape_cast %936 : vector<2xf32> to vector<2x1xf32>
    %938 = vector.broadcast %937 : vector<2x1xf32> to vector<2x8xf32>
    %939 = arith.subf %935, %938 : vector<2x8xf32>
    %940 = math.exp %939 : vector<2x8xf32>
    %cst_239 = arith.constant dense<0.000000e+00> : vector<2xf32>
    %941 = vector.multi_reduction <add>, %940, %cst_239 [1] : vector<2x8xf32> to vector<2xf32>
    %942 = vector.shape_cast %941 : vector<2xf32> to vector<2x1xf32>
    %943 = vector.broadcast %942 : vector<2x1xf32> to vector<2x8xf32>
    %944 = arith.divf %940, %943 : vector<2x8xf32>
    %945 = vector.shape_cast %944 : vector<2x8xf32> to vector<2x8x1xf32>
    %946 = vector.broadcast %945 : vector<2x8x1xf32> to vector<2x8x32xf32>
    %947 = arith.mulf %946, %599 : vector<2x8x32xf32>
    %cst_240 = arith.constant dense<0.000000e+00> : vector<2x32xf32>
    %948 = vector.multi_reduction <add>, %947, %cst_240 [1] : vector<2x8x32xf32> to vector<2x32xf32>
    %949 = vector.broadcast %18 : vector<1x32xf32> to vector<2x32xf32>
    %950 = arith.mulf %948, %949 : vector<2x32xf32>
    %cst_241 = arith.constant dense<0.000000e+00> : vector<2xf32>
    %951 = vector.multi_reduction <add>, %950, %cst_241 [1] : vector<2x32xf32> to vector<2xf32>
    %952 = vector.shape_cast %951 : vector<2xf32> to vector<2x1xf32>
    %953 = vector.extract_strided_slice %1 {offsets = [0, 4, 0], sizes = [2, 1, 1], strides = [1, 1, 1]} : vector<2x8x1xf32> to vector<2x1x1xf32>
    %954 = vector.shape_cast %953 : vector<2x1x1xf32> to vector<2x1xf32>
    %955 = vector.broadcast %19 : vector<1x1xf32> to vector<2x1xf32>
    %956 = arith.mulf %954, %955 : vector<2x1xf32>
    %cst_242 = arith.constant dense<0.000000e+00> : vector<2xf32>
    %957 = vector.multi_reduction <add>, %956, %cst_242 [1] : vector<2x1xf32> to vector<2xf32>
    %958 = vector.shape_cast %957 : vector<2xf32> to vector<2x1xf32>
    %959 = arith.addf %952, %958 : vector<2x1xf32>
    %960 = vector.broadcast %20 : vector<1x1xf32> to vector<2x1xf32>
    %961 = arith.addf %959, %960 : vector<2x1xf32>
    %962 = vector.broadcast %961 : vector<2x1xf32> to vector<2x128xf32>
    %963 = vector.broadcast %21 : vector<1x128xf32> to vector<2x128xf32>
    %964 = arith.mulf %962, %963 : vector<2x128xf32>
    %965 = vector.extract_strided_slice %921 {offsets = [0, 0], sizes = [2, 128], strides = [1, 1]} : vector<2x160xf32> to vector<2x128xf32>
    %966 = arith.addf %964, %965 : vector<2x128xf32>
    %967 = vector.broadcast %22 : vector<1x128xf32> to vector<2x128xf32>
    %968 = arith.addf %966, %967 : vector<2x128xf32>
    %969 = vector.extract_strided_slice %968 {offsets = [0, 0], sizes = [2, 32], strides = [1, 1]} : vector<2x128xf32> to vector<2x32xf32>
    %cst_243 = arith.constant 5.000000e-01 : f32
    %970 = vector.broadcast %cst_243 : f32 to vector<2x32xf32>
    %971 = arith.mulf %970, %969 : vector<2x32xf32>
    %972 = math.tanh %971 : vector<2x32xf32>
    %cst_244 = arith.constant 5.000000e-01 : f32
    %973 = vector.broadcast %cst_244 : f32 to vector<2x32xf32>
    %974 = arith.mulf %973, %972 : vector<2x32xf32>
    %cst_245 = arith.constant 5.000000e-01 : f32
    %975 = vector.broadcast %cst_245 : f32 to vector<2x32xf32>
    %976 = arith.addf %974, %975 : vector<2x32xf32>
    %977 = vector.extract_strided_slice %968 {offsets = [0, 32], sizes = [2, 32], strides = [1, 1]} : vector<2x128xf32> to vector<2x32xf32>
    %cst_246 = arith.constant 5.000000e-01 : f32
    %978 = vector.broadcast %cst_246 : f32 to vector<2x32xf32>
    %979 = arith.mulf %978, %977 : vector<2x32xf32>
    %980 = math.tanh %979 : vector<2x32xf32>
    %cst_247 = arith.constant 5.000000e-01 : f32
    %981 = vector.broadcast %cst_247 : f32 to vector<2x32xf32>
    %982 = arith.mulf %981, %980 : vector<2x32xf32>
    %cst_248 = arith.constant 5.000000e-01 : f32
    %983 = vector.broadcast %cst_248 : f32 to vector<2x32xf32>
    %984 = arith.addf %982, %983 : vector<2x32xf32>
    %985 = vector.extract_strided_slice %968 {offsets = [0, 64], sizes = [2, 32], strides = [1, 1]} : vector<2x128xf32> to vector<2x32xf32>
    %986 = math.tanh %985 : vector<2x32xf32>
    %987 = vector.extract_strided_slice %968 {offsets = [0, 96], sizes = [2, 32], strides = [1, 1]} : vector<2x128xf32> to vector<2x32xf32>
    %cst_249 = arith.constant 5.000000e-01 : f32
    %988 = vector.broadcast %cst_249 : f32 to vector<2x32xf32>
    %989 = arith.mulf %988, %987 : vector<2x32xf32>
    %990 = math.tanh %989 : vector<2x32xf32>
    %cst_250 = arith.constant 5.000000e-01 : f32
    %991 = vector.broadcast %cst_250 : f32 to vector<2x32xf32>
    %992 = arith.mulf %991, %990 : vector<2x32xf32>
    %cst_251 = arith.constant 5.000000e-01 : f32
    %993 = vector.broadcast %cst_251 : f32 to vector<2x32xf32>
    %994 = arith.addf %992, %993 : vector<2x32xf32>
    %995 = arith.mulf %984, %918 : vector<2x32xf32>
    %996 = arith.mulf %976, %986 : vector<2x32xf32>
    %997 = arith.addf %995, %996 : vector<2x32xf32>
    %998 = math.tanh %997 : vector<2x32xf32>
    %999 = arith.mulf %994, %998 : vector<2x32xf32>
    %cst_252 = arith.constant dense<0.000000e+00> : vector<2x160xf32>
    %1000 = tpu.matmul %999, %11, %cst_252 {dimension_numbers = #tpu.dot_dimension_numbers<[1], [0], [0], [1], [0, 0, 1, 1], [], []>, precision = #tpu.contract_precision<fp32>} : vector<2x32xf32>, vector<32x160xf32>, vector<2x160xf32> -> vector<2x160xf32>
    %1001 = vector.extract_strided_slice %1000 {offsets = [0, 128], sizes = [2, 32], strides = [1, 1]} : vector<2x160xf32> to vector<2x32xf32>
    %cst_253 = arith.constant dense<0.000000e+00> : vector<2x32xf32>
    %1002 = tpu.matmul %997, %12, %cst_253 {dimension_numbers = #tpu.dot_dimension_numbers<[1], [0], [0], [1], [0, 0, 1, 1], [], []>, precision = #tpu.contract_precision<fp32>} : vector<2x32xf32>, vector<32x32xf32>, vector<2x32xf32> -> vector<2x32xf32>
    %1003 = arith.addf %1001, %1002 : vector<2x32xf32>
    %1004 = vector.broadcast %14 : vector<1x32xf32> to vector<2x32xf32>
    %1005 = arith.addf %1003, %1004 : vector<2x32xf32>
    %1006 = vector.shape_cast %1005 : vector<2x32xf32> to vector<2x1x32xf32>
    %1007 = vector.broadcast %1006 : vector<2x1x32xf32> to vector<2x8x32xf32>
    %1008 = arith.addf %602, %1007 : vector<2x8x32xf32>
    %1009 = math.tanh %1008 : vector<2x8x32xf32>
    %1010 = vector.broadcast %16 : vector<1x1x32xf32> to vector<2x8x32xf32>
    %1011 = arith.mulf %1009, %1010 : vector<2x8x32xf32>
    %cst_254 = arith.constant dense<0.000000e+00> : vector<2x8xf32>
    %1012 = vector.multi_reduction <add>, %1011, %cst_254 [2] : vector<2x8x32xf32> to vector<2x8xf32>
    %1013 = vector.broadcast %17 : vector<1x1xf32> to vector<2x8xf32>
    %1014 = arith.addf %1012, %1013 : vector<2x8xf32>
    %cst_255 = arith.constant dense<0xFF800000> : vector<2xf32>
    %1015 = vector.multi_reduction <maximumf>, %1014, %cst_255 [1] : vector<2x8xf32> to vector<2xf32>
    %1016 = vector.shape_cast %1015 : vector<2xf32> to vector<2x1xf32>
    %1017 = vector.broadcast %1016 : vector<2x1xf32> to vector<2x8xf32>
    %1018 = arith.subf %1014, %1017 : vector<2x8xf32>
    %1019 = math.exp %1018 : vector<2x8xf32>
    %cst_256 = arith.constant dense<0.000000e+00> : vector<2xf32>
    %1020 = vector.multi_reduction <add>, %1019, %cst_256 [1] : vector<2x8xf32> to vector<2xf32>
    %1021 = vector.shape_cast %1020 : vector<2xf32> to vector<2x1xf32>
    %1022 = vector.broadcast %1021 : vector<2x1xf32> to vector<2x8xf32>
    %1023 = arith.divf %1019, %1022 : vector<2x8xf32>
    %1024 = vector.shape_cast %1023 : vector<2x8xf32> to vector<2x8x1xf32>
    %1025 = vector.broadcast %1024 : vector<2x8x1xf32> to vector<2x8x32xf32>
    %1026 = arith.mulf %1025, %599 : vector<2x8x32xf32>
    %cst_257 = arith.constant dense<0.000000e+00> : vector<2x32xf32>
    %1027 = vector.multi_reduction <add>, %1026, %cst_257 [1] : vector<2x8x32xf32> to vector<2x32xf32>
    %1028 = vector.broadcast %18 : vector<1x32xf32> to vector<2x32xf32>
    %1029 = arith.mulf %1027, %1028 : vector<2x32xf32>
    %cst_258 = arith.constant dense<0.000000e+00> : vector<2xf32>
    %1030 = vector.multi_reduction <add>, %1029, %cst_258 [1] : vector<2x32xf32> to vector<2xf32>
    %1031 = vector.shape_cast %1030 : vector<2xf32> to vector<2x1xf32>
    %1032 = vector.extract_strided_slice %1 {offsets = [0, 5, 0], sizes = [2, 1, 1], strides = [1, 1, 1]} : vector<2x8x1xf32> to vector<2x1x1xf32>
    %1033 = vector.shape_cast %1032 : vector<2x1x1xf32> to vector<2x1xf32>
    %1034 = vector.broadcast %19 : vector<1x1xf32> to vector<2x1xf32>
    %1035 = arith.mulf %1033, %1034 : vector<2x1xf32>
    %cst_259 = arith.constant dense<0.000000e+00> : vector<2xf32>
    %1036 = vector.multi_reduction <add>, %1035, %cst_259 [1] : vector<2x1xf32> to vector<2xf32>
    %1037 = vector.shape_cast %1036 : vector<2xf32> to vector<2x1xf32>
    %1038 = arith.addf %1031, %1037 : vector<2x1xf32>
    %1039 = vector.broadcast %20 : vector<1x1xf32> to vector<2x1xf32>
    %1040 = arith.addf %1038, %1039 : vector<2x1xf32>
    %1041 = vector.broadcast %1040 : vector<2x1xf32> to vector<2x128xf32>
    %1042 = vector.broadcast %21 : vector<1x128xf32> to vector<2x128xf32>
    %1043 = arith.mulf %1041, %1042 : vector<2x128xf32>
    %1044 = vector.extract_strided_slice %1000 {offsets = [0, 0], sizes = [2, 128], strides = [1, 1]} : vector<2x160xf32> to vector<2x128xf32>
    %1045 = arith.addf %1043, %1044 : vector<2x128xf32>
    %1046 = vector.broadcast %22 : vector<1x128xf32> to vector<2x128xf32>
    %1047 = arith.addf %1045, %1046 : vector<2x128xf32>
    %1048 = vector.extract_strided_slice %1047 {offsets = [0, 0], sizes = [2, 32], strides = [1, 1]} : vector<2x128xf32> to vector<2x32xf32>
    %cst_260 = arith.constant 5.000000e-01 : f32
    %1049 = vector.broadcast %cst_260 : f32 to vector<2x32xf32>
    %1050 = arith.mulf %1049, %1048 : vector<2x32xf32>
    %1051 = math.tanh %1050 : vector<2x32xf32>
    %cst_261 = arith.constant 5.000000e-01 : f32
    %1052 = vector.broadcast %cst_261 : f32 to vector<2x32xf32>
    %1053 = arith.mulf %1052, %1051 : vector<2x32xf32>
    %cst_262 = arith.constant 5.000000e-01 : f32
    %1054 = vector.broadcast %cst_262 : f32 to vector<2x32xf32>
    %1055 = arith.addf %1053, %1054 : vector<2x32xf32>
    %1056 = vector.extract_strided_slice %1047 {offsets = [0, 32], sizes = [2, 32], strides = [1, 1]} : vector<2x128xf32> to vector<2x32xf32>
    %cst_263 = arith.constant 5.000000e-01 : f32
    %1057 = vector.broadcast %cst_263 : f32 to vector<2x32xf32>
    %1058 = arith.mulf %1057, %1056 : vector<2x32xf32>
    %1059 = math.tanh %1058 : vector<2x32xf32>
    %cst_264 = arith.constant 5.000000e-01 : f32
    %1060 = vector.broadcast %cst_264 : f32 to vector<2x32xf32>
    %1061 = arith.mulf %1060, %1059 : vector<2x32xf32>
    %cst_265 = arith.constant 5.000000e-01 : f32
    %1062 = vector.broadcast %cst_265 : f32 to vector<2x32xf32>
    %1063 = arith.addf %1061, %1062 : vector<2x32xf32>
    %1064 = vector.extract_strided_slice %1047 {offsets = [0, 64], sizes = [2, 32], strides = [1, 1]} : vector<2x128xf32> to vector<2x32xf32>
    %1065 = math.tanh %1064 : vector<2x32xf32>
    %1066 = vector.extract_strided_slice %1047 {offsets = [0, 96], sizes = [2, 32], strides = [1, 1]} : vector<2x128xf32> to vector<2x32xf32>
    %cst_266 = arith.constant 5.000000e-01 : f32
    %1067 = vector.broadcast %cst_266 : f32 to vector<2x32xf32>
    %1068 = arith.mulf %1067, %1066 : vector<2x32xf32>
    %1069 = math.tanh %1068 : vector<2x32xf32>
    %cst_267 = arith.constant 5.000000e-01 : f32
    %1070 = vector.broadcast %cst_267 : f32 to vector<2x32xf32>
    %1071 = arith.mulf %1070, %1069 : vector<2x32xf32>
    %cst_268 = arith.constant 5.000000e-01 : f32
    %1072 = vector.broadcast %cst_268 : f32 to vector<2x32xf32>
    %1073 = arith.addf %1071, %1072 : vector<2x32xf32>
    %1074 = arith.mulf %1063, %997 : vector<2x32xf32>
    %1075 = arith.mulf %1055, %1065 : vector<2x32xf32>
    %1076 = arith.addf %1074, %1075 : vector<2x32xf32>
    %1077 = math.tanh %1076 : vector<2x32xf32>
    %1078 = arith.mulf %1073, %1077 : vector<2x32xf32>
    %cst_269 = arith.constant dense<0.000000e+00> : vector<2x160xf32>
    %1079 = tpu.matmul %1078, %11, %cst_269 {dimension_numbers = #tpu.dot_dimension_numbers<[1], [0], [0], [1], [0, 0, 1, 1], [], []>, precision = #tpu.contract_precision<fp32>} : vector<2x32xf32>, vector<32x160xf32>, vector<2x160xf32> -> vector<2x160xf32>
    %1080 = vector.extract_strided_slice %1079 {offsets = [0, 128], sizes = [2, 32], strides = [1, 1]} : vector<2x160xf32> to vector<2x32xf32>
    %cst_270 = arith.constant dense<0.000000e+00> : vector<2x32xf32>
    %1081 = tpu.matmul %1076, %12, %cst_270 {dimension_numbers = #tpu.dot_dimension_numbers<[1], [0], [0], [1], [0, 0, 1, 1], [], []>, precision = #tpu.contract_precision<fp32>} : vector<2x32xf32>, vector<32x32xf32>, vector<2x32xf32> -> vector<2x32xf32>
    %1082 = arith.addf %1080, %1081 : vector<2x32xf32>
    %1083 = vector.broadcast %14 : vector<1x32xf32> to vector<2x32xf32>
    %1084 = arith.addf %1082, %1083 : vector<2x32xf32>
    %1085 = vector.shape_cast %1084 : vector<2x32xf32> to vector<2x1x32xf32>
    %1086 = vector.broadcast %1085 : vector<2x1x32xf32> to vector<2x8x32xf32>
    %1087 = arith.addf %602, %1086 : vector<2x8x32xf32>
    %1088 = math.tanh %1087 : vector<2x8x32xf32>
    %1089 = vector.broadcast %16 : vector<1x1x32xf32> to vector<2x8x32xf32>
    %1090 = arith.mulf %1088, %1089 : vector<2x8x32xf32>
    %cst_271 = arith.constant dense<0.000000e+00> : vector<2x8xf32>
    %1091 = vector.multi_reduction <add>, %1090, %cst_271 [2] : vector<2x8x32xf32> to vector<2x8xf32>
    %1092 = vector.broadcast %17 : vector<1x1xf32> to vector<2x8xf32>
    %1093 = arith.addf %1091, %1092 : vector<2x8xf32>
    %cst_272 = arith.constant dense<0xFF800000> : vector<2xf32>
    %1094 = vector.multi_reduction <maximumf>, %1093, %cst_272 [1] : vector<2x8xf32> to vector<2xf32>
    %1095 = vector.shape_cast %1094 : vector<2xf32> to vector<2x1xf32>
    %1096 = vector.broadcast %1095 : vector<2x1xf32> to vector<2x8xf32>
    %1097 = arith.subf %1093, %1096 : vector<2x8xf32>
    %1098 = math.exp %1097 : vector<2x8xf32>
    %cst_273 = arith.constant dense<0.000000e+00> : vector<2xf32>
    %1099 = vector.multi_reduction <add>, %1098, %cst_273 [1] : vector<2x8xf32> to vector<2xf32>
    %1100 = vector.shape_cast %1099 : vector<2xf32> to vector<2x1xf32>
    %1101 = vector.broadcast %1100 : vector<2x1xf32> to vector<2x8xf32>
    %1102 = arith.divf %1098, %1101 : vector<2x8xf32>
    %1103 = vector.shape_cast %1102 : vector<2x8xf32> to vector<2x8x1xf32>
    %1104 = vector.broadcast %1103 : vector<2x8x1xf32> to vector<2x8x32xf32>
    %1105 = arith.mulf %1104, %599 : vector<2x8x32xf32>
    %cst_274 = arith.constant dense<0.000000e+00> : vector<2x32xf32>
    %1106 = vector.multi_reduction <add>, %1105, %cst_274 [1] : vector<2x8x32xf32> to vector<2x32xf32>
    %1107 = vector.broadcast %18 : vector<1x32xf32> to vector<2x32xf32>
    %1108 = arith.mulf %1106, %1107 : vector<2x32xf32>
    %cst_275 = arith.constant dense<0.000000e+00> : vector<2xf32>
    %1109 = vector.multi_reduction <add>, %1108, %cst_275 [1] : vector<2x32xf32> to vector<2xf32>
    %1110 = vector.shape_cast %1109 : vector<2xf32> to vector<2x1xf32>
    %1111 = vector.extract_strided_slice %1 {offsets = [0, 6, 0], sizes = [2, 1, 1], strides = [1, 1, 1]} : vector<2x8x1xf32> to vector<2x1x1xf32>
    %1112 = vector.shape_cast %1111 : vector<2x1x1xf32> to vector<2x1xf32>
    %1113 = vector.broadcast %19 : vector<1x1xf32> to vector<2x1xf32>
    %1114 = arith.mulf %1112, %1113 : vector<2x1xf32>
    %cst_276 = arith.constant dense<0.000000e+00> : vector<2xf32>
    %1115 = vector.multi_reduction <add>, %1114, %cst_276 [1] : vector<2x1xf32> to vector<2xf32>
    %1116 = vector.shape_cast %1115 : vector<2xf32> to vector<2x1xf32>
    %1117 = arith.addf %1110, %1116 : vector<2x1xf32>
    %1118 = vector.broadcast %20 : vector<1x1xf32> to vector<2x1xf32>
    %1119 = arith.addf %1117, %1118 : vector<2x1xf32>
    %1120 = vector.broadcast %1119 : vector<2x1xf32> to vector<2x128xf32>
    %1121 = vector.broadcast %21 : vector<1x128xf32> to vector<2x128xf32>
    %1122 = arith.mulf %1120, %1121 : vector<2x128xf32>
    %1123 = vector.extract_strided_slice %1079 {offsets = [0, 0], sizes = [2, 128], strides = [1, 1]} : vector<2x160xf32> to vector<2x128xf32>
    %1124 = arith.addf %1122, %1123 : vector<2x128xf32>
    %1125 = vector.broadcast %22 : vector<1x128xf32> to vector<2x128xf32>
    %1126 = arith.addf %1124, %1125 : vector<2x128xf32>
    %1127 = vector.extract_strided_slice %1126 {offsets = [0, 0], sizes = [2, 32], strides = [1, 1]} : vector<2x128xf32> to vector<2x32xf32>
    %cst_277 = arith.constant 5.000000e-01 : f32
    %1128 = vector.broadcast %cst_277 : f32 to vector<2x32xf32>
    %1129 = arith.mulf %1128, %1127 : vector<2x32xf32>
    %1130 = math.tanh %1129 : vector<2x32xf32>
    %cst_278 = arith.constant 5.000000e-01 : f32
    %1131 = vector.broadcast %cst_278 : f32 to vector<2x32xf32>
    %1132 = arith.mulf %1131, %1130 : vector<2x32xf32>
    %cst_279 = arith.constant 5.000000e-01 : f32
    %1133 = vector.broadcast %cst_279 : f32 to vector<2x32xf32>
    %1134 = arith.addf %1132, %1133 : vector<2x32xf32>
    %1135 = vector.extract_strided_slice %1126 {offsets = [0, 32], sizes = [2, 32], strides = [1, 1]} : vector<2x128xf32> to vector<2x32xf32>
    %cst_280 = arith.constant 5.000000e-01 : f32
    %1136 = vector.broadcast %cst_280 : f32 to vector<2x32xf32>
    %1137 = arith.mulf %1136, %1135 : vector<2x32xf32>
    %1138 = math.tanh %1137 : vector<2x32xf32>
    %cst_281 = arith.constant 5.000000e-01 : f32
    %1139 = vector.broadcast %cst_281 : f32 to vector<2x32xf32>
    %1140 = arith.mulf %1139, %1138 : vector<2x32xf32>
    %cst_282 = arith.constant 5.000000e-01 : f32
    %1141 = vector.broadcast %cst_282 : f32 to vector<2x32xf32>
    %1142 = arith.addf %1140, %1141 : vector<2x32xf32>
    %1143 = vector.extract_strided_slice %1126 {offsets = [0, 64], sizes = [2, 32], strides = [1, 1]} : vector<2x128xf32> to vector<2x32xf32>
    %1144 = math.tanh %1143 : vector<2x32xf32>
    %1145 = vector.extract_strided_slice %1126 {offsets = [0, 96], sizes = [2, 32], strides = [1, 1]} : vector<2x128xf32> to vector<2x32xf32>
    %cst_283 = arith.constant 5.000000e-01 : f32
    %1146 = vector.broadcast %cst_283 : f32 to vector<2x32xf32>
    %1147 = arith.mulf %1146, %1145 : vector<2x32xf32>
    %1148 = math.tanh %1147 : vector<2x32xf32>
    %cst_284 = arith.constant 5.000000e-01 : f32
    %1149 = vector.broadcast %cst_284 : f32 to vector<2x32xf32>
    %1150 = arith.mulf %1149, %1148 : vector<2x32xf32>
    %cst_285 = arith.constant 5.000000e-01 : f32
    %1151 = vector.broadcast %cst_285 : f32 to vector<2x32xf32>
    %1152 = arith.addf %1150, %1151 : vector<2x32xf32>
    %1153 = arith.mulf %1142, %1076 : vector<2x32xf32>
    %1154 = arith.mulf %1134, %1144 : vector<2x32xf32>
    %1155 = arith.addf %1153, %1154 : vector<2x32xf32>
    %1156 = math.tanh %1155 : vector<2x32xf32>
    %1157 = arith.mulf %1152, %1156 : vector<2x32xf32>
    %cst_286 = arith.constant dense<0.000000e+00> : vector<2x160xf32>
    %1158 = tpu.matmul %1157, %11, %cst_286 {dimension_numbers = #tpu.dot_dimension_numbers<[1], [0], [0], [1], [0, 0, 1, 1], [], []>, precision = #tpu.contract_precision<fp32>} : vector<2x32xf32>, vector<32x160xf32>, vector<2x160xf32> -> vector<2x160xf32>
    %1159 = vector.extract_strided_slice %1158 {offsets = [0, 128], sizes = [2, 32], strides = [1, 1]} : vector<2x160xf32> to vector<2x32xf32>
    %cst_287 = arith.constant dense<0.000000e+00> : vector<2x32xf32>
    %1160 = tpu.matmul %1155, %12, %cst_287 {dimension_numbers = #tpu.dot_dimension_numbers<[1], [0], [0], [1], [0, 0, 1, 1], [], []>, precision = #tpu.contract_precision<fp32>} : vector<2x32xf32>, vector<32x32xf32>, vector<2x32xf32> -> vector<2x32xf32>
    %1161 = arith.addf %1159, %1160 : vector<2x32xf32>
    %1162 = vector.broadcast %14 : vector<1x32xf32> to vector<2x32xf32>
    %1163 = arith.addf %1161, %1162 : vector<2x32xf32>
    %1164 = vector.shape_cast %1163 : vector<2x32xf32> to vector<2x1x32xf32>
    %1165 = vector.broadcast %1164 : vector<2x1x32xf32> to vector<2x8x32xf32>
    %1166 = arith.addf %602, %1165 : vector<2x8x32xf32>
    %1167 = math.tanh %1166 : vector<2x8x32xf32>
    %1168 = vector.broadcast %16 : vector<1x1x32xf32> to vector<2x8x32xf32>
    %1169 = arith.mulf %1167, %1168 : vector<2x8x32xf32>
    %cst_288 = arith.constant dense<0.000000e+00> : vector<2x8xf32>
    %1170 = vector.multi_reduction <add>, %1169, %cst_288 [2] : vector<2x8x32xf32> to vector<2x8xf32>
    %1171 = vector.broadcast %17 : vector<1x1xf32> to vector<2x8xf32>
    %1172 = arith.addf %1170, %1171 : vector<2x8xf32>
    %cst_289 = arith.constant dense<0xFF800000> : vector<2xf32>
    %1173 = vector.multi_reduction <maximumf>, %1172, %cst_289 [1] : vector<2x8xf32> to vector<2xf32>
    %1174 = vector.shape_cast %1173 : vector<2xf32> to vector<2x1xf32>
    %1175 = vector.broadcast %1174 : vector<2x1xf32> to vector<2x8xf32>
    %1176 = arith.subf %1172, %1175 : vector<2x8xf32>
    %1177 = math.exp %1176 : vector<2x8xf32>
    %cst_290 = arith.constant dense<0.000000e+00> : vector<2xf32>
    %1178 = vector.multi_reduction <add>, %1177, %cst_290 [1] : vector<2x8xf32> to vector<2xf32>
    %1179 = vector.shape_cast %1178 : vector<2xf32> to vector<2x1xf32>
    %1180 = vector.broadcast %1179 : vector<2x1xf32> to vector<2x8xf32>
    %1181 = arith.divf %1177, %1180 : vector<2x8xf32>
    %1182 = vector.shape_cast %1181 : vector<2x8xf32> to vector<2x8x1xf32>
    %1183 = vector.broadcast %1182 : vector<2x8x1xf32> to vector<2x8x32xf32>
    %1184 = arith.mulf %1183, %599 : vector<2x8x32xf32>
    %cst_291 = arith.constant dense<0.000000e+00> : vector<2x32xf32>
    %1185 = vector.multi_reduction <add>, %1184, %cst_291 [1] : vector<2x8x32xf32> to vector<2x32xf32>
    %1186 = vector.broadcast %18 : vector<1x32xf32> to vector<2x32xf32>
    %1187 = arith.mulf %1185, %1186 : vector<2x32xf32>
    %cst_292 = arith.constant dense<0.000000e+00> : vector<2xf32>
    %1188 = vector.multi_reduction <add>, %1187, %cst_292 [1] : vector<2x32xf32> to vector<2xf32>
    %1189 = vector.shape_cast %1188 : vector<2xf32> to vector<2x1xf32>
    %1190 = vector.extract_strided_slice %1 {offsets = [0, 7, 0], sizes = [2, 1, 1], strides = [1, 1, 1]} : vector<2x8x1xf32> to vector<2x1x1xf32>
    %1191 = vector.shape_cast %1190 : vector<2x1x1xf32> to vector<2x1xf32>
    %1192 = vector.broadcast %19 : vector<1x1xf32> to vector<2x1xf32>
    %1193 = arith.mulf %1191, %1192 : vector<2x1xf32>
    %cst_293 = arith.constant dense<0.000000e+00> : vector<2xf32>
    %1194 = vector.multi_reduction <add>, %1193, %cst_293 [1] : vector<2x1xf32> to vector<2xf32>
    %1195 = vector.shape_cast %1194 : vector<2xf32> to vector<2x1xf32>
    %1196 = arith.addf %1189, %1195 : vector<2x1xf32>
    %1197 = vector.broadcast %20 : vector<1x1xf32> to vector<2x1xf32>
    %1198 = arith.addf %1196, %1197 : vector<2x1xf32>
    %1199 = vector.broadcast %1198 : vector<2x1xf32> to vector<2x128xf32>
    %1200 = vector.broadcast %21 : vector<1x128xf32> to vector<2x128xf32>
    %1201 = arith.mulf %1199, %1200 : vector<2x128xf32>
    %1202 = vector.extract_strided_slice %1158 {offsets = [0, 0], sizes = [2, 128], strides = [1, 1]} : vector<2x160xf32> to vector<2x128xf32>
    %1203 = arith.addf %1201, %1202 : vector<2x128xf32>
    %1204 = vector.broadcast %22 : vector<1x128xf32> to vector<2x128xf32>
    %1205 = arith.addf %1203, %1204 : vector<2x128xf32>
    %1206 = vector.extract_strided_slice %1205 {offsets = [0, 0], sizes = [2, 32], strides = [1, 1]} : vector<2x128xf32> to vector<2x32xf32>
    %cst_294 = arith.constant 5.000000e-01 : f32
    %1207 = vector.broadcast %cst_294 : f32 to vector<2x32xf32>
    %1208 = arith.mulf %1207, %1206 : vector<2x32xf32>
    %1209 = math.tanh %1208 : vector<2x32xf32>
    %cst_295 = arith.constant 5.000000e-01 : f32
    %1210 = vector.broadcast %cst_295 : f32 to vector<2x32xf32>
    %1211 = arith.mulf %1210, %1209 : vector<2x32xf32>
    %cst_296 = arith.constant 5.000000e-01 : f32
    %1212 = vector.broadcast %cst_296 : f32 to vector<2x32xf32>
    %1213 = arith.addf %1211, %1212 : vector<2x32xf32>
    %1214 = vector.extract_strided_slice %1205 {offsets = [0, 32], sizes = [2, 32], strides = [1, 1]} : vector<2x128xf32> to vector<2x32xf32>
    %cst_297 = arith.constant 5.000000e-01 : f32
    %1215 = vector.broadcast %cst_297 : f32 to vector<2x32xf32>
    %1216 = arith.mulf %1215, %1214 : vector<2x32xf32>
    %1217 = math.tanh %1216 : vector<2x32xf32>
    %cst_298 = arith.constant 5.000000e-01 : f32
    %1218 = vector.broadcast %cst_298 : f32 to vector<2x32xf32>
    %1219 = arith.mulf %1218, %1217 : vector<2x32xf32>
    %cst_299 = arith.constant 5.000000e-01 : f32
    %1220 = vector.broadcast %cst_299 : f32 to vector<2x32xf32>
    %1221 = arith.addf %1219, %1220 : vector<2x32xf32>
    %1222 = vector.extract_strided_slice %1205 {offsets = [0, 64], sizes = [2, 32], strides = [1, 1]} : vector<2x128xf32> to vector<2x32xf32>
    %1223 = math.tanh %1222 : vector<2x32xf32>
    %1224 = vector.extract_strided_slice %1205 {offsets = [0, 96], sizes = [2, 32], strides = [1, 1]} : vector<2x128xf32> to vector<2x32xf32>
    %cst_300 = arith.constant 5.000000e-01 : f32
    %1225 = vector.broadcast %cst_300 : f32 to vector<2x32xf32>
    %1226 = arith.mulf %1225, %1224 : vector<2x32xf32>
    %1227 = math.tanh %1226 : vector<2x32xf32>
    %cst_301 = arith.constant 5.000000e-01 : f32
    %1228 = vector.broadcast %cst_301 : f32 to vector<2x32xf32>
    %1229 = arith.mulf %1228, %1227 : vector<2x32xf32>
    %cst_302 = arith.constant 5.000000e-01 : f32
    %1230 = vector.broadcast %cst_302 : f32 to vector<2x32xf32>
    %1231 = arith.addf %1229, %1230 : vector<2x32xf32>
    %1232 = arith.mulf %1221, %1155 : vector<2x32xf32>
    %1233 = arith.mulf %1213, %1223 : vector<2x32xf32>
    %1234 = arith.addf %1232, %1233 : vector<2x32xf32>
    %1235 = math.tanh %1234 : vector<2x32xf32>
    %1236 = arith.mulf %1231, %1235 : vector<2x32xf32>
    %c0_303 = arith.constant 0 : index
    %c0_304 = arith.constant 0 : index
    %1237 = vector.load %arg21[%c0_303, %c0_304] : memref<1x32xf32, #tpu.memory_space<vmem>>, vector<1x32xf32>
    %1238 = vector.broadcast %1237 : vector<1x32xf32> to vector<2x32xf32>
    %1239 = arith.mulf %1236, %1238 : vector<2x32xf32>
    %cst_305 = arith.constant dense<0.000000e+00> : vector<2xf32>
    %1240 = vector.multi_reduction <add>, %1239, %cst_305 [1] : vector<2x32xf32> to vector<2xf32>
    %1241 = vector.shape_cast %1240 : vector<2xf32> to vector<2x1xf32>
    %c0_306 = arith.constant 0 : index
    %c0_307 = arith.constant 0 : index
    %1242 = vector.load %arg22[%c0_306, %c0_307] : memref<1x32xf32, #tpu.memory_space<vmem>>, vector<1x32xf32>
    %1243 = vector.broadcast %1242 : vector<1x32xf32> to vector<2x32xf32>
    %1244 = arith.mulf %1185, %1243 : vector<2x32xf32>
    %cst_308 = arith.constant dense<0.000000e+00> : vector<2xf32>
    %1245 = vector.multi_reduction <add>, %1244, %cst_308 [1] : vector<2x32xf32> to vector<2xf32>
    %1246 = vector.shape_cast %1245 : vector<2xf32> to vector<2x1xf32>
    %1247 = arith.addf %1241, %1246 : vector<2x1xf32>
    %c0_309 = arith.constant 0 : index
    %c0_310 = arith.constant 0 : index
    %1248 = vector.load %arg23[%c0_309, %c0_310] : memref<1x1xf32, #tpu.memory_space<vmem>>, vector<1x1xf32>
    %1249 = vector.broadcast %1248 : vector<1x1xf32> to vector<2x1xf32>
    %1250 = arith.addf %1247, %1249 : vector<2x1xf32>
    %c0_311 = arith.constant 0 : index
    %c0_312 = arith.constant 0 : index
    %1251 = vector.load %arg24[%c0_311, %c0_312] : memref<2x1xf32, #tpu.memory_space<vmem>>, vector<2x1xf32>
    tpu.vector_store %arg24[%c0_311, %c0_312], %1250 {strides = array<i32>} : memref<2x1xf32, #tpu.memory_space<vmem>>, vector<2x1xf32>,
    return
  }
  func.func @transform_0(%arg0: i32) -> (i32, i32, i32) {
    %c0_i32 = arith.constant 0 : i32
    %c0_i32_0 = arith.constant 0 : i32
    %c0_i32_1 = arith.constant 0 : i32
    return %arg0, %c0_i32, %c0_i32_0 : i32, i32, i32
  }
  func.func @transform_1(%arg0: i32) -> (i32, i32, i32) {
    %c0_i32 = arith.constant 0 : i32
    %c0_i32_0 = arith.constant 0 : i32
    %c0_i32_1 = arith.constant 0 : i32
    return %arg0, %c0_i32, %c0_i32_0 : i32, i32, i32
  }
  func.func @transform_2(%arg0: i32) -> (i32, i32) {
    %c0_i32 = arith.constant 0 : i32
    %c0_i32_0 = arith.constant 0 : i32
    %c0_i32_1 = arith.constant 0 : i32
    return %c0_i32, %c0_i32_0 : i32, i32
  }
  func.func @transform_3(%arg0: i32) -> (i32, i32) {
    %c0_i32 = arith.constant 0 : i32
    %c0_i32_0 = arith.constant 0 : i32
    %c0_i32_1 = arith.constant 0 : i32
    return %c0_i32, %c0_i32_0 : i32, i32
  }
  func.func @transform_4(%arg0: i32) -> (i32, i32) {
    %c0_i32 = arith.constant 0 : i32
    %c0_i32_0 = arith.constant 0 : i32
    %c0_i32_1 = arith.constant 0 : i32
    return %c0_i32, %c0_i32_0 : i32, i32
  }
  func.func @transform_5(%arg0: i32) -> (i32, i32) {
    %c0_i32 = arith.constant 0 : i32
    %c0_i32_0 = arith.constant 0 : i32
    %c0_i32_1 = arith.constant 0 : i32
    return %c0_i32, %c0_i32_0 : i32, i32
  }
  func.func @transform_6(%arg0: i32) -> (i32, i32) {
    %c0_i32 = arith.constant 0 : i32
    %c0_i32_0 = arith.constant 0 : i32
    %c0_i32_1 = arith.constant 0 : i32
    return %c0_i32, %c0_i32_0 : i32, i32
  }
  func.func @transform_7(%arg0: i32) -> (i32, i32) {
    %c0_i32 = arith.constant 0 : i32
    %c0_i32_0 = arith.constant 0 : i32
    %c0_i32_1 = arith.constant 0 : i32
    return %c0_i32, %c0_i32_0 : i32, i32
  }
  func.func @transform_8(%arg0: i32) -> (i32, i32) {
    %c0_i32 = arith.constant 0 : i32
    %c0_i32_0 = arith.constant 0 : i32
    %c0_i32_1 = arith.constant 0 : i32
    return %c0_i32, %c0_i32_0 : i32, i32
  }
  func.func @transform_9(%arg0: i32) -> (i32, i32) {
    %c0_i32 = arith.constant 0 : i32
    %c0_i32_0 = arith.constant 0 : i32
    %c0_i32_1 = arith.constant 0 : i32
    return %c0_i32, %c0_i32_0 : i32, i32
  }
  func.func @transform_10(%arg0: i32) -> (i32, i32) {
    %c0_i32 = arith.constant 0 : i32
    %c0_i32_0 = arith.constant 0 : i32
    %c0_i32_1 = arith.constant 0 : i32
    return %c0_i32, %c0_i32_0 : i32, i32
  }
  func.func @transform_11(%arg0: i32) -> (i32, i32) {
    %c0_i32 = arith.constant 0 : i32
    %c0_i32_0 = arith.constant 0 : i32
    %c0_i32_1 = arith.constant 0 : i32
    return %c0_i32, %c0_i32_0 : i32, i32
  }
  func.func @transform_12(%arg0: i32) -> (i32, i32) {
    %c0_i32 = arith.constant 0 : i32
    %c0_i32_0 = arith.constant 0 : i32
    %c0_i32_1 = arith.constant 0 : i32
    return %c0_i32, %c0_i32_0 : i32, i32
  }
  func.func @transform_13(%arg0: i32) -> (i32, i32) {
    %c0_i32 = arith.constant 0 : i32
    %c0_i32_0 = arith.constant 0 : i32
    %c0_i32_1 = arith.constant 0 : i32
    return %c0_i32, %c0_i32_0 : i32, i32
  }
  func.func @transform_14(%arg0: i32) -> (i32, i32) {
    %c0_i32 = arith.constant 0 : i32
    %c0_i32_0 = arith.constant 0 : i32
    %c0_i32_1 = arith.constant 0 : i32
    return %c0_i32, %c0_i32_0 : i32, i32
  }
  func.func @transform_15(%arg0: i32) -> (i32, i32) {
    %c0_i32 = arith.constant 0 : i32
    %c0_i32_0 = arith.constant 0 : i32
    %c0_i32_1 = arith.constant 0 : i32
    return %c0_i32, %c0_i32_0 : i32, i32
  }
  func.func @transform_16(%arg0: i32) -> (i32, i32) {
    %c0_i32 = arith.constant 0 : i32
    %c0_i32_0 = arith.constant 0 : i32
    %c0_i32_1 = arith.constant 0 : i32
    return %c0_i32, %c0_i32_0 : i32, i32
  }
  func.func @transform_17(%arg0: i32) -> (i32, i32) {
    %c0_i32 = arith.constant 0 : i32
    %c0_i32_0 = arith.constant 0 : i32
    %c0_i32_1 = arith.constant 0 : i32
    return %c0_i32, %c0_i32_0 : i32, i32
  }
  func.func @transform_18(%arg0: i32) -> (i32, i32) {
    %c0_i32 = arith.constant 0 : i32
    %c0_i32_0 = arith.constant 0 : i32
    %c0_i32_1 = arith.constant 0 : i32
    return %c0_i32, %c0_i32_0 : i32, i32
  }
  func.func @transform_19(%arg0: i32) -> (i32, i32) {
    %c0_i32 = arith.constant 0 : i32
    %c0_i32_0 = arith.constant 0 : i32
    %c0_i32_1 = arith.constant 0 : i32
    return %c0_i32, %c0_i32_0 : i32, i32
  }
  func.func @transform_20(%arg0: i32) -> (i32, i32) {
    %c0_i32 = arith.constant 0 : i32
    %c0_i32_0 = arith.constant 0 : i32
    %c0_i32_1 = arith.constant 0 : i32
    return %c0_i32, %c0_i32_0 : i32, i32
  }
  func.func @transform_21(%arg0: i32) -> (i32, i32) {
    %c0_i32 = arith.constant 0 : i32
    %c0_i32_0 = arith.constant 0 : i32
    %c0_i32_1 = arith.constant 0 : i32
    return %c0_i32, %c0_i32_0 : i32, i32
  }
  func.func @transform_22(%arg0: i32) -> (i32, i32) {
    %c0_i32 = arith.constant 0 : i32
    %c0_i32_0 = arith.constant 0 : i32
    %c0_i32_1 = arith.constant 0 : i32
    return %c0_i32, %c0_i32_0 : i32, i32
  }
  func.func @transform_23(%arg0: i32) -> (i32, i32) {
    %c0_i32 = arith.constant 0 : i32
    %c0_i32_0 = arith.constant 0 : i32
    return %arg0, %c0_i32 : i32, i32
  }
}

</mosaic_0001>

<llo_original>
// kernel: tpu_custom_call.1
$region0: #{tpu_custom_call.1}
  #allocation0 [shape = 'u32[]', space=smem, size = 0x4, offset = 0x4, fixed_abs, tag = 'smem constant byte address 0x4 - core index']
  #allocation1 [shape = 'u32[72,128]{1,0:T(1,128)}', space=vmem, size = 0x9000, scoped, tag = 'internal scratch']
  #allocation2 [shape = 'f32[1,1]{1,0:T(1,128)S(1)}', space=vmem, size = 0x200, scoped, tag = 'scoped memory for tpu_custom_call.1']
  #allocation3 [shape = 'f32[1,1]{1,0:T(1,128)S(1)}', space=vmem, size = 0x200, scoped, tag = 'scoped memory for tpu_custom_call.1']
  #allocation4 [shape = 'f32[1,1]{1,0:T(1,128)S(1)}', space=vmem, size = 0x200, scoped, tag = 'scoped memory for tpu_custom_call.1']
  #allocation5 [shape = 'f32[1,1]{1,0:T(1,128)S(1)}', space=vmem, size = 0x200, scoped, tag = 'scoped memory for tpu_custom_call.1']
  #allocation6 [shape = 'f32[1,1]{1,0:T(1,128)S(1)}', space=vmem, size = 0x200, scoped, tag = 'scoped memory for tpu_custom_call.1']
  %s0 = inlined_call_operand.vmem [shape: f32[2,8,4], index: 0, kind: input, shape index: {}]
  %s1 = inlined_call_operand.vmem [shape: f32[2,8,1], index: 1, kind: input, shape index: {}]
  %s2 = inlined_call_operand.vmem [shape: f32[4,128], index: 2, kind: input, shape index: {}]
  %s3 = inlined_call_operand.vmem [shape: f32[32,128], index: 3, kind: input, shape index: {}]
  %s4 = inlined_call_operand.vmem [shape: f32[1,128], index: 4, kind: input, shape index: {}]
  %s5 = inlined_call_operand.vmem [shape: f32[1,32], index: 5, kind: input, shape index: {}]
  %s6 = inlined_call_operand.vmem [shape: f32[1,32], index: 6, kind: input, shape index: {}]
  %s7 = inlined_call_operand.vmem [shape: f32[8,1], index: 7, kind: input, shape index: {}]
  %s8 = inlined_call_operand.<no memory space> [shape: f32[1,1], index: 8, kind: input, shape index: {}]
  %s9 = inlined_call_operand.hbm [shape: f32[32,160], index: 9, kind: input, shape index: {}]
  %s10 = inlined_call_operand.hbm [shape: f32[32,32], index: 10, kind: input, shape index: {}]
  %s11 = inlined_call_operand.hbm [shape: f32[32,32], index: 11, kind: input, shape index: {}]
  %s12 = inlined_call_operand.vmem [shape: f32[1,32], index: 12, kind: input, shape index: {}]
  %s13 = inlined_call_operand.vmem [shape: f32[1,32], index: 13, kind: input, shape index: {}]
  %s14 = inlined_call_operand.<no memory space> [shape: f32[1,1], index: 14, kind: input, shape index: {}]
  %s15 = inlined_call_operand.vmem [shape: f32[1,32], index: 15, kind: input, shape index: {}]
  %s16 = inlined_call_operand.<no memory space> [shape: f32[1,1], index: 16, kind: input, shape index: {}]
  %s17 = inlined_call_operand.<no memory space> [shape: f32[1,1], index: 17, kind: input, shape index: {}]
  %s18 = inlined_call_operand.vmem [shape: f32[1,128], index: 18, kind: input, shape index: {}]
  %s19 = inlined_call_operand.vmem [shape: f32[1,128], index: 19, kind: input, shape index: {}]
  %s20 = inlined_call_operand.vmem [shape: f32[1,32], index: 20, kind: input, shape index: {}]
  %s21 = inlined_call_operand.vmem [shape: f32[1,32], index: 21, kind: input, shape index: {}]
  %s22 = inlined_call_operand.<no memory space> [shape: f32[1,1], index: 22, kind: input, shape index: {}]
  %s23 = inlined_call_operand.vmem [shape: f32[2,1], index: 23, kind: output, shape index: {}]
  %s24 = sld [smem:[#allocation0]]
  $region114: #{tpu_custom_call.1} parent=0
    _
  %s26 = ssub.s32 1, %s24
  %s27 = scalar_select 0, %s26, %s24
  %v28 = vstv %s8
  %29 = vst [vmem:[#allocation2] sm:$0x1] %v28
  %v30 = vstv %s14
  %31 = vst [vmem:[#allocation3] sm:$0x1] %v30
  %v32 = vstv %s16
  %33 = vst [vmem:[#allocation4] sm:$0x1] %v32
  %v34 = vstv %s17
  %35 = vst [vmem:[#allocation5] sm:$0x1] %v34
  %v36 = vstv %s22
  %37 = vst [vmem:[#allocation6] sm:$0x1] %v36
  $region1: #{tpu_custom_call.1} parent=0
    #allocation7 [shape = 'u8[32768]{0}', space=vmem, size = 0x8000, scoped, tag = 'input window, operand 9, single buffered']
    #allocation8 [shape = 's32[1]{0}', space=sflag, size = 0x4, scoped, tag = 'scoped memory for tpu_custom_call.1']
    #allocation9 [shape = 'u8[16384]{0}', space=vmem, size = 0x4000, scoped, tag = 'input window, operand 10, single buffered']
    #allocation10 [shape = 's32[1]{0}', space=sflag, size = 0x4, scoped, tag = 'scoped memory for tpu_custom_call.1']
    #allocation11 [shape = 'u8[16384]{0}', space=vmem, size = 0x4000, scoped, tag = 'input window, operand 11, single buffered']
    %38 = vsyncpa [#allocation8], 0
    %39 = vsyncpa [#allocation10], 0
    // Predicated region
    $region2: #{tpu_custom_call.1} parent=1 // pred_check
      _
    $region3: #{tpu_custom_call.1} parent=1 // pred_check_branch
      %41 = sbr.rel (0) target = $region5
    $region4: #{tpu_custom_call.1} parent=1 // pred_region
      _
    $region5: #{tpu_custom_call.1} parent=1 // pred_fallthru
      _
    // Predicated region
    $region6: #{tpu_custom_call.1} parent=1 // pred_check
      _
    $region7: #{tpu_custom_call.1} parent=1 // pred_check_branch
      %43 = sbr.rel (0) target = $region9
    $region8: #{tpu_custom_call.1} parent=1 // pred_region
      _
    $region9: #{tpu_custom_call.1} parent=1 // pred_fallthru
      _
    // Predicated region
    $region10: #{tpu_custom_call.1} parent=1 // pred_check
      _
    $region11: #{tpu_custom_call.1} parent=1 // pred_check_branch
      %45 = sbr.rel (0) target = $region13
    $region12: #{tpu_custom_call.1} parent=1 // pred_region
      _
    $region13: #{tpu_custom_call.1} parent=1 // pred_fallthru
      _
    // Predicated region
    $region14: #{tpu_custom_call.1} parent=1 // pred_check
      _
    $region15: #{tpu_custom_call.1} parent=1 // pred_check_branch
      %47 = sbr.rel (0) target = $region17
    $region16: #{tpu_custom_call.1} parent=1 // pred_region
      _
    $region17: #{tpu_custom_call.1} parent=1 // pred_fallthru
      _
    // Predicated region
    $region18: #{tpu_custom_call.1} parent=1 // pred_check
      _
    $region19: #{tpu_custom_call.1} parent=1 // pred_check_branch
      %49 = sbr.rel (0) target = $region21
    $region20: #{tpu_custom_call.1} parent=1 // pred_region
      _
    $region21: #{tpu_custom_call.1} parent=1 // pred_fallthru
      _
    // Predicated region
    $region22: #{tpu_custom_call.1} parent=1 // pred_check
      _
    $region23: #{tpu_custom_call.1} parent=1 // pred_check_branch
      %51 = sbr.rel (0) target = $region25
    $region24: #{tpu_custom_call.1} parent=1 // pred_region
      _
    $region25: #{tpu_custom_call.1} parent=1 // pred_fallthru
      _
    // Predicated region
    $region26: #{tpu_custom_call.1} parent=1 // pred_check
      _
    $region27: #{tpu_custom_call.1} parent=1 // pred_check_branch
      %53 = sbr.rel (0) target = $region29
    $region28: #{tpu_custom_call.1} parent=1 // pred_region
      _
    $region29: #{tpu_custom_call.1} parent=1 // pred_fallthru
      _
    // Predicated region
    $region30: #{tpu_custom_call.1} parent=1 // pred_check
      _
    $region31: #{tpu_custom_call.1} parent=1 // pred_check_branch
      %55 = sbr.rel (0) target = $region33
    $region32: #{tpu_custom_call.1} parent=1 // pred_region
      _
    $region33: #{tpu_custom_call.1} parent=1 // pred_fallthru
      _
    // Predicated region
    $region34: #{tpu_custom_call.1} parent=1 // pred_check
      _
    $region35: #{tpu_custom_call.1} parent=1 // pred_check_branch
      %57 = sbr.rel (0) target = $region37
    $region36: #{tpu_custom_call.1} parent=1 // pred_region
      _
    $region37: #{tpu_custom_call.1} parent=1 // pred_fallthru
      _
    // Predicated region
    $region38: #{tpu_custom_call.1} parent=1 // pred_check
      _
    $region39: #{tpu_custom_call.1} parent=1 // pred_check_branch
      %59 = sbr.rel (0) target = $region41
    $region40: #{tpu_custom_call.1} parent=1 // pred_region
      %61 = vsyncadd [#allocation8], 0
      %s62 = sshll.u32 %s9, 4
      %s63 = int_to_ptr.hbm [resolvable:$true] %s62
      %s64 = sshll.u32 [#allocation7], 4
      %s65 = int_to_ptr.vmem [resolvable:$true] %s64
      %70 = dma.hbm_to_vmem [thread:$0]  %s63, 1024, %s65, [#allocation8], 256, 256, 16
    $region41: #{tpu_custom_call.1} parent=1 // pred_fallthru
      _
    // Predicated region
    $region42: #{tpu_custom_call.1} parent=1 // pred_check
      _
    $region43: #{tpu_custom_call.1} parent=1 // pred_check_branch
      %72 = sbr.rel (0) target = $region45
    $region44: #{tpu_custom_call.1} parent=1 // pred_region
      %74 = vsyncadd [#allocation10], 0
      %s75 = sshll.u32 %s10, 4
      %s76 = int_to_ptr.hbm [resolvable:$true] %s75
      %s77 = sshll.u32 [#allocation9], 4
      %s78 = int_to_ptr.vmem [resolvable:$true] %s77
      %83 = dma.hbm_to_vmem [thread:$0]  %s76, 512, %s78, [#allocation10], 128, 128, 8
    $region45: #{tpu_custom_call.1} parent=1 // pred_fallthru
      _
    // Predicated region
    $region46: #{tpu_custom_call.1} parent=1 // pred_check
      _
    $region47: #{tpu_custom_call.1} parent=1 // pred_check_branch
      %85 = sbr.rel (0) target = $region49
    $region48: #{tpu_custom_call.1} parent=1 // pred_region
      %87 = vsyncadd [#allocation10], 0
      %s88 = sshll.u32 %s11, 4
      %s89 = int_to_ptr.hbm [resolvable:$true] %s88
      %s90 = sshll.u32 [#allocation11], 4
      %s91 = int_to_ptr.vmem [resolvable:$true] %s90
      %96 = dma.hbm_to_vmem [thread:$0]  %s89, 512, %s91, [#allocation10], 128, 128, 8
    $region49: #{tpu_custom_call.1} parent=1 // pred_fallthru
      _
    // Predicated region
    $region50: #{tpu_custom_call.1} parent=1 // pred_check
      _
    $region51: #{tpu_custom_call.1} parent=1 // pred_check_branch
      %98 = sbr.rel (0) target = $region53
    $region52: #{tpu_custom_call.1} parent=1 // pred_region
      _
    $region53: #{tpu_custom_call.1} parent=1 // pred_fallthru
      _
    // Predicated region
    $region54: #{tpu_custom_call.1} parent=1 // pred_check
      _
    $region55: #{tpu_custom_call.1} parent=1 // pred_check_branch
      %100 = sbr.rel (0) target = $region57
    $region56: #{tpu_custom_call.1} parent=1 // pred_region
      _
    $region57: #{tpu_custom_call.1} parent=1 // pred_fallthru
      _
    // Predicated region
    $region58: #{tpu_custom_call.1} parent=1 // pred_check
      _
    $region59: #{tpu_custom_call.1} parent=1 // pred_check_branch
      %102 = sbr.rel (0) target = $region61
    $region60: #{tpu_custom_call.1} parent=1 // pred_region
      _
    $region61: #{tpu_custom_call.1} parent=1 // pred_fallthru
      _
    // Predicated region
    $region62: #{tpu_custom_call.1} parent=1 // pred_check
      _
    $region63: #{tpu_custom_call.1} parent=1 // pred_check_branch
      %104 = sbr.rel (0) target = $region65
    $region64: #{tpu_custom_call.1} parent=1 // pred_region
      _
    $region65: #{tpu_custom_call.1} parent=1 // pred_fallthru
      _
    // Predicated region
    $region66: #{tpu_custom_call.1} parent=1 // pred_check
      _
    $region67: #{tpu_custom_call.1} parent=1 // pred_check_branch
      %106 = sbr.rel (0) target = $region69
    $region68: #{tpu_custom_call.1} parent=1 // pred_region
      _
    $region69: #{tpu_custom_call.1} parent=1 // pred_fallthru
      _
    // Predicated region
    $region70: #{tpu_custom_call.1} parent=1 // pred_check
      _
    $region71: #{tpu_custom_call.1} parent=1 // pred_check_branch
      %108 = sbr.rel (0) target = $region73
    $region72: #{tpu_custom_call.1} parent=1 // pred_region
      _
    $region73: #{tpu_custom_call.1} parent=1 // pred_fallthru
      _
    // Predicated region
    $region74: #{tpu_custom_call.1} parent=1 // pred_check
      _
    $region75: #{tpu_custom_call.1} parent=1 // pred_check_branch
      %110 = sbr.rel (0) target = $region77
    $region76: #{tpu_custom_call.1} parent=1 // pred_region
      _
    $region77: #{tpu_custom_call.1} parent=1 // pred_fallthru
      _
    // Predicated region
    $region78: #{tpu_custom_call.1} parent=1 // pred_check
      _
    $region79: #{tpu_custom_call.1} parent=1 // pred_check_branch
      %112 = sbr.rel (0) target = $region81
    $region80: #{tpu_custom_call.1} parent=1 // pred_region
      _
    $region81: #{tpu_custom_call.1} parent=1 // pred_fallthru
      _
    // Predicated region
    $region82: #{tpu_custom_call.1} parent=1 // pred_check
      _
    $region83: #{tpu_custom_call.1} parent=1 // pred_check_branch
      %114 = sbr.rel (0) target = $region85
    $region84: #{tpu_custom_call.1} parent=1 // pred_region
      _
    $region85: #{tpu_custom_call.1} parent=1 // pred_fallthru
      _
    // Predicated region
    $region86: #{tpu_custom_call.1} parent=1 // pred_check
      _
    $region87: #{tpu_custom_call.1} parent=1 // pred_check_branch
      %116 = sbr.rel (0) target = $region89
    $region88: #{tpu_custom_call.1} parent=1 // pred_region
      _
    $region89: #{tpu_custom_call.1} parent=1 // pred_fallthru
      _
    // Predicated region
    $region90: #{tpu_custom_call.1} parent=1 // pred_check
      _
    $region91: #{tpu_custom_call.1} parent=1 // pred_check_branch
      %118 = sbr.rel (0) target = $region93
    $region92: #{tpu_custom_call.1} parent=1 // pred_region
      _
    $region93: #{tpu_custom_call.1} parent=1 // pred_fallthru
      _
    // Predicated region
    $region94: #{tpu_custom_call.1} parent=1 // pred_check
      _
    $region95: #{tpu_custom_call.1} parent=1 // pred_check_branch
      %120 = sbr.rel (0) target = $region97
    $region96: #{tpu_custom_call.1} parent=1 // pred_region
      %122 = dma.done [#allocation8], 1024
    $region97: #{tpu_custom_call.1} parent=1 // pred_fallthru
      _
    // Predicated region
    $region98: #{tpu_custom_call.1} parent=1 // pred_check
      _
    $region99: #{tpu_custom_call.1} parent=1 // pred_check_branch
      %124 = sbr.rel (0) target = $region101
    $region100: #{tpu_custom_call.1} parent=1 // pred_region
      %126 = dma.done [#allocation10], 512
    $region101: #{tpu_custom_call.1} parent=1 // pred_fallthru
      _
    // Predicated region
    $region102: #{tpu_custom_call.1} parent=1 // pred_check
      _
    $region103: #{tpu_custom_call.1} parent=1 // pred_check_branch
      %128 = sbr.rel (0) target = $region105
    $region104: #{tpu_custom_call.1} parent=1 // pred_region
      %130 = dma.done [#allocation10], 512
    $region105: #{tpu_custom_call.1} parent=1 // pred_fallthru
      _
    %v131 = vld [vmem:[%s0] sm:$0xff]
    %v132 = vld [vmem:[%s0 + $0x8] sm:$0xff]
    %v133 = vld [vmem:[%s1] sm:$0xff]
    %v134 = vld [vmem:[%s1 + $0x8] sm:$0xff]
    %v135 = vld [vmem:[%s2] sm:$0xf]
    %v136 = vld [vmem:[%s3] sm:$0xff]
    %v137 = vld [vmem:[%s3 + $0x8] sm:$0xff]
    %v138 = vld [vmem:[%s3 + $0x10] sm:$0xff]
    %v139 = vld [vmem:[%s3 + $0x18] sm:$0xff]
    %v140 = vld [vmem:[%s4] sm:$0x1]
    %v141 = vld [vmem:[%s5] sm:$0x1]
    %v142 = vld [vmem:[%s6] sm:$0x1]
    %v143 = vld [vmem:[%s7] sm:$0xff]
    %v144 = vld [vmem:[#allocation2] sm:$0x1]
    %v145 = vld [vmem:[#allocation7] sm:$0xff]
    %v146 = vld [vmem:[#allocation7 + $0x8] sm:$0xff]
    %v147 = vld [vmem:[#allocation7 + $0x10] sm:$0xff]
    %v148 = vld [vmem:[#allocation7 + $0x18] sm:$0xff]
    %v149 = vld [vmem:[#allocation7 + $0x20] sm:$0xff]
    %v150 = vld [vmem:[#allocation7 + $0x28] sm:$0xff]
    %v151 = vld [vmem:[#allocation7 + $0x30] sm:$0xff]
    %v152 = vld [vmem:[#allocation7 + $0x38] sm:$0xff]
    %v153 = vld [vmem:[#allocation9] sm:$0xff]
    %v154 = vld [vmem:[#allocation9 + $0x8] sm:$0xff]
    %v155 = vld [vmem:[#allocation9 + $0x10] sm:$0xff]
    %v156 = vld [vmem:[#allocation9 + $0x18] sm:$0xff]
    %v157 = vld [vmem:[#allocation11] sm:$0xff]
    %v158 = vld [vmem:[#allocation11 + $0x8] sm:$0xff]
    %v159 = vld [vmem:[#allocation11 + $0x10] sm:$0xff]
    %v160 = vld [vmem:[#allocation11 + $0x18] sm:$0xff]
    %v161 = vld [vmem:[%s12] sm:$0x1]
    %v162 = vld [vmem:[%s13] sm:$0x1]
    %v163 = vld [vmem:[#allocation3] sm:$0x1]
    %v164 = vld [vmem:[%s15] sm:$0x1]
    %v165 = vld [vmem:[#allocation4] sm:$0x1]
    %v166 = vld [vmem:[#allocation5] sm:$0x1]
    %v167 = vld [vmem:[%s18] sm:$0x1]
    %v168 = vld [vmem:[%s19] sm:$0x1]
    %170 = vset.pattern.permute.xlu0 0
    %171 = vperm.xlu0 %170, %v143
    %v172 = vpop.permute.xlu0 %171
    %v174 = vmul.f32 %v131, %v172
    %v175 = vmul.f32 %v132, %v172
    %vm176 = vcmask 31744
    %v177 = vsel %vm176, %v174, 0.0
    %v178 = vrot.slane %v177, 4
    %v179 = vadd.f32 %v177, %v178
    %v180 = vrot.slane %v179, 2
    %v181 = vadd.f32 %v179, %v180
    %v182 = vrot.slane %v181, 1
    %v183 = vadd.f32 %v181, %v182
    %v184 = vsel %vm176, %v175, 0.0
    %v185 = vrot.slane %v184, 4
    %v186 = vadd.f32 %v184, %v185
    %v187 = vrot.slane %v186, 2
    %v188 = vadd.f32 %v186, %v187
    %v189 = vrot.slane %v188, 1
    %v190 = vadd.f32 %v188, %v189
    %v192 = vperm.slane %v144, 0
    %193 = vset.pattern.permute.xlu0 0
    %194 = vperm.xlu0 %193, %v192
    %v195 = vpop.permute.xlu0 %194
    %v197 = vadd.f32 %v183, %v195
    %v198 = vadd.f32 %v190, %v195
    %v199 = vlaneseq
    %v200 = vshrl.u32 %v199, 7
    %v202 = vperm.slane %v141, 0
    %v204 = vmul.f32 %v202, 0.0
    %v206 = vperm.slane %v142, 0
    %v208 = vmul.f32 %v206, 0.0
    %v209 = vadd.f32 %v204, %v208
    %vm210 = vcmask 261120
    %v211 = vsel %vm210, %v209, 0.0
    %212 = vadd.xlane.f32.xlu0 %v211
    %v213 = vpop.xlane.xlu0 %212
    %v214 = vadd.f32 %v213, %v197
    %v215 = vadd.f32 %v213, %v198
    %vm218 = vcmask 1041409
    %v219 = vsel %vm218, %v215, %v214
    %vm221 = vcmask 25600
    %v222 = vsel %vm221, %v219, -inf
    %223 = vmax.xlane.f32.xlu0 %v222
    %v224 = vpop.xlane.xlu0 %223
    %v226 = vrot.slane %v224, 1
    %v229 = vsub.f32 %v214, %v224
    %v230 = vsub.f32 %v215, %v226
    %v231 = vmul.f32 %v229, 1.442695
    %v232 = vpow.pop %v231
    %v233 = vmul.f32 %v230, 1.442695
    %v234 = vpow.pop %v233
    %v237 = vrot.slane %v234, 7
    %v238 = vsel %vm218, %v237, %v232
    %v240 = vsel %vm221, %v238, 0.0
    %241 = vadd.xlane.f32.xlu0 %v240
    %v242 = vpop.xlane.xlu0 %241
    %v244 = vrot.slane %v242, 1
    %v247 = vrcp.pop %v242
    %v248 = vmul.f32 %v242, %v247
    %v249 = vsub.f32 1.0, %v248
    %v250 = vmul.f32 %v247, %v249
    %v251 = vadd.f32 %v247, %v250
    %vm252 = vweird.f32 %v242
    %vm253 = vweird.f32 %v247
    %vm254 = vmor %vm252, %vm253
    %v255 = vsel %vm254, %v247, %v251
    %v256 = vand.u32 2147483647, %v242
    %vm257 = vcmp.eq.f32.partialorder %v256, 8.507059e+37
    %v258 = vand.u32 %v242, 2147483648
    %v259 = vor.u32 1.1754944e-38, %v258
    %v260 = vsel %vm257, %v259, %v255
    %v261 = vmul.f32 %v232, %v260
    %v262 = vrcp.pop %v244
    %v263 = vmul.f32 %v244, %v262
    %v264 = vsub.f32 1.0, %v263
    %v265 = vmul.f32 %v262, %v264
    %v266 = vadd.f32 %v262, %v265
    %vm267 = vweird.f32 %v244
    %vm268 = vweird.f32 %v262
    %vm269 = vmor %vm267, %vm268
    %v270 = vsel %vm269, %v262, %v266
    %v271 = vand.u32 2147483647, %v244
    %vm272 = vcmp.eq.f32.partialorder %v271, 8.507059e+37
    %v273 = vand.u32 %v244, 2147483648
    %v274 = vor.u32 1.1754944e-38, %v273
    %v275 = vsel %vm272, %v274, %v270
    %v276 = vmul.f32 %v234, %v275
    %v277 = vmul.f32 %v261, %v131
    %v278 = vmul.f32 %v276, %v132
    %v279 = vperm.slane %v277, 0
    %v280 = vlaneseq
    %v281 = vshrl.u32 %v280, 7
    %283 = vset.pattern.permute.xlu0 %v281
    %284 = vperm.xlu0 %283, %v279
    %v285 = vpop.permute.xlu0 %284
    %v286 = vperm.slane %v278, 0
    %v287 = vlaneseq
    %v288 = vshrl.u32 %v287, 7
    %290 = vset.pattern.permute.xlu0 %v288
    %291 = vperm.xlu0 %290, %v286
    %v292 = vpop.permute.xlu0 %291
    %v293 = vmul.f32 %v285, %v135
    %v294 = vmul.f32 %v292, %v135
    %vm295 = vcmask 1043456
    %v296 = vsel %vm295, %v293, 0.0
    %v297 = vrot.slane %v296, 4
    %v298 = vadd.f32 %v296, %v297
    %v299 = vrot.slane %v298, 2
    %v300 = vadd.f32 %v298, %v299
    %v301 = vrot.slane %v300, 1
    %v302 = vadd.f32 %v300, %v301
    %v303 = vsel %vm295, %v294, 0.0
    %v304 = vrot.slane %v303, 4
    %v305 = vadd.f32 %v303, %v304
    %v306 = vrot.slane %v305, 2
    %v307 = vadd.f32 %v305, %v306
    %v308 = vrot.slane %v307, 1
    %v309 = vadd.f32 %v307, %v308
    %v311 = vsel %vm210, 0.0, 0
    %313 = vmatpush.msra.mxu0 0.0
    %314 = vmatpush.msra.mxu0 0.0
    %315 = vmatpush.msra.mxu0 0.0
    %316 = vmatpush.msra.mxu0 0.0
    %317 = vmatpush.msra.mxu0 0.0
    %318 = vmatpush.msra.mxu0 0.0
    %319 = vmatpush.msra.mxu0 0.0
    %320 = vmatpush.msra.mxu0 0.0
    %321 = vmatpush.msra.mxu0 0.0
    %322 = vmatpush.msra.mxu0 0.0
    %323 = vmatpush.msra.mxu0 0.0
    %324 = vmatpush.msra.mxu0 0.0
    %v325 = vand.u32 %v139, 4294901760
    %326 = vmatpush.msra.mxu0 %v325
    %v327 = vand.u32 %v138, 4294901760
    %328 = vmatpush.msra.mxu0 %v327
    %v329 = vand.u32 %v137, 4294901760
    %330 = vmatpush.msra.mxu0 %v329
    %v331 = vand.u32 %v136, 4294901760
    %332 = vmatpush.msra.mxu0 %v331
    %v333 = vand.u32 %v311, 4294901760
    %v334 = vsub.f32 %v311, %v333
    %v335 = vand.u32 %v334, 4294901760
    %v336 = vsub.f32 %v334, %v335
    %v337 = vand.u32 %v336, 4294901760
    %338 = vmatmul.f32.gmra.mxu0 %v337
    %v339 = vpop.f32.mrf.mxu0
    %v340 = vadd.f32 0.0, %v339
    %341 = vdwg.mxu0
    %342 = vmatpush.msra.mxu0 0.0
    %343 = vmatpush.msra.mxu0 0.0
    %344 = vmatpush.msra.mxu0 0.0
    %345 = vmatpush.msra.mxu0 0.0
    %346 = vmatpush.msra.mxu0 0.0
    %347 = vmatpush.msra.mxu0 0.0
    %348 = vmatpush.msra.mxu0 0.0
    %349 = vmatpush.msra.mxu0 0.0
    %350 = vmatpush.msra.mxu0 0.0
    %351 = vmatpush.msra.mxu0 0.0
    %352 = vmatpush.msra.mxu0 0.0
    %353 = vmatpush.msra.mxu0 0.0
    %v354 = vand.u32 %v139, 4294901760
    %v355 = vsub.f32 %v139, %v354
    %v356 = vand.u32 %v355, 4294901760
    %v357 = vsub.f32 %v355, %v356
    %v358 = vand.u32 %v357, 4294901760
    %359 = vmatpush.msra.mxu0 %v358
    %v360 = vand.u32 %v138, 4294901760
    %v361 = vsub.f32 %v138, %v360
    %v362 = vand.u32 %v361, 4294901760
    %v363 = vsub.f32 %v361, %v362
    %v364 = vand.u32 %v363, 4294901760
    %365 = vmatpush.msra.mxu0 %v364
    %v366 = vand.u32 %v137, 4294901760
    %v367 = vsub.f32 %v137, %v366
    %v368 = vand.u32 %v367, 4294901760
    %v369 = vsub.f32 %v367, %v368
    %v370 = vand.u32 %v369, 4294901760
    %371 = vmatpush.msra.mxu0 %v370
    %v372 = vand.u32 %v136, 4294901760
    %v373 = vsub.f32 %v136, %v372
    %v374 = vand.u32 %v373, 4294901760
    %v375 = vsub.f32 %v373, %v374
    %v376 = vand.u32 %v375, 4294901760
    %377 = vmatpush.msra.mxu0 %v376
    %v378 = vand.u32 %v311, 4294901760
    %379 = vmatmul.f32.gmra.mxu0 %v378
    %v380 = vpop.f32.mrf.mxu0
    %v381 = vadd.f32 %v340, %v380
    %382 = vdwg.mxu0
    %383 = vmatpush.msra.mxu0 0.0
    %384 = vmatpush.msra.mxu0 0.0
    %385 = vmatpush.msra.mxu0 0.0
    %386 = vmatpush.msra.mxu0 0.0
    %387 = vmatpush.msra.mxu0 0.0
    %388 = vmatpush.msra.mxu0 0.0
    %389 = vmatpush.msra.mxu0 0.0
    %390 = vmatpush.msra.mxu0 0.0
    %391 = vmatpush.msra.mxu0 0.0
    %392 = vmatpush.msra.mxu0 0.0
    %393 = vmatpush.msra.mxu0 0.0
    %394 = vmatpush.msra.mxu0 0.0
    %v395 = vand.u32 %v139, 4294901760
    %v396 = vsub.f32 %v139, %v395
    %397 = vmatpush.msra.mxu0 %v396
    %v398 = vand.u32 %v138, 4294901760
    %v399 = vsub.f32 %v138, %v398
    %400 = vmatpush.msra.mxu0 %v399
    %v401 = vand.u32 %v137, 4294901760
    %v402 = vsub.f32 %v137, %v401
    %403 = vmatpush.msra.mxu0 %v402
    %v404 = vand.u32 %v136, 4294901760
    %v405 = vsub.f32 %v136, %v404
    %406 = vmatpush.msra.mxu0 %v405
    %v407 = vand.u32 %v311, 4294901760
    %v408 = vsub.f32 %v311, %v407
    %409 = vmatmul.f32.gmra.mxu0 %v408
    %v410 = vpop.f32.mrf.mxu0
    %v411 = vadd.f32 %v381, %v410
    %412 = vdwg.mxu0
    %413 = vmatpush.msra.mxu0 0.0
    %414 = vmatpush.msra.mxu0 0.0
    %415 = vmatpush.msra.mxu0 0.0
    %416 = vmatpush.msra.mxu0 0.0
    %417 = vmatpush.msra.mxu0 0.0
    %418 = vmatpush.msra.mxu0 0.0
    %419 = vmatpush.msra.mxu0 0.0
    %420 = vmatpush.msra.mxu0 0.0
    %421 = vmatpush.msra.mxu0 0.0
    %422 = vmatpush.msra.mxu0 0.0
    %423 = vmatpush.msra.mxu0 0.0
    %424 = vmatpush.msra.mxu0 0.0
    %v425 = vand.u32 %v139, 4294901760
    %426 = vmatpush.msra.mxu0 %v425
    %v427 = vand.u32 %v138, 4294901760
    %428 = vmatpush.msra.mxu0 %v427
    %v429 = vand.u32 %v137, 4294901760
    %430 = vmatpush.msra.mxu0 %v429
    %v431 = vand.u32 %v136, 4294901760
    %432 = vmatpush.msra.mxu0 %v431
    %v433 = vand.u32 %v311, 4294901760
    %v434 = vsub.f32 %v311, %v433
    %v435 = vand.u32 %v434, 4294901760
    %436 = vmatmul.f32.gmra.mxu0 %v435
    %v437 = vpop.f32.mrf.mxu0
    %v438 = vadd.f32 %v411, %v437
    %439 = vdwg.mxu0
    %440 = vmatpush.msra.mxu0 0.0
    %441 = vmatpush.msra.mxu0 0.0
    %442 = vmatpush.msra.mxu0 0.0
    %443 = vmatpush.msra.mxu0 0.0
    %444 = vmatpush.msra.mxu0 0.0
    %445 = vmatpush.msra.mxu0 0.0
    %446 = vmatpush.msra.mxu0 0.0
    %447 = vmatpush.msra.mxu0 0.0
    %448 = vmatpush.msra.mxu0 0.0
    %449 = vmatpush.msra.mxu0 0.0
    %450 = vmatpush.msra.mxu0 0.0
    %451 = vmatpush.msra.mxu0 0.0
    %v452 = vand.u32 %v139, 4294901760
    %v453 = vsub.f32 %v139, %v452
    %v454 = vand.u32 %v453, 4294901760
    %455 = vmatpush.msra.mxu0 %v454
    %v456 = vand.u32 %v138, 4294901760
    %v457 = vsub.f32 %v138, %v456
    %v458 = vand.u32 %v457, 4294901760
    %459 = vmatpush.msra.mxu0 %v458
    %v460 = vand.u32 %v137, 4294901760
    %v461 = vsub.f32 %v137, %v460
    %v462 = vand.u32 %v461, 4294901760
    %463 = vmatpush.msra.mxu0 %v462
    %v464 = vand.u32 %v136, 4294901760
    %v465 = vsub.f32 %v136, %v464
    %v466 = vand.u32 %v465, 4294901760
    %467 = vmatpush.msra.mxu0 %v466
    %v468 = vand.u32 %v311, 4294901760
    %469 = vmatmul.f32.gmra.mxu0 %v468
    %v470 = vpop.f32.mrf.mxu0
    %v471 = vadd.f32 %v438, %v470
    %472 = vdwg.mxu0
    %473 = vmatpush.msra.mxu0 0.0
    %474 = vmatpush.msra.mxu0 0.0
    %475 = vmatpush.msra.mxu0 0.0
    %476 = vmatpush.msra.mxu0 0.0
    %477 = vmatpush.msra.mxu0 0.0
    %478 = vmatpush.msra.mxu0 0.0
    %479 = vmatpush.msra.mxu0 0.0
    %480 = vmatpush.msra.mxu0 0.0
    %481 = vmatpush.msra.mxu0 0.0
    %482 = vmatpush.msra.mxu0 0.0
    %483 = vmatpush.msra.mxu0 0.0
    %484 = vmatpush.msra.mxu0 0.0
    %v485 = vand.u32 %v139, 4294901760
    %486 = vmatpush.msra.mxu0 %v485
    %v487 = vand.u32 %v138, 4294901760
    %488 = vmatpush.msra.mxu0 %v487
    %v489 = vand.u32 %v137, 4294901760
    %490 = vmatpush.msra.mxu0 %v489
    %v491 = vand.u32 %v136, 4294901760
    %492 = vmatpush.msra.mxu0 %v491
    %v493 = vand.u32 %v311, 4294901760
    %494 = vmatmul.f32.gmra.mxu0 %v493
    %v495 = vpop.f32.mrf.mxu0
    %v496 = vadd.f32 %v471, %v495
    %497 = vdwg.mxu0
    %v499 = vrot.slane %v496, 1
    %v502 = vadd.f32 %v302, %v496
    %v503 = vadd.f32 %v309, %v499
    %v505 = vperm.slane %v140, 0
    %v507 = vadd.f32 %v502, %v505
    %v508 = vadd.f32 %v503, %v505
    %v509 = vmul.f32 %v507, 0.5
    %v510 = vmul.f32 %v508, 0.5
    %v511 = vtanh.pop %v509
    %v512 = vtanh.pop %v510
    %v513 = vmul.f32 %v511, 0.5
    %v514 = vmul.f32 %v512, 0.5
    %v515 = vadd.f32 %v513, 0.5
    %v516 = vadd.f32 %v514, 0.5
    %v517 = vtanh.pop %v507
    %v518 = vtanh.pop %v508
    %v519 = vmul.f32 %v515, 0.0
    %v520 = vmul.f32 %v516, 0.0
    %523 = vrot.lane.b32.xlu0 %v517, 64
    %v524 = vpop.permute.xlu0 %523
    %525 = vrot.lane.b32.xlu0 %v518, 64
    %v526 = vpop.permute.xlu0 %525
    %v529 = vmul.f32 %v515, %v524
    %v530 = vmul.f32 %v516, %v526
    %533 = vrot.lane.b32.xlu0 %v529, 32
    %v534 = vpop.permute.xlu0 %533
    %535 = vrot.lane.b32.xlu0 %v530, 32
    %v536 = vpop.permute.xlu0 %535
    %v539 = vadd.f32 %v519, %v534
    %v540 = vadd.f32 %v520, %v536
    %v541 = vtanh.pop %v539
    %v542 = vtanh.pop %v540
    %545 = vrot.lane.b32.xlu0 %v541, 64
    %v546 = vpop.permute.xlu0 %545
    %547 = vrot.lane.b32.xlu0 %v542, 64
    %v548 = vpop.permute.xlu0 %547
    %v551 = vmul.f32 %v515, %v546
    %v552 = vmul.f32 %v516, %v548
    %vm553 = vcmp.eq.s32.totalorder %v200, 0
    %v554 = vsel %vm553, 1, 0
    %vm555 = vcmp.eq.s32.totalorder %v554, 1
    %v556 = vperm.slane %v551, 0
    %v557 = vperm.slane %v552, 0
    %v558 = vsel %vm555, %v556, 0.0
    %v559 = vsel %vm555, %v557, 0.0
    %v560 = vadd.f32 %v558, 0.0
    %v561 = vadd.f32 %v559, 0.0
    %562 = vrot.lane.b32.xlu0 %v202, 96
    %v563 = vpop.permute.xlu0 %562
    %v565 = vmul.f32 %v551, %v563
    %v566 = vmul.f32 %v552, %v563
    %567 = vrot.lane.b32.xlu0 %v206, 32
    %v568 = vpop.permute.xlu0 %567
    %v570 = vmul.f32 %v539, %v568
    %v571 = vmul.f32 %v540, %v568
    %574 = vrot.lane.b32.xlu0 %v570, 64
    %v575 = vpop.permute.xlu0 %574
    %576 = vrot.lane.b32.xlu0 %v571, 64
    %v577 = vpop.permute.xlu0 %576
    %v580 = vadd.f32 %v565, %v575
    %v581 = vadd.f32 %v566, %v577
    %v584 = vrot.slane %v581, 7
    %v585 = vsel %vm218, %v584, %v580
    %586 = vrot.lane.b32.xlu0 %v585, 32
    %v587 = vpop.permute.xlu0 %586
    %vm589 = vcmask 254976
    %v590 = vsel %vm589, %v587, 0.0
    %591 = vadd.xlane.f32.xlu0 %v590
    %v592 = vpop.xlane.xlu0 %591
    %v595 = vsel %vm218, %v198, %v197
    %v597 = vadd.f32 %v592, %v595
    %v598 = vsel %vm221, %v597, -inf
    %599 = vmax.xlane.f32.xlu0 %v598
    %v600 = vpop.xlane.xlu0 %599
    %v601 = vsub.f32 %v597, %v600
    %v602 = vmul.f32 %v601, 1.442695
    %v603 = vpow.pop %v602
    %v604 = vsel %vm221, %v603, 0.0
    %605 = vadd.xlane.f32.xlu0 %v604
    %v606 = vpop.xlane.xlu0 %605
    %v607 = vrcp.pop %v606
    %v608 = vmul.f32 %v606, %v607
    %v609 = vsub.f32 1.0, %v608
    %v610 = vmul.f32 %v607, %v609
    %v611 = vadd.f32 %v607, %v610
    %vm612 = vweird.f32 %v606
    %vm613 = vweird.f32 %v607
    %vm614 = vmor %vm612, %vm613
    %v615 = vsel %vm614, %v607, %v611
    %v616 = vand.u32 2147483647, %v606
    %vm617 = vcmp.eq.f32.partialorder %v616, 8.507059e+37
    %v618 = vand.u32 %v606, 2147483648
    %v619 = vor.u32 1.1754944e-38, %v618
    %v620 = vsel %vm617, %v619, %v615
    %v621 = vmul.f32 %v603, %v620
    %v624 = vrot.slane %v131, 1
    %v625 = vsel %vm218, %v132, %v624
    %v627 = vmul.f32 %v621, %v625
    %v628 = vperm.slane %v627, 0
    %v629 = vlaneseq
    %v630 = vshrl.u32 %v629, 7
    %632 = vset.pattern.permute.xlu0 %v630
    %633 = vperm.xlu0 %632, %v628
    %v634 = vpop.permute.xlu0 %633
    %v635 = vperm.slane %v627, 1
    %v636 = vlaneseq
    %v637 = vshrl.u32 %v636, 7
    %639 = vset.pattern.permute.xlu0 %v637
    %640 = vperm.xlu0 %639, %v635
    %v641 = vpop.permute.xlu0 %640
    %v642 = vmul.f32 %v634, %v135
    %v643 = vmul.f32 %v641, %v135
    %v644 = vsel %vm295, %v642, 0.0
    %v645 = vrot.slane %v644, 4
    %v646 = vadd.f32 %v644, %v645
    %v647 = vrot.slane %v646, 2
    %v648 = vadd.f32 %v646, %v647
    %v649 = vrot.slane %v648, 1
    %v650 = vadd.f32 %v648, %v649
    %v651 = vsel %vm295, %v643, 0.0
    %v652 = vrot.slane %v651, 4
    %v653 = vadd.f32 %v651, %v652
    %v654 = vrot.slane %v653, 2
    %v655 = vadd.f32 %v653, %v654
    %v656 = vrot.slane %v655, 1
    %v657 = vadd.f32 %v655, %v656
    %v660 = vrot.slane %v552, 7
    %v661 = vsel %vm218, %v660, %v551
    %662 = vrot.lane.b32.xlu0 %v661, 32
    %v663 = vpop.permute.xlu0 %662
    %v664 = vsel %vm210, %v663, 0
    %666 = vmatpush.msra.mxu0 0.0
    %667 = vmatpush.msra.mxu0 0.0
    %668 = vmatpush.msra.mxu0 0.0
    %669 = vmatpush.msra.mxu0 0.0
    %670 = vmatpush.msra.mxu0 0.0
    %671 = vmatpush.msra.mxu0 0.0
    %672 = vmatpush.msra.mxu0 0.0
    %673 = vmatpush.msra.mxu0 0.0
    %674 = vmatpush.msra.mxu0 0.0
    %675 = vmatpush.msra.mxu0 0.0
    %676 = vmatpush.msra.mxu0 0.0
    %677 = vmatpush.msra.mxu0 0.0
    %v678 = vand.u32 %v139, 4294901760
    %679 = vmatpush.msra.mxu0 %v678
    %v680 = vand.u32 %v138, 4294901760
    %681 = vmatpush.msra.mxu0 %v680
    %v682 = vand.u32 %v137, 4294901760
    %683 = vmatpush.msra.mxu0 %v682
    %v684 = vand.u32 %v136, 4294901760
    %685 = vmatpush.msra.mxu0 %v684
    %v686 = vand.u32 %v664, 4294901760
    %v687 = vsub.f32 %v664, %v686
    %v688 = vand.u32 %v687, 4294901760
    %v689 = vsub.f32 %v687, %v688
    %v690 = vand.u32 %v689, 4294901760
    %691 = vmatmul.f32.gmra.mxu0 %v690
    %v692 = vpop.f32.mrf.mxu0
    %v693 = vadd.f32 0.0, %v692
    %694 = vdwg.mxu0
    %695 = vmatpush.msra.mxu0 0.0
    %696 = vmatpush.msra.mxu0 0.0
    %697 = vmatpush.msra.mxu0 0.0
    %698 = vmatpush.msra.mxu0 0.0
    %699 = vmatpush.msra.mxu0 0.0
    %700 = vmatpush.msra.mxu0 0.0
    %701 = vmatpush.msra.mxu0 0.0
    %702 = vmatpush.msra.mxu0 0.0
    %703 = vmatpush.msra.mxu0 0.0
    %704 = vmatpush.msra.mxu0 0.0
    %705 = vmatpush.msra.mxu0 0.0
    %706 = vmatpush.msra.mxu0 0.0
    %v707 = vand.u32 %v139, 4294901760
    %v708 = vsub.f32 %v139, %v707
    %v709 = vand.u32 %v708, 4294901760
    %v710 = vsub.f32 %v708, %v709
    %v711 = vand.u32 %v710, 4294901760
    %712 = vmatpush.msra.mxu0 %v711
    %v713 = vand.u32 %v138, 4294901760
    %v714 = vsub.f32 %v138, %v713
    %v715 = vand.u32 %v714, 4294901760
    %v716 = vsub.f32 %v714, %v715
    %v717 = vand.u32 %v716, 4294901760
    %718 = vmatpush.msra.mxu0 %v717
    %v719 = vand.u32 %v137, 4294901760
    %v720 = vsub.f32 %v137, %v719
    %v721 = vand.u32 %v720, 4294901760
    %v722 = vsub.f32 %v720, %v721
    %v723 = vand.u32 %v722, 4294901760
    %724 = vmatpush.msra.mxu0 %v723
    %v725 = vand.u32 %v136, 4294901760
    %v726 = vsub.f32 %v136, %v725
    %v727 = vand.u32 %v726, 4294901760
    %v728 = vsub.f32 %v726, %v727
    %v729 = vand.u32 %v728, 4294901760
    %730 = vmatpush.msra.mxu0 %v729
    %v731 = vand.u32 %v664, 4294901760
    %732 = vmatmul.f32.gmra.mxu0 %v731
    %v733 = vpop.f32.mrf.mxu0
    %v734 = vadd.f32 %v693, %v733
    %735 = vdwg.mxu0
    %736 = vmatpush.msra.mxu0 0.0
    %737 = vmatpush.msra.mxu0 0.0
    %738 = vmatpush.msra.mxu0 0.0
    %739 = vmatpush.msra.mxu0 0.0
    %740 = vmatpush.msra.mxu0 0.0
    %741 = vmatpush.msra.mxu0 0.0
    %742 = vmatpush.msra.mxu0 0.0
    %743 = vmatpush.msra.mxu0 0.0
    %744 = vmatpush.msra.mxu0 0.0
    %745 = vmatpush.msra.mxu0 0.0
    %746 = vmatpush.msra.mxu0 0.0
    %747 = vmatpush.msra.mxu0 0.0
    %v748 = vand.u32 %v139, 4294901760
    %v749 = vsub.f32 %v139, %v748
    %750 = vmatpush.msra.mxu0 %v749
    %v751 = vand.u32 %v138, 4294901760
    %v752 = vsub.f32 %v138, %v751
    %753 = vmatpush.msra.mxu0 %v752
    %v754 = vand.u32 %v137, 4294901760
    %v755 = vsub.f32 %v137, %v754
    %756 = vmatpush.msra.mxu0 %v755
    %v757 = vand.u32 %v136, 4294901760
    %v758 = vsub.f32 %v136, %v757
    %759 = vmatpush.msra.mxu0 %v758
    %v760 = vand.u32 %v664, 4294901760
    %v761 = vsub.f32 %v664, %v760
    %762 = vmatmul.f32.gmra.mxu0 %v761
    %v763 = vpop.f32.mrf.mxu0
    %v764 = vadd.f32 %v734, %v763
    %765 = vdwg.mxu0
    %766 = vmatpush.msra.mxu0 0.0
    %767 = vmatpush.msra.mxu0 0.0
    %768 = vmatpush.msra.mxu0 0.0
    %769 = vmatpush.msra.mxu0 0.0
    %770 = vmatpush.msra.mxu0 0.0
    %771 = vmatpush.msra.mxu0 0.0
    %772 = vmatpush.msra.mxu0 0.0
    %773 = vmatpush.msra.mxu0 0.0
    %774 = vmatpush.msra.mxu0 0.0
    %775 = vmatpush.msra.mxu0 0.0
    %776 = vmatpush.msra.mxu0 0.0
    %777 = vmatpush.msra.mxu0 0.0
    %v778 = vand.u32 %v139, 4294901760
    %779 = vmatpush.msra.mxu0 %v778
    %v780 = vand.u32 %v138, 4294901760
    %781 = vmatpush.msra.mxu0 %v780
    %v782 = vand.u32 %v137, 4294901760
    %783 = vmatpush.msra.mxu0 %v782
    %v784 = vand.u32 %v136, 4294901760
    %785 = vmatpush.msra.mxu0 %v784
    %v786 = vand.u32 %v664, 4294901760
    %v787 = vsub.f32 %v664, %v786
    %v788 = vand.u32 %v787, 4294901760
    %789 = vmatmul.f32.gmra.mxu0 %v788
    %v790 = vpop.f32.mrf.mxu0
    %v791 = vadd.f32 %v764, %v790
    %792 = vdwg.mxu0
    %793 = vmatpush.msra.mxu0 0.0
    %794 = vmatpush.msra.mxu0 0.0
    %795 = vmatpush.msra.mxu0 0.0
    %796 = vmatpush.msra.mxu0 0.0
    %797 = vmatpush.msra.mxu0 0.0
    %798 = vmatpush.msra.mxu0 0.0
    %799 = vmatpush.msra.mxu0 0.0
    %800 = vmatpush.msra.mxu0 0.0
    %801 = vmatpush.msra.mxu0 0.0
    %802 = vmatpush.msra.mxu0 0.0
    %803 = vmatpush.msra.mxu0 0.0
    %804 = vmatpush.msra.mxu0 0.0
    %v805 = vand.u32 %v139, 4294901760
    %v806 = vsub.f32 %v139, %v805
    %v807 = vand.u32 %v806, 4294901760
    %808 = vmatpush.msra.mxu0 %v807
    %v809 = vand.u32 %v138, 4294901760
    %v810 = vsub.f32 %v138, %v809
    %v811 = vand.u32 %v810, 4294901760
    %812 = vmatpush.msra.mxu0 %v811
    %v813 = vand.u32 %v137, 4294901760
    %v814 = vsub.f32 %v137, %v813
    %v815 = vand.u32 %v814, 4294901760
    %816 = vmatpush.msra.mxu0 %v815
    %v817 = vand.u32 %v136, 4294901760
    %v818 = vsub.f32 %v136, %v817
    %v819 = vand.u32 %v818, 4294901760
    %820 = vmatpush.msra.mxu0 %v819
    %v821 = vand.u32 %v664, 4294901760
    %822 = vmatmul.f32.gmra.mxu0 %v821
    %v823 = vpop.f32.mrf.mxu0
    %v824 = vadd.f32 %v791, %v823
    %825 = vdwg.mxu0
    %826 = vmatpush.msra.mxu0 0.0
    %827 = vmatpush.msra.mxu0 0.0
    %828 = vmatpush.msra.mxu0 0.0
    %829 = vmatpush.msra.mxu0 0.0
    %830 = vmatpush.msra.mxu0 0.0
    %831 = vmatpush.msra.mxu0 0.0
    %832 = vmatpush.msra.mxu0 0.0
    %833 = vmatpush.msra.mxu0 0.0
    %834 = vmatpush.msra.mxu0 0.0
    %835 = vmatpush.msra.mxu0 0.0
    %836 = vmatpush.msra.mxu0 0.0
    %837 = vmatpush.msra.mxu0 0.0
    %v838 = vand.u32 %v139, 4294901760
    %839 = vmatpush.msra.mxu0 %v838
    %v840 = vand.u32 %v138, 4294901760
    %841 = vmatpush.msra.mxu0 %v840
    %v842 = vand.u32 %v137, 4294901760
    %843 = vmatpush.msra.mxu0 %v842
    %v844 = vand.u32 %v136, 4294901760
    %845 = vmatpush.msra.mxu0 %v844
    %v846 = vand.u32 %v664, 4294901760
    %847 = vmatmul.f32.gmra.mxu0 %v846
    %v848 = vpop.f32.mrf.mxu0
    %v849 = vadd.f32 %v824, %v848
    %850 = vdwg.mxu0
    %v852 = vrot.slane %v849, 1
    %v855 = vadd.f32 %v650, %v849
    %v856 = vadd.f32 %v657, %v852
    %v857 = vadd.f32 %v855, %v505
    %v858 = vadd.f32 %v856, %v505
    %v859 = vmul.f32 %v857, 0.5
    %v860 = vmul.f32 %v858, 0.5
    %v861 = vtanh.pop %v859
    %v862 = vtanh.pop %v860
    %v863 = vmul.f32 %v861, 0.5
    %v864 = vmul.f32 %v862, 0.5
    %v865 = vadd.f32 %v863, 0.5
    %v866 = vadd.f32 %v864, 0.5
    %v867 = vtanh.pop %v857
    %v868 = vtanh.pop %v858
    %v869 = vmul.f32 %v865, %v539
    %v870 = vmul.f32 %v866, %v540
    %873 = vrot.lane.b32.xlu0 %v867, 64
    %v874 = vpop.permute.xlu0 %873
    %875 = vrot.lane.b32.xlu0 %v868, 64
    %v876 = vpop.permute.xlu0 %875
    %v879 = vmul.f32 %v865, %v874
    %v880 = vmul.f32 %v866, %v876
    %883 = vrot.lane.b32.xlu0 %v879, 32
    %v884 = vpop.permute.xlu0 %883
    %885 = vrot.lane.b32.xlu0 %v880, 32
    %v886 = vpop.permute.xlu0 %885
    %v889 = vadd.f32 %v869, %v884
    %v890 = vadd.f32 %v870, %v886
    %v891 = vtanh.pop %v889
    %v892 = vtanh.pop %v890
    %895 = vrot.lane.b32.xlu0 %v891, 64
    %v896 = vpop.permute.xlu0 %895
    %897 = vrot.lane.b32.xlu0 %v892, 64
    %v898 = vpop.permute.xlu0 %897
    %v901 = vmul.f32 %v865, %v896
    %v902 = vmul.f32 %v866, %v898
    %vm903 = vcmp.eq.s32.totalorder %v200, 1
    %v904 = vsel %vm903, 1, 0
    %vm905 = vcmp.eq.s32.totalorder %v904, 1
    %v906 = vperm.slane %v901, 0
    %v907 = vperm.slane %v902, 0
    %v908 = vsel %vm905, %v906, 0.0
    %v909 = vsel %vm905, %v907, 0.0
    %v910 = vadd.f32 %v560, %v908
    %v911 = vadd.f32 %v561, %v909
    %v912 = vmul.f32 %v901, %v563
    %v913 = vmul.f32 %v902, %v563
    %v914 = vmul.f32 %v889, %v568
    %v915 = vmul.f32 %v890, %v568
    %918 = vrot.lane.b32.xlu0 %v914, 64
    %v919 = vpop.permute.xlu0 %918
    %920 = vrot.lane.b32.xlu0 %v915, 64
    %v921 = vpop.permute.xlu0 %920
    %v924 = vadd.f32 %v912, %v919
    %v925 = vadd.f32 %v913, %v921
    %v928 = vrot.slane %v925, 7
    %v929 = vsel %vm218, %v928, %v924
    %930 = vrot.lane.b32.xlu0 %v929, 32
    %v931 = vpop.permute.xlu0 %930
    %v933 = vsel %vm589, %v931, 0.0
    %934 = vadd.xlane.f32.xlu0 %v933
    %v935 = vpop.xlane.xlu0 %934
    %v936 = vadd.f32 %v935, %v595
    %v937 = vsel %vm221, %v936, -inf
    %938 = vmax.xlane.f32.xlu0 %v937
    %v939 = vpop.xlane.xlu0 %938
    %v940 = vsub.f32 %v936, %v939
    %v941 = vmul.f32 %v940, 1.442695
    %v942 = vpow.pop %v941
    %v943 = vsel %vm221, %v942, 0.0
    %944 = vadd.xlane.f32.xlu0 %v943
    %v945 = vpop.xlane.xlu0 %944
    %v946 = vrcp.pop %v945
    %v947 = vmul.f32 %v945, %v946
    %v948 = vsub.f32 1.0, %v947
    %v949 = vmul.f32 %v946, %v948
    %v950 = vadd.f32 %v946, %v949
    %vm951 = vweird.f32 %v945
    %vm952 = vweird.f32 %v946
    %vm953 = vmor %vm951, %vm952
    %v954 = vsel %vm953, %v946, %v950
    %v955 = vand.u32 2147483647, %v945
    %vm956 = vcmp.eq.f32.partialorder %v955, 8.507059e+37
    %v957 = vand.u32 %v945, 2147483648
    %v958 = vor.u32 1.1754944e-38, %v957
    %v959 = vsel %vm956, %v958, %v954
    %v960 = vmul.f32 %v942, %v959
    %v961 = vrot.slane %v131, 2
    %v962 = vrot.slane %v132, 1
    %v963 = vsel %vm218, %v962, %v961
    %v965 = vmul.f32 %v960, %v963
    %v966 = vperm.slane %v965, 0
    %v967 = vlaneseq
    %v968 = vshrl.u32 %v967, 7
    %970 = vset.pattern.permute.xlu0 %v968
    %971 = vperm.xlu0 %970, %v966
    %v972 = vpop.permute.xlu0 %971
    %v973 = vperm.slane %v965, 1
    %v974 = vlaneseq
    %v975 = vshrl.u32 %v974, 7
    %977 = vset.pattern.permute.xlu0 %v975
    %978 = vperm.xlu0 %977, %v973
    %v979 = vpop.permute.xlu0 %978
    %v980 = vmul.f32 %v972, %v135
    %v981 = vmul.f32 %v979, %v135
    %v982 = vsel %vm295, %v980, 0.0
    %v983 = vrot.slane %v982, 4
    %v984 = vadd.f32 %v982, %v983
    %v985 = vrot.slane %v984, 2
    %v986 = vadd.f32 %v984, %v985
    %v987 = vrot.slane %v986, 1
    %v988 = vadd.f32 %v986, %v987
    %v989 = vsel %vm295, %v981, 0.0
    %v990 = vrot.slane %v989, 4
    %v991 = vadd.f32 %v989, %v990
    %v992 = vrot.slane %v991, 2
    %v993 = vadd.f32 %v991, %v992
    %v994 = vrot.slane %v993, 1
    %v995 = vadd.f32 %v993, %v994
    %v998 = vrot.slane %v902, 7
    %v999 = vsel %vm218, %v998, %v901
    %1000 = vrot.lane.b32.xlu0 %v999, 32
    %v1001 = vpop.permute.xlu0 %1000
    %v1002 = vsel %vm210, %v1001, 0
    %1004 = vmatpush.msra.mxu0 0.0
    %1005 = vmatpush.msra.mxu0 0.0
    %1006 = vmatpush.msra.mxu0 0.0
    %1007 = vmatpush.msra.mxu0 0.0
    %1008 = vmatpush.msra.mxu0 0.0
    %1009 = vmatpush.msra.mxu0 0.0
    %1010 = vmatpush.msra.mxu0 0.0
    %1011 = vmatpush.msra.mxu0 0.0
    %1012 = vmatpush.msra.mxu0 0.0
    %1013 = vmatpush.msra.mxu0 0.0
    %1014 = vmatpush.msra.mxu0 0.0
    %1015 = vmatpush.msra.mxu0 0.0
    %v1016 = vand.u32 %v139, 4294901760
    %1017 = vmatpush.msra.mxu0 %v1016
    %v1018 = vand.u32 %v138, 4294901760
    %1019 = vmatpush.msra.mxu0 %v1018
    %v1020 = vand.u32 %v137, 4294901760
    %1021 = vmatpush.msra.mxu0 %v1020
    %v1022 = vand.u32 %v136, 4294901760
    %1023 = vmatpush.msra.mxu0 %v1022
    %v1024 = vand.u32 %v1002, 4294901760
    %v1025 = vsub.f32 %v1002, %v1024
    %v1026 = vand.u32 %v1025, 4294901760
    %v1027 = vsub.f32 %v1025, %v1026
    %v1028 = vand.u32 %v1027, 4294901760
    %1029 = vmatmul.f32.gmra.mxu0 %v1028
    %v1030 = vpop.f32.mrf.mxu0
    %v1031 = vadd.f32 0.0, %v1030
    %1032 = vdwg.mxu0
    %1033 = vmatpush.msra.mxu0 0.0
    %1034 = vmatpush.msra.mxu0 0.0
    %1035 = vmatpush.msra.mxu0 0.0
    %1036 = vmatpush.msra.mxu0 0.0
    %1037 = vmatpush.msra.mxu0 0.0
    %1038 = vmatpush.msra.mxu0 0.0
    %1039 = vmatpush.msra.mxu0 0.0
    %1040 = vmatpush.msra.mxu0 0.0
    %1041 = vmatpush.msra.mxu0 0.0
    %1042 = vmatpush.msra.mxu0 0.0
    %1043 = vmatpush.msra.mxu0 0.0
    %1044 = vmatpush.msra.mxu0 0.0
    %v1045 = vand.u32 %v139, 4294901760
    %v1046 = vsub.f32 %v139, %v1045
    %v1047 = vand.u32 %v1046, 4294901760
    %v1048 = vsub.f32 %v1046, %v1047
    %v1049 = vand.u32 %v1048, 4294901760
    %1050 = vmatpush.msra.mxu0 %v1049
    %v1051 = vand.u32 %v138, 4294901760
    %v1052 = vsub.f32 %v138, %v1051
    %v1053 = vand.u32 %v1052, 4294901760
    %v1054 = vsub.f32 %v1052, %v1053
    %v1055 = vand.u32 %v1054, 4294901760
    %1056 = vmatpush.msra.mxu0 %v1055
    %v1057 = vand.u32 %v137, 4294901760
    %v1058 = vsub.f32 %v137, %v1057
    %v1059 = vand.u32 %v1058, 4294901760
    %v1060 = vsub.f32 %v1058, %v1059
    %v1061 = vand.u32 %v1060, 4294901760
    %1062 = vmatpush.msra.mxu0 %v1061
    %v1063 = vand.u32 %v136, 4294901760
    %v1064 = vsub.f32 %v136, %v1063
    %v1065 = vand.u32 %v1064, 4294901760
    %v1066 = vsub.f32 %v1064, %v1065
    %v1067 = vand.u32 %v1066, 4294901760
    %1068 = vmatpush.msra.mxu0 %v1067
    %v1069 = vand.u32 %v1002, 4294901760
    %1070 = vmatmul.f32.gmra.mxu0 %v1069
    %v1071 = vpop.f32.mrf.mxu0
    %v1072 = vadd.f32 %v1031, %v1071
    %1073 = vdwg.mxu0
    %1074 = vmatpush.msra.mxu0 0.0
    %1075 = vmatpush.msra.mxu0 0.0
    %1076 = vmatpush.msra.mxu0 0.0
    %1077 = vmatpush.msra.mxu0 0.0
    %1078 = vmatpush.msra.mxu0 0.0
    %1079 = vmatpush.msra.mxu0 0.0
    %1080 = vmatpush.msra.mxu0 0.0
    %1081 = vmatpush.msra.mxu0 0.0
    %1082 = vmatpush.msra.mxu0 0.0
    %1083 = vmatpush.msra.mxu0 0.0
    %1084 = vmatpush.msra.mxu0 0.0
    %1085 = vmatpush.msra.mxu0 0.0
    %v1086 = vand.u32 %v139, 4294901760
    %v1087 = vsub.f32 %v139, %v1086
    %1088 = vmatpush.msra.mxu0 %v1087
    %v1089 = vand.u32 %v138, 4294901760
    %v1090 = vsub.f32 %v138, %v1089
    %1091 = vmatpush.msra.mxu0 %v1090
    %v1092 = vand.u32 %v137, 4294901760
    %v1093 = vsub.f32 %v137, %v1092
    %1094 = vmatpush.msra.mxu0 %v1093
    %v1095 = vand.u32 %v136, 4294901760
    %v1096 = vsub.f32 %v136, %v1095
    %1097 = vmatpush.msra.mxu0 %v1096
    %v1098 = vand.u32 %v1002, 4294901760
    %v1099 = vsub.f32 %v1002, %v1098
    %1100 = vmatmul.f32.gmra.mxu0 %v1099
    %v1101 = vpop.f32.mrf.mxu0
    %v1102 = vadd.f32 %v1072, %v1101
    %1103 = vdwg.mxu0
    %1104 = vmatpush.msra.mxu0 0.0
    %1105 = vmatpush.msra.mxu0 0.0
    %1106 = vmatpush.msra.mxu0 0.0
    %1107 = vmatpush.msra.mxu0 0.0
    %1108 = vmatpush.msra.mxu0 0.0
    %1109 = vmatpush.msra.mxu0 0.0
    %1110 = vmatpush.msra.mxu0 0.0
    %1111 = vmatpush.msra.mxu0 0.0
    %1112 = vmatpush.msra.mxu0 0.0
    %1113 = vmatpush.msra.mxu0 0.0
    %1114 = vmatpush.msra.mxu0 0.0
    %1115 = vmatpush.msra.mxu0 0.0
    %v1116 = vand.u32 %v139, 4294901760
    %1117 = vmatpush.msra.mxu0 %v1116
    %v1118 = vand.u32 %v138, 4294901760
    %1119 = vmatpush.msra.mxu0 %v1118
    %v1120 = vand.u32 %v137, 4294901760
    %1121 = vmatpush.msra.mxu0 %v1120
    %v1122 = vand.u32 %v136, 4294901760
    %1123 = vmatpush.msra.mxu0 %v1122
    %v1124 = vand.u32 %v1002, 4294901760
    %v1125 = vsub.f32 %v1002, %v1124
    %v1126 = vand.u32 %v1125, 4294901760
    %1127 = vmatmul.f32.gmra.mxu0 %v1126
    %v1128 = vpop.f32.mrf.mxu0
    %v1129 = vadd.f32 %v1102, %v1128
    %1130 = vdwg.mxu0
    %1131 = vmatpush.msra.mxu0 0.0
    %1132 = vmatpush.msra.mxu0 0.0
    %1133 = vmatpush.msra.mxu0 0.0
    %1134 = vmatpush.msra.mxu0 0.0
    %1135 = vmatpush.msra.mxu0 0.0
    %1136 = vmatpush.msra.mxu0 0.0
    %1137 = vmatpush.msra.mxu0 0.0
    %1138 = vmatpush.msra.mxu0 0.0
    %1139 = vmatpush.msra.mxu0 0.0
    %1140 = vmatpush.msra.mxu0 0.0
    %1141 = vmatpush.msra.mxu0 0.0
    %1142 = vmatpush.msra.mxu0 0.0
    %v1143 = vand.u32 %v139, 4294901760
    %v1144 = vsub.f32 %v139, %v1143
    %v1145 = vand.u32 %v1144, 4294901760
    %1146 = vmatpush.msra.mxu0 %v1145
    %v1147 = vand.u32 %v138, 4294901760
    %v1148 = vsub.f32 %v138, %v1147
    %v1149 = vand.u32 %v1148, 4294901760
    %1150 = vmatpush.msra.mxu0 %v1149
    %v1151 = vand.u32 %v137, 4294901760
    %v1152 = vsub.f32 %v137, %v1151
    %v1153 = vand.u32 %v1152, 4294901760
    %1154 = vmatpush.msra.mxu0 %v1153
    %v1155 = vand.u32 %v136, 4294901760
    %v1156 = vsub.f32 %v136, %v1155
    %v1157 = vand.u32 %v1156, 4294901760
    %1158 = vmatpush.msra.mxu0 %v1157
    %v1159 = vand.u32 %v1002, 4294901760
    %1160 = vmatmul.f32.gmra.mxu0 %v1159
    %v1161 = vpop.f32.mrf.mxu0
    %v1162 = vadd.f32 %v1129, %v1161
    %1163 = vdwg.mxu0
    %1164 = vmatpush.msra.mxu0 0.0
    %1165 = vmatpush.msra.mxu0 0.0
    %1166 = vmatpush.msra.mxu0 0.0
    %1167 = vmatpush.msra.mxu0 0.0
    %1168 = vmatpush.msra.mxu0 0.0
    %1169 = vmatpush.msra.mxu0 0.0
    %1170 = vmatpush.msra.mxu0 0.0
    %1171 = vmatpush.msra.mxu0 0.0
    %1172 = vmatpush.msra.mxu0 0.0
    %1173 = vmatpush.msra.mxu0 0.0
    %1174 = vmatpush.msra.mxu0 0.0
    %1175 = vmatpush.msra.mxu0 0.0
    %v1176 = vand.u32 %v139, 4294901760
    %1177 = vmatpush.msra.mxu0 %v1176
    %v1178 = vand.u32 %v138, 4294901760
    %1179 = vmatpush.msra.mxu0 %v1178
    %v1180 = vand.u32 %v137, 4294901760
    %1181 = vmatpush.msra.mxu0 %v1180
    %v1182 = vand.u32 %v136, 4294901760
    %1183 = vmatpush.msra.mxu0 %v1182
    %v1184 = vand.u32 %v1002, 4294901760
    %1185 = vmatmul.f32.gmra.mxu0 %v1184
    %v1186 = vpop.f32.mrf.mxu0
    %v1187 = vadd.f32 %v1162, %v1186
    %1188 = vdwg.mxu0
    %v1190 = vrot.slane %v1187, 1
    %v1193 = vadd.f32 %v988, %v1187
    %v1194 = vadd.f32 %v995, %v1190
    %v1195 = vadd.f32 %v1193, %v505
    %v1196 = vadd.f32 %v1194, %v505
    %v1197 = vmul.f32 %v1195, 0.5
    %v1198 = vmul.f32 %v1196, 0.5
    %v1199 = vtanh.pop %v1197
    %v1200 = vtanh.pop %v1198
    %v1201 = vmul.f32 %v1199, 0.5
    %v1202 = vmul.f32 %v1200, 0.5
    %v1203 = vadd.f32 %v1201, 0.5
    %v1204 = vadd.f32 %v1202, 0.5
    %v1205 = vtanh.pop %v1195
    %v1206 = vtanh.pop %v1196
    %v1207 = vmul.f32 %v1203, %v889
    %v1208 = vmul.f32 %v1204, %v890
    %1211 = vrot.lane.b32.xlu0 %v1205, 64
    %v1212 = vpop.permute.xlu0 %1211
    %1213 = vrot.lane.b32.xlu0 %v1206, 64
    %v1214 = vpop.permute.xlu0 %1213
    %v1217 = vmul.f32 %v1203, %v1212
    %v1218 = vmul.f32 %v1204, %v1214
    %1221 = vrot.lane.b32.xlu0 %v1217, 32
    %v1222 = vpop.permute.xlu0 %1221
    %1223 = vrot.lane.b32.xlu0 %v1218, 32
    %v1224 = vpop.permute.xlu0 %1223
    %v1227 = vadd.f32 %v1207, %v1222
    %v1228 = vadd.f32 %v1208, %v1224
    %v1229 = vtanh.pop %v1227
    %v1230 = vtanh.pop %v1228
    %1233 = vrot.lane.b32.xlu0 %v1229, 64
    %v1234 = vpop.permute.xlu0 %1233
    %1235 = vrot.lane.b32.xlu0 %v1230, 64
    %v1236 = vpop.permute.xlu0 %1235
    %v1239 = vmul.f32 %v1203, %v1234
    %v1240 = vmul.f32 %v1204, %v1236
    %vm1241 = vcmp.eq.s32.totalorder %v200, 2
    %v1242 = vsel %vm1241, 1, 0
    %vm1243 = vcmp.eq.s32.totalorder %v1242, 1
    %v1244 = vperm.slane %v1239, 0
    %v1245 = vperm.slane %v1240, 0
    %v1246 = vsel %vm1243, %v1244, 0.0
    %v1247 = vsel %vm1243, %v1245, 0.0
    %v1248 = vadd.f32 %v910, %v1246
    %v1249 = vadd.f32 %v911, %v1247
    %v1250 = vmul.f32 %v1239, %v563
    %v1251 = vmul.f32 %v1240, %v563
    %v1252 = vmul.f32 %v1227, %v568
    %v1253 = vmul.f32 %v1228, %v568
    %1256 = vrot.lane.b32.xlu0 %v1252, 64
    %v1257 = vpop.permute.xlu0 %1256
    %1258 = vrot.lane.b32.xlu0 %v1253, 64
    %v1259 = vpop.permute.xlu0 %1258
    %v1262 = vadd.f32 %v1250, %v1257
    %v1263 = vadd.f32 %v1251, %v1259
    %v1266 = vrot.slane %v1263, 7
    %v1267 = vsel %vm218, %v1266, %v1262
    %1268 = vrot.lane.b32.xlu0 %v1267, 32
    %v1269 = vpop.permute.xlu0 %1268
    %v1271 = vsel %vm589, %v1269, 0.0
    %1272 = vadd.xlane.f32.xlu0 %v1271
    %v1273 = vpop.xlane.xlu0 %1272
    %v1274 = vadd.f32 %v1273, %v595
    %v1275 = vsel %vm221, %v1274, -inf
    %1276 = vmax.xlane.f32.xlu0 %v1275
    %v1277 = vpop.xlane.xlu0 %1276
    %v1278 = vsub.f32 %v1274, %v1277
    %v1279 = vmul.f32 %v1278, 1.442695
    %v1280 = vpow.pop %v1279
    %v1281 = vsel %vm221, %v1280, 0.0
    %1282 = vadd.xlane.f32.xlu0 %v1281
    %v1283 = vpop.xlane.xlu0 %1282
    %v1284 = vrcp.pop %v1283
    %v1285 = vmul.f32 %v1283, %v1284
    %v1286 = vsub.f32 1.0, %v1285
    %v1287 = vmul.f32 %v1284, %v1286
    %v1288 = vadd.f32 %v1284, %v1287
    %vm1289 = vweird.f32 %v1283
    %vm1290 = vweird.f32 %v1284
    %vm1291 = vmor %vm1289, %vm1290
    %v1292 = vsel %vm1291, %v1284, %v1288
    %v1293 = vand.u32 2147483647, %v1283
    %vm1294 = vcmp.eq.f32.partialorder %v1293, 8.507059e+37
    %v1295 = vand.u32 %v1283, 2147483648
    %v1296 = vor.u32 1.1754944e-38, %v1295
    %v1297 = vsel %vm1294, %v1296, %v1292
    %v1298 = vmul.f32 %v1280, %v1297
    %v1299 = vrot.slane %v131, 3
    %v1300 = vrot.slane %v132, 2
    %v1301 = vsel %vm218, %v1300, %v1299
    %v1303 = vmul.f32 %v1298, %v1301
    %v1304 = vperm.slane %v1303, 0
    %v1305 = vlaneseq
    %v1306 = vshrl.u32 %v1305, 7
    %1308 = vset.pattern.permute.xlu0 %v1306
    %1309 = vperm.xlu0 %1308, %v1304
    %v1310 = vpop.permute.xlu0 %1309
    %v1311 = vperm.slane %v1303, 1
    %v1312 = vlaneseq
    %v1313 = vshrl.u32 %v1312, 7
    %1315 = vset.pattern.permute.xlu0 %v1313
    %1316 = vperm.xlu0 %1315, %v1311
    %v1317 = vpop.permute.xlu0 %1316
    %v1318 = vmul.f32 %v1310, %v135
    %v1319 = vmul.f32 %v1317, %v135
    %v1320 = vsel %vm295, %v1318, 0.0
    %v1321 = vrot.slane %v1320, 4
    %v1322 = vadd.f32 %v1320, %v1321
    %v1323 = vrot.slane %v1322, 2
    %v1324 = vadd.f32 %v1322, %v1323
    %v1325 = vrot.slane %v1324, 1
    %v1326 = vadd.f32 %v1324, %v1325
    %v1327 = vsel %vm295, %v1319, 0.0
    %v1328 = vrot.slane %v1327, 4
    %v1329 = vadd.f32 %v1327, %v1328
    %v1330 = vrot.slane %v1329, 2
    %v1331 = vadd.f32 %v1329, %v1330
    %v1332 = vrot.slane %v1331, 1
    %v1333 = vadd.f32 %v1331, %v1332
    %v1336 = vrot.slane %v1240, 7
    %v1337 = vsel %vm218, %v1336, %v1239
    %1338 = vrot.lane.b32.xlu0 %v1337, 32
    %v1339 = vpop.permute.xlu0 %1338
    %v1340 = vsel %vm210, %v1339, 0
    %1342 = vmatpush.msra.mxu0 0.0
    %1343 = vmatpush.msra.mxu0 0.0
    %1344 = vmatpush.msra.mxu0 0.0
    %1345 = vmatpush.msra.mxu0 0.0
    %1346 = vmatpush.msra.mxu0 0.0
    %1347 = vmatpush.msra.mxu0 0.0
    %1348 = vmatpush.msra.mxu0 0.0
    %1349 = vmatpush.msra.mxu0 0.0
    %1350 = vmatpush.msra.mxu0 0.0
    %1351 = vmatpush.msra.mxu0 0.0
    %1352 = vmatpush.msra.mxu0 0.0
    %1353 = vmatpush.msra.mxu0 0.0
    %v1354 = vand.u32 %v139, 4294901760
    %1355 = vmatpush.msra.mxu0 %v1354
    %v1356 = vand.u32 %v138, 4294901760
    %1357 = vmatpush.msra.mxu0 %v1356
    %v1358 = vand.u32 %v137, 4294901760
    %1359 = vmatpush.msra.mxu0 %v1358
    %v1360 = vand.u32 %v136, 4294901760
    %1361 = vmatpush.msra.mxu0 %v1360
    %v1362 = vand.u32 %v1340, 4294901760
    %v1363 = vsub.f32 %v1340, %v1362
    %v1364 = vand.u32 %v1363, 4294901760
    %v1365 = vsub.f32 %v1363, %v1364
    %v1366 = vand.u32 %v1365, 4294901760
    %1367 = vmatmul.f32.gmra.mxu0 %v1366
    %v1368 = vpop.f32.mrf.mxu0
    %v1369 = vadd.f32 0.0, %v1368
    %1370 = vdwg.mxu0
    %1371 = vmatpush.msra.mxu0 0.0
    %1372 = vmatpush.msra.mxu0 0.0
    %1373 = vmatpush.msra.mxu0 0.0
    %1374 = vmatpush.msra.mxu0 0.0
    %1375 = vmatpush.msra.mxu0 0.0
    %1376 = vmatpush.msra.mxu0 0.0
    %1377 = vmatpush.msra.mxu0 0.0
    %1378 = vmatpush.msra.mxu0 0.0
    %1379 = vmatpush.msra.mxu0 0.0
    %1380 = vmatpush.msra.mxu0 0.0
    %1381 = vmatpush.msra.mxu0 0.0
    %1382 = vmatpush.msra.mxu0 0.0
    %v1383 = vand.u32 %v139, 4294901760
    %v1384 = vsub.f32 %v139, %v1383
    %v1385 = vand.u32 %v1384, 4294901760
    %v1386 = vsub.f32 %v1384, %v1385
    %v1387 = vand.u32 %v1386, 4294901760
    %1388 = vmatpush.msra.mxu0 %v1387
    %v1389 = vand.u32 %v138, 4294901760
    %v1390 = vsub.f32 %v138, %v1389
    %v1391 = vand.u32 %v1390, 4294901760
    %v1392 = vsub.f32 %v1390, %v1391
    %v1393 = vand.u32 %v1392, 4294901760
    %1394 = vmatpush.msra.mxu0 %v1393
    %v1395 = vand.u32 %v137, 4294901760
    %v1396 = vsub.f32 %v137, %v1395
    %v1397 = vand.u32 %v1396, 4294901760
    %v1398 = vsub.f32 %v1396, %v1397
    %v1399 = vand.u32 %v1398, 4294901760
    %1400 = vmatpush.msra.mxu0 %v1399
    %v1401 = vand.u32 %v136, 4294901760
    %v1402 = vsub.f32 %v136, %v1401
    %v1403 = vand.u32 %v1402, 4294901760
    %v1404 = vsub.f32 %v1402, %v1403
    %v1405 = vand.u32 %v1404, 4294901760
    %1406 = vmatpush.msra.mxu0 %v1405
    %v1407 = vand.u32 %v1340, 4294901760
    %1408 = vmatmul.f32.gmra.mxu0 %v1407
    %v1409 = vpop.f32.mrf.mxu0
    %v1410 = vadd.f32 %v1369, %v1409
    %1411 = vdwg.mxu0
    %1412 = vmatpush.msra.mxu0 0.0
    %1413 = vmatpush.msra.mxu0 0.0
    %1414 = vmatpush.msra.mxu0 0.0
    %1415 = vmatpush.msra.mxu0 0.0
    %1416 = vmatpush.msra.mxu0 0.0
    %1417 = vmatpush.msra.mxu0 0.0
    %1418 = vmatpush.msra.mxu0 0.0
    %1419 = vmatpush.msra.mxu0 0.0
    %1420 = vmatpush.msra.mxu0 0.0
    %1421 = vmatpush.msra.mxu0 0.0
    %1422 = vmatpush.msra.mxu0 0.0
    %1423 = vmatpush.msra.mxu0 0.0
    %v1424 = vand.u32 %v139, 4294901760
    %v1425 = vsub.f32 %v139, %v1424
    %1426 = vmatpush.msra.mxu0 %v1425
    %v1427 = vand.u32 %v138, 4294901760
    %v1428 = vsub.f32 %v138, %v1427
    %1429 = vmatpush.msra.mxu0 %v1428
    %v1430 = vand.u32 %v137, 4294901760
    %v1431 = vsub.f32 %v137, %v1430
    %1432 = vmatpush.msra.mxu0 %v1431
    %v1433 = vand.u32 %v136, 4294901760
    %v1434 = vsub.f32 %v136, %v1433
    %1435 = vmatpush.msra.mxu0 %v1434
    %v1436 = vand.u32 %v1340, 4294901760
    %v1437 = vsub.f32 %v1340, %v1436
    %1438 = vmatmul.f32.gmra.mxu0 %v1437
    %v1439 = vpop.f32.mrf.mxu0
    %v1440 = vadd.f32 %v1410, %v1439
    %1441 = vdwg.mxu0
    %1442 = vmatpush.msra.mxu0 0.0
    %1443 = vmatpush.msra.mxu0 0.0
    %1444 = vmatpush.msra.mxu0 0.0
    %1445 = vmatpush.msra.mxu0 0.0
    %1446 = vmatpush.msra.mxu0 0.0
    %1447 = vmatpush.msra.mxu0 0.0
    %1448 = vmatpush.msra.mxu0 0.0
    %1449 = vmatpush.msra.mxu0 0.0
    %1450 = vmatpush.msra.mxu0 0.0
    %1451 = vmatpush.msra.mxu0 0.0
    %1452 = vmatpush.msra.mxu0 0.0
    %1453 = vmatpush.msra.mxu0 0.0
    %v1454 = vand.u32 %v139, 4294901760
    %1455 = vmatpush.msra.mxu0 %v1454
    %v1456 = vand.u32 %v138, 4294901760
    %1457 = vmatpush.msra.mxu0 %v1456
    %v1458 = vand.u32 %v137, 4294901760
    %1459 = vmatpush.msra.mxu0 %v1458
    %v1460 = vand.u32 %v136, 4294901760
    %1461 = vmatpush.msra.mxu0 %v1460
    %v1462 = vand.u32 %v1340, 4294901760
    %v1463 = vsub.f32 %v1340, %v1462
    %v1464 = vand.u32 %v1463, 4294901760
    %1465 = vmatmul.f32.gmra.mxu0 %v1464
    %v1466 = vpop.f32.mrf.mxu0
    %v1467 = vadd.f32 %v1440, %v1466
    %1468 = vdwg.mxu0
    %1469 = vmatpush.msra.mxu0 0.0
    %1470 = vmatpush.msra.mxu0 0.0
    %1471 = vmatpush.msra.mxu0 0.0
    %1472 = vmatpush.msra.mxu0 0.0
    %1473 = vmatpush.msra.mxu0 0.0
    %1474 = vmatpush.msra.mxu0 0.0
    %1475 = vmatpush.msra.mxu0 0.0
    %1476 = vmatpush.msra.mxu0 0.0
    %1477 = vmatpush.msra.mxu0 0.0
    %1478 = vmatpush.msra.mxu0 0.0
    %1479 = vmatpush.msra.mxu0 0.0
    %1480 = vmatpush.msra.mxu0 0.0
    %v1481 = vand.u32 %v139, 4294901760
    %v1482 = vsub.f32 %v139, %v1481
    %v1483 = vand.u32 %v1482, 4294901760
    %1484 = vmatpush.msra.mxu0 %v1483
    %v1485 = vand.u32 %v138, 4294901760
    %v1486 = vsub.f32 %v138, %v1485
    %v1487 = vand.u32 %v1486, 4294901760
    %1488 = vmatpush.msra.mxu0 %v1487
    %v1489 = vand.u32 %v137, 4294901760
    %v1490 = vsub.f32 %v137, %v1489
    %v1491 = vand.u32 %v1490, 4294901760
    %1492 = vmatpush.msra.mxu0 %v1491
    %v1493 = vand.u32 %v136, 4294901760
    %v1494 = vsub.f32 %v136, %v1493
    %v1495 = vand.u32 %v1494, 4294901760
    %1496 = vmatpush.msra.mxu0 %v1495
    %v1497 = vand.u32 %v1340, 4294901760
    %1498 = vmatmul.f32.gmra.mxu0 %v1497
    %v1499 = vpop.f32.mrf.mxu0
    %v1500 = vadd.f32 %v1467, %v1499
    %1501 = vdwg.mxu0
    %1502 = vmatpush.msra.mxu0 0.0
    %1503 = vmatpush.msra.mxu0 0.0
    %1504 = vmatpush.msra.mxu0 0.0
    %1505 = vmatpush.msra.mxu0 0.0
    %1506 = vmatpush.msra.mxu0 0.0
    %1507 = vmatpush.msra.mxu0 0.0
    %1508 = vmatpush.msra.mxu0 0.0
    %1509 = vmatpush.msra.mxu0 0.0
    %1510 = vmatpush.msra.mxu0 0.0
    %1511 = vmatpush.msra.mxu0 0.0
    %1512 = vmatpush.msra.mxu0 0.0
    %1513 = vmatpush.msra.mxu0 0.0
    %v1514 = vand.u32 %v139, 4294901760
    %1515 = vmatpush.msra.mxu0 %v1514
    %v1516 = vand.u32 %v138, 4294901760
    %1517 = vmatpush.msra.mxu0 %v1516
    %v1518 = vand.u32 %v137, 4294901760
    %1519 = vmatpush.msra.mxu0 %v1518
    %v1520 = vand.u32 %v136, 4294901760
    %1521 = vmatpush.msra.mxu0 %v1520
    %v1522 = vand.u32 %v1340, 4294901760
    %1523 = vmatmul.f32.gmra.mxu0 %v1522
    %v1524 = vpop.f32.mrf.mxu0
    %v1525 = vadd.f32 %v1500, %v1524
    %1526 = vdwg.mxu0
    %v1528 = vrot.slane %v1525, 1
    %v1531 = vadd.f32 %v1326, %v1525
    %v1532 = vadd.f32 %v1333, %v1528
    %v1533 = vadd.f32 %v1531, %v505
    %v1534 = vadd.f32 %v1532, %v505
    %v1535 = vmul.f32 %v1533, 0.5
    %v1536 = vmul.f32 %v1534, 0.5
    %v1537 = vtanh.pop %v1535
    %v1538 = vtanh.pop %v1536
    %v1539 = vmul.f32 %v1537, 0.5
    %v1540 = vmul.f32 %v1538, 0.5
    %v1541 = vadd.f32 %v1539, 0.5
    %v1542 = vadd.f32 %v1540, 0.5
    %v1543 = vtanh.pop %v1533
    %v1544 = vtanh.pop %v1534
    %v1545 = vmul.f32 %v1541, %v1227
    %v1546 = vmul.f32 %v1542, %v1228
    %1549 = vrot.lane.b32.xlu0 %v1543, 64
    %v1550 = vpop.permute.xlu0 %1549
    %1551 = vrot.lane.b32.xlu0 %v1544, 64
    %v1552 = vpop.permute.xlu0 %1551
    %v1555 = vmul.f32 %v1541, %v1550
    %v1556 = vmul.f32 %v1542, %v1552
    %1559 = vrot.lane.b32.xlu0 %v1555, 32
    %v1560 = vpop.permute.xlu0 %1559
    %1561 = vrot.lane.b32.xlu0 %v1556, 32
    %v1562 = vpop.permute.xlu0 %1561
    %v1565 = vadd.f32 %v1545, %v1560
    %v1566 = vadd.f32 %v1546, %v1562
    %v1567 = vtanh.pop %v1565
    %v1568 = vtanh.pop %v1566
    %1571 = vrot.lane.b32.xlu0 %v1567, 64
    %v1572 = vpop.permute.xlu0 %1571
    %1573 = vrot.lane.b32.xlu0 %v1568, 64
    %v1574 = vpop.permute.xlu0 %1573
    %v1577 = vmul.f32 %v1541, %v1572
    %v1578 = vmul.f32 %v1542, %v1574
    %vm1579 = vcmp.eq.s32.totalorder %v200, 3
    %v1580 = vsel %vm1579, 1, 0
    %vm1581 = vcmp.eq.s32.totalorder %v1580, 1
    %v1582 = vperm.slane %v1577, 0
    %v1583 = vperm.slane %v1578, 0
    %v1584 = vsel %vm1581, %v1582, 0.0
    %v1585 = vsel %vm1581, %v1583, 0.0
    %v1586 = vadd.f32 %v1248, %v1584
    %v1587 = vadd.f32 %v1249, %v1585
    %v1588 = vmul.f32 %v1577, %v563
    %v1589 = vmul.f32 %v1578, %v563
    %v1590 = vmul.f32 %v1565, %v568
    %v1591 = vmul.f32 %v1566, %v568
    %1594 = vrot.lane.b32.xlu0 %v1590, 64
    %v1595 = vpop.permute.xlu0 %1594
    %1596 = vrot.lane.b32.xlu0 %v1591, 64
    %v1597 = vpop.permute.xlu0 %1596
    %v1600 = vadd.f32 %v1588, %v1595
    %v1601 = vadd.f32 %v1589, %v1597
    %v1604 = vrot.slane %v1601, 7
    %v1605 = vsel %vm218, %v1604, %v1600
    %1606 = vrot.lane.b32.xlu0 %v1605, 32
    %v1607 = vpop.permute.xlu0 %1606
    %v1609 = vsel %vm589, %v1607, 0.0
    %1610 = vadd.xlane.f32.xlu0 %v1609
    %v1611 = vpop.xlane.xlu0 %1610
    %v1612 = vadd.f32 %v1611, %v595
    %v1613 = vsel %vm221, %v1612, -inf
    %1614 = vmax.xlane.f32.xlu0 %v1613
    %v1615 = vpop.xlane.xlu0 %1614
    %v1616 = vsub.f32 %v1612, %v1615
    %v1617 = vmul.f32 %v1616, 1.442695
    %v1618 = vpow.pop %v1617
    %v1619 = vsel %vm221, %v1618, 0.0
    %1620 = vadd.xlane.f32.xlu0 %v1619
    %v1621 = vpop.xlane.xlu0 %1620
    %v1622 = vrcp.pop %v1621
    %v1623 = vmul.f32 %v1621, %v1622
    %v1624 = vsub.f32 1.0, %v1623
    %v1625 = vmul.f32 %v1622, %v1624
    %v1626 = vadd.f32 %v1622, %v1625
    %vm1627 = vweird.f32 %v1621
    %vm1628 = vweird.f32 %v1622
    %vm1629 = vmor %vm1627, %vm1628
    %v1630 = vsel %vm1629, %v1622, %v1626
    %v1631 = vand.u32 2147483647, %v1621
    %vm1632 = vcmp.eq.f32.partialorder %v1631, 8.507059e+37
    %v1633 = vand.u32 %v1621, 2147483648
    %v1634 = vor.u32 1.1754944e-38, %v1633
    %v1635 = vsel %vm1632, %v1634, %v1630
    %v1636 = vmul.f32 %v1618, %v1635
    %v1637 = vrot.slane %v131, 4
    %v1638 = vrot.slane %v132, 3
    %v1639 = vsel %vm218, %v1638, %v1637
    %v1641 = vmul.f32 %v1636, %v1639
    %v1642 = vperm.slane %v1641, 0
    %v1643 = vlaneseq
    %v1644 = vshrl.u32 %v1643, 7
    %1646 = vset.pattern.permute.xlu0 %v1644
    %1647 = vperm.xlu0 %1646, %v1642
    %v1648 = vpop.permute.xlu0 %1647
    %v1649 = vperm.slane %v1641, 1
    %v1650 = vlaneseq
    %v1651 = vshrl.u32 %v1650, 7
    %1653 = vset.pattern.permute.xlu0 %v1651
    %1654 = vperm.xlu0 %1653, %v1649
    %v1655 = vpop.permute.xlu0 %1654
    %v1656 = vmul.f32 %v1648, %v135
    %v1657 = vmul.f32 %v1655, %v135
    %v1658 = vsel %vm295, %v1656, 0.0
    %v1659 = vrot.slane %v1658, 4
    %v1660 = vadd.f32 %v1658, %v1659
    %v1661 = vrot.slane %v1660, 2
    %v1662 = vadd.f32 %v1660, %v1661
    %v1663 = vrot.slane %v1662, 1
    %v1664 = vadd.f32 %v1662, %v1663
    %v1665 = vsel %vm295, %v1657, 0.0
    %v1666 = vrot.slane %v1665, 4
    %v1667 = vadd.f32 %v1665, %v1666
    %v1668 = vrot.slane %v1667, 2
    %v1669 = vadd.f32 %v1667, %v1668
    %v1670 = vrot.slane %v1669, 1
    %v1671 = vadd.f32 %v1669, %v1670
    %v1674 = vrot.slane %v1578, 7
    %v1675 = vsel %vm218, %v1674, %v1577
    %1676 = vrot.lane.b32.xlu0 %v1675, 32
    %v1677 = vpop.permute.xlu0 %1676
    %v1678 = vsel %vm210, %v1677, 0
    %1680 = vmatpush.msra.mxu0 0.0
    %1681 = vmatpush.msra.mxu0 0.0
    %1682 = vmatpush.msra.mxu0 0.0
    %1683 = vmatpush.msra.mxu0 0.0
    %1684 = vmatpush.msra.mxu0 0.0
    %1685 = vmatpush.msra.mxu0 0.0
    %1686 = vmatpush.msra.mxu0 0.0
    %1687 = vmatpush.msra.mxu0 0.0
    %1688 = vmatpush.msra.mxu0 0.0
    %1689 = vmatpush.msra.mxu0 0.0
    %1690 = vmatpush.msra.mxu0 0.0
    %1691 = vmatpush.msra.mxu0 0.0
    %v1692 = vand.u32 %v139, 4294901760
    %1693 = vmatpush.msra.mxu0 %v1692
    %v1694 = vand.u32 %v138, 4294901760
    %1695 = vmatpush.msra.mxu0 %v1694
    %v1696 = vand.u32 %v137, 4294901760
    %1697 = vmatpush.msra.mxu0 %v1696
    %v1698 = vand.u32 %v136, 4294901760
    %1699 = vmatpush.msra.mxu0 %v1698
    %v1700 = vand.u32 %v1678, 4294901760
    %v1701 = vsub.f32 %v1678, %v1700
    %v1702 = vand.u32 %v1701, 4294901760
    %v1703 = vsub.f32 %v1701, %v1702
    %v1704 = vand.u32 %v1703, 4294901760
    %1705 = vmatmul.f32.gmra.mxu0 %v1704
    %v1706 = vpop.f32.mrf.mxu0
    %v1707 = vadd.f32 0.0, %v1706
    %1708 = vdwg.mxu0
    %1709 = vmatpush.msra.mxu0 0.0
    %1710 = vmatpush.msra.mxu0 0.0
    %1711 = vmatpush.msra.mxu0 0.0
    %1712 = vmatpush.msra.mxu0 0.0
    %1713 = vmatpush.msra.mxu0 0.0
    %1714 = vmatpush.msra.mxu0 0.0
    %1715 = vmatpush.msra.mxu0 0.0
    %1716 = vmatpush.msra.mxu0 0.0
    %1717 = vmatpush.msra.mxu0 0.0
    %1718 = vmatpush.msra.mxu0 0.0
    %1719 = vmatpush.msra.mxu0 0.0
    %1720 = vmatpush.msra.mxu0 0.0
    %v1721 = vand.u32 %v139, 4294901760
    %v1722 = vsub.f32 %v139, %v1721
    %v1723 = vand.u32 %v1722, 4294901760
    %v1724 = vsub.f32 %v1722, %v1723
    %v1725 = vand.u32 %v1724, 4294901760
    %1726 = vmatpush.msra.mxu0 %v1725
    %v1727 = vand.u32 %v138, 4294901760
    %v1728 = vsub.f32 %v138, %v1727
    %v1729 = vand.u32 %v1728, 4294901760
    %v1730 = vsub.f32 %v1728, %v1729
    %v1731 = vand.u32 %v1730, 4294901760
    %1732 = vmatpush.msra.mxu0 %v1731
    %v1733 = vand.u32 %v137, 4294901760
    %v1734 = vsub.f32 %v137, %v1733
    %v1735 = vand.u32 %v1734, 4294901760
    %v1736 = vsub.f32 %v1734, %v1735
    %v1737 = vand.u32 %v1736, 4294901760
    %1738 = vmatpush.msra.mxu0 %v1737
    %v1739 = vand.u32 %v136, 4294901760
    %v1740 = vsub.f32 %v136, %v1739
    %v1741 = vand.u32 %v1740, 4294901760
    %v1742 = vsub.f32 %v1740, %v1741
    %v1743 = vand.u32 %v1742, 4294901760
    %1744 = vmatpush.msra.mxu0 %v1743
    %v1745 = vand.u32 %v1678, 4294901760
    %1746 = vmatmul.f32.gmra.mxu0 %v1745
    %v1747 = vpop.f32.mrf.mxu0
    %v1748 = vadd.f32 %v1707, %v1747
    %1749 = vdwg.mxu0
    %1750 = vmatpush.msra.mxu0 0.0
    %1751 = vmatpush.msra.mxu0 0.0
    %1752 = vmatpush.msra.mxu0 0.0
    %1753 = vmatpush.msra.mxu0 0.0
    %1754 = vmatpush.msra.mxu0 0.0
    %1755 = vmatpush.msra.mxu0 0.0
    %1756 = vmatpush.msra.mxu0 0.0
    %1757 = vmatpush.msra.mxu0 0.0
    %1758 = vmatpush.msra.mxu0 0.0
    %1759 = vmatpush.msra.mxu0 0.0
    %1760 = vmatpush.msra.mxu0 0.0
    %1761 = vmatpush.msra.mxu0 0.0
    %v1762 = vand.u32 %v139, 4294901760
    %v1763 = vsub.f32 %v139, %v1762
    %1764 = vmatpush.msra.mxu0 %v1763
    %v1765 = vand.u32 %v138, 4294901760
    %v1766 = vsub.f32 %v138, %v1765
    %1767 = vmatpush.msra.mxu0 %v1766
    %v1768 = vand.u32 %v137, 4294901760
    %v1769 = vsub.f32 %v137, %v1768
    %1770 = vmatpush.msra.mxu0 %v1769
    %v1771 = vand.u32 %v136, 4294901760
    %v1772 = vsub.f32 %v136, %v1771
    %1773 = vmatpush.msra.mxu0 %v1772
    %v1774 = vand.u32 %v1678, 4294901760
    %v1775 = vsub.f32 %v1678, %v1774
    %1776 = vmatmul.f32.gmra.mxu0 %v1775
    %v1777 = vpop.f32.mrf.mxu0
    %v1778 = vadd.f32 %v1748, %v1777
    %1779 = vdwg.mxu0
    %1780 = vmatpush.msra.mxu0 0.0
    %1781 = vmatpush.msra.mxu0 0.0
    %1782 = vmatpush.msra.mxu0 0.0
    %1783 = vmatpush.msra.mxu0 0.0
    %1784 = vmatpush.msra.mxu0 0.0
    %1785 = vmatpush.msra.mxu0 0.0
    %1786 = vmatpush.msra.mxu0 0.0
    %1787 = vmatpush.msra.mxu0 0.0
    %1788 = vmatpush.msra.mxu0 0.0
    %1789 = vmatpush.msra.mxu0 0.0
    %1790 = vmatpush.msra.mxu0 0.0
    %1791 = vmatpush.msra.mxu0 0.0
    %v1792 = vand.u32 %v139, 4294901760
    %1793 = vmatpush.msra.mxu0 %v1792
    %v1794 = vand.u32 %v138, 4294901760
    %1795 = vmatpush.msra.mxu0 %v1794
    %v1796 = vand.u32 %v137, 4294901760
    %1797 = vmatpush.msra.mxu0 %v1796
    %v1798 = vand.u32 %v136, 4294901760
    %1799 = vmatpush.msra.mxu0 %v1798
    %v1800 = vand.u32 %v1678, 4294901760
    %v1801 = vsub.f32 %v1678, %v1800
    %v1802 = vand.u32 %v1801, 4294901760
    %1803 = vmatmul.f32.gmra.mxu0 %v1802
    %v1804 = vpop.f32.mrf.mxu0
    %v1805 = vadd.f32 %v1778, %v1804
    %1806 = vdwg.mxu0
    %1807 = vmatpush.msra.mxu0 0.0
    %1808 = vmatpush.msra.mxu0 0.0
    %1809 = vmatpush.msra.mxu0 0.0
    %1810 = vmatpush.msra.mxu0 0.0
    %1811 = vmatpush.msra.mxu0 0.0
    %1812 = vmatpush.msra.mxu0 0.0
    %1813 = vmatpush.msra.mxu0 0.0
    %1814 = vmatpush.msra.mxu0 0.0
    %1815 = vmatpush.msra.mxu0 0.0
    %1816 = vmatpush.msra.mxu0 0.0
    %1817 = vmatpush.msra.mxu0 0.0
    %1818 = vmatpush.msra.mxu0 0.0
    %v1819 = vand.u32 %v139, 4294901760
    %v1820 = vsub.f32 %v139, %v1819
    %v1821 = vand.u32 %v1820, 4294901760
    %1822 = vmatpush.msra.mxu0 %v1821
    %v1823 = vand.u32 %v138, 4294901760
    %v1824 = vsub.f32 %v138, %v1823
    %v1825 = vand.u32 %v1824, 4294901760
    %1826 = vmatpush.msra.mxu0 %v1825
    %v1827 = vand.u32 %v137, 4294901760
    %v1828 = vsub.f32 %v137, %v1827
    %v1829 = vand.u32 %v1828, 4294901760
    %1830 = vmatpush.msra.mxu0 %v1829
    %v1831 = vand.u32 %v136, 4294901760
    %v1832 = vsub.f32 %v136, %v1831
    %v1833 = vand.u32 %v1832, 4294901760
    %1834 = vmatpush.msra.mxu0 %v1833
    %v1835 = vand.u32 %v1678, 4294901760
    %1836 = vmatmul.f32.gmra.mxu0 %v1835
    %v1837 = vpop.f32.mrf.mxu0
    %v1838 = vadd.f32 %v1805, %v1837
    %1839 = vdwg.mxu0
    %1840 = vmatpush.msra.mxu0 0.0
    %1841 = vmatpush.msra.mxu0 0.0
    %1842 = vmatpush.msra.mxu0 0.0
    %1843 = vmatpush.msra.mxu0 0.0
    %1844 = vmatpush.msra.mxu0 0.0
    %1845 = vmatpush.msra.mxu0 0.0
    %1846 = vmatpush.msra.mxu0 0.0
    %1847 = vmatpush.msra.mxu0 0.0
    %1848 = vmatpush.msra.mxu0 0.0
    %1849 = vmatpush.msra.mxu0 0.0
    %1850 = vmatpush.msra.mxu0 0.0
    %1851 = vmatpush.msra.mxu0 0.0
    %v1852 = vand.u32 %v139, 4294901760
    %1853 = vmatpush.msra.mxu0 %v1852
    %v1854 = vand.u32 %v138, 4294901760
    %1855 = vmatpush.msra.mxu0 %v1854
    %v1856 = vand.u32 %v137, 4294901760
    %1857 = vmatpush.msra.mxu0 %v1856
    %v1858 = vand.u32 %v136, 4294901760
    %1859 = vmatpush.msra.mxu0 %v1858
    %v1860 = vand.u32 %v1678, 4294901760
    %1861 = vmatmul.f32.gmra.mxu0 %v1860
    %v1862 = vpop.f32.mrf.mxu0
    %v1863 = vadd.f32 %v1838, %v1862
    %1864 = vdwg.mxu0
    %v1866 = vrot.slane %v1863, 1
    %v1869 = vadd.f32 %v1664, %v1863
    %v1870 = vadd.f32 %v1671, %v1866
    %v1871 = vadd.f32 %v1869, %v505
    %v1872 = vadd.f32 %v1870, %v505
    %v1873 = vmul.f32 %v1871, 0.5
    %v1874 = vmul.f32 %v1872, 0.5
    %v1875 = vtanh.pop %v1873
    %v1876 = vtanh.pop %v1874
    %v1877 = vmul.f32 %v1875, 0.5
    %v1878 = vmul.f32 %v1876, 0.5
    %v1879 = vadd.f32 %v1877, 0.5
    %v1880 = vadd.f32 %v1878, 0.5
    %v1881 = vtanh.pop %v1871
    %v1882 = vtanh.pop %v1872
    %v1883 = vmul.f32 %v1879, %v1565
    %v1884 = vmul.f32 %v1880, %v1566
    %1887 = vrot.lane.b32.xlu0 %v1881, 64
    %v1888 = vpop.permute.xlu0 %1887
    %1889 = vrot.lane.b32.xlu0 %v1882, 64
    %v1890 = vpop.permute.xlu0 %1889
    %v1893 = vmul.f32 %v1879, %v1888
    %v1894 = vmul.f32 %v1880, %v1890
    %1897 = vrot.lane.b32.xlu0 %v1893, 32
    %v1898 = vpop.permute.xlu0 %1897
    %1899 = vrot.lane.b32.xlu0 %v1894, 32
    %v1900 = vpop.permute.xlu0 %1899
    %v1903 = vadd.f32 %v1883, %v1898
    %v1904 = vadd.f32 %v1884, %v1900
    %v1905 = vtanh.pop %v1903
    %v1906 = vtanh.pop %v1904
    %1909 = vrot.lane.b32.xlu0 %v1905, 64
    %v1910 = vpop.permute.xlu0 %1909
    %1911 = vrot.lane.b32.xlu0 %v1906, 64
    %v1912 = vpop.permute.xlu0 %1911
    %v1915 = vmul.f32 %v1879, %v1910
    %v1916 = vmul.f32 %v1880, %v1912
    %vm1917 = vcmp.eq.s32.totalorder %v200, 4
    %v1918 = vsel %vm1917, 1, 0
    %vm1919 = vcmp.eq.s32.totalorder %v1918, 1
    %v1920 = vperm.slane %v1915, 0
    %v1921 = vperm.slane %v1916, 0
    %v1922 = vsel %vm1919, %v1920, 0.0
    %v1923 = vsel %vm1919, %v1921, 0.0
    %v1924 = vadd.f32 %v1586, %v1922
    %v1925 = vadd.f32 %v1587, %v1923
    %v1926 = vmul.f32 %v1915, %v563
    %v1927 = vmul.f32 %v1916, %v563
    %v1928 = vmul.f32 %v1903, %v568
    %v1929 = vmul.f32 %v1904, %v568
    %1932 = vrot.lane.b32.xlu0 %v1928, 64
    %v1933 = vpop.permute.xlu0 %1932
    %1934 = vrot.lane.b32.xlu0 %v1929, 64
    %v1935 = vpop.permute.xlu0 %1934
    %v1938 = vadd.f32 %v1926, %v1933
    %v1939 = vadd.f32 %v1927, %v1935
    %v1942 = vrot.slane %v1939, 7
    %v1943 = vsel %vm218, %v1942, %v1938
    %1944 = vrot.lane.b32.xlu0 %v1943, 32
    %v1945 = vpop.permute.xlu0 %1944
    %v1947 = vsel %vm589, %v1945, 0.0
    %1948 = vadd.xlane.f32.xlu0 %v1947
    %v1949 = vpop.xlane.xlu0 %1948
    %v1950 = vadd.f32 %v1949, %v595
    %v1951 = vsel %vm221, %v1950, -inf
    %1952 = vmax.xlane.f32.xlu0 %v1951
    %v1953 = vpop.xlane.xlu0 %1952
    %v1954 = vsub.f32 %v1950, %v1953
    %v1955 = vmul.f32 %v1954, 1.442695
    %v1956 = vpow.pop %v1955
    %v1957 = vsel %vm221, %v1956, 0.0
    %1958 = vadd.xlane.f32.xlu0 %v1957
    %v1959 = vpop.xlane.xlu0 %1958
    %v1960 = vrcp.pop %v1959
    %v1961 = vmul.f32 %v1959, %v1960
    %v1962 = vsub.f32 1.0, %v1961
    %v1963 = vmul.f32 %v1960, %v1962
    %v1964 = vadd.f32 %v1960, %v1963
    %vm1965 = vweird.f32 %v1959
    %vm1966 = vweird.f32 %v1960
    %vm1967 = vmor %vm1965, %vm1966
    %v1968 = vsel %vm1967, %v1960, %v1964
    %v1969 = vand.u32 2147483647, %v1959
    %vm1970 = vcmp.eq.f32.partialorder %v1969, 8.507059e+37
    %v1971 = vand.u32 %v1959, 2147483648
    %v1972 = vor.u32 1.1754944e-38, %v1971
    %v1973 = vsel %vm1970, %v1972, %v1968
    %v1974 = vmul.f32 %v1956, %v1973
    %v1975 = vrot.slane %v131, 5
    %v1976 = vrot.slane %v132, 4
    %v1977 = vsel %vm218, %v1976, %v1975
    %v1979 = vmul.f32 %v1974, %v1977
    %v1980 = vperm.slane %v1979, 0
    %v1981 = vlaneseq
    %v1982 = vshrl.u32 %v1981, 7
    %1984 = vset.pattern.permute.xlu0 %v1982
    %1985 = vperm.xlu0 %1984, %v1980
    %v1986 = vpop.permute.xlu0 %1985
    %v1987 = vperm.slane %v1979, 1
    %v1988 = vlaneseq
    %v1989 = vshrl.u32 %v1988, 7
    %1991 = vset.pattern.permute.xlu0 %v1989
    %1992 = vperm.xlu0 %1991, %v1987
    %v1993 = vpop.permute.xlu0 %1992
    %v1994 = vmul.f32 %v1986, %v135
    %v1995 = vmul.f32 %v1993, %v135
    %v1996 = vsel %vm295, %v1994, 0.0
    %v1997 = vrot.slane %v1996, 4
    %v1998 = vadd.f32 %v1996, %v1997
    %v1999 = vrot.slane %v1998, 2
    %v2000 = vadd.f32 %v1998, %v1999
    %v2001 = vrot.slane %v2000, 1
    %v2002 = vadd.f32 %v2000, %v2001
    %v2003 = vsel %vm295, %v1995, 0.0
    %v2004 = vrot.slane %v2003, 4
    %v2005 = vadd.f32 %v2003, %v2004
    %v2006 = vrot.slane %v2005, 2
    %v2007 = vadd.f32 %v2005, %v2006
    %v2008 = vrot.slane %v2007, 1
    %v2009 = vadd.f32 %v2007, %v2008
    %v2012 = vrot.slane %v1916, 7
    %v2013 = vsel %vm218, %v2012, %v1915
    %2014 = vrot.lane.b32.xlu0 %v2013, 32
    %v2015 = vpop.permute.xlu0 %2014
    %v2016 = vsel %vm210, %v2015, 0
    %2018 = vmatpush.msra.mxu0 0.0
    %2019 = vmatpush.msra.mxu0 0.0
    %2020 = vmatpush.msra.mxu0 0.0
    %2021 = vmatpush.msra.mxu0 0.0
    %2022 = vmatpush.msra.mxu0 0.0
    %2023 = vmatpush.msra.mxu0 0.0
    %2024 = vmatpush.msra.mxu0 0.0
    %2025 = vmatpush.msra.mxu0 0.0
    %2026 = vmatpush.msra.mxu0 0.0
    %2027 = vmatpush.msra.mxu0 0.0
    %2028 = vmatpush.msra.mxu0 0.0
    %2029 = vmatpush.msra.mxu0 0.0
    %v2030 = vand.u32 %v139, 4294901760
    %2031 = vmatpush.msra.mxu0 %v2030
    %v2032 = vand.u32 %v138, 4294901760
    %2033 = vmatpush.msra.mxu0 %v2032
    %v2034 = vand.u32 %v137, 4294901760
    %2035 = vmatpush.msra.mxu0 %v2034
    %v2036 = vand.u32 %v136, 4294901760
    %2037 = vmatpush.msra.mxu0 %v2036
    %v2038 = vand.u32 %v2016, 4294901760
    %v2039 = vsub.f32 %v2016, %v2038
    %v2040 = vand.u32 %v2039, 4294901760
    %v2041 = vsub.f32 %v2039, %v2040
    %v2042 = vand.u32 %v2041, 4294901760
    %2043 = vmatmul.f32.gmra.mxu0 %v2042
    %v2044 = vpop.f32.mrf.mxu0
    %v2045 = vadd.f32 0.0, %v2044
    %2046 = vdwg.mxu0
    %2047 = vmatpush.msra.mxu0 0.0
    %2048 = vmatpush.msra.mxu0 0.0
    %2049 = vmatpush.msra.mxu0 0.0
    %2050 = vmatpush.msra.mxu0 0.0
    %2051 = vmatpush.msra.mxu0 0.0
    %2052 = vmatpush.msra.mxu0 0.0
    %2053 = vmatpush.msra.mxu0 0.0
    %2054 = vmatpush.msra.mxu0 0.0
    %2055 = vmatpush.msra.mxu0 0.0
    %2056 = vmatpush.msra.mxu0 0.0
    %2057 = vmatpush.msra.mxu0 0.0
    %2058 = vmatpush.msra.mxu0 0.0
    %v2059 = vand.u32 %v139, 4294901760
    %v2060 = vsub.f32 %v139, %v2059
    %v2061 = vand.u32 %v2060, 4294901760
    %v2062 = vsub.f32 %v2060, %v2061
    %v2063 = vand.u32 %v2062, 4294901760
    %2064 = vmatpush.msra.mxu0 %v2063
    %v2065 = vand.u32 %v138, 4294901760
    %v2066 = vsub.f32 %v138, %v2065
    %v2067 = vand.u32 %v2066, 4294901760
    %v2068 = vsub.f32 %v2066, %v2067
    %v2069 = vand.u32 %v2068, 4294901760
    %2070 = vmatpush.msra.mxu0 %v2069
    %v2071 = vand.u32 %v137, 4294901760
    %v2072 = vsub.f32 %v137, %v2071
    %v2073 = vand.u32 %v2072, 4294901760
    %v2074 = vsub.f32 %v2072, %v2073
    %v2075 = vand.u32 %v2074, 4294901760
    %2076 = vmatpush.msra.mxu0 %v2075
    %v2077 = vand.u32 %v136, 4294901760
    %v2078 = vsub.f32 %v136, %v2077
    %v2079 = vand.u32 %v2078, 4294901760
    %v2080 = vsub.f32 %v2078, %v2079
    %v2081 = vand.u32 %v2080, 4294901760
    %2082 = vmatpush.msra.mxu0 %v2081
    %v2083 = vand.u32 %v2016, 4294901760
    %2084 = vmatmul.f32.gmra.mxu0 %v2083
    %v2085 = vpop.f32.mrf.mxu0
    %v2086 = vadd.f32 %v2045, %v2085
    %2087 = vdwg.mxu0
    %2088 = vmatpush.msra.mxu0 0.0
    %2089 = vmatpush.msra.mxu0 0.0
    %2090 = vmatpush.msra.mxu0 0.0
    %2091 = vmatpush.msra.mxu0 0.0
    %2092 = vmatpush.msra.mxu0 0.0
    %2093 = vmatpush.msra.mxu0 0.0
    %2094 = vmatpush.msra.mxu0 0.0
    %2095 = vmatpush.msra.mxu0 0.0
    %2096 = vmatpush.msra.mxu0 0.0
    %2097 = vmatpush.msra.mxu0 0.0
    %2098 = vmatpush.msra.mxu0 0.0
    %2099 = vmatpush.msra.mxu0 0.0
    %v2100 = vand.u32 %v139, 4294901760
    %v2101 = vsub.f32 %v139, %v2100
    %2102 = vmatpush.msra.mxu0 %v2101
    %v2103 = vand.u32 %v138, 4294901760
    %v2104 = vsub.f32 %v138, %v2103
    %2105 = vmatpush.msra.mxu0 %v2104
    %v2106 = vand.u32 %v137, 4294901760
    %v2107 = vsub.f32 %v137, %v2106
    %2108 = vmatpush.msra.mxu0 %v2107
    %v2109 = vand.u32 %v136, 4294901760
    %v2110 = vsub.f32 %v136, %v2109
    %2111 = vmatpush.msra.mxu0 %v2110
    %v2112 = vand.u32 %v2016, 4294901760
    %v2113 = vsub.f32 %v2016, %v2112
    %2114 = vmatmul.f32.gmra.mxu0 %v2113
    %v2115 = vpop.f32.mrf.mxu0
    %v2116 = vadd.f32 %v2086, %v2115
    %2117 = vdwg.mxu0
    %2118 = vmatpush.msra.mxu0 0.0
    %2119 = vmatpush.msra.mxu0 0.0
    %2120 = vmatpush.msra.mxu0 0.0
    %2121 = vmatpush.msra.mxu0 0.0
    %2122 = vmatpush.msra.mxu0 0.0
    %2123 = vmatpush.msra.mxu0 0.0
    %2124 = vmatpush.msra.mxu0 0.0
    %2125 = vmatpush.msra.mxu0 0.0
    %2126 = vmatpush.msra.mxu0 0.0
    %2127 = vmatpush.msra.mxu0 0.0
    %2128 = vmatpush.msra.mxu0 0.0
    %2129 = vmatpush.msra.mxu0 0.0
    %v2130 = vand.u32 %v139, 4294901760
    %2131 = vmatpush.msra.mxu0 %v2130
    %v2132 = vand.u32 %v138, 4294901760
    %2133 = vmatpush.msra.mxu0 %v2132
    %v2134 = vand.u32 %v137, 4294901760
    %2135 = vmatpush.msra.mxu0 %v2134
    %v2136 = vand.u32 %v136, 4294901760
    %2137 = vmatpush.msra.mxu0 %v2136
    %v2138 = vand.u32 %v2016, 4294901760
    %v2139 = vsub.f32 %v2016, %v2138
    %v2140 = vand.u32 %v2139, 4294901760
    %2141 = vmatmul.f32.gmra.mxu0 %v2140
    %v2142 = vpop.f32.mrf.mxu0
    %v2143 = vadd.f32 %v2116, %v2142
    %2144 = vdwg.mxu0
    %2145 = vmatpush.msra.mxu0 0.0
    %2146 = vmatpush.msra.mxu0 0.0
    %2147 = vmatpush.msra.mxu0 0.0
    %2148 = vmatpush.msra.mxu0 0.0
    %2149 = vmatpush.msra.mxu0 0.0
    %2150 = vmatpush.msra.mxu0 0.0
    %2151 = vmatpush.msra.mxu0 0.0
    %2152 = vmatpush.msra.mxu0 0.0
    %2153 = vmatpush.msra.mxu0 0.0
    %2154 = vmatpush.msra.mxu0 0.0
    %2155 = vmatpush.msra.mxu0 0.0
    %2156 = vmatpush.msra.mxu0 0.0
    %v2157 = vand.u32 %v139, 4294901760
    %v2158 = vsub.f32 %v139, %v2157
    %v2159 = vand.u32 %v2158, 4294901760
    %2160 = vmatpush.msra.mxu0 %v2159
    %v2161 = vand.u32 %v138, 4294901760
    %v2162 = vsub.f32 %v138, %v2161
    %v2163 = vand.u32 %v2162, 4294901760
    %2164 = vmatpush.msra.mxu0 %v2163
    %v2165 = vand.u32 %v137, 4294901760
    %v2166 = vsub.f32 %v137, %v2165
    %v2167 = vand.u32 %v2166, 4294901760
    %2168 = vmatpush.msra.mxu0 %v2167
    %v2169 = vand.u32 %v136, 4294901760
    %v2170 = vsub.f32 %v136, %v2169
    %v2171 = vand.u32 %v2170, 4294901760
    %2172 = vmatpush.msra.mxu0 %v2171
    %v2173 = vand.u32 %v2016, 4294901760
    %2174 = vmatmul.f32.gmra.mxu0 %v2173
    %v2175 = vpop.f32.mrf.mxu0
    %v2176 = vadd.f32 %v2143, %v2175
    %2177 = vdwg.mxu0
    %2178 = vmatpush.msra.mxu0 0.0
    %2179 = vmatpush.msra.mxu0 0.0
    %2180 = vmatpush.msra.mxu0 0.0
    %2181 = vmatpush.msra.mxu0 0.0
    %2182 = vmatpush.msra.mxu0 0.0
    %2183 = vmatpush.msra.mxu0 0.0
    %2184 = vmatpush.msra.mxu0 0.0
    %2185 = vmatpush.msra.mxu0 0.0
    %2186 = vmatpush.msra.mxu0 0.0
    %2187 = vmatpush.msra.mxu0 0.0
    %2188 = vmatpush.msra.mxu0 0.0
    %2189 = vmatpush.msra.mxu0 0.0
    %v2190 = vand.u32 %v139, 4294901760
    %2191 = vmatpush.msra.mxu0 %v2190
    %v2192 = vand.u32 %v138, 4294901760
    %2193 = vmatpush.msra.mxu0 %v2192
    %v2194 = vand.u32 %v137, 4294901760
    %2195 = vmatpush.msra.mxu0 %v2194
    %v2196 = vand.u32 %v136, 4294901760
    %2197 = vmatpush.msra.mxu0 %v2196
    %v2198 = vand.u32 %v2016, 4294901760
    %2199 = vmatmul.f32.gmra.mxu0 %v2198
    %v2200 = vpop.f32.mrf.mxu0
    %v2201 = vadd.f32 %v2176, %v2200
    %2202 = vdwg.mxu0
    %v2204 = vrot.slane %v2201, 1
    %v2207 = vadd.f32 %v2002, %v2201
    %v2208 = vadd.f32 %v2009, %v2204
    %v2209 = vadd.f32 %v2207, %v505
    %v2210 = vadd.f32 %v2208, %v505
    %v2211 = vmul.f32 %v2209, 0.5
    %v2212 = vmul.f32 %v2210, 0.5
    %v2213 = vtanh.pop %v2211
    %v2214 = vtanh.pop %v2212
    %v2215 = vmul.f32 %v2213, 0.5
    %v2216 = vmul.f32 %v2214, 0.5
    %v2217 = vadd.f32 %v2215, 0.5
    %v2218 = vadd.f32 %v2216, 0.5
    %v2219 = vtanh.pop %v2209
    %v2220 = vtanh.pop %v2210
    %v2221 = vmul.f32 %v2217, %v1903
    %v2222 = vmul.f32 %v2218, %v1904
    %2225 = vrot.lane.b32.xlu0 %v2219, 64
    %v2226 = vpop.permute.xlu0 %2225
    %2227 = vrot.lane.b32.xlu0 %v2220, 64
    %v2228 = vpop.permute.xlu0 %2227
    %v2231 = vmul.f32 %v2217, %v2226
    %v2232 = vmul.f32 %v2218, %v2228
    %2235 = vrot.lane.b32.xlu0 %v2231, 32
    %v2236 = vpop.permute.xlu0 %2235
    %2237 = vrot.lane.b32.xlu0 %v2232, 32
    %v2238 = vpop.permute.xlu0 %2237
    %v2241 = vadd.f32 %v2221, %v2236
    %v2242 = vadd.f32 %v2222, %v2238
    %v2243 = vtanh.pop %v2241
    %v2244 = vtanh.pop %v2242
    %2247 = vrot.lane.b32.xlu0 %v2243, 64
    %v2248 = vpop.permute.xlu0 %2247
    %2249 = vrot.lane.b32.xlu0 %v2244, 64
    %v2250 = vpop.permute.xlu0 %2249
    %v2253 = vmul.f32 %v2217, %v2248
    %v2254 = vmul.f32 %v2218, %v2250
    %vm2255 = vcmp.eq.s32.totalorder %v200, 5
    %v2256 = vsel %vm2255, 1, 0
    %vm2257 = vcmp.eq.s32.totalorder %v2256, 1
    %v2258 = vperm.slane %v2253, 0
    %v2259 = vperm.slane %v2254, 0
    %v2260 = vsel %vm2257, %v2258, 0.0
    %v2261 = vsel %vm2257, %v2259, 0.0
    %v2262 = vadd.f32 %v1924, %v2260
    %v2263 = vadd.f32 %v1925, %v2261
    %v2264 = vmul.f32 %v2253, %v563
    %v2265 = vmul.f32 %v2254, %v563
    %v2266 = vmul.f32 %v2241, %v568
    %v2267 = vmul.f32 %v2242, %v568
    %2270 = vrot.lane.b32.xlu0 %v2266, 64
    %v2271 = vpop.permute.xlu0 %2270
    %2272 = vrot.lane.b32.xlu0 %v2267, 64
    %v2273 = vpop.permute.xlu0 %2272
    %v2276 = vadd.f32 %v2264, %v2271
    %v2277 = vadd.f32 %v2265, %v2273
    %v2280 = vrot.slane %v2277, 7
    %v2281 = vsel %vm218, %v2280, %v2276
    %2282 = vrot.lane.b32.xlu0 %v2281, 32
    %v2283 = vpop.permute.xlu0 %2282
    %v2285 = vsel %vm589, %v2283, 0.0
    %2286 = vadd.xlane.f32.xlu0 %v2285
    %v2287 = vpop.xlane.xlu0 %2286
    %v2288 = vadd.f32 %v2287, %v595
    %v2289 = vsel %vm221, %v2288, -inf
    %2290 = vmax.xlane.f32.xlu0 %v2289
    %v2291 = vpop.xlane.xlu0 %2290
    %v2292 = vsub.f32 %v2288, %v2291
    %v2293 = vmul.f32 %v2292, 1.442695
    %v2294 = vpow.pop %v2293
    %v2295 = vsel %vm221, %v2294, 0.0
    %2296 = vadd.xlane.f32.xlu0 %v2295
    %v2297 = vpop.xlane.xlu0 %2296
    %v2298 = vrcp.pop %v2297
    %v2299 = vmul.f32 %v2297, %v2298
    %v2300 = vsub.f32 1.0, %v2299
    %v2301 = vmul.f32 %v2298, %v2300
    %v2302 = vadd.f32 %v2298, %v2301
    %vm2303 = vweird.f32 %v2297
    %vm2304 = vweird.f32 %v2298
    %vm2305 = vmor %vm2303, %vm2304
    %v2306 = vsel %vm2305, %v2298, %v2302
    %v2307 = vand.u32 2147483647, %v2297
    %vm2308 = vcmp.eq.f32.partialorder %v2307, 8.507059e+37
    %v2309 = vand.u32 %v2297, 2147483648
    %v2310 = vor.u32 1.1754944e-38, %v2309
    %v2311 = vsel %vm2308, %v2310, %v2306
    %v2312 = vmul.f32 %v2294, %v2311
    %v2313 = vrot.slane %v131, 6
    %v2314 = vrot.slane %v132, 5
    %v2315 = vsel %vm218, %v2314, %v2313
    %v2317 = vmul.f32 %v2312, %v2315
    %v2318 = vperm.slane %v2317, 0
    %v2319 = vlaneseq
    %v2320 = vshrl.u32 %v2319, 7
    %2322 = vset.pattern.permute.xlu0 %v2320
    %2323 = vperm.xlu0 %2322, %v2318
    %v2324 = vpop.permute.xlu0 %2323
    %v2325 = vperm.slane %v2317, 1
    %v2326 = vlaneseq
    %v2327 = vshrl.u32 %v2326, 7
    %2329 = vset.pattern.permute.xlu0 %v2327
    %2330 = vperm.xlu0 %2329, %v2325
    %v2331 = vpop.permute.xlu0 %2330
    %v2332 = vmul.f32 %v2324, %v135
    %v2333 = vmul.f32 %v2331, %v135
    %v2334 = vsel %vm295, %v2332, 0.0
    %v2335 = vrot.slane %v2334, 4
    %v2336 = vadd.f32 %v2334, %v2335
    %v2337 = vrot.slane %v2336, 2
    %v2338 = vadd.f32 %v2336, %v2337
    %v2339 = vrot.slane %v2338, 1
    %v2340 = vadd.f32 %v2338, %v2339
    %v2341 = vsel %vm295, %v2333, 0.0
    %v2342 = vrot.slane %v2341, 4
    %v2343 = vadd.f32 %v2341, %v2342
    %v2344 = vrot.slane %v2343, 2
    %v2345 = vadd.f32 %v2343, %v2344
    %v2346 = vrot.slane %v2345, 1
    %v2347 = vadd.f32 %v2345, %v2346
    %v2350 = vrot.slane %v2254, 7
    %v2351 = vsel %vm218, %v2350, %v2253
    %2352 = vrot.lane.b32.xlu0 %v2351, 32
    %v2353 = vpop.permute.xlu0 %2352
    %v2354 = vsel %vm210, %v2353, 0
    %2356 = vmatpush.msra.mxu0 0.0
    %2357 = vmatpush.msra.mxu0 0.0
    %2358 = vmatpush.msra.mxu0 0.0
    %2359 = vmatpush.msra.mxu0 0.0
    %2360 = vmatpush.msra.mxu0 0.0
    %2361 = vmatpush.msra.mxu0 0.0
    %2362 = vmatpush.msra.mxu0 0.0
    %2363 = vmatpush.msra.mxu0 0.0
    %2364 = vmatpush.msra.mxu0 0.0
    %2365 = vmatpush.msra.mxu0 0.0
    %2366 = vmatpush.msra.mxu0 0.0
    %2367 = vmatpush.msra.mxu0 0.0
    %v2368 = vand.u32 %v139, 4294901760
    %2369 = vmatpush.msra.mxu0 %v2368
    %v2370 = vand.u32 %v138, 4294901760
    %2371 = vmatpush.msra.mxu0 %v2370
    %v2372 = vand.u32 %v137, 4294901760
    %2373 = vmatpush.msra.mxu0 %v2372
    %v2374 = vand.u32 %v136, 4294901760
    %2375 = vmatpush.msra.mxu0 %v2374
    %v2376 = vand.u32 %v2354, 4294901760
    %v2377 = vsub.f32 %v2354, %v2376
    %v2378 = vand.u32 %v2377, 4294901760
    %v2379 = vsub.f32 %v2377, %v2378
    %v2380 = vand.u32 %v2379, 4294901760
    %2381 = vmatmul.f32.gmra.mxu0 %v2380
    %v2382 = vpop.f32.mrf.mxu0
    %v2383 = vadd.f32 0.0, %v2382
    %2384 = vdwg.mxu0
    %2385 = vmatpush.msra.mxu0 0.0
    %2386 = vmatpush.msra.mxu0 0.0
    %2387 = vmatpush.msra.mxu0 0.0
    %2388 = vmatpush.msra.mxu0 0.0
    %2389 = vmatpush.msra.mxu0 0.0
    %2390 = vmatpush.msra.mxu0 0.0
    %2391 = vmatpush.msra.mxu0 0.0
    %2392 = vmatpush.msra.mxu0 0.0
    %2393 = vmatpush.msra.mxu0 0.0
    %2394 = vmatpush.msra.mxu0 0.0
    %2395 = vmatpush.msra.mxu0 0.0
    %2396 = vmatpush.msra.mxu0 0.0
    %v2397 = vand.u32 %v139, 4294901760
    %v2398 = vsub.f32 %v139, %v2397
    %v2399 = vand.u32 %v2398, 4294901760
    %v2400 = vsub.f32 %v2398, %v2399
    %v2401 = vand.u32 %v2400, 4294901760
    %2402 = vmatpush.msra.mxu0 %v2401
    %v2403 = vand.u32 %v138, 4294901760
    %v2404 = vsub.f32 %v138, %v2403
    %v2405 = vand.u32 %v2404, 4294901760
    %v2406 = vsub.f32 %v2404, %v2405
    %v2407 = vand.u32 %v2406, 4294901760
    %2408 = vmatpush.msra.mxu0 %v2407
    %v2409 = vand.u32 %v137, 4294901760
    %v2410 = vsub.f32 %v137, %v2409
    %v2411 = vand.u32 %v2410, 4294901760
    %v2412 = vsub.f32 %v2410, %v2411
    %v2413 = vand.u32 %v2412, 4294901760
    %2414 = vmatpush.msra.mxu0 %v2413
    %v2415 = vand.u32 %v136, 4294901760
    %v2416 = vsub.f32 %v136, %v2415
    %v2417 = vand.u32 %v2416, 4294901760
    %v2418 = vsub.f32 %v2416, %v2417
    %v2419 = vand.u32 %v2418, 4294901760
    %2420 = vmatpush.msra.mxu0 %v2419
    %v2421 = vand.u32 %v2354, 4294901760
    %2422 = vmatmul.f32.gmra.mxu0 %v2421
    %v2423 = vpop.f32.mrf.mxu0
    %v2424 = vadd.f32 %v2383, %v2423
    %2425 = vdwg.mxu0
    %2426 = vmatpush.msra.mxu0 0.0
    %2427 = vmatpush.msra.mxu0 0.0
    %2428 = vmatpush.msra.mxu0 0.0
    %2429 = vmatpush.msra.mxu0 0.0
    %2430 = vmatpush.msra.mxu0 0.0
    %2431 = vmatpush.msra.mxu0 0.0
    %2432 = vmatpush.msra.mxu0 0.0
    %2433 = vmatpush.msra.mxu0 0.0
    %2434 = vmatpush.msra.mxu0 0.0
    %2435 = vmatpush.msra.mxu0 0.0
    %2436 = vmatpush.msra.mxu0 0.0
    %2437 = vmatpush.msra.mxu0 0.0
    %v2438 = vand.u32 %v139, 4294901760
    %v2439 = vsub.f32 %v139, %v2438
    %2440 = vmatpush.msra.mxu0 %v2439
    %v2441 = vand.u32 %v138, 4294901760
    %v2442 = vsub.f32 %v138, %v2441
    %2443 = vmatpush.msra.mxu0 %v2442
    %v2444 = vand.u32 %v137, 4294901760
    %v2445 = vsub.f32 %v137, %v2444
    %2446 = vmatpush.msra.mxu0 %v2445
    %v2447 = vand.u32 %v136, 4294901760
    %v2448 = vsub.f32 %v136, %v2447
    %2449 = vmatpush.msra.mxu0 %v2448
    %v2450 = vand.u32 %v2354, 4294901760
    %v2451 = vsub.f32 %v2354, %v2450
    %2452 = vmatmul.f32.gmra.mxu0 %v2451
    %v2453 = vpop.f32.mrf.mxu0
    %v2454 = vadd.f32 %v2424, %v2453
    %2455 = vdwg.mxu0
    %2456 = vmatpush.msra.mxu0 0.0
    %2457 = vmatpush.msra.mxu0 0.0
    %2458 = vmatpush.msra.mxu0 0.0
    %2459 = vmatpush.msra.mxu0 0.0
    %2460 = vmatpush.msra.mxu0 0.0
    %2461 = vmatpush.msra.mxu0 0.0
    %2462 = vmatpush.msra.mxu0 0.0
    %2463 = vmatpush.msra.mxu0 0.0
    %2464 = vmatpush.msra.mxu0 0.0
    %2465 = vmatpush.msra.mxu0 0.0
    %2466 = vmatpush.msra.mxu0 0.0
    %2467 = vmatpush.msra.mxu0 0.0
    %v2468 = vand.u32 %v139, 4294901760
    %2469 = vmatpush.msra.mxu0 %v2468
    %v2470 = vand.u32 %v138, 4294901760
    %2471 = vmatpush.msra.mxu0 %v2470
    %v2472 = vand.u32 %v137, 4294901760
    %2473 = vmatpush.msra.mxu0 %v2472
    %v2474 = vand.u32 %v136, 4294901760
    %2475 = vmatpush.msra.mxu0 %v2474
    %v2476 = vand.u32 %v2354, 4294901760
    %v2477 = vsub.f32 %v2354, %v2476
    %v2478 = vand.u32 %v2477, 4294901760
    %2479 = vmatmul.f32.gmra.mxu0 %v2478
    %v2480 = vpop.f32.mrf.mxu0
    %v2481 = vadd.f32 %v2454, %v2480
    %2482 = vdwg.mxu0
    %2483 = vmatpush.msra.mxu0 0.0
    %2484 = vmatpush.msra.mxu0 0.0
    %2485 = vmatpush.msra.mxu0 0.0
    %2486 = vmatpush.msra.mxu0 0.0
    %2487 = vmatpush.msra.mxu0 0.0
    %2488 = vmatpush.msra.mxu0 0.0
    %2489 = vmatpush.msra.mxu0 0.0
    %2490 = vmatpush.msra.mxu0 0.0
    %2491 = vmatpush.msra.mxu0 0.0
    %2492 = vmatpush.msra.mxu0 0.0
    %2493 = vmatpush.msra.mxu0 0.0
    %2494 = vmatpush.msra.mxu0 0.0
    %v2495 = vand.u32 %v139, 4294901760
    %v2496 = vsub.f32 %v139, %v2495
    %v2497 = vand.u32 %v2496, 4294901760
    %2498 = vmatpush.msra.mxu0 %v2497
    %v2499 = vand.u32 %v138, 4294901760
    %v2500 = vsub.f32 %v138, %v2499
    %v2501 = vand.u32 %v2500, 4294901760
    %2502 = vmatpush.msra.mxu0 %v2501
    %v2503 = vand.u32 %v137, 4294901760
    %v2504 = vsub.f32 %v137, %v2503
    %v2505 = vand.u32 %v2504, 4294901760
    %2506 = vmatpush.msra.mxu0 %v2505
    %v2507 = vand.u32 %v136, 4294901760
    %v2508 = vsub.f32 %v136, %v2507
    %v2509 = vand.u32 %v2508, 4294901760
    %2510 = vmatpush.msra.mxu0 %v2509
    %v2511 = vand.u32 %v2354, 4294901760
    %2512 = vmatmul.f32.gmra.mxu0 %v2511
    %v2513 = vpop.f32.mrf.mxu0
    %v2514 = vadd.f32 %v2481, %v2513
    %2515 = vdwg.mxu0
    %2516 = vmatpush.msra.mxu0 0.0
    %2517 = vmatpush.msra.mxu0 0.0
    %2518 = vmatpush.msra.mxu0 0.0
    %2519 = vmatpush.msra.mxu0 0.0
    %2520 = vmatpush.msra.mxu0 0.0
    %2521 = vmatpush.msra.mxu0 0.0
    %2522 = vmatpush.msra.mxu0 0.0
    %2523 = vmatpush.msra.mxu0 0.0
    %2524 = vmatpush.msra.mxu0 0.0
    %2525 = vmatpush.msra.mxu0 0.0
    %2526 = vmatpush.msra.mxu0 0.0
    %2527 = vmatpush.msra.mxu0 0.0
    %v2528 = vand.u32 %v139, 4294901760
    %2529 = vmatpush.msra.mxu0 %v2528
    %v2530 = vand.u32 %v138, 4294901760
    %2531 = vmatpush.msra.mxu0 %v2530
    %v2532 = vand.u32 %v137, 4294901760
    %2533 = vmatpush.msra.mxu0 %v2532
    %v2534 = vand.u32 %v136, 4294901760
    %2535 = vmatpush.msra.mxu0 %v2534
    %v2536 = vand.u32 %v2354, 4294901760
    %2537 = vmatmul.f32.gmra.mxu0 %v2536
    %v2538 = vpop.f32.mrf.mxu0
    %v2539 = vadd.f32 %v2514, %v2538
    %2540 = vdwg.mxu0
    %v2542 = vrot.slane %v2539, 1
    %v2545 = vadd.f32 %v2340, %v2539
    %v2546 = vadd.f32 %v2347, %v2542
    %v2547 = vadd.f32 %v2545, %v505
    %v2548 = vadd.f32 %v2546, %v505
    %v2549 = vmul.f32 %v2547, 0.5
    %v2550 = vmul.f32 %v2548, 0.5
    %v2551 = vtanh.pop %v2549
    %v2552 = vtanh.pop %v2550
    %v2553 = vmul.f32 %v2551, 0.5
    %v2554 = vmul.f32 %v2552, 0.5
    %v2555 = vadd.f32 %v2553, 0.5
    %v2556 = vadd.f32 %v2554, 0.5
    %v2557 = vtanh.pop %v2547
    %v2558 = vtanh.pop %v2548
    %v2559 = vmul.f32 %v2555, %v2241
    %v2560 = vmul.f32 %v2556, %v2242
    %2563 = vrot.lane.b32.xlu0 %v2557, 64
    %v2564 = vpop.permute.xlu0 %2563
    %2565 = vrot.lane.b32.xlu0 %v2558, 64
    %v2566 = vpop.permute.xlu0 %2565
    %v2569 = vmul.f32 %v2555, %v2564
    %v2570 = vmul.f32 %v2556, %v2566
    %2573 = vrot.lane.b32.xlu0 %v2569, 32
    %v2574 = vpop.permute.xlu0 %2573
    %2575 = vrot.lane.b32.xlu0 %v2570, 32
    %v2576 = vpop.permute.xlu0 %2575
    %v2579 = vadd.f32 %v2559, %v2574
    %v2580 = vadd.f32 %v2560, %v2576
    %v2581 = vtanh.pop %v2579
    %v2582 = vtanh.pop %v2580
    %2585 = vrot.lane.b32.xlu0 %v2581, 64
    %v2586 = vpop.permute.xlu0 %2585
    %2587 = vrot.lane.b32.xlu0 %v2582, 64
    %v2588 = vpop.permute.xlu0 %2587
    %v2591 = vmul.f32 %v2555, %v2586
    %v2592 = vmul.f32 %v2556, %v2588
    %vm2593 = vcmp.eq.s32.totalorder %v200, 6
    %v2594 = vsel %vm2593, 1, 0
    %vm2595 = vcmp.eq.s32.totalorder %v2594, 1
    %v2596 = vperm.slane %v2591, 0
    %v2597 = vperm.slane %v2592, 0
    %v2598 = vsel %vm2595, %v2596, 0.0
    %v2599 = vsel %vm2595, %v2597, 0.0
    %v2600 = vadd.f32 %v2262, %v2598
    %v2601 = vadd.f32 %v2263, %v2599
    %v2602 = vmul.f32 %v2591, %v563
    %v2603 = vmul.f32 %v2592, %v563
    %v2604 = vmul.f32 %v2579, %v568
    %v2605 = vmul.f32 %v2580, %v568
    %2608 = vrot.lane.b32.xlu0 %v2604, 64
    %v2609 = vpop.permute.xlu0 %2608
    %2610 = vrot.lane.b32.xlu0 %v2605, 64
    %v2611 = vpop.permute.xlu0 %2610
    %v2614 = vadd.f32 %v2602, %v2609
    %v2615 = vadd.f32 %v2603, %v2611
    %v2618 = vrot.slane %v2615, 7
    %v2619 = vsel %vm218, %v2618, %v2614
    %2620 = vrot.lane.b32.xlu0 %v2619, 32
    %v2621 = vpop.permute.xlu0 %2620
    %v2623 = vsel %vm589, %v2621, 0.0
    %2624 = vadd.xlane.f32.xlu0 %v2623
    %v2625 = vpop.xlane.xlu0 %2624
    %v2626 = vadd.f32 %v2625, %v595
    %v2627 = vsel %vm221, %v2626, -inf
    %2628 = vmax.xlane.f32.xlu0 %v2627
    %v2629 = vpop.xlane.xlu0 %2628
    %v2630 = vsub.f32 %v2626, %v2629
    %v2631 = vmul.f32 %v2630, 1.442695
    %v2632 = vpow.pop %v2631
    %v2633 = vsel %vm221, %v2632, 0.0
    %2634 = vadd.xlane.f32.xlu0 %v2633
    %v2635 = vpop.xlane.xlu0 %2634
    %v2636 = vrcp.pop %v2635
    %v2637 = vmul.f32 %v2635, %v2636
    %v2638 = vsub.f32 1.0, %v2637
    %v2639 = vmul.f32 %v2636, %v2638
    %v2640 = vadd.f32 %v2636, %v2639
    %vm2641 = vweird.f32 %v2635
    %vm2642 = vweird.f32 %v2636
    %vm2643 = vmor %vm2641, %vm2642
    %v2644 = vsel %vm2643, %v2636, %v2640
    %v2645 = vand.u32 2147483647, %v2635
    %vm2646 = vcmp.eq.f32.partialorder %v2645, 8.507059e+37
    %v2647 = vand.u32 %v2635, 2147483648
    %v2648 = vor.u32 1.1754944e-38, %v2647
    %v2649 = vsel %vm2646, %v2648, %v2644
    %v2650 = vmul.f32 %v2632, %v2649
    %v2651 = vrot.slane %v131, 7
    %v2652 = vrot.slane %v132, 6
    %v2653 = vsel %vm218, %v2652, %v2651
    %v2655 = vmul.f32 %v2650, %v2653
    %v2656 = vperm.slane %v2655, 0
    %v2657 = vlaneseq
    %v2658 = vshrl.u32 %v2657, 7
    %2660 = vset.pattern.permute.xlu0 %v2658
    %2661 = vperm.xlu0 %2660, %v2656
    %v2662 = vpop.permute.xlu0 %2661
    %v2663 = vperm.slane %v2655, 1
    %v2664 = vlaneseq
    %v2665 = vshrl.u32 %v2664, 7
    %2667 = vset.pattern.permute.xlu0 %v2665
    %2668 = vperm.xlu0 %2667, %v2663
    %v2669 = vpop.permute.xlu0 %2668
    %v2670 = vmul.f32 %v2662, %v135
    %v2671 = vmul.f32 %v2669, %v135
    %v2672 = vsel %vm295, %v2670, 0.0
    %v2673 = vrot.slane %v2672, 4
    %v2674 = vadd.f32 %v2672, %v2673
    %v2675 = vrot.slane %v2674, 2
    %v2676 = vadd.f32 %v2674, %v2675
    %v2677 = vrot.slane %v2676, 1
    %v2678 = vadd.f32 %v2676, %v2677
    %v2679 = vsel %vm295, %v2671, 0.0
    %v2680 = vrot.slane %v2679, 4
    %v2681 = vadd.f32 %v2679, %v2680
    %v2682 = vrot.slane %v2681, 2
    %v2683 = vadd.f32 %v2681, %v2682
    %v2684 = vrot.slane %v2683, 1
    %v2685 = vadd.f32 %v2683, %v2684
    %v2688 = vrot.slane %v2592, 7
    %v2689 = vsel %vm218, %v2688, %v2591
    %2690 = vrot.lane.b32.xlu0 %v2689, 32
    %v2691 = vpop.permute.xlu0 %2690
    %v2692 = vsel %vm210, %v2691, 0
    %2694 = vmatpush.msra.mxu0 0.0
    %2695 = vmatpush.msra.mxu0 0.0
    %2696 = vmatpush.msra.mxu0 0.0
    %2697 = vmatpush.msra.mxu0 0.0
    %2698 = vmatpush.msra.mxu0 0.0
    %2699 = vmatpush.msra.mxu0 0.0
    %2700 = vmatpush.msra.mxu0 0.0
    %2701 = vmatpush.msra.mxu0 0.0
    %2702 = vmatpush.msra.mxu0 0.0
    %2703 = vmatpush.msra.mxu0 0.0
    %2704 = vmatpush.msra.mxu0 0.0
    %2705 = vmatpush.msra.mxu0 0.0
    %v2706 = vand.u32 %v139, 4294901760
    %2707 = vmatpush.msra.mxu0 %v2706
    %v2708 = vand.u32 %v138, 4294901760
    %2709 = vmatpush.msra.mxu0 %v2708
    %v2710 = vand.u32 %v137, 4294901760
    %2711 = vmatpush.msra.mxu0 %v2710
    %v2712 = vand.u32 %v136, 4294901760
    %2713 = vmatpush.msra.mxu0 %v2712
    %v2714 = vand.u32 %v2692, 4294901760
    %v2715 = vsub.f32 %v2692, %v2714
    %v2716 = vand.u32 %v2715, 4294901760
    %v2717 = vsub.f32 %v2715, %v2716
    %v2718 = vand.u32 %v2717, 4294901760
    %2719 = vmatmul.f32.gmra.mxu0 %v2718
    %v2720 = vpop.f32.mrf.mxu0
    %v2721 = vadd.f32 0.0, %v2720
    %2722 = vdwg.mxu0
    %2723 = vmatpush.msra.mxu0 0.0
    %2724 = vmatpush.msra.mxu0 0.0
    %2725 = vmatpush.msra.mxu0 0.0
    %2726 = vmatpush.msra.mxu0 0.0
    %2727 = vmatpush.msra.mxu0 0.0
    %2728 = vmatpush.msra.mxu0 0.0
    %2729 = vmatpush.msra.mxu0 0.0
    %2730 = vmatpush.msra.mxu0 0.0
    %2731 = vmatpush.msra.mxu0 0.0
    %2732 = vmatpush.msra.mxu0 0.0
    %2733 = vmatpush.msra.mxu0 0.0
    %2734 = vmatpush.msra.mxu0 0.0
    %v2735 = vand.u32 %v139, 4294901760
    %v2736 = vsub.f32 %v139, %v2735
    %v2737 = vand.u32 %v2736, 4294901760
    %v2738 = vsub.f32 %v2736, %v2737
    %v2739 = vand.u32 %v2738, 4294901760
    %2740 = vmatpush.msra.mxu0 %v2739
    %v2741 = vand.u32 %v138, 4294901760
    %v2742 = vsub.f32 %v138, %v2741
    %v2743 = vand.u32 %v2742, 4294901760
    %v2744 = vsub.f32 %v2742, %v2743
    %v2745 = vand.u32 %v2744, 4294901760
    %2746 = vmatpush.msra.mxu0 %v2745
    %v2747 = vand.u32 %v137, 4294901760
    %v2748 = vsub.f32 %v137, %v2747
    %v2749 = vand.u32 %v2748, 4294901760
    %v2750 = vsub.f32 %v2748, %v2749
    %v2751 = vand.u32 %v2750, 4294901760
    %2752 = vmatpush.msra.mxu0 %v2751
    %v2753 = vand.u32 %v136, 4294901760
    %v2754 = vsub.f32 %v136, %v2753
    %v2755 = vand.u32 %v2754, 4294901760
    %v2756 = vsub.f32 %v2754, %v2755
    %v2757 = vand.u32 %v2756, 4294901760
    %2758 = vmatpush.msra.mxu0 %v2757
    %v2759 = vand.u32 %v2692, 4294901760
    %2760 = vmatmul.f32.gmra.mxu0 %v2759
    %v2761 = vpop.f32.mrf.mxu0
    %v2762 = vadd.f32 %v2721, %v2761
    %2763 = vdwg.mxu0
    %2764 = vmatpush.msra.mxu0 0.0
    %2765 = vmatpush.msra.mxu0 0.0
    %2766 = vmatpush.msra.mxu0 0.0
    %2767 = vmatpush.msra.mxu0 0.0
    %2768 = vmatpush.msra.mxu0 0.0
    %2769 = vmatpush.msra.mxu0 0.0
    %2770 = vmatpush.msra.mxu0 0.0
    %2771 = vmatpush.msra.mxu0 0.0
    %2772 = vmatpush.msra.mxu0 0.0
    %2773 = vmatpush.msra.mxu0 0.0
    %2774 = vmatpush.msra.mxu0 0.0
    %2775 = vmatpush.msra.mxu0 0.0
    %v2776 = vand.u32 %v139, 4294901760
    %v2777 = vsub.f32 %v139, %v2776
    %2778 = vmatpush.msra.mxu0 %v2777
    %v2779 = vand.u32 %v138, 4294901760
    %v2780 = vsub.f32 %v138, %v2779
    %2781 = vmatpush.msra.mxu0 %v2780
    %v2782 = vand.u32 %v137, 4294901760
    %v2783 = vsub.f32 %v137, %v2782
    %2784 = vmatpush.msra.mxu0 %v2783
    %v2785 = vand.u32 %v136, 4294901760
    %v2786 = vsub.f32 %v136, %v2785
    %2787 = vmatpush.msra.mxu0 %v2786
    %v2788 = vand.u32 %v2692, 4294901760
    %v2789 = vsub.f32 %v2692, %v2788
    %2790 = vmatmul.f32.gmra.mxu0 %v2789
    %v2791 = vpop.f32.mrf.mxu0
    %v2792 = vadd.f32 %v2762, %v2791
    %2793 = vdwg.mxu0
    %2794 = vmatpush.msra.mxu0 0.0
    %2795 = vmatpush.msra.mxu0 0.0
    %2796 = vmatpush.msra.mxu0 0.0
    %2797 = vmatpush.msra.mxu0 0.0
    %2798 = vmatpush.msra.mxu0 0.0
    %2799 = vmatpush.msra.mxu0 0.0
    %2800 = vmatpush.msra.mxu0 0.0
    %2801 = vmatpush.msra.mxu0 0.0
    %2802 = vmatpush.msra.mxu0 0.0
    %2803 = vmatpush.msra.mxu0 0.0
    %2804 = vmatpush.msra.mxu0 0.0
    %2805 = vmatpush.msra.mxu0 0.0
    %v2806 = vand.u32 %v139, 4294901760
    %2807 = vmatpush.msra.mxu0 %v2806
    %v2808 = vand.u32 %v138, 4294901760
    %2809 = vmatpush.msra.mxu0 %v2808
    %v2810 = vand.u32 %v137, 4294901760
    %2811 = vmatpush.msra.mxu0 %v2810
    %v2812 = vand.u32 %v136, 4294901760
    %2813 = vmatpush.msra.mxu0 %v2812
    %v2814 = vand.u32 %v2692, 4294901760
    %v2815 = vsub.f32 %v2692, %v2814
    %v2816 = vand.u32 %v2815, 4294901760
    %2817 = vmatmul.f32.gmra.mxu0 %v2816
    %v2818 = vpop.f32.mrf.mxu0
    %v2819 = vadd.f32 %v2792, %v2818
    %2820 = vdwg.mxu0
    %2821 = vmatpush.msra.mxu0 0.0
    %2822 = vmatpush.msra.mxu0 0.0
    %2823 = vmatpush.msra.mxu0 0.0
    %2824 = vmatpush.msra.mxu0 0.0
    %2825 = vmatpush.msra.mxu0 0.0
    %2826 = vmatpush.msra.mxu0 0.0
    %2827 = vmatpush.msra.mxu0 0.0
    %2828 = vmatpush.msra.mxu0 0.0
    %2829 = vmatpush.msra.mxu0 0.0
    %2830 = vmatpush.msra.mxu0 0.0
    %2831 = vmatpush.msra.mxu0 0.0
    %2832 = vmatpush.msra.mxu0 0.0
    %v2833 = vand.u32 %v139, 4294901760
    %v2834 = vsub.f32 %v139, %v2833
    %v2835 = vand.u32 %v2834, 4294901760
    %2836 = vmatpush.msra.mxu0 %v2835
    %v2837 = vand.u32 %v138, 4294901760
    %v2838 = vsub.f32 %v138, %v2837
    %v2839 = vand.u32 %v2838, 4294901760
    %2840 = vmatpush.msra.mxu0 %v2839
    %v2841 = vand.u32 %v137, 4294901760
    %v2842 = vsub.f32 %v137, %v2841
    %v2843 = vand.u32 %v2842, 4294901760
    %2844 = vmatpush.msra.mxu0 %v2843
    %v2845 = vand.u32 %v136, 4294901760
    %v2846 = vsub.f32 %v136, %v2845
    %v2847 = vand.u32 %v2846, 4294901760
    %2848 = vmatpush.msra.mxu0 %v2847
    %v2849 = vand.u32 %v2692, 4294901760
    %2850 = vmatmul.f32.gmra.mxu0 %v2849
    %v2851 = vpop.f32.mrf.mxu0
    %v2852 = vadd.f32 %v2819, %v2851
    %2853 = vdwg.mxu0
    %2854 = vmatpush.msra.mxu0 0.0
    %2855 = vmatpush.msra.mxu0 0.0
    %2856 = vmatpush.msra.mxu0 0.0
    %2857 = vmatpush.msra.mxu0 0.0
    %2858 = vmatpush.msra.mxu0 0.0
    %2859 = vmatpush.msra.mxu0 0.0
    %2860 = vmatpush.msra.mxu0 0.0
    %2861 = vmatpush.msra.mxu0 0.0
    %2862 = vmatpush.msra.mxu0 0.0
    %2863 = vmatpush.msra.mxu0 0.0
    %2864 = vmatpush.msra.mxu0 0.0
    %2865 = vmatpush.msra.mxu0 0.0
    %v2866 = vand.u32 %v139, 4294901760
    %2867 = vmatpush.msra.mxu0 %v2866
    %v2868 = vand.u32 %v138, 4294901760
    %2869 = vmatpush.msra.mxu0 %v2868
    %v2870 = vand.u32 %v137, 4294901760
    %2871 = vmatpush.msra.mxu0 %v2870
    %v2872 = vand.u32 %v136, 4294901760
    %2873 = vmatpush.msra.mxu0 %v2872
    %v2874 = vand.u32 %v2692, 4294901760
    %2875 = vmatmul.f32.gmra.mxu0 %v2874
    %v2876 = vpop.f32.mrf.mxu0
    %v2877 = vadd.f32 %v2852, %v2876
    %2878 = vdwg.mxu0
    %v2880 = vrot.slane %v2877, 1
    %v2883 = vadd.f32 %v2678, %v2877
    %v2884 = vadd.f32 %v2685, %v2880
    %v2885 = vadd.f32 %v2883, %v505
    %v2886 = vadd.f32 %v2884, %v505
    %v2887 = vmul.f32 %v2885, 0.5
    %v2888 = vmul.f32 %v2886, 0.5
    %v2889 = vtanh.pop %v2887
    %v2890 = vtanh.pop %v2888
    %v2891 = vmul.f32 %v2889, 0.5
    %v2892 = vmul.f32 %v2890, 0.5
    %v2893 = vadd.f32 %v2891, 0.5
    %v2894 = vadd.f32 %v2892, 0.5
    %v2895 = vtanh.pop %v2885
    %v2896 = vtanh.pop %v2886
    %v2897 = vmul.f32 %v2893, %v2579
    %v2898 = vmul.f32 %v2894, %v2580
    %2901 = vrot.lane.b32.xlu0 %v2895, 64
    %v2902 = vpop.permute.xlu0 %2901
    %2903 = vrot.lane.b32.xlu0 %v2896, 64
    %v2904 = vpop.permute.xlu0 %2903
    %v2907 = vmul.f32 %v2893, %v2902
    %v2908 = vmul.f32 %v2894, %v2904
    %2911 = vrot.lane.b32.xlu0 %v2907, 32
    %v2912 = vpop.permute.xlu0 %2911
    %2913 = vrot.lane.b32.xlu0 %v2908, 32
    %v2914 = vpop.permute.xlu0 %2913
    %v2917 = vadd.f32 %v2897, %v2912
    %v2918 = vadd.f32 %v2898, %v2914
    %v2919 = vtanh.pop %v2917
    %v2920 = vtanh.pop %v2918
    %2923 = vrot.lane.b32.xlu0 %v2919, 64
    %v2924 = vpop.permute.xlu0 %2923
    %2925 = vrot.lane.b32.xlu0 %v2920, 64
    %v2926 = vpop.permute.xlu0 %2925
    %v2929 = vmul.f32 %v2893, %v2924
    %v2930 = vmul.f32 %v2894, %v2926
    %vm2931 = vcmp.eq.s32.totalorder %v200, 7
    %v2932 = vsel %vm2931, 1, 0
    %vm2933 = vcmp.eq.s32.totalorder %v2932, 1
    %v2934 = vperm.slane %v2929, 0
    %v2935 = vperm.slane %v2930, 0
    %v2936 = vsel %vm2933, %v2934, 0.0
    %v2937 = vsel %vm2933, %v2935, 0.0
    %v2938 = vadd.f32 %v2600, %v2936
    %v2939 = vadd.f32 %v2601, %v2937
    %2942 = vrot.lane.b32.xlu0 %v2938, 32
    %v2943 = vpop.permute.xlu0 %2942
    %2944 = vrot.lane.b32.xlu0 %v2939, 32
    %v2945 = vpop.permute.xlu0 %2944
    %v2946 = vsel %vm210, %v2943, 0
    %v2948 = vsel %vm210, %v2945, 0
    %2950 = vmatpush.msra.mxu0 0.0
    %2951 = vmatpush.msra.mxu0 0.0
    %2952 = vmatpush.msra.mxu0 0.0
    %2953 = vmatpush.msra.mxu0 0.0
    %2954 = vmatpush.msra.mxu0 0.0
    %2955 = vmatpush.msra.mxu0 0.0
    %2956 = vmatpush.msra.mxu0 0.0
    %2957 = vmatpush.msra.mxu0 0.0
    %2958 = vmatpush.msra.mxu0 0.0
    %2959 = vmatpush.msra.mxu0 0.0
    %2960 = vmatpush.msra.mxu0 0.0
    %2961 = vmatpush.msra.mxu0 0.0
    %v2962 = vand.u32 %v160, 4294901760
    %2963 = vmatpush.msra.mxu0 %v2962
    %v2964 = vand.u32 %v159, 4294901760
    %2965 = vmatpush.msra.mxu0 %v2964
    %v2966 = vand.u32 %v158, 4294901760
    %2967 = vmatpush.msra.mxu0 %v2966
    %v2968 = vand.u32 %v157, 4294901760
    %2969 = vmatpush.msra.mxu0 %v2968
    %v2970 = vand.u32 %v2946, 4294901760
    %v2971 = vsub.f32 %v2946, %v2970
    %v2972 = vand.u32 %v2971, 4294901760
    %v2973 = vsub.f32 %v2971, %v2972
    %v2974 = vand.u32 %v2973, 4294901760
    %2975 = vmatmul.f32.gmra.mxu0 %v2974
    %v2976 = vpop.f32.mrf.mxu0
    %v2977 = vadd.f32 0.0, %v2976
    %v2978 = vand.u32 %v2948, 4294901760
    %v2979 = vsub.f32 %v2948, %v2978
    %v2980 = vand.u32 %v2979, 4294901760
    %v2981 = vsub.f32 %v2979, %v2980
    %v2982 = vand.u32 %v2981, 4294901760
    %2983 = vmatmul.f32.gmra.mxu0 %v2982
    %v2984 = vpop.f32.mrf.mxu0
    %v2985 = vadd.f32 0.0, %v2984
    %2986 = vdwg.mxu0
    %2987 = vmatpush.msra.mxu0 0.0
    %2988 = vmatpush.msra.mxu0 0.0
    %2989 = vmatpush.msra.mxu0 0.0
    %2990 = vmatpush.msra.mxu0 0.0
    %2991 = vmatpush.msra.mxu0 0.0
    %2992 = vmatpush.msra.mxu0 0.0
    %2993 = vmatpush.msra.mxu0 0.0
    %2994 = vmatpush.msra.mxu0 0.0
    %2995 = vmatpush.msra.mxu0 0.0
    %2996 = vmatpush.msra.mxu0 0.0
    %2997 = vmatpush.msra.mxu0 0.0
    %2998 = vmatpush.msra.mxu0 0.0
    %v2999 = vand.u32 %v160, 4294901760
    %v3000 = vsub.f32 %v160, %v2999
    %v3001 = vand.u32 %v3000, 4294901760
    %v3002 = vsub.f32 %v3000, %v3001
    %v3003 = vand.u32 %v3002, 4294901760
    %3004 = vmatpush.msra.mxu0 %v3003
    %v3005 = vand.u32 %v159, 4294901760
    %v3006 = vsub.f32 %v159, %v3005
    %v3007 = vand.u32 %v3006, 4294901760
    %v3008 = vsub.f32 %v3006, %v3007
    %v3009 = vand.u32 %v3008, 4294901760
    %3010 = vmatpush.msra.mxu0 %v3009
    %v3011 = vand.u32 %v158, 4294901760
    %v3012 = vsub.f32 %v158, %v3011
    %v3013 = vand.u32 %v3012, 4294901760
    %v3014 = vsub.f32 %v3012, %v3013
    %v3015 = vand.u32 %v3014, 4294901760
    %3016 = vmatpush.msra.mxu0 %v3015
    %v3017 = vand.u32 %v157, 4294901760
    %v3018 = vsub.f32 %v157, %v3017
    %v3019 = vand.u32 %v3018, 4294901760
    %v3020 = vsub.f32 %v3018, %v3019
    %v3021 = vand.u32 %v3020, 4294901760
    %3022 = vmatpush.msra.mxu0 %v3021
    %v3023 = vand.u32 %v2946, 4294901760
    %3024 = vmatmul.f32.gmra.mxu0 %v3023
    %v3025 = vpop.f32.mrf.mxu0
    %v3026 = vadd.f32 %v2977, %v3025
    %v3027 = vand.u32 %v2948, 4294901760
    %3028 = vmatmul.f32.gmra.mxu0 %v3027
    %v3029 = vpop.f32.mrf.mxu0
    %v3030 = vadd.f32 %v2985, %v3029
    %3031 = vdwg.mxu0
    %3032 = vmatpush.msra.mxu0 0.0
    %3033 = vmatpush.msra.mxu0 0.0
    %3034 = vmatpush.msra.mxu0 0.0
    %3035 = vmatpush.msra.mxu0 0.0
    %3036 = vmatpush.msra.mxu0 0.0
    %3037 = vmatpush.msra.mxu0 0.0
    %3038 = vmatpush.msra.mxu0 0.0
    %3039 = vmatpush.msra.mxu0 0.0
    %3040 = vmatpush.msra.mxu0 0.0
    %3041 = vmatpush.msra.mxu0 0.0
    %3042 = vmatpush.msra.mxu0 0.0
    %3043 = vmatpush.msra.mxu0 0.0
    %v3044 = vand.u32 %v160, 4294901760
    %v3045 = vsub.f32 %v160, %v3044
    %3046 = vmatpush.msra.mxu0 %v3045
    %v3047 = vand.u32 %v159, 4294901760
    %v3048 = vsub.f32 %v159, %v3047
    %3049 = vmatpush.msra.mxu0 %v3048
    %v3050 = vand.u32 %v158, 4294901760
    %v3051 = vsub.f32 %v158, %v3050
    %3052 = vmatpush.msra.mxu0 %v3051
    %v3053 = vand.u32 %v157, 4294901760
    %v3054 = vsub.f32 %v157, %v3053
    %3055 = vmatpush.msra.mxu0 %v3054
    %v3056 = vand.u32 %v2946, 4294901760
    %v3057 = vsub.f32 %v2946, %v3056
    %3058 = vmatmul.f32.gmra.mxu0 %v3057
    %v3059 = vpop.f32.mrf.mxu0
    %v3060 = vadd.f32 %v3026, %v3059
    %v3061 = vand.u32 %v2948, 4294901760
    %v3062 = vsub.f32 %v2948, %v3061
    %3063 = vmatmul.f32.gmra.mxu0 %v3062
    %v3064 = vpop.f32.mrf.mxu0
    %v3065 = vadd.f32 %v3030, %v3064
    %3066 = vdwg.mxu0
    %3067 = vmatpush.msra.mxu0 0.0
    %3068 = vmatpush.msra.mxu0 0.0
    %3069 = vmatpush.msra.mxu0 0.0
    %3070 = vmatpush.msra.mxu0 0.0
    %3071 = vmatpush.msra.mxu0 0.0
    %3072 = vmatpush.msra.mxu0 0.0
    %3073 = vmatpush.msra.mxu0 0.0
    %3074 = vmatpush.msra.mxu0 0.0
    %3075 = vmatpush.msra.mxu0 0.0
    %3076 = vmatpush.msra.mxu0 0.0
    %3077 = vmatpush.msra.mxu0 0.0
    %3078 = vmatpush.msra.mxu0 0.0
    %v3079 = vand.u32 %v160, 4294901760
    %3080 = vmatpush.msra.mxu0 %v3079
    %v3081 = vand.u32 %v159, 4294901760
    %3082 = vmatpush.msra.mxu0 %v3081
    %v3083 = vand.u32 %v158, 4294901760
    %3084 = vmatpush.msra.mxu0 %v3083
    %v3085 = vand.u32 %v157, 4294901760
    %3086 = vmatpush.msra.mxu0 %v3085
    %v3087 = vand.u32 %v2946, 4294901760
    %v3088 = vsub.f32 %v2946, %v3087
    %v3089 = vand.u32 %v3088, 4294901760
    %3090 = vmatmul.f32.gmra.mxu0 %v3089
    %v3091 = vpop.f32.mrf.mxu0
    %v3092 = vadd.f32 %v3060, %v3091
    %v3093 = vand.u32 %v2948, 4294901760
    %v3094 = vsub.f32 %v2948, %v3093
    %v3095 = vand.u32 %v3094, 4294901760
    %3096 = vmatmul.f32.gmra.mxu0 %v3095
    %v3097 = vpop.f32.mrf.mxu0
    %v3098 = vadd.f32 %v3065, %v3097
    %3099 = vdwg.mxu0
    %3100 = vmatpush.msra.mxu0 0.0
    %3101 = vmatpush.msra.mxu0 0.0
    %3102 = vmatpush.msra.mxu0 0.0
    %3103 = vmatpush.msra.mxu0 0.0
    %3104 = vmatpush.msra.mxu0 0.0
    %3105 = vmatpush.msra.mxu0 0.0
    %3106 = vmatpush.msra.mxu0 0.0
    %3107 = vmatpush.msra.mxu0 0.0
    %3108 = vmatpush.msra.mxu0 0.0
    %3109 = vmatpush.msra.mxu0 0.0
    %3110 = vmatpush.msra.mxu0 0.0
    %3111 = vmatpush.msra.mxu0 0.0
    %v3112 = vand.u32 %v160, 4294901760
    %v3113 = vsub.f32 %v160, %v3112
    %v3114 = vand.u32 %v3113, 4294901760
    %3115 = vmatpush.msra.mxu0 %v3114
    %v3116 = vand.u32 %v159, 4294901760
    %v3117 = vsub.f32 %v159, %v3116
    %v3118 = vand.u32 %v3117, 4294901760
    %3119 = vmatpush.msra.mxu0 %v3118
    %v3120 = vand.u32 %v158, 4294901760
    %v3121 = vsub.f32 %v158, %v3120
    %v3122 = vand.u32 %v3121, 4294901760
    %3123 = vmatpush.msra.mxu0 %v3122
    %v3124 = vand.u32 %v157, 4294901760
    %v3125 = vsub.f32 %v157, %v3124
    %v3126 = vand.u32 %v3125, 4294901760
    %3127 = vmatpush.msra.mxu0 %v3126
    %v3128 = vand.u32 %v2946, 4294901760
    %3129 = vmatmul.f32.gmra.mxu0 %v3128
    %v3130 = vpop.f32.mrf.mxu0
    %v3131 = vadd.f32 %v3092, %v3130
    %v3132 = vand.u32 %v2948, 4294901760
    %3133 = vmatmul.f32.gmra.mxu0 %v3132
    %v3134 = vpop.f32.mrf.mxu0
    %v3135 = vadd.f32 %v3098, %v3134
    %3136 = vdwg.mxu0
    %3137 = vmatpush.msra.mxu0 0.0
    %3138 = vmatpush.msra.mxu0 0.0
    %3139 = vmatpush.msra.mxu0 0.0
    %3140 = vmatpush.msra.mxu0 0.0
    %3141 = vmatpush.msra.mxu0 0.0
    %3142 = vmatpush.msra.mxu0 0.0
    %3143 = vmatpush.msra.mxu0 0.0
    %3144 = vmatpush.msra.mxu0 0.0
    %3145 = vmatpush.msra.mxu0 0.0
    %3146 = vmatpush.msra.mxu0 0.0
    %3147 = vmatpush.msra.mxu0 0.0
    %3148 = vmatpush.msra.mxu0 0.0
    %v3149 = vand.u32 %v160, 4294901760
    %3150 = vmatpush.msra.mxu0 %v3149
    %v3151 = vand.u32 %v159, 4294901760
    %3152 = vmatpush.msra.mxu0 %v3151
    %v3153 = vand.u32 %v158, 4294901760
    %3154 = vmatpush.msra.mxu0 %v3153
    %v3155 = vand.u32 %v157, 4294901760
    %3156 = vmatpush.msra.mxu0 %v3155
    %v3157 = vand.u32 %v2946, 4294901760
    %3158 = vmatmul.f32.gmra.mxu0 %v3157
    %v3159 = vpop.f32.mrf.mxu0
    %v3160 = vadd.f32 %v3131, %v3159
    %v3161 = vand.u32 %v2948, 4294901760
    %3162 = vmatmul.f32.gmra.mxu0 %v3161
    %v3163 = vpop.f32.mrf.mxu0
    %v3164 = vadd.f32 %v3135, %v3163
    %3165 = vdwg.mxu0
    %3166 = vmatpush.msra.mxu0 0.0
    %3167 = vmatpush.msra.mxu0 0.0
    %3168 = vmatpush.msra.mxu0 0.0
    %3169 = vmatpush.msra.mxu0 0.0
    %3170 = vmatpush.msra.mxu0 0.0
    %3171 = vmatpush.msra.mxu0 0.0
    %3172 = vmatpush.msra.mxu0 0.0
    %3173 = vmatpush.msra.mxu0 0.0
    %3174 = vmatpush.msra.mxu0 0.0
    %3175 = vmatpush.msra.mxu0 0.0
    %3176 = vmatpush.msra.mxu0 0.0
    %3177 = vmatpush.msra.mxu0 0.0
    %v3178 = vand.u32 %v151, 4294901760
    %3179 = vmatpush.msra.mxu0 %v3178
    %v3180 = vand.u32 %v149, 4294901760
    %3181 = vmatpush.msra.mxu0 %v3180
    %v3182 = vand.u32 %v147, 4294901760
    %3183 = vmatpush.msra.mxu0 %v3182
    %v3184 = vand.u32 %v145, 4294901760
    %3185 = vmatpush.msra.mxu0 %v3184
    %v3186 = vand.u32 %v311, 4294901760
    %v3187 = vsub.f32 %v311, %v3186
    %v3188 = vand.u32 %v3187, 4294901760
    %v3189 = vsub.f32 %v3187, %v3188
    %v3190 = vand.u32 %v3189, 4294901760
    %3191 = vmatmul.f32.gmra.mxu0 %v3190
    %v3192 = vpop.f32.mrf.mxu0
    %v3193 = vadd.f32 0.0, %v3192
    %3194 = vdwg.mxu0
    %3195 = vmatpush.msra.mxu0 0.0
    %3196 = vmatpush.msra.mxu0 0.0
    %3197 = vmatpush.msra.mxu0 0.0
    %3198 = vmatpush.msra.mxu0 0.0
    %3199 = vmatpush.msra.mxu0 0.0
    %3200 = vmatpush.msra.mxu0 0.0
    %3201 = vmatpush.msra.mxu0 0.0
    %3202 = vmatpush.msra.mxu0 0.0
    %3203 = vmatpush.msra.mxu0 0.0
    %3204 = vmatpush.msra.mxu0 0.0
    %3205 = vmatpush.msra.mxu0 0.0
    %3206 = vmatpush.msra.mxu0 0.0
    %v3207 = vand.u32 %v151, 4294901760
    %v3208 = vsub.f32 %v151, %v3207
    %v3209 = vand.u32 %v3208, 4294901760
    %v3210 = vsub.f32 %v3208, %v3209
    %v3211 = vand.u32 %v3210, 4294901760
    %3212 = vmatpush.msra.mxu0 %v3211
    %v3213 = vand.u32 %v149, 4294901760
    %v3214 = vsub.f32 %v149, %v3213
    %v3215 = vand.u32 %v3214, 4294901760
    %v3216 = vsub.f32 %v3214, %v3215
    %v3217 = vand.u32 %v3216, 4294901760
    %3218 = vmatpush.msra.mxu0 %v3217
    %v3219 = vand.u32 %v147, 4294901760
    %v3220 = vsub.f32 %v147, %v3219
    %v3221 = vand.u32 %v3220, 4294901760
    %v3222 = vsub.f32 %v3220, %v3221
    %v3223 = vand.u32 %v3222, 4294901760
    %3224 = vmatpush.msra.mxu0 %v3223
    %v3225 = vand.u32 %v145, 4294901760
    %v3226 = vsub.f32 %v145, %v3225
    %v3227 = vand.u32 %v3226, 4294901760
    %v3228 = vsub.f32 %v3226, %v3227
    %v3229 = vand.u32 %v3228, 4294901760
    %3230 = vmatpush.msra.mxu0 %v3229
    %v3231 = vand.u32 %v311, 4294901760
    %3232 = vmatmul.f32.gmra.mxu0 %v3231
    %v3233 = vpop.f32.mrf.mxu0
    %v3234 = vadd.f32 %v3193, %v3233
    %3235 = vdwg.mxu0
    %3236 = vmatpush.msra.mxu0 0.0
    %3237 = vmatpush.msra.mxu0 0.0
    %3238 = vmatpush.msra.mxu0 0.0
    %3239 = vmatpush.msra.mxu0 0.0
    %3240 = vmatpush.msra.mxu0 0.0
    %3241 = vmatpush.msra.mxu0 0.0
    %3242 = vmatpush.msra.mxu0 0.0
    %3243 = vmatpush.msra.mxu0 0.0
    %3244 = vmatpush.msra.mxu0 0.0
    %3245 = vmatpush.msra.mxu0 0.0
    %3246 = vmatpush.msra.mxu0 0.0
    %3247 = vmatpush.msra.mxu0 0.0
    %v3248 = vand.u32 %v151, 4294901760
    %v3249 = vsub.f32 %v151, %v3248
    %3250 = vmatpush.msra.mxu0 %v3249
    %v3251 = vand.u32 %v149, 4294901760
    %v3252 = vsub.f32 %v149, %v3251
    %3253 = vmatpush.msra.mxu0 %v3252
    %v3254 = vand.u32 %v147, 4294901760
    %v3255 = vsub.f32 %v147, %v3254
    %3256 = vmatpush.msra.mxu0 %v3255
    %v3257 = vand.u32 %v145, 4294901760
    %v3258 = vsub.f32 %v145, %v3257
    %3259 = vmatpush.msra.mxu0 %v3258
    %v3260 = vand.u32 %v311, 4294901760
    %v3261 = vsub.f32 %v311, %v3260
    %3262 = vmatmul.f32.gmra.mxu0 %v3261
    %v3263 = vpop.f32.mrf.mxu0
    %v3264 = vadd.f32 %v3234, %v3263
    %3265 = vdwg.mxu0
    %3266 = vmatpush.msra.mxu0 0.0
    %3267 = vmatpush.msra.mxu0 0.0
    %3268 = vmatpush.msra.mxu0 0.0
    %3269 = vmatpush.msra.mxu0 0.0
    %3270 = vmatpush.msra.mxu0 0.0
    %3271 = vmatpush.msra.mxu0 0.0
    %3272 = vmatpush.msra.mxu0 0.0
    %3273 = vmatpush.msra.mxu0 0.0
    %3274 = vmatpush.msra.mxu0 0.0
    %3275 = vmatpush.msra.mxu0 0.0
    %3276 = vmatpush.msra.mxu0 0.0
    %3277 = vmatpush.msra.mxu0 0.0
    %v3278 = vand.u32 %v151, 4294901760
    %3279 = vmatpush.msra.mxu0 %v3278
    %v3280 = vand.u32 %v149, 4294901760
    %3281 = vmatpush.msra.mxu0 %v3280
    %v3282 = vand.u32 %v147, 4294901760
    %3283 = vmatpush.msra.mxu0 %v3282
    %v3284 = vand.u32 %v145, 4294901760
    %3285 = vmatpush.msra.mxu0 %v3284
    %v3286 = vand.u32 %v311, 4294901760
    %v3287 = vsub.f32 %v311, %v3286
    %v3288 = vand.u32 %v3287, 4294901760
    %3289 = vmatmul.f32.gmra.mxu0 %v3288
    %v3290 = vpop.f32.mrf.mxu0
    %v3291 = vadd.f32 %v3264, %v3290
    %3292 = vdwg.mxu0
    %3293 = vmatpush.msra.mxu0 0.0
    %3294 = vmatpush.msra.mxu0 0.0
    %3295 = vmatpush.msra.mxu0 0.0
    %3296 = vmatpush.msra.mxu0 0.0
    %3297 = vmatpush.msra.mxu0 0.0
    %3298 = vmatpush.msra.mxu0 0.0
    %3299 = vmatpush.msra.mxu0 0.0
    %3300 = vmatpush.msra.mxu0 0.0
    %3301 = vmatpush.msra.mxu0 0.0
    %3302 = vmatpush.msra.mxu0 0.0
    %3303 = vmatpush.msra.mxu0 0.0
    %3304 = vmatpush.msra.mxu0 0.0
    %v3305 = vand.u32 %v151, 4294901760
    %v3306 = vsub.f32 %v151, %v3305
    %v3307 = vand.u32 %v3306, 4294901760
    %3308 = vmatpush.msra.mxu0 %v3307
    %v3309 = vand.u32 %v149, 4294901760
    %v3310 = vsub.f32 %v149, %v3309
    %v3311 = vand.u32 %v3310, 4294901760
    %3312 = vmatpush.msra.mxu0 %v3311
    %v3313 = vand.u32 %v147, 4294901760
    %v3314 = vsub.f32 %v147, %v3313
    %v3315 = vand.u32 %v3314, 4294901760
    %3316 = vmatpush.msra.mxu0 %v3315
    %v3317 = vand.u32 %v145, 4294901760
    %v3318 = vsub.f32 %v145, %v3317
    %v3319 = vand.u32 %v3318, 4294901760
    %3320 = vmatpush.msra.mxu0 %v3319
    %v3321 = vand.u32 %v311, 4294901760
    %3322 = vmatmul.f32.gmra.mxu0 %v3321
    %v3323 = vpop.f32.mrf.mxu0
    %v3324 = vadd.f32 %v3291, %v3323
    %3325 = vdwg.mxu0
    %3326 = vmatpush.msra.mxu0 0.0
    %3327 = vmatpush.msra.mxu0 0.0
    %3328 = vmatpush.msra.mxu0 0.0
    %3329 = vmatpush.msra.mxu0 0.0
    %3330 = vmatpush.msra.mxu0 0.0
    %3331 = vmatpush.msra.mxu0 0.0
    %3332 = vmatpush.msra.mxu0 0.0
    %3333 = vmatpush.msra.mxu0 0.0
    %3334 = vmatpush.msra.mxu0 0.0
    %3335 = vmatpush.msra.mxu0 0.0
    %3336 = vmatpush.msra.mxu0 0.0
    %3337 = vmatpush.msra.mxu0 0.0
    %v3338 = vand.u32 %v151, 4294901760
    %3339 = vmatpush.msra.mxu0 %v3338
    %v3340 = vand.u32 %v149, 4294901760
    %3341 = vmatpush.msra.mxu0 %v3340
    %v3342 = vand.u32 %v147, 4294901760
    %3343 = vmatpush.msra.mxu0 %v3342
    %v3344 = vand.u32 %v145, 4294901760
    %3345 = vmatpush.msra.mxu0 %v3344
    %v3346 = vand.u32 %v311, 4294901760
    %3347 = vmatmul.f32.gmra.mxu0 %v3346
    %v3348 = vpop.f32.mrf.mxu0
    %v3349 = vadd.f32 %v3324, %v3348
    %3350 = vdwg.mxu0
    %3351 = vmatpush.msra.mxu0 0.0
    %3352 = vmatpush.msra.mxu0 0.0
    %3353 = vmatpush.msra.mxu0 0.0
    %3354 = vmatpush.msra.mxu0 0.0
    %3355 = vmatpush.msra.mxu0 0.0
    %3356 = vmatpush.msra.mxu0 0.0
    %3357 = vmatpush.msra.mxu0 0.0
    %3358 = vmatpush.msra.mxu0 0.0
    %3359 = vmatpush.msra.mxu0 0.0
    %3360 = vmatpush.msra.mxu0 0.0
    %3361 = vmatpush.msra.mxu0 0.0
    %3362 = vmatpush.msra.mxu0 0.0
    %v3363 = vand.u32 %v152, 4294901760
    %3364 = vmatpush.msra.mxu0 %v3363
    %v3365 = vand.u32 %v150, 4294901760
    %3366 = vmatpush.msra.mxu0 %v3365
    %v3367 = vand.u32 %v148, 4294901760
    %3368 = vmatpush.msra.mxu0 %v3367
    %v3369 = vand.u32 %v146, 4294901760
    %3370 = vmatpush.msra.mxu0 %v3369
    %v3371 = vand.u32 %v311, 4294901760
    %v3372 = vsub.f32 %v311, %v3371
    %v3373 = vand.u32 %v3372, 4294901760
    %v3374 = vsub.f32 %v3372, %v3373
    %v3375 = vand.u32 %v3374, 4294901760
    %3376 = vmatmul.f32.gmra.mxu0 %v3375
    %v3377 = vpop.f32.mrf.mxu0
    %v3378 = vadd.f32 0.0, %v3377
    %3379 = vdwg.mxu0
    %3380 = vmatpush.msra.mxu0 0.0
    %3381 = vmatpush.msra.mxu0 0.0
    %3382 = vmatpush.msra.mxu0 0.0
    %3383 = vmatpush.msra.mxu0 0.0
    %3384 = vmatpush.msra.mxu0 0.0
    %3385 = vmatpush.msra.mxu0 0.0
    %3386 = vmatpush.msra.mxu0 0.0
    %3387 = vmatpush.msra.mxu0 0.0
    %3388 = vmatpush.msra.mxu0 0.0
    %3389 = vmatpush.msra.mxu0 0.0
    %3390 = vmatpush.msra.mxu0 0.0
    %3391 = vmatpush.msra.mxu0 0.0
    %v3392 = vand.u32 %v152, 4294901760
    %v3393 = vsub.f32 %v152, %v3392
    %v3394 = vand.u32 %v3393, 4294901760
    %v3395 = vsub.f32 %v3393, %v3394
    %v3396 = vand.u32 %v3395, 4294901760
    %3397 = vmatpush.msra.mxu0 %v3396
    %v3398 = vand.u32 %v150, 4294901760
    %v3399 = vsub.f32 %v150, %v3398
    %v3400 = vand.u32 %v3399, 4294901760
    %v3401 = vsub.f32 %v3399, %v3400
    %v3402 = vand.u32 %v3401, 4294901760
    %3403 = vmatpush.msra.mxu0 %v3402
    %v3404 = vand.u32 %v148, 4294901760
    %v3405 = vsub.f32 %v148, %v3404
    %v3406 = vand.u32 %v3405, 4294901760
    %v3407 = vsub.f32 %v3405, %v3406
    %v3408 = vand.u32 %v3407, 4294901760
    %3409 = vmatpush.msra.mxu0 %v3408
    %v3410 = vand.u32 %v146, 4294901760
    %v3411 = vsub.f32 %v146, %v3410
    %v3412 = vand.u32 %v3411, 4294901760
    %v3413 = vsub.f32 %v3411, %v3412
    %v3414 = vand.u32 %v3413, 4294901760
    %3415 = vmatpush.msra.mxu0 %v3414
    %v3416 = vand.u32 %v311, 4294901760
    %3417 = vmatmul.f32.gmra.mxu0 %v3416
    %v3418 = vpop.f32.mrf.mxu0
    %v3419 = vadd.f32 %v3378, %v3418
    %3420 = vdwg.mxu0
    %3421 = vmatpush.msra.mxu0 0.0
    %3422 = vmatpush.msra.mxu0 0.0
    %3423 = vmatpush.msra.mxu0 0.0
    %3424 = vmatpush.msra.mxu0 0.0
    %3425 = vmatpush.msra.mxu0 0.0
    %3426 = vmatpush.msra.mxu0 0.0
    %3427 = vmatpush.msra.mxu0 0.0
    %3428 = vmatpush.msra.mxu0 0.0
    %3429 = vmatpush.msra.mxu0 0.0
    %3430 = vmatpush.msra.mxu0 0.0
    %3431 = vmatpush.msra.mxu0 0.0
    %3432 = vmatpush.msra.mxu0 0.0
    %v3433 = vand.u32 %v152, 4294901760
    %v3434 = vsub.f32 %v152, %v3433
    %3435 = vmatpush.msra.mxu0 %v3434
    %v3436 = vand.u32 %v150, 4294901760
    %v3437 = vsub.f32 %v150, %v3436
    %3438 = vmatpush.msra.mxu0 %v3437
    %v3439 = vand.u32 %v148, 4294901760
    %v3440 = vsub.f32 %v148, %v3439
    %3441 = vmatpush.msra.mxu0 %v3440
    %v3442 = vand.u32 %v146, 4294901760
    %v3443 = vsub.f32 %v146, %v3442
    %3444 = vmatpush.msra.mxu0 %v3443
    %v3445 = vand.u32 %v311, 4294901760
    %v3446 = vsub.f32 %v311, %v3445
    %3447 = vmatmul.f32.gmra.mxu0 %v3446
    %v3448 = vpop.f32.mrf.mxu0
    %v3449 = vadd.f32 %v3419, %v3448
    %3450 = vdwg.mxu0
    %3451 = vmatpush.msra.mxu0 0.0
    %3452 = vmatpush.msra.mxu0 0.0
    %3453 = vmatpush.msra.mxu0 0.0
    %3454 = vmatpush.msra.mxu0 0.0
    %3455 = vmatpush.msra.mxu0 0.0
    %3456 = vmatpush.msra.mxu0 0.0
    %3457 = vmatpush.msra.mxu0 0.0
    %3458 = vmatpush.msra.mxu0 0.0
    %3459 = vmatpush.msra.mxu0 0.0
    %3460 = vmatpush.msra.mxu0 0.0
    %3461 = vmatpush.msra.mxu0 0.0
    %3462 = vmatpush.msra.mxu0 0.0
    %v3463 = vand.u32 %v152, 4294901760
    %3464 = vmatpush.msra.mxu0 %v3463
    %v3465 = vand.u32 %v150, 4294901760
    %3466 = vmatpush.msra.mxu0 %v3465
    %v3467 = vand.u32 %v148, 4294901760
    %3468 = vmatpush.msra.mxu0 %v3467
    %v3469 = vand.u32 %v146, 4294901760
    %3470 = vmatpush.msra.mxu0 %v3469
    %v3471 = vand.u32 %v311, 4294901760
    %v3472 = vsub.f32 %v311, %v3471
    %v3473 = vand.u32 %v3472, 4294901760
    %3474 = vmatmul.f32.gmra.mxu0 %v3473
    %v3475 = vpop.f32.mrf.mxu0
    %v3476 = vadd.f32 %v3449, %v3475
    %3477 = vdwg.mxu0
    %3478 = vmatpush.msra.mxu0 0.0
    %3479 = vmatpush.msra.mxu0 0.0
    %3480 = vmatpush.msra.mxu0 0.0
    %3481 = vmatpush.msra.mxu0 0.0
    %3482 = vmatpush.msra.mxu0 0.0
    %3483 = vmatpush.msra.mxu0 0.0
    %3484 = vmatpush.msra.mxu0 0.0
    %3485 = vmatpush.msra.mxu0 0.0
    %3486 = vmatpush.msra.mxu0 0.0
    %3487 = vmatpush.msra.mxu0 0.0
    %3488 = vmatpush.msra.mxu0 0.0
    %3489 = vmatpush.msra.mxu0 0.0
    %v3490 = vand.u32 %v152, 4294901760
    %v3491 = vsub.f32 %v152, %v3490
    %v3492 = vand.u32 %v3491, 4294901760
    %3493 = vmatpush.msra.mxu0 %v3492
    %v3494 = vand.u32 %v150, 4294901760
    %v3495 = vsub.f32 %v150, %v3494
    %v3496 = vand.u32 %v3495, 4294901760
    %3497 = vmatpush.msra.mxu0 %v3496
    %v3498 = vand.u32 %v148, 4294901760
    %v3499 = vsub.f32 %v148, %v3498
    %v3500 = vand.u32 %v3499, 4294901760
    %3501 = vmatpush.msra.mxu0 %v3500
    %v3502 = vand.u32 %v146, 4294901760
    %v3503 = vsub.f32 %v146, %v3502
    %v3504 = vand.u32 %v3503, 4294901760
    %3505 = vmatpush.msra.mxu0 %v3504
    %v3506 = vand.u32 %v311, 4294901760
    %3507 = vmatmul.f32.gmra.mxu0 %v3506
    %v3508 = vpop.f32.mrf.mxu0
    %v3509 = vadd.f32 %v3476, %v3508
    %3510 = vdwg.mxu0
    %3511 = vmatpush.msra.mxu0 0.0
    %3512 = vmatpush.msra.mxu0 0.0
    %3513 = vmatpush.msra.mxu0 0.0
    %3514 = vmatpush.msra.mxu0 0.0
    %3515 = vmatpush.msra.mxu0 0.0
    %3516 = vmatpush.msra.mxu0 0.0
    %3517 = vmatpush.msra.mxu0 0.0
    %3518 = vmatpush.msra.mxu0 0.0
    %3519 = vmatpush.msra.mxu0 0.0
    %3520 = vmatpush.msra.mxu0 0.0
    %3521 = vmatpush.msra.mxu0 0.0
    %3522 = vmatpush.msra.mxu0 0.0
    %v3523 = vand.u32 %v152, 4294901760
    %3524 = vmatpush.msra.mxu0 %v3523
    %v3525 = vand.u32 %v150, 4294901760
    %3526 = vmatpush.msra.mxu0 %v3525
    %v3527 = vand.u32 %v148, 4294901760
    %3528 = vmatpush.msra.mxu0 %v3527
    %v3529 = vand.u32 %v146, 4294901760
    %3530 = vmatpush.msra.mxu0 %v3529
    %v3531 = vand.u32 %v311, 4294901760
    %3532 = vmatmul.f32.gmra.mxu0 %v3531
    %v3533 = vpop.f32.mrf.mxu0
    %v3534 = vadd.f32 %v3509, %v3533
    %3535 = vdwg.mxu0
    %3536 = vmatpush.msra.mxu0 0.0
    %3537 = vmatpush.msra.mxu0 0.0
    %3538 = vmatpush.msra.mxu0 0.0
    %3539 = vmatpush.msra.mxu0 0.0
    %3540 = vmatpush.msra.mxu0 0.0
    %3541 = vmatpush.msra.mxu0 0.0
    %3542 = vmatpush.msra.mxu0 0.0
    %3543 = vmatpush.msra.mxu0 0.0
    %3544 = vmatpush.msra.mxu0 0.0
    %3545 = vmatpush.msra.mxu0 0.0
    %3546 = vmatpush.msra.mxu0 0.0
    %3547 = vmatpush.msra.mxu0 0.0
    %v3548 = vand.u32 %v156, 4294901760
    %3549 = vmatpush.msra.mxu0 %v3548
    %v3550 = vand.u32 %v155, 4294901760
    %3551 = vmatpush.msra.mxu0 %v3550
    %v3552 = vand.u32 %v154, 4294901760
    %3553 = vmatpush.msra.mxu0 %v3552
    %v3554 = vand.u32 %v153, 4294901760
    %3555 = vmatpush.msra.mxu0 %v3554
    %v3556 = vand.u32 %v311, 4294901760
    %v3557 = vsub.f32 %v311, %v3556
    %v3558 = vand.u32 %v3557, 4294901760
    %v3559 = vsub.f32 %v3557, %v3558
    %v3560 = vand.u32 %v3559, 4294901760
    %3561 = vmatmul.f32.gmra.mxu0 %v3560
    %v3562 = vpop.f32.mrf.mxu0
    %v3563 = vadd.f32 0.0, %v3562
    %3564 = vdwg.mxu0
    %3565 = vmatpush.msra.mxu0 0.0
    %3566 = vmatpush.msra.mxu0 0.0
    %3567 = vmatpush.msra.mxu0 0.0
    %3568 = vmatpush.msra.mxu0 0.0
    %3569 = vmatpush.msra.mxu0 0.0
    %3570 = vmatpush.msra.mxu0 0.0
    %3571 = vmatpush.msra.mxu0 0.0
    %3572 = vmatpush.msra.mxu0 0.0
    %3573 = vmatpush.msra.mxu0 0.0
    %3574 = vmatpush.msra.mxu0 0.0
    %3575 = vmatpush.msra.mxu0 0.0
    %3576 = vmatpush.msra.mxu0 0.0
    %v3577 = vand.u32 %v156, 4294901760
    %v3578 = vsub.f32 %v156, %v3577
    %v3579 = vand.u32 %v3578, 4294901760
    %v3580 = vsub.f32 %v3578, %v3579
    %v3581 = vand.u32 %v3580, 4294901760
    %3582 = vmatpush.msra.mxu0 %v3581
    %v3583 = vand.u32 %v155, 4294901760
    %v3584 = vsub.f32 %v155, %v3583
    %v3585 = vand.u32 %v3584, 4294901760
    %v3586 = vsub.f32 %v3584, %v3585
    %v3587 = vand.u32 %v3586, 4294901760
    %3588 = vmatpush.msra.mxu0 %v3587
    %v3589 = vand.u32 %v154, 4294901760
    %v3590 = vsub.f32 %v154, %v3589
    %v3591 = vand.u32 %v3590, 4294901760
    %v3592 = vsub.f32 %v3590, %v3591
    %v3593 = vand.u32 %v3592, 4294901760
    %3594 = vmatpush.msra.mxu0 %v3593
    %v3595 = vand.u32 %v153, 4294901760
    %v3596 = vsub.f32 %v153, %v3595
    %v3597 = vand.u32 %v3596, 4294901760
    %v3598 = vsub.f32 %v3596, %v3597
    %v3599 = vand.u32 %v3598, 4294901760
    %3600 = vmatpush.msra.mxu0 %v3599
    %v3601 = vand.u32 %v311, 4294901760
    %3602 = vmatmul.f32.gmra.mxu0 %v3601
    %v3603 = vpop.f32.mrf.mxu0
    %v3604 = vadd.f32 %v3563, %v3603
    %3605 = vdwg.mxu0
    %3606 = vmatpush.msra.mxu0 0.0
    %3607 = vmatpush.msra.mxu0 0.0
    %3608 = vmatpush.msra.mxu0 0.0
    %3609 = vmatpush.msra.mxu0 0.0
    %3610 = vmatpush.msra.mxu0 0.0
    %3611 = vmatpush.msra.mxu0 0.0
    %3612 = vmatpush.msra.mxu0 0.0
    %3613 = vmatpush.msra.mxu0 0.0
    %3614 = vmatpush.msra.mxu0 0.0
    %3615 = vmatpush.msra.mxu0 0.0
    %3616 = vmatpush.msra.mxu0 0.0
    %3617 = vmatpush.msra.mxu0 0.0
    %v3618 = vand.u32 %v156, 4294901760
    %v3619 = vsub.f32 %v156, %v3618
    %3620 = vmatpush.msra.mxu0 %v3619
    %v3621 = vand.u32 %v155, 4294901760
    %v3622 = vsub.f32 %v155, %v3621
    %3623 = vmatpush.msra.mxu0 %v3622
    %v3624 = vand.u32 %v154, 4294901760
    %v3625 = vsub.f32 %v154, %v3624
    %3626 = vmatpush.msra.mxu0 %v3625
    %v3627 = vand.u32 %v153, 4294901760
    %v3628 = vsub.f32 %v153, %v3627
    %3629 = vmatpush.msra.mxu0 %v3628
    %v3630 = vand.u32 %v311, 4294901760
    %v3631 = vsub.f32 %v311, %v3630
    %3632 = vmatmul.f32.gmra.mxu0 %v3631
    %v3633 = vpop.f32.mrf.mxu0
    %v3634 = vadd.f32 %v3604, %v3633
    %3635 = vdwg.mxu0
    %3636 = vmatpush.msra.mxu0 0.0
    %3637 = vmatpush.msra.mxu0 0.0
    %3638 = vmatpush.msra.mxu0 0.0
    %3639 = vmatpush.msra.mxu0 0.0
    %3640 = vmatpush.msra.mxu0 0.0
    %3641 = vmatpush.msra.mxu0 0.0
    %3642 = vmatpush.msra.mxu0 0.0
    %3643 = vmatpush.msra.mxu0 0.0
    %3644 = vmatpush.msra.mxu0 0.0
    %3645 = vmatpush.msra.mxu0 0.0
    %3646 = vmatpush.msra.mxu0 0.0
    %3647 = vmatpush.msra.mxu0 0.0
    %v3648 = vand.u32 %v156, 4294901760
    %3649 = vmatpush.msra.mxu0 %v3648
    %v3650 = vand.u32 %v155, 4294901760
    %3651 = vmatpush.msra.mxu0 %v3650
    %v3652 = vand.u32 %v154, 4294901760
    %3653 = vmatpush.msra.mxu0 %v3652
    %v3654 = vand.u32 %v153, 4294901760
    %3655 = vmatpush.msra.mxu0 %v3654
    %v3656 = vand.u32 %v311, 4294901760
    %v3657 = vsub.f32 %v311, %v3656
    %v3658 = vand.u32 %v3657, 4294901760
    %3659 = vmatmul.f32.gmra.mxu0 %v3658
    %v3660 = vpop.f32.mrf.mxu0
    %v3661 = vadd.f32 %v3634, %v3660
    %3662 = vdwg.mxu0
    %3663 = vmatpush.msra.mxu0 0.0
    %3664 = vmatpush.msra.mxu0 0.0
    %3665 = vmatpush.msra.mxu0 0.0
    %3666 = vmatpush.msra.mxu0 0.0
    %3667 = vmatpush.msra.mxu0 0.0
    %3668 = vmatpush.msra.mxu0 0.0
    %3669 = vmatpush.msra.mxu0 0.0
    %3670 = vmatpush.msra.mxu0 0.0
    %3671 = vmatpush.msra.mxu0 0.0
    %3672 = vmatpush.msra.mxu0 0.0
    %3673 = vmatpush.msra.mxu0 0.0
    %3674 = vmatpush.msra.mxu0 0.0
    %v3675 = vand.u32 %v156, 4294901760
    %v3676 = vsub.f32 %v156, %v3675
    %v3677 = vand.u32 %v3676, 4294901760
    %3678 = vmatpush.msra.mxu0 %v3677
    %v3679 = vand.u32 %v155, 4294901760
    %v3680 = vsub.f32 %v155, %v3679
    %v3681 = vand.u32 %v3680, 4294901760
    %3682 = vmatpush.msra.mxu0 %v3681
    %v3683 = vand.u32 %v154, 4294901760
    %v3684 = vsub.f32 %v154, %v3683
    %v3685 = vand.u32 %v3684, 4294901760
    %3686 = vmatpush.msra.mxu0 %v3685
    %v3687 = vand.u32 %v153, 4294901760
    %v3688 = vsub.f32 %v153, %v3687
    %v3689 = vand.u32 %v3688, 4294901760
    %3690 = vmatpush.msra.mxu0 %v3689
    %v3691 = vand.u32 %v311, 4294901760
    %3692 = vmatmul.f32.gmra.mxu0 %v3691
    %v3693 = vpop.f32.mrf.mxu0
    %v3694 = vadd.f32 %v3661, %v3693
    %3695 = vdwg.mxu0
    %3696 = vmatpush.msra.mxu0 0.0
    %3697 = vmatpush.msra.mxu0 0.0
    %3698 = vmatpush.msra.mxu0 0.0
    %3699 = vmatpush.msra.mxu0 0.0
    %3700 = vmatpush.msra.mxu0 0.0
    %3701 = vmatpush.msra.mxu0 0.0
    %3702 = vmatpush.msra.mxu0 0.0
    %3703 = vmatpush.msra.mxu0 0.0
    %3704 = vmatpush.msra.mxu0 0.0
    %3705 = vmatpush.msra.mxu0 0.0
    %3706 = vmatpush.msra.mxu0 0.0
    %3707 = vmatpush.msra.mxu0 0.0
    %v3708 = vand.u32 %v156, 4294901760
    %3709 = vmatpush.msra.mxu0 %v3708
    %v3710 = vand.u32 %v155, 4294901760
    %3711 = vmatpush.msra.mxu0 %v3710
    %v3712 = vand.u32 %v154, 4294901760
    %3713 = vmatpush.msra.mxu0 %v3712
    %v3714 = vand.u32 %v153, 4294901760
    %3715 = vmatpush.msra.mxu0 %v3714
    %v3716 = vand.u32 %v311, 4294901760
    %3717 = vmatmul.f32.gmra.mxu0 %v3716
    %v3718 = vpop.f32.mrf.mxu0
    %v3719 = vadd.f32 %v3694, %v3718
    %3720 = vdwg.mxu0
    %v3721 = vadd.f32 %v3534, %v3719
    %v3723 = vperm.slane %v161, 0
    %v3725 = vadd.f32 %v3721, %v3723
    %v3727 = vrot.slane %v3725, 1
    %v3728 = vperm.slane %v3725, 0
    %v3729 = vperm.slane %v3727, 0
    %v3732 = vadd.f32 %v3160, %v3728
    %v3733 = vadd.f32 %v3164, %v3729
    %v3734 = vtanh.pop %v3732
    %v3735 = vtanh.pop %v3733
    %v3737 = vperm.slane %v162, 0
    %v3739 = vmul.f32 %v3734, %v3737
    %v3740 = vmul.f32 %v3735, %v3737
    %v3741 = vsel %vm210, %v3739, 0.0
    %3742 = vadd.xlane.f32.xlu0 %v3741
    %v3743 = vpop.xlane.xlu0 %3742
    %v3744 = vsel %vm210, %v3740, 0.0
    %3745 = vadd.xlane.f32.xlu0 %v3744
    %v3746 = vpop.xlane.xlu0 %3745
    %v3748 = vperm.slane %v163, 0
    %3749 = vset.pattern.permute.xlu0 0
    %3750 = vperm.xlu0 %3749, %v3748
    %v3751 = vpop.permute.xlu0 %3750
    %v3753 = vadd.f32 %v3743, %v3751
    %v3754 = vadd.f32 %v3746, %v3751
    %v3757 = vlaneseq
    %v3758 = vand.u32 %v3757, 127
    %v3759 = vperm.slane %v3753, %v3758
    %v3760 = vperm.slane %v3754, %v3758
    %v3761 = vsel %vm218, %v3760, %v3759
    %vm3763 = vcmask 58368
    %v3764 = vsel %vm3763, %v3761, -inf
    %3765 = vmax.xlane.f32.xlu0 %v3764
    %v3766 = vpop.xlane.xlu0 %3765
    %v3768 = vperm.slane %v3766, 0
    %v3769 = vperm.slane %v3766, 1
    %v3772 = vsub.f32 %v3753, %v3768
    %v3773 = vsub.f32 %v3754, %v3769
    %v3774 = vmul.f32 %v3772, 1.442695
    %v3775 = vpow.pop %v3774
    %v3776 = vmul.f32 %v3773, 1.442695
    %v3777 = vpow.pop %v3776
    %3780 = vset.pattern.permute.xlu0 0
    %3781 = vperm.xlu0 %3780, %v3775
    %v3782 = vpop.permute.xlu0 %3781
    %3783 = vset.pattern.permute.xlu0 0
    %3784 = vperm.xlu0 %3783, %v3777
    %v3785 = vpop.permute.xlu0 %3784
    %v3786 = vperm.slane %v3782, %v3758
    %v3787 = vperm.slane %v3785, %v3758
    %v3788 = vsel %vm218, %v3787, %v3786
    %v3790 = vsel %vm3763, %v3788, 0.0
    %3791 = vadd.xlane.f32.xlu0 %v3790
    %v3792 = vpop.xlane.xlu0 %3791
    %v3794 = vperm.slane %v3792, 0
    %v3795 = vperm.slane %v3792, 1
    %v3798 = vrcp.pop %v3794
    %v3799 = vmul.f32 %v3794, %v3798
    %v3800 = vsub.f32 1.0, %v3799
    %v3801 = vmul.f32 %v3798, %v3800
    %v3802 = vadd.f32 %v3798, %v3801
    %vm3803 = vweird.f32 %v3794
    %vm3804 = vweird.f32 %v3798
    %vm3805 = vmor %vm3803, %vm3804
    %v3806 = vsel %vm3805, %v3798, %v3802
    %v3807 = vand.u32 2147483647, %v3794
    %vm3808 = vcmp.eq.f32.partialorder %v3807, 8.507059e+37
    %v3809 = vand.u32 %v3794, 2147483648
    %v3810 = vor.u32 1.1754944e-38, %v3809
    %v3811 = vsel %vm3808, %v3810, %v3806
    %v3812 = vmul.f32 %v3775, %v3811
    %v3813 = vrcp.pop %v3795
    %v3814 = vmul.f32 %v3795, %v3813
    %v3815 = vsub.f32 1.0, %v3814
    %v3816 = vmul.f32 %v3813, %v3815
    %v3817 = vadd.f32 %v3813, %v3816
    %vm3818 = vweird.f32 %v3795
    %vm3819 = vweird.f32 %v3813
    %vm3820 = vmor %vm3818, %vm3819
    %v3821 = vsel %vm3820, %v3813, %v3817
    %v3822 = vand.u32 2147483647, %v3795
    %vm3823 = vcmp.eq.f32.partialorder %v3822, 8.507059e+37
    %v3824 = vand.u32 %v3795, 2147483648
    %v3825 = vor.u32 1.1754944e-38, %v3824
    %v3826 = vsel %vm3823, %v3825, %v3821
    %v3827 = vmul.f32 %v3777, %v3826
    %3829 = vset.pattern.permute.xlu0 0
    %3830 = vperm.xlu0 %3829, %v3812
    %v3831 = vpop.permute.xlu0 %3830
    %3834 = vset.pattern.permute.xlu0 0
    %3835 = vperm.xlu0 %3834, %v3827
    %v3836 = vpop.permute.xlu0 %3835
    %v3838 = vmul.f32 %v3831, %v2938
    %v3839 = vmul.f32 %v3836, %v2939
    %vm3840 = vcmask 1048320
    %v3841 = vsel %vm3840, %v3838, 0.0
    %v3842 = vrot.slane %v3841, 4
    %v3843 = vadd.f32 %v3841, %v3842
    %v3844 = vrot.slane %v3843, 2
    %v3845 = vadd.f32 %v3843, %v3844
    %v3846 = vrot.slane %v3845, 1
    %v3847 = vadd.f32 %v3845, %v3846
    %v3848 = vsel %vm3840, %v3839, 0.0
    %v3849 = vrot.slane %v3848, 4
    %v3850 = vadd.f32 %v3848, %v3849
    %v3851 = vrot.slane %v3850, 2
    %v3852 = vadd.f32 %v3850, %v3851
    %v3853 = vrot.slane %v3852, 1
    %v3854 = vadd.f32 %v3852, %v3853
    %v3856 = vperm.slane %v164, 0
    %3857 = vrot.lane.b32.xlu0 %v3856, 96
    %v3858 = vpop.permute.xlu0 %3857
    %v3860 = vmul.f32 %v3847, %v3858
    %v3861 = vmul.f32 %v3854, %v3858
    %v3864 = vrot.slane %v3861, 7
    %v3865 = vsel %vm218, %v3864, %v3860
    %3866 = vrot.lane.b32.xlu0 %v3865, 32
    %v3867 = vpop.permute.xlu0 %3866
    %v3869 = vsel %vm589, %v3867, 0.0
    %3870 = vadd.xlane.f32.xlu0 %v3869
    %v3871 = vpop.xlane.xlu0 %3870
    %v3873 = vperm.slane %v165, 0
    %v3875 = vmul.f32 %v133, %v3873
    %v3876 = vmul.f32 %v134, %v3873
    %v3877 = vadd.f32 %v3875, 0.0
    %v3878 = vadd.f32 %v3876, 0.0
    %v3881 = vrot.slane %v3878, 7
    %v3882 = vsel %vm218, %v3881, %v3877
    %v3884 = vadd.f32 %v3871, %v3882
    %v3886 = vperm.slane %v166, 0
    %v3888 = vadd.f32 %v3884, %v3886
    %3890 = vset.pattern.permute.xlu0 0
    %3891 = vperm.xlu0 %3890, %v3888
    %v3892 = vpop.permute.xlu0 %3891
    %v3895 = vperm.slane %v167, 0
    %v3897 = vmul.f32 %v3892, %v3895
    %v3898 = vadd.f32 %v3897, %v3349
    %v3900 = vperm.slane %v168, 0
    %v3902 = vadd.f32 %v3898, %v3900
    %v3903 = vmul.f32 %v3902, 0.5
    %v3904 = vtanh.pop %v3903
    %v3905 = vmul.f32 %v3904, 0.5
    %v3906 = vadd.f32 %v3905, 0.5
    %v3907 = vtanh.pop %v3902
    %v3908 = vmul.f32 %v3906, 0.0
    %3910 = vrot.lane.b32.xlu0 %v3907, 64
    %v3911 = vpop.permute.xlu0 %3910
    %v3913 = vmul.f32 %v3906, %v3911
    %3915 = vrot.lane.b32.xlu0 %v3913, 32
    %v3916 = vpop.permute.xlu0 %3915
    %v3918 = vadd.f32 %v3908, %v3916
    %v3919 = vtanh.pop %v3918
    %3921 = vrot.lane.b32.xlu0 %v3919, 64
    %v3922 = vpop.permute.xlu0 %3921
    %v3924 = vmul.f32 %v3906, %v3922
    %3926 = vrot.lane.b32.xlu0 %v3924, 32
    %v3927 = vpop.permute.xlu0 %3926
    %v3928 = vsel %vm210, %v3927, 0
    %3930 = vmatpush.msra.mxu0 0.0
    %3931 = vmatpush.msra.mxu0 0.0
    %3932 = vmatpush.msra.mxu0 0.0
    %3933 = vmatpush.msra.mxu0 0.0
    %3934 = vmatpush.msra.mxu0 0.0
    %3935 = vmatpush.msra.mxu0 0.0
    %3936 = vmatpush.msra.mxu0 0.0
    %3937 = vmatpush.msra.mxu0 0.0
    %3938 = vmatpush.msra.mxu0 0.0
    %3939 = vmatpush.msra.mxu0 0.0
    %3940 = vmatpush.msra.mxu0 0.0
    %3941 = vmatpush.msra.mxu0 0.0
    %v3942 = vand.u32 %v151, 4294901760
    %3943 = vmatpush.msra.mxu0 %v3942
    %v3944 = vand.u32 %v149, 4294901760
    %3945 = vmatpush.msra.mxu0 %v3944
    %v3946 = vand.u32 %v147, 4294901760
    %3947 = vmatpush.msra.mxu0 %v3946
    %v3948 = vand.u32 %v145, 4294901760
    %3949 = vmatpush.msra.mxu0 %v3948
    %v3950 = vand.u32 %v3928, 4294901760
    %v3951 = vsub.f32 %v3928, %v3950
    %v3952 = vand.u32 %v3951, 4294901760
    %v3953 = vsub.f32 %v3951, %v3952
    %v3954 = vand.u32 %v3953, 4294901760
    %3955 = vmatmul.f32.gmra.mxu0 %v3954
    %v3956 = vpop.f32.mrf.mxu0
    %v3957 = vadd.f32 0.0, %v3956
    %3958 = vdwg.mxu0
    %3959 = vmatpush.msra.mxu0 0.0
    %3960 = vmatpush.msra.mxu0 0.0
    %3961 = vmatpush.msra.mxu0 0.0
    %3962 = vmatpush.msra.mxu0 0.0
    %3963 = vmatpush.msra.mxu0 0.0
    %3964 = vmatpush.msra.mxu0 0.0
    %3965 = vmatpush.msra.mxu0 0.0
    %3966 = vmatpush.msra.mxu0 0.0
    %3967 = vmatpush.msra.mxu0 0.0
    %3968 = vmatpush.msra.mxu0 0.0
    %3969 = vmatpush.msra.mxu0 0.0
    %3970 = vmatpush.msra.mxu0 0.0
    %v3971 = vand.u32 %v151, 4294901760
    %v3972 = vsub.f32 %v151, %v3971
    %v3973 = vand.u32 %v3972, 4294901760
    %v3974 = vsub.f32 %v3972, %v3973
    %v3975 = vand.u32 %v3974, 4294901760
    %3976 = vmatpush.msra.mxu0 %v3975
    %v3977 = vand.u32 %v149, 4294901760
    %v3978 = vsub.f32 %v149, %v3977
    %v3979 = vand.u32 %v3978, 4294901760
    %v3980 = vsub.f32 %v3978, %v3979
    %v3981 = vand.u32 %v3980, 4294901760
    %3982 = vmatpush.msra.mxu0 %v3981
    %v3983 = vand.u32 %v147, 4294901760
    %v3984 = vsub.f32 %v147, %v3983
    %v3985 = vand.u32 %v3984, 4294901760
    %v3986 = vsub.f32 %v3984, %v3985
    %v3987 = vand.u32 %v3986, 4294901760
    %3988 = vmatpush.msra.mxu0 %v3987
    %v3989 = vand.u32 %v145, 4294901760
    %v3990 = vsub.f32 %v145, %v3989
    %v3991 = vand.u32 %v3990, 4294901760
    %v3992 = vsub.f32 %v3990, %v3991
    %v3993 = vand.u32 %v3992, 4294901760
    %3994 = vmatpush.msra.mxu0 %v3993
    %v3995 = vand.u32 %v3928, 4294901760
    %3996 = vmatmul.f32.gmra.mxu0 %v3995
    %v3997 = vpop.f32.mrf.mxu0
    %v3998 = vadd.f32 %v3957, %v3997
    %3999 = vdwg.mxu0
    %4000 = vmatpush.msra.mxu0 0.0
    %4001 = vmatpush.msra.mxu0 0.0
    %4002 = vmatpush.msra.mxu0 0.0
    %4003 = vmatpush.msra.mxu0 0.0
    %4004 = vmatpush.msra.mxu0 0.0
    %4005 = vmatpush.msra.mxu0 0.0
    %4006 = vmatpush.msra.mxu0 0.0
    %4007 = vmatpush.msra.mxu0 0.0
    %4008 = vmatpush.msra.mxu0 0.0
    %4009 = vmatpush.msra.mxu0 0.0
    %4010 = vmatpush.msra.mxu0 0.0
    %4011 = vmatpush.msra.mxu0 0.0
    %v4012 = vand.u32 %v151, 4294901760
    %v4013 = vsub.f32 %v151, %v4012
    %4014 = vmatpush.msra.mxu0 %v4013
    %v4015 = vand.u32 %v149, 4294901760
    %v4016 = vsub.f32 %v149, %v4015
    %4017 = vmatpush.msra.mxu0 %v4016
    %v4018 = vand.u32 %v147, 4294901760
    %v4019 = vsub.f32 %v147, %v4018
    %4020 = vmatpush.msra.mxu0 %v4019
    %v4021 = vand.u32 %v145, 4294901760
    %v4022 = vsub.f32 %v145, %v4021
    %4023 = vmatpush.msra.mxu0 %v4022
    %v4024 = vand.u32 %v3928, 4294901760
    %v4025 = vsub.f32 %v3928, %v4024
    %4026 = vmatmul.f32.gmra.mxu0 %v4025
    %v4027 = vpop.f32.mrf.mxu0
    %v4028 = vadd.f32 %v3998, %v4027
    %4029 = vdwg.mxu0
    %4030 = vmatpush.msra.mxu0 0.0
    %4031 = vmatpush.msra.mxu0 0.0
    %4032 = vmatpush.msra.mxu0 0.0
    %4033 = vmatpush.msra.mxu0 0.0
    %4034 = vmatpush.msra.mxu0 0.0
    %4035 = vmatpush.msra.mxu0 0.0
    %4036 = vmatpush.msra.mxu0 0.0
    %4037 = vmatpush.msra.mxu0 0.0
    %4038 = vmatpush.msra.mxu0 0.0
    %4039 = vmatpush.msra.mxu0 0.0
    %4040 = vmatpush.msra.mxu0 0.0
    %4041 = vmatpush.msra.mxu0 0.0
    %v4042 = vand.u32 %v151, 4294901760
    %4043 = vmatpush.msra.mxu0 %v4042
    %v4044 = vand.u32 %v149, 4294901760
    %4045 = vmatpush.msra.mxu0 %v4044
    %v4046 = vand.u32 %v147, 4294901760
    %4047 = vmatpush.msra.mxu0 %v4046
    %v4048 = vand.u32 %v145, 4294901760
    %4049 = vmatpush.msra.mxu0 %v4048
    %v4050 = vand.u32 %v3928, 4294901760
    %v4051 = vsub.f32 %v3928, %v4050
    %v4052 = vand.u32 %v4051, 4294901760
    %4053 = vmatmul.f32.gmra.mxu0 %v4052
    %v4054 = vpop.f32.mrf.mxu0
    %v4055 = vadd.f32 %v4028, %v4054
    %4056 = vdwg.mxu0
    %4057 = vmatpush.msra.mxu0 0.0
    %4058 = vmatpush.msra.mxu0 0.0
    %4059 = vmatpush.msra.mxu0 0.0
    %4060 = vmatpush.msra.mxu0 0.0
    %4061 = vmatpush.msra.mxu0 0.0
    %4062 = vmatpush.msra.mxu0 0.0
    %4063 = vmatpush.msra.mxu0 0.0
    %4064 = vmatpush.msra.mxu0 0.0
    %4065 = vmatpush.msra.mxu0 0.0
    %4066 = vmatpush.msra.mxu0 0.0
    %4067 = vmatpush.msra.mxu0 0.0
    %4068 = vmatpush.msra.mxu0 0.0
    %v4069 = vand.u32 %v151, 4294901760
    %v4070 = vsub.f32 %v151, %v4069
    %v4071 = vand.u32 %v4070, 4294901760
    %4072 = vmatpush.msra.mxu0 %v4071
    %v4073 = vand.u32 %v149, 4294901760
    %v4074 = vsub.f32 %v149, %v4073
    %v4075 = vand.u32 %v4074, 4294901760
    %4076 = vmatpush.msra.mxu0 %v4075
    %v4077 = vand.u32 %v147, 4294901760
    %v4078 = vsub.f32 %v147, %v4077
    %v4079 = vand.u32 %v4078, 4294901760
    %4080 = vmatpush.msra.mxu0 %v4079
    %v4081 = vand.u32 %v145, 4294901760
    %v4082 = vsub.f32 %v145, %v4081
    %v4083 = vand.u32 %v4082, 4294901760
    %4084 = vmatpush.msra.mxu0 %v4083
    %v4085 = vand.u32 %v3928, 4294901760
    %4086 = vmatmul.f32.gmra.mxu0 %v4085
    %v4087 = vpop.f32.mrf.mxu0
    %v4088 = vadd.f32 %v4055, %v4087
    %4089 = vdwg.mxu0
    %4090 = vmatpush.msra.mxu0 0.0
    %4091 = vmatpush.msra.mxu0 0.0
    %4092 = vmatpush.msra.mxu0 0.0
    %4093 = vmatpush.msra.mxu0 0.0
    %4094 = vmatpush.msra.mxu0 0.0
    %4095 = vmatpush.msra.mxu0 0.0
    %4096 = vmatpush.msra.mxu0 0.0
    %4097 = vmatpush.msra.mxu0 0.0
    %4098 = vmatpush.msra.mxu0 0.0
    %4099 = vmatpush.msra.mxu0 0.0
    %4100 = vmatpush.msra.mxu0 0.0
    %4101 = vmatpush.msra.mxu0 0.0
    %v4102 = vand.u32 %v151, 4294901760
    %4103 = vmatpush.msra.mxu0 %v4102
    %v4104 = vand.u32 %v149, 4294901760
    %4105 = vmatpush.msra.mxu0 %v4104
    %v4106 = vand.u32 %v147, 4294901760
    %4107 = vmatpush.msra.mxu0 %v4106
    %v4108 = vand.u32 %v145, 4294901760
    %4109 = vmatpush.msra.mxu0 %v4108
    %v4110 = vand.u32 %v3928, 4294901760
    %4111 = vmatmul.f32.gmra.mxu0 %v4110
    %v4112 = vpop.f32.mrf.mxu0
    %v4113 = vadd.f32 %v4088, %v4112
    %4114 = vdwg.mxu0
    %4115 = vmatpush.msra.mxu0 0.0
    %4116 = vmatpush.msra.mxu0 0.0
    %4117 = vmatpush.msra.mxu0 0.0
    %4118 = vmatpush.msra.mxu0 0.0
    %4119 = vmatpush.msra.mxu0 0.0
    %4120 = vmatpush.msra.mxu0 0.0
    %4121 = vmatpush.msra.mxu0 0.0
    %4122 = vmatpush.msra.mxu0 0.0
    %4123 = vmatpush.msra.mxu0 0.0
    %4124 = vmatpush.msra.mxu0 0.0
    %4125 = vmatpush.msra.mxu0 0.0
    %4126 = vmatpush.msra.mxu0 0.0
    %v4127 = vand.u32 %v152, 4294901760
    %4128 = vmatpush.msra.mxu0 %v4127
    %v4129 = vand.u32 %v150, 4294901760
    %4130 = vmatpush.msra.mxu0 %v4129
    %v4131 = vand.u32 %v148, 4294901760
    %4132 = vmatpush.msra.mxu0 %v4131
    %v4133 = vand.u32 %v146, 4294901760
    %4134 = vmatpush.msra.mxu0 %v4133
    %v4135 = vand.u32 %v3928, 4294901760
    %v4136 = vsub.f32 %v3928, %v4135
    %v4137 = vand.u32 %v4136, 4294901760
    %v4138 = vsub.f32 %v4136, %v4137
    %v4139 = vand.u32 %v4138, 4294901760
    %4140 = vmatmul.f32.gmra.mxu0 %v4139
    %v4141 = vpop.f32.mrf.mxu0
    %v4142 = vadd.f32 0.0, %v4141
    %4143 = vdwg.mxu0
    %4144 = vmatpush.msra.mxu0 0.0
    %4145 = vmatpush.msra.mxu0 0.0
    %4146 = vmatpush.msra.mxu0 0.0
    %4147 = vmatpush.msra.mxu0 0.0
    %4148 = vmatpush.msra.mxu0 0.0
    %4149 = vmatpush.msra.mxu0 0.0
    %4150 = vmatpush.msra.mxu0 0.0
    %4151 = vmatpush.msra.mxu0 0.0
    %4152 = vmatpush.msra.mxu0 0.0
    %4153 = vmatpush.msra.mxu0 0.0
    %4154 = vmatpush.msra.mxu0 0.0
    %4155 = vmatpush.msra.mxu0 0.0
    %v4156 = vand.u32 %v152, 4294901760
    %v4157 = vsub.f32 %v152, %v4156
    %v4158 = vand.u32 %v4157, 4294901760
    %v4159 = vsub.f32 %v4157, %v4158
    %v4160 = vand.u32 %v4159, 4294901760
    %4161 = vmatpush.msra.mxu0 %v4160
    %v4162 = vand.u32 %v150, 4294901760
    %v4163 = vsub.f32 %v150, %v4162
    %v4164 = vand.u32 %v4163, 4294901760
    %v4165 = vsub.f32 %v4163, %v4164
    %v4166 = vand.u32 %v4165, 4294901760
    %4167 = vmatpush.msra.mxu0 %v4166
    %v4168 = vand.u32 %v148, 4294901760
    %v4169 = vsub.f32 %v148, %v4168
    %v4170 = vand.u32 %v4169, 4294901760
    %v4171 = vsub.f32 %v4169, %v4170
    %v4172 = vand.u32 %v4171, 4294901760
    %4173 = vmatpush.msra.mxu0 %v4172
    %v4174 = vand.u32 %v146, 4294901760
    %v4175 = vsub.f32 %v146, %v4174
    %v4176 = vand.u32 %v4175, 4294901760
    %v4177 = vsub.f32 %v4175, %v4176
    %v4178 = vand.u32 %v4177, 4294901760
    %4179 = vmatpush.msra.mxu0 %v4178
    %v4180 = vand.u32 %v3928, 4294901760
    %4181 = vmatmul.f32.gmra.mxu0 %v4180
    %v4182 = vpop.f32.mrf.mxu0
    %v4183 = vadd.f32 %v4142, %v4182
    %4184 = vdwg.mxu0
    %4185 = vmatpush.msra.mxu0 0.0
    %4186 = vmatpush.msra.mxu0 0.0
    %4187 = vmatpush.msra.mxu0 0.0
    %4188 = vmatpush.msra.mxu0 0.0
    %4189 = vmatpush.msra.mxu0 0.0
    %4190 = vmatpush.msra.mxu0 0.0
    %4191 = vmatpush.msra.mxu0 0.0
    %4192 = vmatpush.msra.mxu0 0.0
    %4193 = vmatpush.msra.mxu0 0.0
    %4194 = vmatpush.msra.mxu0 0.0
    %4195 = vmatpush.msra.mxu0 0.0
    %4196 = vmatpush.msra.mxu0 0.0
    %v4197 = vand.u32 %v152, 4294901760
    %v4198 = vsub.f32 %v152, %v4197
    %4199 = vmatpush.msra.mxu0 %v4198
    %v4200 = vand.u32 %v150, 4294901760
    %v4201 = vsub.f32 %v150, %v4200
    %4202 = vmatpush.msra.mxu0 %v4201
    %v4203 = vand.u32 %v148, 4294901760
    %v4204 = vsub.f32 %v148, %v4203
    %4205 = vmatpush.msra.mxu0 %v4204
    %v4206 = vand.u32 %v146, 4294901760
    %v4207 = vsub.f32 %v146, %v4206
    %4208 = vmatpush.msra.mxu0 %v4207
    %v4209 = vand.u32 %v3928, 4294901760
    %v4210 = vsub.f32 %v3928, %v4209
    %4211 = vmatmul.f32.gmra.mxu0 %v4210
    %v4212 = vpop.f32.mrf.mxu0
    %v4213 = vadd.f32 %v4183, %v4212
    %4214 = vdwg.mxu0
    %4215 = vmatpush.msra.mxu0 0.0
    %4216 = vmatpush.msra.mxu0 0.0
    %4217 = vmatpush.msra.mxu0 0.0
    %4218 = vmatpush.msra.mxu0 0.0
    %4219 = vmatpush.msra.mxu0 0.0
    %4220 = vmatpush.msra.mxu0 0.0
    %4221 = vmatpush.msra.mxu0 0.0
    %4222 = vmatpush.msra.mxu0 0.0
    %4223 = vmatpush.msra.mxu0 0.0
    %4224 = vmatpush.msra.mxu0 0.0
    %4225 = vmatpush.msra.mxu0 0.0
    %4226 = vmatpush.msra.mxu0 0.0
    %v4227 = vand.u32 %v152, 4294901760
    %4228 = vmatpush.msra.mxu0 %v4227
    %v4229 = vand.u32 %v150, 4294901760
    %4230 = vmatpush.msra.mxu0 %v4229
    %v4231 = vand.u32 %v148, 4294901760
    %4232 = vmatpush.msra.mxu0 %v4231
    %v4233 = vand.u32 %v146, 4294901760
    %4234 = vmatpush.msra.mxu0 %v4233
    %v4235 = vand.u32 %v3928, 4294901760
    %v4236 = vsub.f32 %v3928, %v4235
    %v4237 = vand.u32 %v4236, 4294901760
    %4238 = vmatmul.f32.gmra.mxu0 %v4237
    %v4239 = vpop.f32.mrf.mxu0
    %v4240 = vadd.f32 %v4213, %v4239
    %4241 = vdwg.mxu0
    %4242 = vmatpush.msra.mxu0 0.0
    %4243 = vmatpush.msra.mxu0 0.0
    %4244 = vmatpush.msra.mxu0 0.0
    %4245 = vmatpush.msra.mxu0 0.0
    %4246 = vmatpush.msra.mxu0 0.0
    %4247 = vmatpush.msra.mxu0 0.0
    %4248 = vmatpush.msra.mxu0 0.0
    %4249 = vmatpush.msra.mxu0 0.0
    %4250 = vmatpush.msra.mxu0 0.0
    %4251 = vmatpush.msra.mxu0 0.0
    %4252 = vmatpush.msra.mxu0 0.0
    %4253 = vmatpush.msra.mxu0 0.0
    %v4254 = vand.u32 %v152, 4294901760
    %v4255 = vsub.f32 %v152, %v4254
    %v4256 = vand.u32 %v4255, 4294901760
    %4257 = vmatpush.msra.mxu0 %v4256
    %v4258 = vand.u32 %v150, 4294901760
    %v4259 = vsub.f32 %v150, %v4258
    %v4260 = vand.u32 %v4259, 4294901760
    %4261 = vmatpush.msra.mxu0 %v4260
    %v4262 = vand.u32 %v148, 4294901760
    %v4263 = vsub.f32 %v148, %v4262
    %v4264 = vand.u32 %v4263, 4294901760
    %4265 = vmatpush.msra.mxu0 %v4264
    %v4266 = vand.u32 %v146, 4294901760
    %v4267 = vsub.f32 %v146, %v4266
    %v4268 = vand.u32 %v4267, 4294901760
    %4269 = vmatpush.msra.mxu0 %v4268
    %v4270 = vand.u32 %v3928, 4294901760
    %4271 = vmatmul.f32.gmra.mxu0 %v4270
    %v4272 = vpop.f32.mrf.mxu0
    %v4273 = vadd.f32 %v4240, %v4272
    %4274 = vdwg.mxu0
    %4275 = vmatpush.msra.mxu0 0.0
    %4276 = vmatpush.msra.mxu0 0.0
    %4277 = vmatpush.msra.mxu0 0.0
    %4278 = vmatpush.msra.mxu0 0.0
    %4279 = vmatpush.msra.mxu0 0.0
    %4280 = vmatpush.msra.mxu0 0.0
    %4281 = vmatpush.msra.mxu0 0.0
    %4282 = vmatpush.msra.mxu0 0.0
    %4283 = vmatpush.msra.mxu0 0.0
    %4284 = vmatpush.msra.mxu0 0.0
    %4285 = vmatpush.msra.mxu0 0.0
    %4286 = vmatpush.msra.mxu0 0.0
    %v4287 = vand.u32 %v152, 4294901760
    %4288 = vmatpush.msra.mxu0 %v4287
    %v4289 = vand.u32 %v150, 4294901760
    %4290 = vmatpush.msra.mxu0 %v4289
    %v4291 = vand.u32 %v148, 4294901760
    %4292 = vmatpush.msra.mxu0 %v4291
    %v4293 = vand.u32 %v146, 4294901760
    %4294 = vmatpush.msra.mxu0 %v4293
    %v4295 = vand.u32 %v3928, 4294901760
    %4296 = vmatmul.f32.gmra.mxu0 %v4295
    %v4297 = vpop.f32.mrf.mxu0
    %v4298 = vadd.f32 %v4273, %v4297
    %4299 = vdwg.mxu0
    %4301 = vrot.lane.b32.xlu0 %v3918, 96
    %v4302 = vpop.permute.xlu0 %4301
    %v4303 = vsel %vm210, %v4302, 0
    %4305 = vmatpush.msra.mxu0 0.0
    %4306 = vmatpush.msra.mxu0 0.0
    %4307 = vmatpush.msra.mxu0 0.0
    %4308 = vmatpush.msra.mxu0 0.0
    %4309 = vmatpush.msra.mxu0 0.0
    %4310 = vmatpush.msra.mxu0 0.0
    %4311 = vmatpush.msra.mxu0 0.0
    %4312 = vmatpush.msra.mxu0 0.0
    %4313 = vmatpush.msra.mxu0 0.0
    %4314 = vmatpush.msra.mxu0 0.0
    %4315 = vmatpush.msra.mxu0 0.0
    %4316 = vmatpush.msra.mxu0 0.0
    %v4317 = vand.u32 %v156, 4294901760
    %4318 = vmatpush.msra.mxu0 %v4317
    %v4319 = vand.u32 %v155, 4294901760
    %4320 = vmatpush.msra.mxu0 %v4319
    %v4321 = vand.u32 %v154, 4294901760
    %4322 = vmatpush.msra.mxu0 %v4321
    %v4323 = vand.u32 %v153, 4294901760
    %4324 = vmatpush.msra.mxu0 %v4323
    %v4325 = vand.u32 %v4303, 4294901760
    %v4326 = vsub.f32 %v4303, %v4325
    %v4327 = vand.u32 %v4326, 4294901760
    %v4328 = vsub.f32 %v4326, %v4327
    %v4329 = vand.u32 %v4328, 4294901760
    %4330 = vmatmul.f32.gmra.mxu0 %v4329
    %v4331 = vpop.f32.mrf.mxu0
    %v4332 = vadd.f32 0.0, %v4331
    %4333 = vdwg.mxu0
    %4334 = vmatpush.msra.mxu0 0.0
    %4335 = vmatpush.msra.mxu0 0.0
    %4336 = vmatpush.msra.mxu0 0.0
    %4337 = vmatpush.msra.mxu0 0.0
    %4338 = vmatpush.msra.mxu0 0.0
    %4339 = vmatpush.msra.mxu0 0.0
    %4340 = vmatpush.msra.mxu0 0.0
    %4341 = vmatpush.msra.mxu0 0.0
    %4342 = vmatpush.msra.mxu0 0.0
    %4343 = vmatpush.msra.mxu0 0.0
    %4344 = vmatpush.msra.mxu0 0.0
    %4345 = vmatpush.msra.mxu0 0.0
    %v4346 = vand.u32 %v156, 4294901760
    %v4347 = vsub.f32 %v156, %v4346
    %v4348 = vand.u32 %v4347, 4294901760
    %v4349 = vsub.f32 %v4347, %v4348
    %v4350 = vand.u32 %v4349, 4294901760
    %4351 = vmatpush.msra.mxu0 %v4350
    %v4352 = vand.u32 %v155, 4294901760
    %v4353 = vsub.f32 %v155, %v4352
    %v4354 = vand.u32 %v4353, 4294901760
    %v4355 = vsub.f32 %v4353, %v4354
    %v4356 = vand.u32 %v4355, 4294901760
    %4357 = vmatpush.msra.mxu0 %v4356
    %v4358 = vand.u32 %v154, 4294901760
    %v4359 = vsub.f32 %v154, %v4358
    %v4360 = vand.u32 %v4359, 4294901760
    %v4361 = vsub.f32 %v4359, %v4360
    %v4362 = vand.u32 %v4361, 4294901760
    %4363 = vmatpush.msra.mxu0 %v4362
    %v4364 = vand.u32 %v153, 4294901760
    %v4365 = vsub.f32 %v153, %v4364
    %v4366 = vand.u32 %v4365, 4294901760
    %v4367 = vsub.f32 %v4365, %v4366
    %v4368 = vand.u32 %v4367, 4294901760
    %4369 = vmatpush.msra.mxu0 %v4368
    %v4370 = vand.u32 %v4303, 4294901760
    %4371 = vmatmul.f32.gmra.mxu0 %v4370
    %v4372 = vpop.f32.mrf.mxu0
    %v4373 = vadd.f32 %v4332, %v4372
    %4374 = vdwg.mxu0
    %4375 = vmatpush.msra.mxu0 0.0
    %4376 = vmatpush.msra.mxu0 0.0
    %4377 = vmatpush.msra.mxu0 0.0
    %4378 = vmatpush.msra.mxu0 0.0
    %4379 = vmatpush.msra.mxu0 0.0
    %4380 = vmatpush.msra.mxu0 0.0
    %4381 = vmatpush.msra.mxu0 0.0
    %4382 = vmatpush.msra.mxu0 0.0
    %4383 = vmatpush.msra.mxu0 0.0
    %4384 = vmatpush.msra.mxu0 0.0
    %4385 = vmatpush.msra.mxu0 0.0
    %4386 = vmatpush.msra.mxu0 0.0
    %v4387 = vand.u32 %v156, 4294901760
    %v4388 = vsub.f32 %v156, %v4387
    %4389 = vmatpush.msra.mxu0 %v4388
    %v4390 = vand.u32 %v155, 4294901760
    %v4391 = vsub.f32 %v155, %v4390
    %4392 = vmatpush.msra.mxu0 %v4391
    %v4393 = vand.u32 %v154, 4294901760
    %v4394 = vsub.f32 %v154, %v4393
    %4395 = vmatpush.msra.mxu0 %v4394
    %v4396 = vand.u32 %v153, 4294901760
    %v4397 = vsub.f32 %v153, %v4396
    %4398 = vmatpush.msra.mxu0 %v4397
    %v4399 = vand.u32 %v4303, 4294901760
    %v4400 = vsub.f32 %v4303, %v4399
    %4401 = vmatmul.f32.gmra.mxu0 %v4400
    %v4402 = vpop.f32.mrf.mxu0
    %v4403 = vadd.f32 %v4373, %v4402
    %4404 = vdwg.mxu0
    %4405 = vmatpush.msra.mxu0 0.0
    %4406 = vmatpush.msra.mxu0 0.0
    %4407 = vmatpush.msra.mxu0 0.0
    %4408 = vmatpush.msra.mxu0 0.0
    %4409 = vmatpush.msra.mxu0 0.0
    %4410 = vmatpush.msra.mxu0 0.0
    %4411 = vmatpush.msra.mxu0 0.0
    %4412 = vmatpush.msra.mxu0 0.0
    %4413 = vmatpush.msra.mxu0 0.0
    %4414 = vmatpush.msra.mxu0 0.0
    %4415 = vmatpush.msra.mxu0 0.0
    %4416 = vmatpush.msra.mxu0 0.0
    %v4417 = vand.u32 %v156, 4294901760
    %4418 = vmatpush.msra.mxu0 %v4417
    %v4419 = vand.u32 %v155, 4294901760
    %4420 = vmatpush.msra.mxu0 %v4419
    %v4421 = vand.u32 %v154, 4294901760
    %4422 = vmatpush.msra.mxu0 %v4421
    %v4423 = vand.u32 %v153, 4294901760
    %4424 = vmatpush.msra.mxu0 %v4423
    %v4425 = vand.u32 %v4303, 4294901760
    %v4426 = vsub.f32 %v4303, %v4425
    %v4427 = vand.u32 %v4426, 4294901760
    %4428 = vmatmul.f32.gmra.mxu0 %v4427
    %v4429 = vpop.f32.mrf.mxu0
    %v4430 = vadd.f32 %v4403, %v4429
    %4431 = vdwg.mxu0
    %4432 = vmatpush.msra.mxu0 0.0
    %4433 = vmatpush.msra.mxu0 0.0
    %4434 = vmatpush.msra.mxu0 0.0
    %4435 = vmatpush.msra.mxu0 0.0
    %4436 = vmatpush.msra.mxu0 0.0
    %4437 = vmatpush.msra.mxu0 0.0
    %4438 = vmatpush.msra.mxu0 0.0
    %4439 = vmatpush.msra.mxu0 0.0
    %4440 = vmatpush.msra.mxu0 0.0
    %4441 = vmatpush.msra.mxu0 0.0
    %4442 = vmatpush.msra.mxu0 0.0
    %4443 = vmatpush.msra.mxu0 0.0
    %v4444 = vand.u32 %v156, 4294901760
    %v4445 = vsub.f32 %v156, %v4444
    %v4446 = vand.u32 %v4445, 4294901760
    %4447 = vmatpush.msra.mxu0 %v4446
    %v4448 = vand.u32 %v155, 4294901760
    %v4449 = vsub.f32 %v155, %v4448
    %v4450 = vand.u32 %v4449, 4294901760
    %4451 = vmatpush.msra.mxu0 %v4450
    %v4452 = vand.u32 %v154, 4294901760
    %v4453 = vsub.f32 %v154, %v4452
    %v4454 = vand.u32 %v4453, 4294901760
    %4455 = vmatpush.msra.mxu0 %v4454
    %v4456 = vand.u32 %v153, 4294901760
    %v4457 = vsub.f32 %v153, %v4456
    %v4458 = vand.u32 %v4457, 4294901760
    %4459 = vmatpush.msra.mxu0 %v4458
    %v4460 = vand.u32 %v4303, 4294901760
    %4461 = vmatmul.f32.gmra.mxu0 %v4460
    %v4462 = vpop.f32.mrf.mxu0
    %v4463 = vadd.f32 %v4430, %v4462
    %4464 = vdwg.mxu0
    %4465 = vmatpush.msra.mxu0 0.0
    %4466 = vmatpush.msra.mxu0 0.0
    %4467 = vmatpush.msra.mxu0 0.0
    %4468 = vmatpush.msra.mxu0 0.0
    %4469 = vmatpush.msra.mxu0 0.0
    %4470 = vmatpush.msra.mxu0 0.0
    %4471 = vmatpush.msra.mxu0 0.0
    %4472 = vmatpush.msra.mxu0 0.0
    %4473 = vmatpush.msra.mxu0 0.0
    %4474 = vmatpush.msra.mxu0 0.0
    %4475 = vmatpush.msra.mxu0 0.0
    %4476 = vmatpush.msra.mxu0 0.0
    %v4477 = vand.u32 %v156, 4294901760
    %4478 = vmatpush.msra.mxu0 %v4477
    %v4479 = vand.u32 %v155, 4294901760
    %4480 = vmatpush.msra.mxu0 %v4479
    %v4481 = vand.u32 %v154, 4294901760
    %4482 = vmatpush.msra.mxu0 %v4481
    %v4483 = vand.u32 %v153, 4294901760
    %4484 = vmatpush.msra.mxu0 %v4483
    %v4485 = vand.u32 %v4303, 4294901760
    %4486 = vmatmul.f32.gmra.mxu0 %v4485
    %v4487 = vpop.f32.mrf.mxu0
    %v4488 = vadd.f32 %v4463, %v4487
    %4489 = vdwg.mxu0
    %v4490 = vadd.f32 %v4298, %v4488
    %v4491 = vadd.f32 %v4490, %v3723
    %v4493 = vrot.slane %v4491, 1
    %v4494 = vperm.slane %v4491, 0
    %v4495 = vperm.slane %v4493, 0
    %v4498 = vadd.f32 %v3160, %v4494
    %v4499 = vadd.f32 %v3164, %v4495
    %v4500 = vtanh.pop %v4498
    %v4501 = vtanh.pop %v4499
    %v4502 = vmul.f32 %v4500, %v3737
    %v4503 = vmul.f32 %v4501, %v3737
    %v4504 = vsel %vm210, %v4502, 0.0
    %4505 = vadd.xlane.f32.xlu0 %v4504
    %v4506 = vpop.xlane.xlu0 %4505
    %v4507 = vsel %vm210, %v4503, 0.0
    %4508 = vadd.xlane.f32.xlu0 %v4507
    %v4509 = vpop.xlane.xlu0 %4508
    %v4510 = vadd.f32 %v4506, %v3751
    %v4511 = vadd.f32 %v4509, %v3751
    %v4514 = vperm.slane %v4510, %v3758
    %v4515 = vperm.slane %v4511, %v3758
    %v4516 = vsel %vm218, %v4515, %v4514
    %v4518 = vsel %vm3763, %v4516, -inf
    %4519 = vmax.xlane.f32.xlu0 %v4518
    %v4520 = vpop.xlane.xlu0 %4519
    %v4522 = vperm.slane %v4520, 0
    %v4523 = vperm.slane %v4520, 1
    %v4526 = vsub.f32 %v4510, %v4522
    %v4527 = vsub.f32 %v4511, %v4523
    %v4528 = vmul.f32 %v4526, 1.442695
    %v4529 = vpow.pop %v4528
    %v4530 = vmul.f32 %v4527, 1.442695
    %v4531 = vpow.pop %v4530
    %4534 = vset.pattern.permute.xlu0 0
    %4535 = vperm.xlu0 %4534, %v4529
    %v4536 = vpop.permute.xlu0 %4535
    %4537 = vset.pattern.permute.xlu0 0
    %4538 = vperm.xlu0 %4537, %v4531
    %v4539 = vpop.permute.xlu0 %4538
    %v4540 = vperm.slane %v4536, %v3758
    %v4541 = vperm.slane %v4539, %v3758
    %v4542 = vsel %vm218, %v4541, %v4540
    %v4544 = vsel %vm3763, %v4542, 0.0
    %4545 = vadd.xlane.f32.xlu0 %v4544
    %v4546 = vpop.xlane.xlu0 %4545
    %v4548 = vperm.slane %v4546, 0
    %v4549 = vperm.slane %v4546, 1
    %v4552 = vrcp.pop %v4548
    %v4553 = vmul.f32 %v4548, %v4552
    %v4554 = vsub.f32 1.0, %v4553
    %v4555 = vmul.f32 %v4552, %v4554
    %v4556 = vadd.f32 %v4552, %v4555
    %vm4557 = vweird.f32 %v4548
    %vm4558 = vweird.f32 %v4552
    %vm4559 = vmor %vm4557, %vm4558
    %v4560 = vsel %vm4559, %v4552, %v4556
    %v4561 = vand.u32 2147483647, %v4548
    %vm4562 = vcmp.eq.f32.partialorder %v4561, 8.507059e+37
    %v4563 = vand.u32 %v4548, 2147483648
    %v4564 = vor.u32 1.1754944e-38, %v4563
    %v4565 = vsel %vm4562, %v4564, %v4560
    %v4566 = vmul.f32 %v4529, %v4565
    %v4567 = vrcp.pop %v4549
    %v4568 = vmul.f32 %v4549, %v4567
    %v4569 = vsub.f32 1.0, %v4568
    %v4570 = vmul.f32 %v4567, %v4569
    %v4571 = vadd.f32 %v4567, %v4570
    %vm4572 = vweird.f32 %v4549
    %vm4573 = vweird.f32 %v4567
    %vm4574 = vmor %vm4572, %vm4573
    %v4575 = vsel %vm4574, %v4567, %v4571
    %v4576 = vand.u32 2147483647, %v4549
    %vm4577 = vcmp.eq.f32.partialorder %v4576, 8.507059e+37
    %v4578 = vand.u32 %v4549, 2147483648
    %v4579 = vor.u32 1.1754944e-38, %v4578
    %v4580 = vsel %vm4577, %v4579, %v4575
    %v4581 = vmul.f32 %v4531, %v4580
    %4583 = vset.pattern.permute.xlu0 0
    %4584 = vperm.xlu0 %4583, %v4566
    %v4585 = vpop.permute.xlu0 %4584
    %4588 = vset.pattern.permute.xlu0 0
    %4589 = vperm.xlu0 %4588, %v4581
    %v4590 = vpop.permute.xlu0 %4589
    %v4592 = vmul.f32 %v4585, %v2938
    %v4593 = vmul.f32 %v4590, %v2939
    %v4594 = vsel %vm3840, %v4592, 0.0
    %v4595 = vrot.slane %v4594, 4
    %v4596 = vadd.f32 %v4594, %v4595
    %v4597 = vrot.slane %v4596, 2
    %v4598 = vadd.f32 %v4596, %v4597
    %v4599 = vrot.slane %v4598, 1
    %v4600 = vadd.f32 %v4598, %v4599
    %v4601 = vsel %vm3840, %v4593, 0.0
    %v4602 = vrot.slane %v4601, 4
    %v4603 = vadd.f32 %v4601, %v4602
    %v4604 = vrot.slane %v4603, 2
    %v4605 = vadd.f32 %v4603, %v4604
    %v4606 = vrot.slane %v4605, 1
    %v4607 = vadd.f32 %v4605, %v4606
    %v4608 = vmul.f32 %v4600, %v3858
    %v4609 = vmul.f32 %v4607, %v3858
    %v4612 = vrot.slane %v4609, 7
    %v4613 = vsel %vm218, %v4612, %v4608
    %4614 = vrot.lane.b32.xlu0 %v4613, 32
    %v4615 = vpop.permute.xlu0 %4614
    %v4617 = vsel %vm589, %v4615, 0.0
    %4618 = vadd.xlane.f32.xlu0 %v4617
    %v4619 = vpop.xlane.xlu0 %4618
    %v4620 = vrot.slane %v3877, 1
    %v4621 = vsel %vm218, %v3878, %v4620
    %v4623 = vadd.f32 %v4619, %v4621
    %v4624 = vadd.f32 %v4623, %v3886
    %4626 = vset.pattern.permute.xlu0 0
    %4627 = vperm.xlu0 %4626, %v4624
    %v4628 = vpop.permute.xlu0 %4627
    %v4630 = vmul.f32 %v4628, %v3895
    %v4631 = vadd.f32 %v4630, %v4113
    %v4632 = vadd.f32 %v4631, %v3900
    %v4633 = vmul.f32 %v4632, 0.5
    %v4634 = vtanh.pop %v4633
    %v4635 = vmul.f32 %v4634, 0.5
    %v4636 = vadd.f32 %v4635, 0.5
    %v4637 = vtanh.pop %v4632
    %v4638 = vmul.f32 %v4636, %v3918
    %4640 = vrot.lane.b32.xlu0 %v4637, 64
    %v4641 = vpop.permute.xlu0 %4640
    %v4643 = vmul.f32 %v4636, %v4641
    %4645 = vrot.lane.b32.xlu0 %v4643, 32
    %v4646 = vpop.permute.xlu0 %4645
    %v4648 = vadd.f32 %v4638, %v4646
    %v4649 = vtanh.pop %v4648
    %4651 = vrot.lane.b32.xlu0 %v4649, 64
    %v4652 = vpop.permute.xlu0 %4651
    %v4654 = vmul.f32 %v4636, %v4652
    %4656 = vrot.lane.b32.xlu0 %v4654, 32
    %v4657 = vpop.permute.xlu0 %4656
    %v4658 = vsel %vm210, %v4657, 0
    %4660 = vmatpush.msra.mxu0 0.0
    %4661 = vmatpush.msra.mxu0 0.0
    %4662 = vmatpush.msra.mxu0 0.0
    %4663 = vmatpush.msra.mxu0 0.0
    %4664 = vmatpush.msra.mxu0 0.0
    %4665 = vmatpush.msra.mxu0 0.0
    %4666 = vmatpush.msra.mxu0 0.0
    %4667 = vmatpush.msra.mxu0 0.0
    %4668 = vmatpush.msra.mxu0 0.0
    %4669 = vmatpush.msra.mxu0 0.0
    %4670 = vmatpush.msra.mxu0 0.0
    %4671 = vmatpush.msra.mxu0 0.0
    %v4672 = vand.u32 %v151, 4294901760
    %4673 = vmatpush.msra.mxu0 %v4672
    %v4674 = vand.u32 %v149, 4294901760
    %4675 = vmatpush.msra.mxu0 %v4674
    %v4676 = vand.u32 %v147, 4294901760
    %4677 = vmatpush.msra.mxu0 %v4676
    %v4678 = vand.u32 %v145, 4294901760
    %4679 = vmatpush.msra.mxu0 %v4678
    %v4680 = vand.u32 %v4658, 4294901760
    %v4681 = vsub.f32 %v4658, %v4680
    %v4682 = vand.u32 %v4681, 4294901760
    %v4683 = vsub.f32 %v4681, %v4682
    %v4684 = vand.u32 %v4683, 4294901760
    %4685 = vmatmul.f32.gmra.mxu0 %v4684
    %v4686 = vpop.f32.mrf.mxu0
    %v4687 = vadd.f32 0.0, %v4686
    %4688 = vdwg.mxu0
    %4689 = vmatpush.msra.mxu0 0.0
    %4690 = vmatpush.msra.mxu0 0.0
    %4691 = vmatpush.msra.mxu0 0.0
    %4692 = vmatpush.msra.mxu0 0.0
    %4693 = vmatpush.msra.mxu0 0.0
    %4694 = vmatpush.msra.mxu0 0.0
    %4695 = vmatpush.msra.mxu0 0.0
    %4696 = vmatpush.msra.mxu0 0.0
    %4697 = vmatpush.msra.mxu0 0.0
    %4698 = vmatpush.msra.mxu0 0.0
    %4699 = vmatpush.msra.mxu0 0.0
    %4700 = vmatpush.msra.mxu0 0.0
    %v4701 = vand.u32 %v151, 4294901760
    %v4702 = vsub.f32 %v151, %v4701
    %v4703 = vand.u32 %v4702, 4294901760
    %v4704 = vsub.f32 %v4702, %v4703
    %v4705 = vand.u32 %v4704, 4294901760
    %4706 = vmatpush.msra.mxu0 %v4705
    %v4707 = vand.u32 %v149, 4294901760
    %v4708 = vsub.f32 %v149, %v4707
    %v4709 = vand.u32 %v4708, 4294901760
    %v4710 = vsub.f32 %v4708, %v4709
    %v4711 = vand.u32 %v4710, 4294901760
    %4712 = vmatpush.msra.mxu0 %v4711
    %v4713 = vand.u32 %v147, 4294901760
    %v4714 = vsub.f32 %v147, %v4713
    %v4715 = vand.u32 %v4714, 4294901760
    %v4716 = vsub.f32 %v4714, %v4715
    %v4717 = vand.u32 %v4716, 4294901760
    %4718 = vmatpush.msra.mxu0 %v4717
    %v4719 = vand.u32 %v145, 4294901760
    %v4720 = vsub.f32 %v145, %v4719
    %v4721 = vand.u32 %v4720, 4294901760
    %v4722 = vsub.f32 %v4720, %v4721
    %v4723 = vand.u32 %v4722, 4294901760
    %4724 = vmatpush.msra.mxu0 %v4723
    %v4725 = vand.u32 %v4658, 4294901760
    %4726 = vmatmul.f32.gmra.mxu0 %v4725
    %v4727 = vpop.f32.mrf.mxu0
    %v4728 = vadd.f32 %v4687, %v4727
    %4729 = vdwg.mxu0
    %4730 = vmatpush.msra.mxu0 0.0
    %4731 = vmatpush.msra.mxu0 0.0
    %4732 = vmatpush.msra.mxu0 0.0
    %4733 = vmatpush.msra.mxu0 0.0
    %4734 = vmatpush.msra.mxu0 0.0
    %4735 = vmatpush.msra.mxu0 0.0
    %4736 = vmatpush.msra.mxu0 0.0
    %4737 = vmatpush.msra.mxu0 0.0
    %4738 = vmatpush.msra.mxu0 0.0
    %4739 = vmatpush.msra.mxu0 0.0
    %4740 = vmatpush.msra.mxu0 0.0
    %4741 = vmatpush.msra.mxu0 0.0
    %v4742 = vand.u32 %v151, 4294901760
    %v4743 = vsub.f32 %v151, %v4742
    %4744 = vmatpush.msra.mxu0 %v4743
    %v4745 = vand.u32 %v149, 4294901760
    %v4746 = vsub.f32 %v149, %v4745
    %4747 = vmatpush.msra.mxu0 %v4746
    %v4748 = vand.u32 %v147, 4294901760
    %v4749 = vsub.f32 %v147, %v4748
    %4750 = vmatpush.msra.mxu0 %v4749
    %v4751 = vand.u32 %v145, 4294901760
    %v4752 = vsub.f32 %v145, %v4751
    %4753 = vmatpush.msra.mxu0 %v4752
    %v4754 = vand.u32 %v4658, 4294901760
    %v4755 = vsub.f32 %v4658, %v4754
    %4756 = vmatmul.f32.gmra.mxu0 %v4755
    %v4757 = vpop.f32.mrf.mxu0
    %v4758 = vadd.f32 %v4728, %v4757
    %4759 = vdwg.mxu0
    %4760 = vmatpush.msra.mxu0 0.0
    %4761 = vmatpush.msra.mxu0 0.0
    %4762 = vmatpush.msra.mxu0 0.0
    %4763 = vmatpush.msra.mxu0 0.0
    %4764 = vmatpush.msra.mxu0 0.0
    %4765 = vmatpush.msra.mxu0 0.0
    %4766 = vmatpush.msra.mxu0 0.0
    %4767 = vmatpush.msra.mxu0 0.0
    %4768 = vmatpush.msra.mxu0 0.0
    %4769 = vmatpush.msra.mxu0 0.0
    %4770 = vmatpush.msra.mxu0 0.0
    %4771 = vmatpush.msra.mxu0 0.0
    %v4772 = vand.u32 %v151, 4294901760
    %4773 = vmatpush.msra.mxu0 %v4772
    %v4774 = vand.u32 %v149, 4294901760
    %4775 = vmatpush.msra.mxu0 %v4774
    %v4776 = vand.u32 %v147, 4294901760
    %4777 = vmatpush.msra.mxu0 %v4776
    %v4778 = vand.u32 %v145, 4294901760
    %4779 = vmatpush.msra.mxu0 %v4778
    %v4780 = vand.u32 %v4658, 4294901760
    %v4781 = vsub.f32 %v4658, %v4780
    %v4782 = vand.u32 %v4781, 4294901760
    %4783 = vmatmul.f32.gmra.mxu0 %v4782
    %v4784 = vpop.f32.mrf.mxu0
    %v4785 = vadd.f32 %v4758, %v4784
    %4786 = vdwg.mxu0
    %4787 = vmatpush.msra.mxu0 0.0
    %4788 = vmatpush.msra.mxu0 0.0
    %4789 = vmatpush.msra.mxu0 0.0
    %4790 = vmatpush.msra.mxu0 0.0
    %4791 = vmatpush.msra.mxu0 0.0
    %4792 = vmatpush.msra.mxu0 0.0
    %4793 = vmatpush.msra.mxu0 0.0
    %4794 = vmatpush.msra.mxu0 0.0
    %4795 = vmatpush.msra.mxu0 0.0
    %4796 = vmatpush.msra.mxu0 0.0
    %4797 = vmatpush.msra.mxu0 0.0
    %4798 = vmatpush.msra.mxu0 0.0
    %v4799 = vand.u32 %v151, 4294901760
    %v4800 = vsub.f32 %v151, %v4799
    %v4801 = vand.u32 %v4800, 4294901760
    %4802 = vmatpush.msra.mxu0 %v4801
    %v4803 = vand.u32 %v149, 4294901760
    %v4804 = vsub.f32 %v149, %v4803
    %v4805 = vand.u32 %v4804, 4294901760
    %4806 = vmatpush.msra.mxu0 %v4805
    %v4807 = vand.u32 %v147, 4294901760
    %v4808 = vsub.f32 %v147, %v4807
    %v4809 = vand.u32 %v4808, 4294901760
    %4810 = vmatpush.msra.mxu0 %v4809
    %v4811 = vand.u32 %v145, 4294901760
    %v4812 = vsub.f32 %v145, %v4811
    %v4813 = vand.u32 %v4812, 4294901760
    %4814 = vmatpush.msra.mxu0 %v4813
    %v4815 = vand.u32 %v4658, 4294901760
    %4816 = vmatmul.f32.gmra.mxu0 %v4815
    %v4817 = vpop.f32.mrf.mxu0
    %v4818 = vadd.f32 %v4785, %v4817
    %4819 = vdwg.mxu0
    %4820 = vmatpush.msra.mxu0 0.0
    %4821 = vmatpush.msra.mxu0 0.0
    %4822 = vmatpush.msra.mxu0 0.0
    %4823 = vmatpush.msra.mxu0 0.0
    %4824 = vmatpush.msra.mxu0 0.0
    %4825 = vmatpush.msra.mxu0 0.0
    %4826 = vmatpush.msra.mxu0 0.0
    %4827 = vmatpush.msra.mxu0 0.0
    %4828 = vmatpush.msra.mxu0 0.0
    %4829 = vmatpush.msra.mxu0 0.0
    %4830 = vmatpush.msra.mxu0 0.0
    %4831 = vmatpush.msra.mxu0 0.0
    %v4832 = vand.u32 %v151, 4294901760
    %4833 = vmatpush.msra.mxu0 %v4832
    %v4834 = vand.u32 %v149, 4294901760
    %4835 = vmatpush.msra.mxu0 %v4834
    %v4836 = vand.u32 %v147, 4294901760
    %4837 = vmatpush.msra.mxu0 %v4836
    %v4838 = vand.u32 %v145, 4294901760
    %4839 = vmatpush.msra.mxu0 %v4838
    %v4840 = vand.u32 %v4658, 4294901760
    %4841 = vmatmul.f32.gmra.mxu0 %v4840
    %v4842 = vpop.f32.mrf.mxu0
    %v4843 = vadd.f32 %v4818, %v4842
    %4844 = vdwg.mxu0
    %4845 = vmatpush.msra.mxu0 0.0
    %4846 = vmatpush.msra.mxu0 0.0
    %4847 = vmatpush.msra.mxu0 0.0
    %4848 = vmatpush.msra.mxu0 0.0
    %4849 = vmatpush.msra.mxu0 0.0
    %4850 = vmatpush.msra.mxu0 0.0
    %4851 = vmatpush.msra.mxu0 0.0
    %4852 = vmatpush.msra.mxu0 0.0
    %4853 = vmatpush.msra.mxu0 0.0
    %4854 = vmatpush.msra.mxu0 0.0
    %4855 = vmatpush.msra.mxu0 0.0
    %4856 = vmatpush.msra.mxu0 0.0
    %v4857 = vand.u32 %v152, 4294901760
    %4858 = vmatpush.msra.mxu0 %v4857
    %v4859 = vand.u32 %v150, 4294901760
    %4860 = vmatpush.msra.mxu0 %v4859
    %v4861 = vand.u32 %v148, 4294901760
    %4862 = vmatpush.msra.mxu0 %v4861
    %v4863 = vand.u32 %v146, 4294901760
    %4864 = vmatpush.msra.mxu0 %v4863
    %v4865 = vand.u32 %v4658, 4294901760
    %v4866 = vsub.f32 %v4658, %v4865
    %v4867 = vand.u32 %v4866, 4294901760
    %v4868 = vsub.f32 %v4866, %v4867
    %v4869 = vand.u32 %v4868, 4294901760
    %4870 = vmatmul.f32.gmra.mxu0 %v4869
    %v4871 = vpop.f32.mrf.mxu0
    %v4872 = vadd.f32 0.0, %v4871
    %4873 = vdwg.mxu0
    %4874 = vmatpush.msra.mxu0 0.0
    %4875 = vmatpush.msra.mxu0 0.0
    %4876 = vmatpush.msra.mxu0 0.0
    %4877 = vmatpush.msra.mxu0 0.0
    %4878 = vmatpush.msra.mxu0 0.0
    %4879 = vmatpush.msra.mxu0 0.0
    %4880 = vmatpush.msra.mxu0 0.0
    %4881 = vmatpush.msra.mxu0 0.0
    %4882 = vmatpush.msra.mxu0 0.0
    %4883 = vmatpush.msra.mxu0 0.0
    %4884 = vmatpush.msra.mxu0 0.0
    %4885 = vmatpush.msra.mxu0 0.0
    %v4886 = vand.u32 %v152, 4294901760
    %v4887 = vsub.f32 %v152, %v4886
    %v4888 = vand.u32 %v4887, 4294901760
    %v4889 = vsub.f32 %v4887, %v4888
    %v4890 = vand.u32 %v4889, 4294901760
    %4891 = vmatpush.msra.mxu0 %v4890
    %v4892 = vand.u32 %v150, 4294901760
    %v4893 = vsub.f32 %v150, %v4892
    %v4894 = vand.u32 %v4893, 4294901760
    %v4895 = vsub.f32 %v4893, %v4894
    %v4896 = vand.u32 %v4895, 4294901760
    %4897 = vmatpush.msra.mxu0 %v4896
    %v4898 = vand.u32 %v148, 4294901760
    %v4899 = vsub.f32 %v148, %v4898
    %v4900 = vand.u32 %v4899, 4294901760
    %v4901 = vsub.f32 %v4899, %v4900
    %v4902 = vand.u32 %v4901, 4294901760
    %4903 = vmatpush.msra.mxu0 %v4902
    %v4904 = vand.u32 %v146, 4294901760
    %v4905 = vsub.f32 %v146, %v4904
    %v4906 = vand.u32 %v4905, 4294901760
    %v4907 = vsub.f32 %v4905, %v4906
    %v4908 = vand.u32 %v4907, 4294901760
    %4909 = vmatpush.msra.mxu0 %v4908
    %v4910 = vand.u32 %v4658, 4294901760
    %4911 = vmatmul.f32.gmra.mxu0 %v4910
    %v4912 = vpop.f32.mrf.mxu0
    %v4913 = vadd.f32 %v4872, %v4912
    %4914 = vdwg.mxu0
    %4915 = vmatpush.msra.mxu0 0.0
    %4916 = vmatpush.msra.mxu0 0.0
    %4917 = vmatpush.msra.mxu0 0.0
    %4918 = vmatpush.msra.mxu0 0.0
    %4919 = vmatpush.msra.mxu0 0.0
    %4920 = vmatpush.msra.mxu0 0.0
    %4921 = vmatpush.msra.mxu0 0.0
    %4922 = vmatpush.msra.mxu0 0.0
    %4923 = vmatpush.msra.mxu0 0.0
    %4924 = vmatpush.msra.mxu0 0.0
    %4925 = vmatpush.msra.mxu0 0.0
    %4926 = vmatpush.msra.mxu0 0.0
    %v4927 = vand.u32 %v152, 4294901760
    %v4928 = vsub.f32 %v152, %v4927
    %4929 = vmatpush.msra.mxu0 %v4928
    %v4930 = vand.u32 %v150, 4294901760
    %v4931 = vsub.f32 %v150, %v4930
    %4932 = vmatpush.msra.mxu0 %v4931
    %v4933 = vand.u32 %v148, 4294901760
    %v4934 = vsub.f32 %v148, %v4933
    %4935 = vmatpush.msra.mxu0 %v4934
    %v4936 = vand.u32 %v146, 4294901760
    %v4937 = vsub.f32 %v146, %v4936
    %4938 = vmatpush.msra.mxu0 %v4937
    %v4939 = vand.u32 %v4658, 4294901760
    %v4940 = vsub.f32 %v4658, %v4939
    %4941 = vmatmul.f32.gmra.mxu0 %v4940
    %v4942 = vpop.f32.mrf.mxu0
    %v4943 = vadd.f32 %v4913, %v4942
    %4944 = vdwg.mxu0
    %4945 = vmatpush.msra.mxu0 0.0
    %4946 = vmatpush.msra.mxu0 0.0
    %4947 = vmatpush.msra.mxu0 0.0
    %4948 = vmatpush.msra.mxu0 0.0
    %4949 = vmatpush.msra.mxu0 0.0
    %4950 = vmatpush.msra.mxu0 0.0
    %4951 = vmatpush.msra.mxu0 0.0
    %4952 = vmatpush.msra.mxu0 0.0
    %4953 = vmatpush.msra.mxu0 0.0
    %4954 = vmatpush.msra.mxu0 0.0
    %4955 = vmatpush.msra.mxu0 0.0
    %4956 = vmatpush.msra.mxu0 0.0
    %v4957 = vand.u32 %v152, 4294901760
    %4958 = vmatpush.msra.mxu0 %v4957
    %v4959 = vand.u32 %v150, 4294901760
    %4960 = vmatpush.msra.mxu0 %v4959
    %v4961 = vand.u32 %v148, 4294901760
    %4962 = vmatpush.msra.mxu0 %v4961
    %v4963 = vand.u32 %v146, 4294901760
    %4964 = vmatpush.msra.mxu0 %v4963
    %v4965 = vand.u32 %v4658, 4294901760
    %v4966 = vsub.f32 %v4658, %v4965
    %v4967 = vand.u32 %v4966, 4294901760
    %4968 = vmatmul.f32.gmra.mxu0 %v4967
    %v4969 = vpop.f32.mrf.mxu0
    %v4970 = vadd.f32 %v4943, %v4969
    %4971 = vdwg.mxu0
    %4972 = vmatpush.msra.mxu0 0.0
    %4973 = vmatpush.msra.mxu0 0.0
    %4974 = vmatpush.msra.mxu0 0.0
    %4975 = vmatpush.msra.mxu0 0.0
    %4976 = vmatpush.msra.mxu0 0.0
    %4977 = vmatpush.msra.mxu0 0.0
    %4978 = vmatpush.msra.mxu0 0.0
    %4979 = vmatpush.msra.mxu0 0.0
    %4980 = vmatpush.msra.mxu0 0.0
    %4981 = vmatpush.msra.mxu0 0.0
    %4982 = vmatpush.msra.mxu0 0.0
    %4983 = vmatpush.msra.mxu0 0.0
    %v4984 = vand.u32 %v152, 4294901760
    %v4985 = vsub.f32 %v152, %v4984
    %v4986 = vand.u32 %v4985, 4294901760
    %4987 = vmatpush.msra.mxu0 %v4986
    %v4988 = vand.u32 %v150, 4294901760
    %v4989 = vsub.f32 %v150, %v4988
    %v4990 = vand.u32 %v4989, 4294901760
    %4991 = vmatpush.msra.mxu0 %v4990
    %v4992 = vand.u32 %v148, 4294901760
    %v4993 = vsub.f32 %v148, %v4992
    %v4994 = vand.u32 %v4993, 4294901760
    %4995 = vmatpush.msra.mxu0 %v4994
    %v4996 = vand.u32 %v146, 4294901760
    %v4997 = vsub.f32 %v146, %v4996
    %v4998 = vand.u32 %v4997, 4294901760
    %4999 = vmatpush.msra.mxu0 %v4998
    %v5000 = vand.u32 %v4658, 4294901760
    %5001 = vmatmul.f32.gmra.mxu0 %v5000
    %v5002 = vpop.f32.mrf.mxu0
    %v5003 = vadd.f32 %v4970, %v5002
    %5004 = vdwg.mxu0
    %5005 = vmatpush.msra.mxu0 0.0
    %5006 = vmatpush.msra.mxu0 0.0
    %5007 = vmatpush.msra.mxu0 0.0
    %5008 = vmatpush.msra.mxu0 0.0
    %5009 = vmatpush.msra.mxu0 0.0
    %5010 = vmatpush.msra.mxu0 0.0
    %5011 = vmatpush.msra.mxu0 0.0
    %5012 = vmatpush.msra.mxu0 0.0
    %5013 = vmatpush.msra.mxu0 0.0
    %5014 = vmatpush.msra.mxu0 0.0
    %5015 = vmatpush.msra.mxu0 0.0
    %5016 = vmatpush.msra.mxu0 0.0
    %v5017 = vand.u32 %v152, 4294901760
    %5018 = vmatpush.msra.mxu0 %v5017
    %v5019 = vand.u32 %v150, 4294901760
    %5020 = vmatpush.msra.mxu0 %v5019
    %v5021 = vand.u32 %v148, 4294901760
    %5022 = vmatpush.msra.mxu0 %v5021
    %v5023 = vand.u32 %v146, 4294901760
    %5024 = vmatpush.msra.mxu0 %v5023
    %v5025 = vand.u32 %v4658, 4294901760
    %5026 = vmatmul.f32.gmra.mxu0 %v5025
    %v5027 = vpop.f32.mrf.mxu0
    %v5028 = vadd.f32 %v5003, %v5027
    %5029 = vdwg.mxu0
    %5031 = vrot.lane.b32.xlu0 %v4648, 96
    %v5032 = vpop.permute.xlu0 %5031
    %v5033 = vsel %vm210, %v5032, 0
    %5035 = vmatpush.msra.mxu0 0.0
    %5036 = vmatpush.msra.mxu0 0.0
    %5037 = vmatpush.msra.mxu0 0.0
    %5038 = vmatpush.msra.mxu0 0.0
    %5039 = vmatpush.msra.mxu0 0.0
    %5040 = vmatpush.msra.mxu0 0.0
    %5041 = vmatpush.msra.mxu0 0.0
    %5042 = vmatpush.msra.mxu0 0.0
    %5043 = vmatpush.msra.mxu0 0.0
    %5044 = vmatpush.msra.mxu0 0.0
    %5045 = vmatpush.msra.mxu0 0.0
    %5046 = vmatpush.msra.mxu0 0.0
    %v5047 = vand.u32 %v156, 4294901760
    %5048 = vmatpush.msra.mxu0 %v5047
    %v5049 = vand.u32 %v155, 4294901760
    %5050 = vmatpush.msra.mxu0 %v5049
    %v5051 = vand.u32 %v154, 4294901760
    %5052 = vmatpush.msra.mxu0 %v5051
    %v5053 = vand.u32 %v153, 4294901760
    %5054 = vmatpush.msra.mxu0 %v5053
    %v5055 = vand.u32 %v5033, 4294901760
    %v5056 = vsub.f32 %v5033, %v5055
    %v5057 = vand.u32 %v5056, 4294901760
    %v5058 = vsub.f32 %v5056, %v5057
    %v5059 = vand.u32 %v5058, 4294901760
    %5060 = vmatmul.f32.gmra.mxu0 %v5059
    %v5061 = vpop.f32.mrf.mxu0
    %v5062 = vadd.f32 0.0, %v5061
    %5063 = vdwg.mxu0
    %5064 = vmatpush.msra.mxu0 0.0
    %5065 = vmatpush.msra.mxu0 0.0
    %5066 = vmatpush.msra.mxu0 0.0
    %5067 = vmatpush.msra.mxu0 0.0
    %5068 = vmatpush.msra.mxu0 0.0
    %5069 = vmatpush.msra.mxu0 0.0
    %5070 = vmatpush.msra.mxu0 0.0
    %5071 = vmatpush.msra.mxu0 0.0
    %5072 = vmatpush.msra.mxu0 0.0
    %5073 = vmatpush.msra.mxu0 0.0
    %5074 = vmatpush.msra.mxu0 0.0
    %5075 = vmatpush.msra.mxu0 0.0
    %v5076 = vand.u32 %v156, 4294901760
    %v5077 = vsub.f32 %v156, %v5076
    %v5078 = vand.u32 %v5077, 4294901760
    %v5079 = vsub.f32 %v5077, %v5078
    %v5080 = vand.u32 %v5079, 4294901760
    %5081 = vmatpush.msra.mxu0 %v5080
    %v5082 = vand.u32 %v155, 4294901760
    %v5083 = vsub.f32 %v155, %v5082
    %v5084 = vand.u32 %v5083, 4294901760
    %v5085 = vsub.f32 %v5083, %v5084
    %v5086 = vand.u32 %v5085, 4294901760
    %5087 = vmatpush.msra.mxu0 %v5086
    %v5088 = vand.u32 %v154, 4294901760
    %v5089 = vsub.f32 %v154, %v5088
    %v5090 = vand.u32 %v5089, 4294901760
    %v5091 = vsub.f32 %v5089, %v5090
    %v5092 = vand.u32 %v5091, 4294901760
    %5093 = vmatpush.msra.mxu0 %v5092
    %v5094 = vand.u32 %v153, 4294901760
    %v5095 = vsub.f32 %v153, %v5094
    %v5096 = vand.u32 %v5095, 4294901760
    %v5097 = vsub.f32 %v5095, %v5096
    %v5098 = vand.u32 %v5097, 4294901760
    %5099 = vmatpush.msra.mxu0 %v5098
    %v5100 = vand.u32 %v5033, 4294901760
    %5101 = vmatmul.f32.gmra.mxu0 %v5100
    %v5102 = vpop.f32.mrf.mxu0
    %v5103 = vadd.f32 %v5062, %v5102
    %5104 = vdwg.mxu0
    %5105 = vmatpush.msra.mxu0 0.0
    %5106 = vmatpush.msra.mxu0 0.0
    %5107 = vmatpush.msra.mxu0 0.0
    %5108 = vmatpush.msra.mxu0 0.0
    %5109 = vmatpush.msra.mxu0 0.0
    %5110 = vmatpush.msra.mxu0 0.0
    %5111 = vmatpush.msra.mxu0 0.0
    %5112 = vmatpush.msra.mxu0 0.0
    %5113 = vmatpush.msra.mxu0 0.0
    %5114 = vmatpush.msra.mxu0 0.0
    %5115 = vmatpush.msra.mxu0 0.0
    %5116 = vmatpush.msra.mxu0 0.0
    %v5117 = vand.u32 %v156, 4294901760
    %v5118 = vsub.f32 %v156, %v5117
    %5119 = vmatpush.msra.mxu0 %v5118
    %v5120 = vand.u32 %v155, 4294901760
    %v5121 = vsub.f32 %v155, %v5120
    %5122 = vmatpush.msra.mxu0 %v5121
    %v5123 = vand.u32 %v154, 4294901760
    %v5124 = vsub.f32 %v154, %v5123
    %5125 = vmatpush.msra.mxu0 %v5124
    %v5126 = vand.u32 %v153, 4294901760
    %v5127 = vsub.f32 %v153, %v5126
    %5128 = vmatpush.msra.mxu0 %v5127
    %v5129 = vand.u32 %v5033, 4294901760
    %v5130 = vsub.f32 %v5033, %v5129
    %5131 = vmatmul.f32.gmra.mxu0 %v5130
    %v5132 = vpop.f32.mrf.mxu0
    %v5133 = vadd.f32 %v5103, %v5132
    %5134 = vdwg.mxu0
    %5135 = vmatpush.msra.mxu0 0.0
    %5136 = vmatpush.msra.mxu0 0.0
    %5137 = vmatpush.msra.mxu0 0.0
    %5138 = vmatpush.msra.mxu0 0.0
    %5139 = vmatpush.msra.mxu0 0.0
    %5140 = vmatpush.msra.mxu0 0.0
    %5141 = vmatpush.msra.mxu0 0.0
    %5142 = vmatpush.msra.mxu0 0.0
    %5143 = vmatpush.msra.mxu0 0.0
    %5144 = vmatpush.msra.mxu0 0.0
    %5145 = vmatpush.msra.mxu0 0.0
    %5146 = vmatpush.msra.mxu0 0.0
    %v5147 = vand.u32 %v156, 4294901760
    %5148 = vmatpush.msra.mxu0 %v5147
    %v5149 = vand.u32 %v155, 4294901760
    %5150 = vmatpush.msra.mxu0 %v5149
    %v5151 = vand.u32 %v154, 4294901760
    %5152 = vmatpush.msra.mxu0 %v5151
    %v5153 = vand.u32 %v153, 4294901760
    %5154 = vmatpush.msra.mxu0 %v5153
    %v5155 = vand.u32 %v5033, 4294901760
    %v5156 = vsub.f32 %v5033, %v5155
    %v5157 = vand.u32 %v5156, 4294901760
    %5158 = vmatmul.f32.gmra.mxu0 %v5157
    %v5159 = vpop.f32.mrf.mxu0
    %v5160 = vadd.f32 %v5133, %v5159
    %5161 = vdwg.mxu0
    %5162 = vmatpush.msra.mxu0 0.0
    %5163 = vmatpush.msra.mxu0 0.0
    %5164 = vmatpush.msra.mxu0 0.0
    %5165 = vmatpush.msra.mxu0 0.0
    %5166 = vmatpush.msra.mxu0 0.0
    %5167 = vmatpush.msra.mxu0 0.0
    %5168 = vmatpush.msra.mxu0 0.0
    %5169 = vmatpush.msra.mxu0 0.0
    %5170 = vmatpush.msra.mxu0 0.0
    %5171 = vmatpush.msra.mxu0 0.0
    %5172 = vmatpush.msra.mxu0 0.0
    %5173 = vmatpush.msra.mxu0 0.0
    %v5174 = vand.u32 %v156, 4294901760
    %v5175 = vsub.f32 %v156, %v5174
    %v5176 = vand.u32 %v5175, 4294901760
    %5177 = vmatpush.msra.mxu0 %v5176
    %v5178 = vand.u32 %v155, 4294901760
    %v5179 = vsub.f32 %v155, %v5178
    %v5180 = vand.u32 %v5179, 4294901760
    %5181 = vmatpush.msra.mxu0 %v5180
    %v5182 = vand.u32 %v154, 4294901760
    %v5183 = vsub.f32 %v154, %v5182
    %v5184 = vand.u32 %v5183, 4294901760
    %5185 = vmatpush.msra.mxu0 %v5184
    %v5186 = vand.u32 %v153, 4294901760
    %v5187 = vsub.f32 %v153, %v5186
    %v5188 = vand.u32 %v5187, 4294901760
    %5189 = vmatpush.msra.mxu0 %v5188
    %v5190 = vand.u32 %v5033, 4294901760
    %5191 = vmatmul.f32.gmra.mxu0 %v5190
    %v5192 = vpop.f32.mrf.mxu0
    %v5193 = vadd.f32 %v5160, %v5192
    %5194 = vdwg.mxu0
    %5195 = vmatpush.msra.mxu0 0.0
    %5196 = vmatpush.msra.mxu0 0.0
    %5197 = vmatpush.msra.mxu0 0.0
    %5198 = vmatpush.msra.mxu0 0.0
    %5199 = vmatpush.msra.mxu0 0.0
    %5200 = vmatpush.msra.mxu0 0.0
    %5201 = vmatpush.msra.mxu0 0.0
    %5202 = vmatpush.msra.mxu0 0.0
    %5203 = vmatpush.msra.mxu0 0.0
    %5204 = vmatpush.msra.mxu0 0.0
    %5205 = vmatpush.msra.mxu0 0.0
    %5206 = vmatpush.msra.mxu0 0.0
    %v5207 = vand.u32 %v156, 4294901760
    %5208 = vmatpush.msra.mxu0 %v5207
    %v5209 = vand.u32 %v155, 4294901760
    %5210 = vmatpush.msra.mxu0 %v5209
    %v5211 = vand.u32 %v154, 4294901760
    %5212 = vmatpush.msra.mxu0 %v5211
    %v5213 = vand.u32 %v153, 4294901760
    %5214 = vmatpush.msra.mxu0 %v5213
    %v5215 = vand.u32 %v5033, 4294901760
    %5216 = vmatmul.f32.gmra.mxu0 %v5215
    %v5217 = vpop.f32.mrf.mxu0
    %v5218 = vadd.f32 %v5193, %v5217
    %5219 = vdwg.mxu0
    %v5220 = vadd.f32 %v5028, %v5218
    %v5221 = vadd.f32 %v5220, %v3723
    %v5223 = vrot.slane %v5221, 1
    %v5224 = vperm.slane %v5221, 0
    %v5225 = vperm.slane %v5223, 0
    %v5228 = vadd.f32 %v3160, %v5224
    %v5229 = vadd.f32 %v3164, %v5225
    %v5230 = vtanh.pop %v5228
    %v5231 = vtanh.pop %v5229
    %v5232 = vmul.f32 %v5230, %v3737
    %v5233 = vmul.f32 %v5231, %v3737
    %v5234 = vsel %vm210, %v5232, 0.0
    %5235 = vadd.xlane.f32.xlu0 %v5234
    %v5236 = vpop.xlane.xlu0 %5235
    %v5237 = vsel %vm210, %v5233, 0.0
    %5238 = vadd.xlane.f32.xlu0 %v5237
    %v5239 = vpop.xlane.xlu0 %5238
    %v5240 = vadd.f32 %v5236, %v3751
    %v5241 = vadd.f32 %v5239, %v3751
    %v5244 = vperm.slane %v5240, %v3758
    %v5245 = vperm.slane %v5241, %v3758
    %v5246 = vsel %vm218, %v5245, %v5244
    %v5248 = vsel %vm3763, %v5246, -inf
    %5249 = vmax.xlane.f32.xlu0 %v5248
    %v5250 = vpop.xlane.xlu0 %5249
    %v5252 = vperm.slane %v5250, 0
    %v5253 = vperm.slane %v5250, 1
    %v5256 = vsub.f32 %v5240, %v5252
    %v5257 = vsub.f32 %v5241, %v5253
    %v5258 = vmul.f32 %v5256, 1.442695
    %v5259 = vpow.pop %v5258
    %v5260 = vmul.f32 %v5257, 1.442695
    %v5261 = vpow.pop %v5260
    %5264 = vset.pattern.permute.xlu0 0
    %5265 = vperm.xlu0 %5264, %v5259
    %v5266 = vpop.permute.xlu0 %5265
    %5267 = vset.pattern.permute.xlu0 0
    %5268 = vperm.xlu0 %5267, %v5261
    %v5269 = vpop.permute.xlu0 %5268
    %v5270 = vperm.slane %v5266, %v3758
    %v5271 = vperm.slane %v5269, %v3758
    %v5272 = vsel %vm218, %v5271, %v5270
    %v5274 = vsel %vm3763, %v5272, 0.0
    %5275 = vadd.xlane.f32.xlu0 %v5274
    %v5276 = vpop.xlane.xlu0 %5275
    %v5278 = vperm.slane %v5276, 0
    %v5279 = vperm.slane %v5276, 1
    %v5282 = vrcp.pop %v5278
    %v5283 = vmul.f32 %v5278, %v5282
    %v5284 = vsub.f32 1.0, %v5283
    %v5285 = vmul.f32 %v5282, %v5284
    %v5286 = vadd.f32 %v5282, %v5285
    %vm5287 = vweird.f32 %v5278
    %vm5288 = vweird.f32 %v5282
    %vm5289 = vmor %vm5287, %vm5288
    %v5290 = vsel %vm5289, %v5282, %v5286
    %v5291 = vand.u32 2147483647, %v5278
    %vm5292 = vcmp.eq.f32.partialorder %v5291, 8.507059e+37
    %v5293 = vand.u32 %v5278, 2147483648
    %v5294 = vor.u32 1.1754944e-38, %v5293
    %v5295 = vsel %vm5292, %v5294, %v5290
    %v5296 = vmul.f32 %v5259, %v5295
    %v5297 = vrcp.pop %v5279
    %v5298 = vmul.f32 %v5279, %v5297
    %v5299 = vsub.f32 1.0, %v5298
    %v5300 = vmul.f32 %v5297, %v5299
    %v5301 = vadd.f32 %v5297, %v5300
    %vm5302 = vweird.f32 %v5279
    %vm5303 = vweird.f32 %v5297
    %vm5304 = vmor %vm5302, %vm5303
    %v5305 = vsel %vm5304, %v5297, %v5301
    %v5306 = vand.u32 2147483647, %v5279
    %vm5307 = vcmp.eq.f32.partialorder %v5306, 8.507059e+37
    %v5308 = vand.u32 %v5279, 2147483648
    %v5309 = vor.u32 1.1754944e-38, %v5308
    %v5310 = vsel %vm5307, %v5309, %v5305
    %v5311 = vmul.f32 %v5261, %v5310
    %5313 = vset.pattern.permute.xlu0 0
    %5314 = vperm.xlu0 %5313, %v5296
    %v5315 = vpop.permute.xlu0 %5314
    %5318 = vset.pattern.permute.xlu0 0
    %5319 = vperm.xlu0 %5318, %v5311
    %v5320 = vpop.permute.xlu0 %5319
    %v5322 = vmul.f32 %v5315, %v2938
    %v5323 = vmul.f32 %v5320, %v2939
    %v5324 = vsel %vm3840, %v5322, 0.0
    %v5325 = vrot.slane %v5324, 4
    %v5326 = vadd.f32 %v5324, %v5325
    %v5327 = vrot.slane %v5326, 2
    %v5328 = vadd.f32 %v5326, %v5327
    %v5329 = vrot.slane %v5328, 1
    %v5330 = vadd.f32 %v5328, %v5329
    %v5331 = vsel %vm3840, %v5323, 0.0
    %v5332 = vrot.slane %v5331, 4
    %v5333 = vadd.f32 %v5331, %v5332
    %v5334 = vrot.slane %v5333, 2
    %v5335 = vadd.f32 %v5333, %v5334
    %v5336 = vrot.slane %v5335, 1
    %v5337 = vadd.f32 %v5335, %v5336
    %v5338 = vmul.f32 %v5330, %v3858
    %v5339 = vmul.f32 %v5337, %v3858
    %v5342 = vrot.slane %v5339, 7
    %v5343 = vsel %vm218, %v5342, %v5338
    %5344 = vrot.lane.b32.xlu0 %v5343, 32
    %v5345 = vpop.permute.xlu0 %5344
    %v5347 = vsel %vm589, %v5345, 0.0
    %5348 = vadd.xlane.f32.xlu0 %v5347
    %v5349 = vpop.xlane.xlu0 %5348
    %v5350 = vrot.slane %v3877, 2
    %v5351 = vrot.slane %v3878, 1
    %v5352 = vsel %vm218, %v5351, %v5350
    %v5354 = vadd.f32 %v5349, %v5352
    %v5355 = vadd.f32 %v5354, %v3886
    %5357 = vset.pattern.permute.xlu0 0
    %5358 = vperm.xlu0 %5357, %v5355
    %v5359 = vpop.permute.xlu0 %5358
    %v5361 = vmul.f32 %v5359, %v3895
    %v5362 = vadd.f32 %v5361, %v4843
    %v5363 = vadd.f32 %v5362, %v3900
    %v5364 = vmul.f32 %v5363, 0.5
    %v5365 = vtanh.pop %v5364
    %v5366 = vmul.f32 %v5365, 0.5
    %v5367 = vadd.f32 %v5366, 0.5
    %v5368 = vtanh.pop %v5363
    %v5369 = vmul.f32 %v5367, %v4648
    %5371 = vrot.lane.b32.xlu0 %v5368, 64
    %v5372 = vpop.permute.xlu0 %5371
    %v5374 = vmul.f32 %v5367, %v5372
    %5376 = vrot.lane.b32.xlu0 %v5374, 32
    %v5377 = vpop.permute.xlu0 %5376
    %v5379 = vadd.f32 %v5369, %v5377
    %v5380 = vtanh.pop %v5379
    %5382 = vrot.lane.b32.xlu0 %v5380, 64
    %v5383 = vpop.permute.xlu0 %5382
    %v5385 = vmul.f32 %v5367, %v5383
    %5387 = vrot.lane.b32.xlu0 %v5385, 32
    %v5388 = vpop.permute.xlu0 %5387
    %v5389 = vsel %vm210, %v5388, 0
    %5391 = vmatpush.msra.mxu0 0.0
    %5392 = vmatpush.msra.mxu0 0.0
    %5393 = vmatpush.msra.mxu0 0.0
    %5394 = vmatpush.msra.mxu0 0.0
    %5395 = vmatpush.msra.mxu0 0.0
    %5396 = vmatpush.msra.mxu0 0.0
    %5397 = vmatpush.msra.mxu0 0.0
    %5398 = vmatpush.msra.mxu0 0.0
    %5399 = vmatpush.msra.mxu0 0.0
    %5400 = vmatpush.msra.mxu0 0.0
    %5401 = vmatpush.msra.mxu0 0.0
    %5402 = vmatpush.msra.mxu0 0.0
    %v5403 = vand.u32 %v151, 4294901760
    %5404 = vmatpush.msra.mxu0 %v5403
    %v5405 = vand.u32 %v149, 4294901760
    %5406 = vmatpush.msra.mxu0 %v5405
    %v5407 = vand.u32 %v147, 4294901760
    %5408 = vmatpush.msra.mxu0 %v5407
    %v5409 = vand.u32 %v145, 4294901760
    %5410 = vmatpush.msra.mxu0 %v5409
    %v5411 = vand.u32 %v5389, 4294901760
    %v5412 = vsub.f32 %v5389, %v5411
    %v5413 = vand.u32 %v5412, 4294901760
    %v5414 = vsub.f32 %v5412, %v5413
    %v5415 = vand.u32 %v5414, 4294901760
    %5416 = vmatmul.f32.gmra.mxu0 %v5415
    %v5417 = vpop.f32.mrf.mxu0
    %v5418 = vadd.f32 0.0, %v5417
    %5419 = vdwg.mxu0
    %5420 = vmatpush.msra.mxu0 0.0
    %5421 = vmatpush.msra.mxu0 0.0
    %5422 = vmatpush.msra.mxu0 0.0
    %5423 = vmatpush.msra.mxu0 0.0
    %5424 = vmatpush.msra.mxu0 0.0
    %5425 = vmatpush.msra.mxu0 0.0
    %5426 = vmatpush.msra.mxu0 0.0
    %5427 = vmatpush.msra.mxu0 0.0
    %5428 = vmatpush.msra.mxu0 0.0
    %5429 = vmatpush.msra.mxu0 0.0
    %5430 = vmatpush.msra.mxu0 0.0
    %5431 = vmatpush.msra.mxu0 0.0
    %v5432 = vand.u32 %v151, 4294901760
    %v5433 = vsub.f32 %v151, %v5432
    %v5434 = vand.u32 %v5433, 4294901760
    %v5435 = vsub.f32 %v5433, %v5434
    %v5436 = vand.u32 %v5435, 4294901760
    %5437 = vmatpush.msra.mxu0 %v5436
    %v5438 = vand.u32 %v149, 4294901760
    %v5439 = vsub.f32 %v149, %v5438
    %v5440 = vand.u32 %v5439, 4294901760
    %v5441 = vsub.f32 %v5439, %v5440
    %v5442 = vand.u32 %v5441, 4294901760
    %5443 = vmatpush.msra.mxu0 %v5442
    %v5444 = vand.u32 %v147, 4294901760
    %v5445 = vsub.f32 %v147, %v5444
    %v5446 = vand.u32 %v5445, 4294901760
    %v5447 = vsub.f32 %v5445, %v5446
    %v5448 = vand.u32 %v5447, 4294901760
    %5449 = vmatpush.msra.mxu0 %v5448
    %v5450 = vand.u32 %v145, 4294901760
    %v5451 = vsub.f32 %v145, %v5450
    %v5452 = vand.u32 %v5451, 4294901760
    %v5453 = vsub.f32 %v5451, %v5452
    %v5454 = vand.u32 %v5453, 4294901760
    %5455 = vmatpush.msra.mxu0 %v5454
    %v5456 = vand.u32 %v5389, 4294901760
    %5457 = vmatmul.f32.gmra.mxu0 %v5456
    %v5458 = vpop.f32.mrf.mxu0
    %v5459 = vadd.f32 %v5418, %v5458
    %5460 = vdwg.mxu0
    %5461 = vmatpush.msra.mxu0 0.0
    %5462 = vmatpush.msra.mxu0 0.0
    %5463 = vmatpush.msra.mxu0 0.0
    %5464 = vmatpush.msra.mxu0 0.0
    %5465 = vmatpush.msra.mxu0 0.0
    %5466 = vmatpush.msra.mxu0 0.0
    %5467 = vmatpush.msra.mxu0 0.0
    %5468 = vmatpush.msra.mxu0 0.0
    %5469 = vmatpush.msra.mxu0 0.0
    %5470 = vmatpush.msra.mxu0 0.0
    %5471 = vmatpush.msra.mxu0 0.0
    %5472 = vmatpush.msra.mxu0 0.0
    %v5473 = vand.u32 %v151, 4294901760
    %v5474 = vsub.f32 %v151, %v5473
    %5475 = vmatpush.msra.mxu0 %v5474
    %v5476 = vand.u32 %v149, 4294901760
    %v5477 = vsub.f32 %v149, %v5476
    %5478 = vmatpush.msra.mxu0 %v5477
    %v5479 = vand.u32 %v147, 4294901760
    %v5480 = vsub.f32 %v147, %v5479
    %5481 = vmatpush.msra.mxu0 %v5480
    %v5482 = vand.u32 %v145, 4294901760
    %v5483 = vsub.f32 %v145, %v5482
    %5484 = vmatpush.msra.mxu0 %v5483
    %v5485 = vand.u32 %v5389, 4294901760
    %v5486 = vsub.f32 %v5389, %v5485
    %5487 = vmatmul.f32.gmra.mxu0 %v5486
    %v5488 = vpop.f32.mrf.mxu0
    %v5489 = vadd.f32 %v5459, %v5488
    %5490 = vdwg.mxu0
    %5491 = vmatpush.msra.mxu0 0.0
    %5492 = vmatpush.msra.mxu0 0.0
    %5493 = vmatpush.msra.mxu0 0.0
    %5494 = vmatpush.msra.mxu0 0.0
    %5495 = vmatpush.msra.mxu0 0.0
    %5496 = vmatpush.msra.mxu0 0.0
    %5497 = vmatpush.msra.mxu0 0.0
    %5498 = vmatpush.msra.mxu0 0.0
    %5499 = vmatpush.msra.mxu0 0.0
    %5500 = vmatpush.msra.mxu0 0.0
    %5501 = vmatpush.msra.mxu0 0.0
    %5502 = vmatpush.msra.mxu0 0.0
    %v5503 = vand.u32 %v151, 4294901760
    %5504 = vmatpush.msra.mxu0 %v5503
    %v5505 = vand.u32 %v149, 4294901760
    %5506 = vmatpush.msra.mxu0 %v5505
    %v5507 = vand.u32 %v147, 4294901760
    %5508 = vmatpush.msra.mxu0 %v5507
    %v5509 = vand.u32 %v145, 4294901760
    %5510 = vmatpush.msra.mxu0 %v5509
    %v5511 = vand.u32 %v5389, 4294901760
    %v5512 = vsub.f32 %v5389, %v5511
    %v5513 = vand.u32 %v5512, 4294901760
    %5514 = vmatmul.f32.gmra.mxu0 %v5513
    %v5515 = vpop.f32.mrf.mxu0
    %v5516 = vadd.f32 %v5489, %v5515
    %5517 = vdwg.mxu0
    %5518 = vmatpush.msra.mxu0 0.0
    %5519 = vmatpush.msra.mxu0 0.0
    %5520 = vmatpush.msra.mxu0 0.0
    %5521 = vmatpush.msra.mxu0 0.0
    %5522 = vmatpush.msra.mxu0 0.0
    %5523 = vmatpush.msra.mxu0 0.0
    %5524 = vmatpush.msra.mxu0 0.0
    %5525 = vmatpush.msra.mxu0 0.0
    %5526 = vmatpush.msra.mxu0 0.0
    %5527 = vmatpush.msra.mxu0 0.0
    %5528 = vmatpush.msra.mxu0 0.0
    %5529 = vmatpush.msra.mxu0 0.0
    %v5530 = vand.u32 %v151, 4294901760
    %v5531 = vsub.f32 %v151, %v5530
    %v5532 = vand.u32 %v5531, 4294901760
    %5533 = vmatpush.msra.mxu0 %v5532
    %v5534 = vand.u32 %v149, 4294901760
    %v5535 = vsub.f32 %v149, %v5534
    %v5536 = vand.u32 %v5535, 4294901760
    %5537 = vmatpush.msra.mxu0 %v5536
    %v5538 = vand.u32 %v147, 4294901760
    %v5539 = vsub.f32 %v147, %v5538
    %v5540 = vand.u32 %v5539, 4294901760
    %5541 = vmatpush.msra.mxu0 %v5540
    %v5542 = vand.u32 %v145, 4294901760
    %v5543 = vsub.f32 %v145, %v5542
    %v5544 = vand.u32 %v5543, 4294901760
    %5545 = vmatpush.msra.mxu0 %v5544
    %v5546 = vand.u32 %v5389, 4294901760
    %5547 = vmatmul.f32.gmra.mxu0 %v5546
    %v5548 = vpop.f32.mrf.mxu0
    %v5549 = vadd.f32 %v5516, %v5548
    %5550 = vdwg.mxu0
    %5551 = vmatpush.msra.mxu0 0.0
    %5552 = vmatpush.msra.mxu0 0.0
    %5553 = vmatpush.msra.mxu0 0.0
    %5554 = vmatpush.msra.mxu0 0.0
    %5555 = vmatpush.msra.mxu0 0.0
    %5556 = vmatpush.msra.mxu0 0.0
    %5557 = vmatpush.msra.mxu0 0.0
    %5558 = vmatpush.msra.mxu0 0.0
    %5559 = vmatpush.msra.mxu0 0.0
    %5560 = vmatpush.msra.mxu0 0.0
    %5561 = vmatpush.msra.mxu0 0.0
    %5562 = vmatpush.msra.mxu0 0.0
    %v5563 = vand.u32 %v151, 4294901760
    %5564 = vmatpush.msra.mxu0 %v5563
    %v5565 = vand.u32 %v149, 4294901760
    %5566 = vmatpush.msra.mxu0 %v5565
    %v5567 = vand.u32 %v147, 4294901760
    %5568 = vmatpush.msra.mxu0 %v5567
    %v5569 = vand.u32 %v145, 4294901760
    %5570 = vmatpush.msra.mxu0 %v5569
    %v5571 = vand.u32 %v5389, 4294901760
    %5572 = vmatmul.f32.gmra.mxu0 %v5571
    %v5573 = vpop.f32.mrf.mxu0
    %v5574 = vadd.f32 %v5549, %v5573
    %5575 = vdwg.mxu0
    %5576 = vmatpush.msra.mxu0 0.0
    %5577 = vmatpush.msra.mxu0 0.0
    %5578 = vmatpush.msra.mxu0 0.0
    %5579 = vmatpush.msra.mxu0 0.0
    %5580 = vmatpush.msra.mxu0 0.0
    %5581 = vmatpush.msra.mxu0 0.0
    %5582 = vmatpush.msra.mxu0 0.0
    %5583 = vmatpush.msra.mxu0 0.0
    %5584 = vmatpush.msra.mxu0 0.0
    %5585 = vmatpush.msra.mxu0 0.0
    %5586 = vmatpush.msra.mxu0 0.0
    %5587 = vmatpush.msra.mxu0 0.0
    %v5588 = vand.u32 %v152, 4294901760
    %5589 = vmatpush.msra.mxu0 %v5588
    %v5590 = vand.u32 %v150, 4294901760
    %5591 = vmatpush.msra.mxu0 %v5590
    %v5592 = vand.u32 %v148, 4294901760
    %5593 = vmatpush.msra.mxu0 %v5592
    %v5594 = vand.u32 %v146, 4294901760
    %5595 = vmatpush.msra.mxu0 %v5594
    %v5596 = vand.u32 %v5389, 4294901760
    %v5597 = vsub.f32 %v5389, %v5596
    %v5598 = vand.u32 %v5597, 4294901760
    %v5599 = vsub.f32 %v5597, %v5598
    %v5600 = vand.u32 %v5599, 4294901760
    %5601 = vmatmul.f32.gmra.mxu0 %v5600
    %v5602 = vpop.f32.mrf.mxu0
    %v5603 = vadd.f32 0.0, %v5602
    %5604 = vdwg.mxu0
    %5605 = vmatpush.msra.mxu0 0.0
    %5606 = vmatpush.msra.mxu0 0.0
    %5607 = vmatpush.msra.mxu0 0.0
    %5608 = vmatpush.msra.mxu0 0.0
    %5609 = vmatpush.msra.mxu0 0.0
    %5610 = vmatpush.msra.mxu0 0.0
    %5611 = vmatpush.msra.mxu0 0.0
    %5612 = vmatpush.msra.mxu0 0.0
    %5613 = vmatpush.msra.mxu0 0.0
    %5614 = vmatpush.msra.mxu0 0.0
    %5615 = vmatpush.msra.mxu0 0.0
    %5616 = vmatpush.msra.mxu0 0.0
    %v5617 = vand.u32 %v152, 4294901760
    %v5618 = vsub.f32 %v152, %v5617
    %v5619 = vand.u32 %v5618, 4294901760
    %v5620 = vsub.f32 %v5618, %v5619
    %v5621 = vand.u32 %v5620, 4294901760
    %5622 = vmatpush.msra.mxu0 %v5621
    %v5623 = vand.u32 %v150, 4294901760
    %v5624 = vsub.f32 %v150, %v5623
    %v5625 = vand.u32 %v5624, 4294901760
    %v5626 = vsub.f32 %v5624, %v5625
    %v5627 = vand.u32 %v5626, 4294901760
    %5628 = vmatpush.msra.mxu0 %v5627
    %v5629 = vand.u32 %v148, 4294901760
    %v5630 = vsub.f32 %v148, %v5629
    %v5631 = vand.u32 %v5630, 4294901760
    %v5632 = vsub.f32 %v5630, %v5631
    %v5633 = vand.u32 %v5632, 4294901760
    %5634 = vmatpush.msra.mxu0 %v5633
    %v5635 = vand.u32 %v146, 4294901760
    %v5636 = vsub.f32 %v146, %v5635
    %v5637 = vand.u32 %v5636, 4294901760
    %v5638 = vsub.f32 %v5636, %v5637
    %v5639 = vand.u32 %v5638, 4294901760
    %5640 = vmatpush.msra.mxu0 %v5639
    %v5641 = vand.u32 %v5389, 4294901760
    %5642 = vmatmul.f32.gmra.mxu0 %v5641
    %v5643 = vpop.f32.mrf.mxu0
    %v5644 = vadd.f32 %v5603, %v5643
    %5645 = vdwg.mxu0
    %5646 = vmatpush.msra.mxu0 0.0
    %5647 = vmatpush.msra.mxu0 0.0
    %5648 = vmatpush.msra.mxu0 0.0
    %5649 = vmatpush.msra.mxu0 0.0
    %5650 = vmatpush.msra.mxu0 0.0
    %5651 = vmatpush.msra.mxu0 0.0
    %5652 = vmatpush.msra.mxu0 0.0
    %5653 = vmatpush.msra.mxu0 0.0
    %5654 = vmatpush.msra.mxu0 0.0
    %5655 = vmatpush.msra.mxu0 0.0
    %5656 = vmatpush.msra.mxu0 0.0
    %5657 = vmatpush.msra.mxu0 0.0
    %v5658 = vand.u32 %v152, 4294901760
    %v5659 = vsub.f32 %v152, %v5658
    %5660 = vmatpush.msra.mxu0 %v5659
    %v5661 = vand.u32 %v150, 4294901760
    %v5662 = vsub.f32 %v150, %v5661
    %5663 = vmatpush.msra.mxu0 %v5662
    %v5664 = vand.u32 %v148, 4294901760
    %v5665 = vsub.f32 %v148, %v5664
    %5666 = vmatpush.msra.mxu0 %v5665
    %v5667 = vand.u32 %v146, 4294901760
    %v5668 = vsub.f32 %v146, %v5667
    %5669 = vmatpush.msra.mxu0 %v5668
    %v5670 = vand.u32 %v5389, 4294901760
    %v5671 = vsub.f32 %v5389, %v5670
    %5672 = vmatmul.f32.gmra.mxu0 %v5671
    %v5673 = vpop.f32.mrf.mxu0
    %v5674 = vadd.f32 %v5644, %v5673
    %5675 = vdwg.mxu0
    %5676 = vmatpush.msra.mxu0 0.0
    %5677 = vmatpush.msra.mxu0 0.0
    %5678 = vmatpush.msra.mxu0 0.0
    %5679 = vmatpush.msra.mxu0 0.0
    %5680 = vmatpush.msra.mxu0 0.0
    %5681 = vmatpush.msra.mxu0 0.0
    %5682 = vmatpush.msra.mxu0 0.0
    %5683 = vmatpush.msra.mxu0 0.0
    %5684 = vmatpush.msra.mxu0 0.0
    %5685 = vmatpush.msra.mxu0 0.0
    %5686 = vmatpush.msra.mxu0 0.0
    %5687 = vmatpush.msra.mxu0 0.0
    %v5688 = vand.u32 %v152, 4294901760
    %5689 = vmatpush.msra.mxu0 %v5688
    %v5690 = vand.u32 %v150, 4294901760
    %5691 = vmatpush.msra.mxu0 %v5690
    %v5692 = vand.u32 %v148, 4294901760
    %5693 = vmatpush.msra.mxu0 %v5692
    %v5694 = vand.u32 %v146, 4294901760
    %5695 = vmatpush.msra.mxu0 %v5694
    %v5696 = vand.u32 %v5389, 4294901760
    %v5697 = vsub.f32 %v5389, %v5696
    %v5698 = vand.u32 %v5697, 4294901760
    %5699 = vmatmul.f32.gmra.mxu0 %v5698
    %v5700 = vpop.f32.mrf.mxu0
    %v5701 = vadd.f32 %v5674, %v5700
    %5702 = vdwg.mxu0
    %5703 = vmatpush.msra.mxu0 0.0
    %5704 = vmatpush.msra.mxu0 0.0
    %5705 = vmatpush.msra.mxu0 0.0
    %5706 = vmatpush.msra.mxu0 0.0
    %5707 = vmatpush.msra.mxu0 0.0
    %5708 = vmatpush.msra.mxu0 0.0
    %5709 = vmatpush.msra.mxu0 0.0
    %5710 = vmatpush.msra.mxu0 0.0
    %5711 = vmatpush.msra.mxu0 0.0
    %5712 = vmatpush.msra.mxu0 0.0
    %5713 = vmatpush.msra.mxu0 0.0
    %5714 = vmatpush.msra.mxu0 0.0
    %v5715 = vand.u32 %v152, 4294901760
    %v5716 = vsub.f32 %v152, %v5715
    %v5717 = vand.u32 %v5716, 4294901760
    %5718 = vmatpush.msra.mxu0 %v5717
    %v5719 = vand.u32 %v150, 4294901760
    %v5720 = vsub.f32 %v150, %v5719
    %v5721 = vand.u32 %v5720, 4294901760
    %5722 = vmatpush.msra.mxu0 %v5721
    %v5723 = vand.u32 %v148, 4294901760
    %v5724 = vsub.f32 %v148, %v5723
    %v5725 = vand.u32 %v5724, 4294901760
    %5726 = vmatpush.msra.mxu0 %v5725
    %v5727 = vand.u32 %v146, 4294901760
    %v5728 = vsub.f32 %v146, %v5727
    %v5729 = vand.u32 %v5728, 4294901760
    %5730 = vmatpush.msra.mxu0 %v5729
    %v5731 = vand.u32 %v5389, 4294901760
    %5732 = vmatmul.f32.gmra.mxu0 %v5731
    %v5733 = vpop.f32.mrf.mxu0
    %v5734 = vadd.f32 %v5701, %v5733
    %5735 = vdwg.mxu0
    %5736 = vmatpush.msra.mxu0 0.0
    %5737 = vmatpush.msra.mxu0 0.0
    %5738 = vmatpush.msra.mxu0 0.0
    %5739 = vmatpush.msra.mxu0 0.0
    %5740 = vmatpush.msra.mxu0 0.0
    %5741 = vmatpush.msra.mxu0 0.0
    %5742 = vmatpush.msra.mxu0 0.0
    %5743 = vmatpush.msra.mxu0 0.0
    %5744 = vmatpush.msra.mxu0 0.0
    %5745 = vmatpush.msra.mxu0 0.0
    %5746 = vmatpush.msra.mxu0 0.0
    %5747 = vmatpush.msra.mxu0 0.0
    %v5748 = vand.u32 %v152, 4294901760
    %5749 = vmatpush.msra.mxu0 %v5748
    %v5750 = vand.u32 %v150, 4294901760
    %5751 = vmatpush.msra.mxu0 %v5750
    %v5752 = vand.u32 %v148, 4294901760
    %5753 = vmatpush.msra.mxu0 %v5752
    %v5754 = vand.u32 %v146, 4294901760
    %5755 = vmatpush.msra.mxu0 %v5754
    %v5756 = vand.u32 %v5389, 4294901760
    %5757 = vmatmul.f32.gmra.mxu0 %v5756
    %v5758 = vpop.f32.mrf.mxu0
    %v5759 = vadd.f32 %v5734, %v5758
    %5760 = vdwg.mxu0
    %5762 = vrot.lane.b32.xlu0 %v5379, 96
    %v5763 = vpop.permute.xlu0 %5762
    %v5764 = vsel %vm210, %v5763, 0
    %5766 = vmatpush.msra.mxu0 0.0
    %5767 = vmatpush.msra.mxu0 0.0
    %5768 = vmatpush.msra.mxu0 0.0
    %5769 = vmatpush.msra.mxu0 0.0
    %5770 = vmatpush.msra.mxu0 0.0
    %5771 = vmatpush.msra.mxu0 0.0
    %5772 = vmatpush.msra.mxu0 0.0
    %5773 = vmatpush.msra.mxu0 0.0
    %5774 = vmatpush.msra.mxu0 0.0
    %5775 = vmatpush.msra.mxu0 0.0
    %5776 = vmatpush.msra.mxu0 0.0
    %5777 = vmatpush.msra.mxu0 0.0
    %v5778 = vand.u32 %v156, 4294901760
    %5779 = vmatpush.msra.mxu0 %v5778
    %v5780 = vand.u32 %v155, 4294901760
    %5781 = vmatpush.msra.mxu0 %v5780
    %v5782 = vand.u32 %v154, 4294901760
    %5783 = vmatpush.msra.mxu0 %v5782
    %v5784 = vand.u32 %v153, 4294901760
    %5785 = vmatpush.msra.mxu0 %v5784
    %v5786 = vand.u32 %v5764, 4294901760
    %v5787 = vsub.f32 %v5764, %v5786
    %v5788 = vand.u32 %v5787, 4294901760
    %v5789 = vsub.f32 %v5787, %v5788
    %v5790 = vand.u32 %v5789, 4294901760
    %5791 = vmatmul.f32.gmra.mxu0 %v5790
    %v5792 = vpop.f32.mrf.mxu0
    %v5793 = vadd.f32 0.0, %v5792
    %5794 = vdwg.mxu0
    %5795 = vmatpush.msra.mxu0 0.0
    %5796 = vmatpush.msra.mxu0 0.0
    %5797 = vmatpush.msra.mxu0 0.0
    %5798 = vmatpush.msra.mxu0 0.0
    %5799 = vmatpush.msra.mxu0 0.0
    %5800 = vmatpush.msra.mxu0 0.0
    %5801 = vmatpush.msra.mxu0 0.0
    %5802 = vmatpush.msra.mxu0 0.0
    %5803 = vmatpush.msra.mxu0 0.0
    %5804 = vmatpush.msra.mxu0 0.0
    %5805 = vmatpush.msra.mxu0 0.0
    %5806 = vmatpush.msra.mxu0 0.0
    %v5807 = vand.u32 %v156, 4294901760
    %v5808 = vsub.f32 %v156, %v5807
    %v5809 = vand.u32 %v5808, 4294901760
    %v5810 = vsub.f32 %v5808, %v5809
    %v5811 = vand.u32 %v5810, 4294901760
    %5812 = vmatpush.msra.mxu0 %v5811
    %v5813 = vand.u32 %v155, 4294901760
    %v5814 = vsub.f32 %v155, %v5813
    %v5815 = vand.u32 %v5814, 4294901760
    %v5816 = vsub.f32 %v5814, %v5815
    %v5817 = vand.u32 %v5816, 4294901760
    %5818 = vmatpush.msra.mxu0 %v5817
    %v5819 = vand.u32 %v154, 4294901760
    %v5820 = vsub.f32 %v154, %v5819
    %v5821 = vand.u32 %v5820, 4294901760
    %v5822 = vsub.f32 %v5820, %v5821
    %v5823 = vand.u32 %v5822, 4294901760
    %5824 = vmatpush.msra.mxu0 %v5823
    %v5825 = vand.u32 %v153, 4294901760
    %v5826 = vsub.f32 %v153, %v5825
    %v5827 = vand.u32 %v5826, 4294901760
    %v5828 = vsub.f32 %v5826, %v5827
    %v5829 = vand.u32 %v5828, 4294901760
    %5830 = vmatpush.msra.mxu0 %v5829
    %v5831 = vand.u32 %v5764, 4294901760
    %5832 = vmatmul.f32.gmra.mxu0 %v5831
    %v5833 = vpop.f32.mrf.mxu0
    %v5834 = vadd.f32 %v5793, %v5833
    %5835 = vdwg.mxu0
    %5836 = vmatpush.msra.mxu0 0.0
    %5837 = vmatpush.msra.mxu0 0.0
    %5838 = vmatpush.msra.mxu0 0.0
    %5839 = vmatpush.msra.mxu0 0.0
    %5840 = vmatpush.msra.mxu0 0.0
    %5841 = vmatpush.msra.mxu0 0.0
    %5842 = vmatpush.msra.mxu0 0.0
    %5843 = vmatpush.msra.mxu0 0.0
    %5844 = vmatpush.msra.mxu0 0.0
    %5845 = vmatpush.msra.mxu0 0.0
    %5846 = vmatpush.msra.mxu0 0.0
    %5847 = vmatpush.msra.mxu0 0.0
    %v5848 = vand.u32 %v156, 4294901760
    %v5849 = vsub.f32 %v156, %v5848
    %5850 = vmatpush.msra.mxu0 %v5849
    %v5851 = vand.u32 %v155, 4294901760
    %v5852 = vsub.f32 %v155, %v5851
    %5853 = vmatpush.msra.mxu0 %v5852
    %v5854 = vand.u32 %v154, 4294901760
    %v5855 = vsub.f32 %v154, %v5854
    %5856 = vmatpush.msra.mxu0 %v5855
    %v5857 = vand.u32 %v153, 4294901760
    %v5858 = vsub.f32 %v153, %v5857
    %5859 = vmatpush.msra.mxu0 %v5858
    %v5860 = vand.u32 %v5764, 4294901760
    %v5861 = vsub.f32 %v5764, %v5860
    %5862 = vmatmul.f32.gmra.mxu0 %v5861
    %v5863 = vpop.f32.mrf.mxu0
    %v5864 = vadd.f32 %v5834, %v5863
    %5865 = vdwg.mxu0
    %5866 = vmatpush.msra.mxu0 0.0
    %5867 = vmatpush.msra.mxu0 0.0
    %5868 = vmatpush.msra.mxu0 0.0
    %5869 = vmatpush.msra.mxu0 0.0
    %5870 = vmatpush.msra.mxu0 0.0
    %5871 = vmatpush.msra.mxu0 0.0
    %5872 = vmatpush.msra.mxu0 0.0
    %5873 = vmatpush.msra.mxu0 0.0
    %5874 = vmatpush.msra.mxu0 0.0
    %5875 = vmatpush.msra.mxu0 0.0
    %5876 = vmatpush.msra.mxu0 0.0
    %5877 = vmatpush.msra.mxu0 0.0
    %v5878 = vand.u32 %v156, 4294901760
    %5879 = vmatpush.msra.mxu0 %v5878
    %v5880 = vand.u32 %v155, 4294901760
    %5881 = vmatpush.msra.mxu0 %v5880
    %v5882 = vand.u32 %v154, 4294901760
    %5883 = vmatpush.msra.mxu0 %v5882
    %v5884 = vand.u32 %v153, 4294901760
    %5885 = vmatpush.msra.mxu0 %v5884
    %v5886 = vand.u32 %v5764, 4294901760
    %v5887 = vsub.f32 %v5764, %v5886
    %v5888 = vand.u32 %v5887, 4294901760
    %5889 = vmatmul.f32.gmra.mxu0 %v5888
    %v5890 = vpop.f32.mrf.mxu0
    %v5891 = vadd.f32 %v5864, %v5890
    %5892 = vdwg.mxu0
    %5893 = vmatpush.msra.mxu0 0.0
    %5894 = vmatpush.msra.mxu0 0.0
    %5895 = vmatpush.msra.mxu0 0.0
    %5896 = vmatpush.msra.mxu0 0.0
    %5897 = vmatpush.msra.mxu0 0.0
    %5898 = vmatpush.msra.mxu0 0.0
    %5899 = vmatpush.msra.mxu0 0.0
    %5900 = vmatpush.msra.mxu0 0.0
    %5901 = vmatpush.msra.mxu0 0.0
    %5902 = vmatpush.msra.mxu0 0.0
    %5903 = vmatpush.msra.mxu0 0.0
    %5904 = vmatpush.msra.mxu0 0.0
    %v5905 = vand.u32 %v156, 4294901760
    %v5906 = vsub.f32 %v156, %v5905
    %v5907 = vand.u32 %v5906, 4294901760
    %5908 = vmatpush.msra.mxu0 %v5907
    %v5909 = vand.u32 %v155, 4294901760
    %v5910 = vsub.f32 %v155, %v5909
    %v5911 = vand.u32 %v5910, 4294901760
    %5912 = vmatpush.msra.mxu0 %v5911
    %v5913 = vand.u32 %v154, 4294901760
    %v5914 = vsub.f32 %v154, %v5913
    %v5915 = vand.u32 %v5914, 4294901760
    %5916 = vmatpush.msra.mxu0 %v5915
    %v5917 = vand.u32 %v153, 4294901760
    %v5918 = vsub.f32 %v153, %v5917
    %v5919 = vand.u32 %v5918, 4294901760
    %5920 = vmatpush.msra.mxu0 %v5919
    %v5921 = vand.u32 %v5764, 4294901760
    %5922 = vmatmul.f32.gmra.mxu0 %v5921
    %v5923 = vpop.f32.mrf.mxu0
    %v5924 = vadd.f32 %v5891, %v5923
    %5925 = vdwg.mxu0
    %5926 = vmatpush.msra.mxu0 0.0
    %5927 = vmatpush.msra.mxu0 0.0
    %5928 = vmatpush.msra.mxu0 0.0
    %5929 = vmatpush.msra.mxu0 0.0
    %5930 = vmatpush.msra.mxu0 0.0
    %5931 = vmatpush.msra.mxu0 0.0
    %5932 = vmatpush.msra.mxu0 0.0
    %5933 = vmatpush.msra.mxu0 0.0
    %5934 = vmatpush.msra.mxu0 0.0
    %5935 = vmatpush.msra.mxu0 0.0
    %5936 = vmatpush.msra.mxu0 0.0
    %5937 = vmatpush.msra.mxu0 0.0
    %v5938 = vand.u32 %v156, 4294901760
    %5939 = vmatpush.msra.mxu0 %v5938
    %v5940 = vand.u32 %v155, 4294901760
    %5941 = vmatpush.msra.mxu0 %v5940
    %v5942 = vand.u32 %v154, 4294901760
    %5943 = vmatpush.msra.mxu0 %v5942
    %v5944 = vand.u32 %v153, 4294901760
    %5945 = vmatpush.msra.mxu0 %v5944
    %v5946 = vand.u32 %v5764, 4294901760
    %5947 = vmatmul.f32.gmra.mxu0 %v5946
    %v5948 = vpop.f32.mrf.mxu0
    %v5949 = vadd.f32 %v5924, %v5948
    %5950 = vdwg.mxu0
    %v5951 = vadd.f32 %v5759, %v5949
    %v5952 = vadd.f32 %v5951, %v3723
    %v5954 = vrot.slane %v5952, 1
    %v5955 = vperm.slane %v5952, 0
    %v5956 = vperm.slane %v5954, 0
    %v5959 = vadd.f32 %v3160, %v5955
    %v5960 = vadd.f32 %v3164, %v5956
    %v5961 = vtanh.pop %v5959
    %v5962 = vtanh.pop %v5960
    %v5963 = vmul.f32 %v5961, %v3737
    %v5964 = vmul.f32 %v5962, %v3737
    %v5965 = vsel %vm210, %v5963, 0.0
    %5966 = vadd.xlane.f32.xlu0 %v5965
    %v5967 = vpop.xlane.xlu0 %5966
    %v5968 = vsel %vm210, %v5964, 0.0
    %5969 = vadd.xlane.f32.xlu0 %v5968
    %v5970 = vpop.xlane.xlu0 %5969
    %v5971 = vadd.f32 %v5967, %v3751
    %v5972 = vadd.f32 %v5970, %v3751
    %v5975 = vperm.slane %v5971, %v3758
    %v5976 = vperm.slane %v5972, %v3758
    %v5977 = vsel %vm218, %v5976, %v5975
    %v5979 = vsel %vm3763, %v5977, -inf
    %5980 = vmax.xlane.f32.xlu0 %v5979
    %v5981 = vpop.xlane.xlu0 %5980
    %v5983 = vperm.slane %v5981, 0
    %v5984 = vperm.slane %v5981, 1
    %v5987 = vsub.f32 %v5971, %v5983
    %v5988 = vsub.f32 %v5972, %v5984
    %v5989 = vmul.f32 %v5987, 1.442695
    %v5990 = vpow.pop %v5989
    %v5991 = vmul.f32 %v5988, 1.442695
    %v5992 = vpow.pop %v5991
    %5995 = vset.pattern.permute.xlu0 0
    %5996 = vperm.xlu0 %5995, %v5990
    %v5997 = vpop.permute.xlu0 %5996
    %5998 = vset.pattern.permute.xlu0 0
    %5999 = vperm.xlu0 %5998, %v5992
    %v6000 = vpop.permute.xlu0 %5999
    %v6001 = vperm.slane %v5997, %v3758
    %v6002 = vperm.slane %v6000, %v3758
    %v6003 = vsel %vm218, %v6002, %v6001
    %v6005 = vsel %vm3763, %v6003, 0.0
    %6006 = vadd.xlane.f32.xlu0 %v6005
    %v6007 = vpop.xlane.xlu0 %6006
    %v6009 = vperm.slane %v6007, 0
    %v6010 = vperm.slane %v6007, 1
    %v6013 = vrcp.pop %v6009
    %v6014 = vmul.f32 %v6009, %v6013
    %v6015 = vsub.f32 1.0, %v6014
    %v6016 = vmul.f32 %v6013, %v6015
    %v6017 = vadd.f32 %v6013, %v6016
    %vm6018 = vweird.f32 %v6009
    %vm6019 = vweird.f32 %v6013
    %vm6020 = vmor %vm6018, %vm6019
    %v6021 = vsel %vm6020, %v6013, %v6017
    %v6022 = vand.u32 2147483647, %v6009
    %vm6023 = vcmp.eq.f32.partialorder %v6022, 8.507059e+37
    %v6024 = vand.u32 %v6009, 2147483648
    %v6025 = vor.u32 1.1754944e-38, %v6024
    %v6026 = vsel %vm6023, %v6025, %v6021
    %v6027 = vmul.f32 %v5990, %v6026
    %v6028 = vrcp.pop %v6010
    %v6029 = vmul.f32 %v6010, %v6028
    %v6030 = vsub.f32 1.0, %v6029
    %v6031 = vmul.f32 %v6028, %v6030
    %v6032 = vadd.f32 %v6028, %v6031
    %vm6033 = vweird.f32 %v6010
    %vm6034 = vweird.f32 %v6028
    %vm6035 = vmor %vm6033, %vm6034
    %v6036 = vsel %vm6035, %v6028, %v6032
    %v6037 = vand.u32 2147483647, %v6010
    %vm6038 = vcmp.eq.f32.partialorder %v6037, 8.507059e+37
    %v6039 = vand.u32 %v6010, 2147483648
    %v6040 = vor.u32 1.1754944e-38, %v6039
    %v6041 = vsel %vm6038, %v6040, %v6036
    %v6042 = vmul.f32 %v5992, %v6041
    %6044 = vset.pattern.permute.xlu0 0
    %6045 = vperm.xlu0 %6044, %v6027
    %v6046 = vpop.permute.xlu0 %6045
    %6049 = vset.pattern.permute.xlu0 0
    %6050 = vperm.xlu0 %6049, %v6042
    %v6051 = vpop.permute.xlu0 %6050
    %v6053 = vmul.f32 %v6046, %v2938
    %v6054 = vmul.f32 %v6051, %v2939
    %v6055 = vsel %vm3840, %v6053, 0.0
    %v6056 = vrot.slane %v6055, 4
    %v6057 = vadd.f32 %v6055, %v6056
    %v6058 = vrot.slane %v6057, 2
    %v6059 = vadd.f32 %v6057, %v6058
    %v6060 = vrot.slane %v6059, 1
    %v6061 = vadd.f32 %v6059, %v6060
    %v6062 = vsel %vm3840, %v6054, 0.0
    %v6063 = vrot.slane %v6062, 4
    %v6064 = vadd.f32 %v6062, %v6063
    %v6065 = vrot.slane %v6064, 2
    %v6066 = vadd.f32 %v6064, %v6065
    %v6067 = vrot.slane %v6066, 1
    %v6068 = vadd.f32 %v6066, %v6067
    %v6069 = vmul.f32 %v6061, %v3858
    %v6070 = vmul.f32 %v6068, %v3858
    %v6073 = vrot.slane %v6070, 7
    %v6074 = vsel %vm218, %v6073, %v6069
    %6075 = vrot.lane.b32.xlu0 %v6074, 32
    %v6076 = vpop.permute.xlu0 %6075
    %v6078 = vsel %vm589, %v6076, 0.0
    %6079 = vadd.xlane.f32.xlu0 %v6078
    %v6080 = vpop.xlane.xlu0 %6079
    %v6081 = vrot.slane %v3877, 3
    %v6082 = vrot.slane %v3878, 2
    %v6083 = vsel %vm218, %v6082, %v6081
    %v6085 = vadd.f32 %v6080, %v6083
    %v6086 = vadd.f32 %v6085, %v3886
    %6088 = vset.pattern.permute.xlu0 0
    %6089 = vperm.xlu0 %6088, %v6086
    %v6090 = vpop.permute.xlu0 %6089
    %v6092 = vmul.f32 %v6090, %v3895
    %v6093 = vadd.f32 %v6092, %v5574
    %v6094 = vadd.f32 %v6093, %v3900
    %v6095 = vmul.f32 %v6094, 0.5
    %v6096 = vtanh.pop %v6095
    %v6097 = vmul.f32 %v6096, 0.5
    %v6098 = vadd.f32 %v6097, 0.5
    %v6099 = vtanh.pop %v6094
    %v6100 = vmul.f32 %v6098, %v5379
    %6102 = vrot.lane.b32.xlu0 %v6099, 64
    %v6103 = vpop.permute.xlu0 %6102
    %v6105 = vmul.f32 %v6098, %v6103
    %6107 = vrot.lane.b32.xlu0 %v6105, 32
    %v6108 = vpop.permute.xlu0 %6107
    %v6110 = vadd.f32 %v6100, %v6108
    %v6111 = vtanh.pop %v6110
    %6113 = vrot.lane.b32.xlu0 %v6111, 64
    %v6114 = vpop.permute.xlu0 %6113
    %v6116 = vmul.f32 %v6098, %v6114
    %6118 = vrot.lane.b32.xlu0 %v6116, 32
    %v6119 = vpop.permute.xlu0 %6118
    %v6120 = vsel %vm210, %v6119, 0
    %6122 = vmatpush.msra.mxu0 0.0
    %6123 = vmatpush.msra.mxu0 0.0
    %6124 = vmatpush.msra.mxu0 0.0
    %6125 = vmatpush.msra.mxu0 0.0
    %6126 = vmatpush.msra.mxu0 0.0
    %6127 = vmatpush.msra.mxu0 0.0
    %6128 = vmatpush.msra.mxu0 0.0
    %6129 = vmatpush.msra.mxu0 0.0
    %6130 = vmatpush.msra.mxu0 0.0
    %6131 = vmatpush.msra.mxu0 0.0
    %6132 = vmatpush.msra.mxu0 0.0
    %6133 = vmatpush.msra.mxu0 0.0
    %v6134 = vand.u32 %v151, 4294901760
    %6135 = vmatpush.msra.mxu0 %v6134
    %v6136 = vand.u32 %v149, 4294901760
    %6137 = vmatpush.msra.mxu0 %v6136
    %v6138 = vand.u32 %v147, 4294901760
    %6139 = vmatpush.msra.mxu0 %v6138
    %v6140 = vand.u32 %v145, 4294901760
    %6141 = vmatpush.msra.mxu0 %v6140
    %v6142 = vand.u32 %v6120, 4294901760
    %v6143 = vsub.f32 %v6120, %v6142
    %v6144 = vand.u32 %v6143, 4294901760
    %v6145 = vsub.f32 %v6143, %v6144
    %v6146 = vand.u32 %v6145, 4294901760
    %6147 = vmatmul.f32.gmra.mxu0 %v6146
    %v6148 = vpop.f32.mrf.mxu0
    %v6149 = vadd.f32 0.0, %v6148
    %6150 = vdwg.mxu0
    %6151 = vmatpush.msra.mxu0 0.0
    %6152 = vmatpush.msra.mxu0 0.0
    %6153 = vmatpush.msra.mxu0 0.0
    %6154 = vmatpush.msra.mxu0 0.0
    %6155 = vmatpush.msra.mxu0 0.0
    %6156 = vmatpush.msra.mxu0 0.0
    %6157 = vmatpush.msra.mxu0 0.0
    %6158 = vmatpush.msra.mxu0 0.0
    %6159 = vmatpush.msra.mxu0 0.0
    %6160 = vmatpush.msra.mxu0 0.0
    %6161 = vmatpush.msra.mxu0 0.0
    %6162 = vmatpush.msra.mxu0 0.0
    %v6163 = vand.u32 %v151, 4294901760
    %v6164 = vsub.f32 %v151, %v6163
    %v6165 = vand.u32 %v6164, 4294901760
    %v6166 = vsub.f32 %v6164, %v6165
    %v6167 = vand.u32 %v6166, 4294901760
    %6168 = vmatpush.msra.mxu0 %v6167
    %v6169 = vand.u32 %v149, 4294901760
    %v6170 = vsub.f32 %v149, %v6169
    %v6171 = vand.u32 %v6170, 4294901760
    %v6172 = vsub.f32 %v6170, %v6171
    %v6173 = vand.u32 %v6172, 4294901760
    %6174 = vmatpush.msra.mxu0 %v6173
    %v6175 = vand.u32 %v147, 4294901760
    %v6176 = vsub.f32 %v147, %v6175
    %v6177 = vand.u32 %v6176, 4294901760
    %v6178 = vsub.f32 %v6176, %v6177
    %v6179 = vand.u32 %v6178, 4294901760
    %6180 = vmatpush.msra.mxu0 %v6179
    %v6181 = vand.u32 %v145, 4294901760
    %v6182 = vsub.f32 %v145, %v6181
    %v6183 = vand.u32 %v6182, 4294901760
    %v6184 = vsub.f32 %v6182, %v6183
    %v6185 = vand.u32 %v6184, 4294901760
    %6186 = vmatpush.msra.mxu0 %v6185
    %v6187 = vand.u32 %v6120, 4294901760
    %6188 = vmatmul.f32.gmra.mxu0 %v6187
    %v6189 = vpop.f32.mrf.mxu0
    %v6190 = vadd.f32 %v6149, %v6189
    %6191 = vdwg.mxu0
    %6192 = vmatpush.msra.mxu0 0.0
    %6193 = vmatpush.msra.mxu0 0.0
    %6194 = vmatpush.msra.mxu0 0.0
    %6195 = vmatpush.msra.mxu0 0.0
    %6196 = vmatpush.msra.mxu0 0.0
    %6197 = vmatpush.msra.mxu0 0.0
    %6198 = vmatpush.msra.mxu0 0.0
    %6199 = vmatpush.msra.mxu0 0.0
    %6200 = vmatpush.msra.mxu0 0.0
    %6201 = vmatpush.msra.mxu0 0.0
    %6202 = vmatpush.msra.mxu0 0.0
    %6203 = vmatpush.msra.mxu0 0.0
    %v6204 = vand.u32 %v151, 4294901760
    %v6205 = vsub.f32 %v151, %v6204
    %6206 = vmatpush.msra.mxu0 %v6205
    %v6207 = vand.u32 %v149, 4294901760
    %v6208 = vsub.f32 %v149, %v6207
    %6209 = vmatpush.msra.mxu0 %v6208
    %v6210 = vand.u32 %v147, 4294901760
    %v6211 = vsub.f32 %v147, %v6210
    %6212 = vmatpush.msra.mxu0 %v6211
    %v6213 = vand.u32 %v145, 4294901760
    %v6214 = vsub.f32 %v145, %v6213
    %6215 = vmatpush.msra.mxu0 %v6214
    %v6216 = vand.u32 %v6120, 4294901760
    %v6217 = vsub.f32 %v6120, %v6216
    %6218 = vmatmul.f32.gmra.mxu0 %v6217
    %v6219 = vpop.f32.mrf.mxu0
    %v6220 = vadd.f32 %v6190, %v6219
    %6221 = vdwg.mxu0
    %6222 = vmatpush.msra.mxu0 0.0
    %6223 = vmatpush.msra.mxu0 0.0
    %6224 = vmatpush.msra.mxu0 0.0
    %6225 = vmatpush.msra.mxu0 0.0
    %6226 = vmatpush.msra.mxu0 0.0
    %6227 = vmatpush.msra.mxu0 0.0
    %6228 = vmatpush.msra.mxu0 0.0
    %6229 = vmatpush.msra.mxu0 0.0
    %6230 = vmatpush.msra.mxu0 0.0
    %6231 = vmatpush.msra.mxu0 0.0
    %6232 = vmatpush.msra.mxu0 0.0
    %6233 = vmatpush.msra.mxu0 0.0
    %v6234 = vand.u32 %v151, 4294901760
    %6235 = vmatpush.msra.mxu0 %v6234
    %v6236 = vand.u32 %v149, 4294901760
    %6237 = vmatpush.msra.mxu0 %v6236
    %v6238 = vand.u32 %v147, 4294901760
    %6239 = vmatpush.msra.mxu0 %v6238
    %v6240 = vand.u32 %v145, 4294901760
    %6241 = vmatpush.msra.mxu0 %v6240
    %v6242 = vand.u32 %v6120, 4294901760
    %v6243 = vsub.f32 %v6120, %v6242
    %v6244 = vand.u32 %v6243, 4294901760
    %6245 = vmatmul.f32.gmra.mxu0 %v6244
    %v6246 = vpop.f32.mrf.mxu0
    %v6247 = vadd.f32 %v6220, %v6246
    %6248 = vdwg.mxu0
    %6249 = vmatpush.msra.mxu0 0.0
    %6250 = vmatpush.msra.mxu0 0.0
    %6251 = vmatpush.msra.mxu0 0.0
    %6252 = vmatpush.msra.mxu0 0.0
    %6253 = vmatpush.msra.mxu0 0.0
    %6254 = vmatpush.msra.mxu0 0.0
    %6255 = vmatpush.msra.mxu0 0.0
    %6256 = vmatpush.msra.mxu0 0.0
    %6257 = vmatpush.msra.mxu0 0.0
    %6258 = vmatpush.msra.mxu0 0.0
    %6259 = vmatpush.msra.mxu0 0.0
    %6260 = vmatpush.msra.mxu0 0.0
    %v6261 = vand.u32 %v151, 4294901760
    %v6262 = vsub.f32 %v151, %v6261
    %v6263 = vand.u32 %v6262, 4294901760
    %6264 = vmatpush.msra.mxu0 %v6263
    %v6265 = vand.u32 %v149, 4294901760
    %v6266 = vsub.f32 %v149, %v6265
    %v6267 = vand.u32 %v6266, 4294901760
    %6268 = vmatpush.msra.mxu0 %v6267
    %v6269 = vand.u32 %v147, 4294901760
    %v6270 = vsub.f32 %v147, %v6269
    %v6271 = vand.u32 %v6270, 4294901760
    %6272 = vmatpush.msra.mxu0 %v6271
    %v6273 = vand.u32 %v145, 4294901760
    %v6274 = vsub.f32 %v145, %v6273
    %v6275 = vand.u32 %v6274, 4294901760
    %6276 = vmatpush.msra.mxu0 %v6275
    %v6277 = vand.u32 %v6120, 4294901760
    %6278 = vmatmul.f32.gmra.mxu0 %v6277
    %v6279 = vpop.f32.mrf.mxu0
    %v6280 = vadd.f32 %v6247, %v6279
    %6281 = vdwg.mxu0
    %6282 = vmatpush.msra.mxu0 0.0
    %6283 = vmatpush.msra.mxu0 0.0
    %6284 = vmatpush.msra.mxu0 0.0
    %6285 = vmatpush.msra.mxu0 0.0
    %6286 = vmatpush.msra.mxu0 0.0
    %6287 = vmatpush.msra.mxu0 0.0
    %6288 = vmatpush.msra.mxu0 0.0
    %6289 = vmatpush.msra.mxu0 0.0
    %6290 = vmatpush.msra.mxu0 0.0
    %6291 = vmatpush.msra.mxu0 0.0
    %6292 = vmatpush.msra.mxu0 0.0
    %6293 = vmatpush.msra.mxu0 0.0
    %v6294 = vand.u32 %v151, 4294901760
    %6295 = vmatpush.msra.mxu0 %v6294
    %v6296 = vand.u32 %v149, 4294901760
    %6297 = vmatpush.msra.mxu0 %v6296
    %v6298 = vand.u32 %v147, 4294901760
    %6299 = vmatpush.msra.mxu0 %v6298
    %v6300 = vand.u32 %v145, 4294901760
    %6301 = vmatpush.msra.mxu0 %v6300
    %v6302 = vand.u32 %v6120, 4294901760
    %6303 = vmatmul.f32.gmra.mxu0 %v6302
    %v6304 = vpop.f32.mrf.mxu0
    %v6305 = vadd.f32 %v6280, %v6304
    %6306 = vdwg.mxu0
    %6307 = vmatpush.msra.mxu0 0.0
    %6308 = vmatpush.msra.mxu0 0.0
    %6309 = vmatpush.msra.mxu0 0.0
    %6310 = vmatpush.msra.mxu0 0.0
    %6311 = vmatpush.msra.mxu0 0.0
    %6312 = vmatpush.msra.mxu0 0.0
    %6313 = vmatpush.msra.mxu0 0.0
    %6314 = vmatpush.msra.mxu0 0.0
    %6315 = vmatpush.msra.mxu0 0.0
    %6316 = vmatpush.msra.mxu0 0.0
    %6317 = vmatpush.msra.mxu0 0.0
    %6318 = vmatpush.msra.mxu0 0.0
    %v6319 = vand.u32 %v152, 4294901760
    %6320 = vmatpush.msra.mxu0 %v6319
    %v6321 = vand.u32 %v150, 4294901760
    %6322 = vmatpush.msra.mxu0 %v6321
    %v6323 = vand.u32 %v148, 4294901760
    %6324 = vmatpush.msra.mxu0 %v6323
    %v6325 = vand.u32 %v146, 4294901760
    %6326 = vmatpush.msra.mxu0 %v6325
    %v6327 = vand.u32 %v6120, 4294901760
    %v6328 = vsub.f32 %v6120, %v6327
    %v6329 = vand.u32 %v6328, 4294901760
    %v6330 = vsub.f32 %v6328, %v6329
    %v6331 = vand.u32 %v6330, 4294901760
    %6332 = vmatmul.f32.gmra.mxu0 %v6331
    %v6333 = vpop.f32.mrf.mxu0
    %v6334 = vadd.f32 0.0, %v6333
    %6335 = vdwg.mxu0
    %6336 = vmatpush.msra.mxu0 0.0
    %6337 = vmatpush.msra.mxu0 0.0
    %6338 = vmatpush.msra.mxu0 0.0
    %6339 = vmatpush.msra.mxu0 0.0
    %6340 = vmatpush.msra.mxu0 0.0
    %6341 = vmatpush.msra.mxu0 0.0
    %6342 = vmatpush.msra.mxu0 0.0
    %6343 = vmatpush.msra.mxu0 0.0
    %6344 = vmatpush.msra.mxu0 0.0
    %6345 = vmatpush.msra.mxu0 0.0
    %6346 = vmatpush.msra.mxu0 0.0
    %6347 = vmatpush.msra.mxu0 0.0
    %v6348 = vand.u32 %v152, 4294901760
    %v6349 = vsub.f32 %v152, %v6348
    %v6350 = vand.u32 %v6349, 4294901760
    %v6351 = vsub.f32 %v6349, %v6350
    %v6352 = vand.u32 %v6351, 4294901760
    %6353 = vmatpush.msra.mxu0 %v6352
    %v6354 = vand.u32 %v150, 4294901760
    %v6355 = vsub.f32 %v150, %v6354
    %v6356 = vand.u32 %v6355, 4294901760
    %v6357 = vsub.f32 %v6355, %v6356
    %v6358 = vand.u32 %v6357, 4294901760
    %6359 = vmatpush.msra.mxu0 %v6358
    %v6360 = vand.u32 %v148, 4294901760
    %v6361 = vsub.f32 %v148, %v6360
    %v6362 = vand.u32 %v6361, 4294901760
    %v6363 = vsub.f32 %v6361, %v6362
    %v6364 = vand.u32 %v6363, 4294901760
    %6365 = vmatpush.msra.mxu0 %v6364
    %v6366 = vand.u32 %v146, 4294901760
    %v6367 = vsub.f32 %v146, %v6366
    %v6368 = vand.u32 %v6367, 4294901760
    %v6369 = vsub.f32 %v6367, %v6368
    %v6370 = vand.u32 %v6369, 4294901760
    %6371 = vmatpush.msra.mxu0 %v6370
    %v6372 = vand.u32 %v6120, 4294901760
    %6373 = vmatmul.f32.gmra.mxu0 %v6372
    %v6374 = vpop.f32.mrf.mxu0
    %v6375 = vadd.f32 %v6334, %v6374
    %6376 = vdwg.mxu0
    %6377 = vmatpush.msra.mxu0 0.0
    %6378 = vmatpush.msra.mxu0 0.0
    %6379 = vmatpush.msra.mxu0 0.0
    %6380 = vmatpush.msra.mxu0 0.0
    %6381 = vmatpush.msra.mxu0 0.0
    %6382 = vmatpush.msra.mxu0 0.0
    %6383 = vmatpush.msra.mxu0 0.0
    %6384 = vmatpush.msra.mxu0 0.0
    %6385 = vmatpush.msra.mxu0 0.0
    %6386 = vmatpush.msra.mxu0 0.0
    %6387 = vmatpush.msra.mxu0 0.0
    %6388 = vmatpush.msra.mxu0 0.0
    %v6389 = vand.u32 %v152, 4294901760
    %v6390 = vsub.f32 %v152, %v6389
    %6391 = vmatpush.msra.mxu0 %v6390
    %v6392 = vand.u32 %v150, 4294901760
    %v6393 = vsub.f32 %v150, %v6392
    %6394 = vmatpush.msra.mxu0 %v6393
    %v6395 = vand.u32 %v148, 4294901760
    %v6396 = vsub.f32 %v148, %v6395
    %6397 = vmatpush.msra.mxu0 %v6396
    %v6398 = vand.u32 %v146, 4294901760
    %v6399 = vsub.f32 %v146, %v6398
    %6400 = vmatpush.msra.mxu0 %v6399
    %v6401 = vand.u32 %v6120, 4294901760
    %v6402 = vsub.f32 %v6120, %v6401
    %6403 = vmatmul.f32.gmra.mxu0 %v6402
    %v6404 = vpop.f32.mrf.mxu0
    %v6405 = vadd.f32 %v6375, %v6404
    %6406 = vdwg.mxu0
    %6407 = vmatpush.msra.mxu0 0.0
    %6408 = vmatpush.msra.mxu0 0.0
    %6409 = vmatpush.msra.mxu0 0.0
    %6410 = vmatpush.msra.mxu0 0.0
    %6411 = vmatpush.msra.mxu0 0.0
    %6412 = vmatpush.msra.mxu0 0.0
    %6413 = vmatpush.msra.mxu0 0.0
    %6414 = vmatpush.msra.mxu0 0.0
    %6415 = vmatpush.msra.mxu0 0.0
    %6416 = vmatpush.msra.mxu0 0.0
    %6417 = vmatpush.msra.mxu0 0.0
    %6418 = vmatpush.msra.mxu0 0.0
    %v6419 = vand.u32 %v152, 4294901760
    %6420 = vmatpush.msra.mxu0 %v6419
    %v6421 = vand.u32 %v150, 4294901760
    %6422 = vmatpush.msra.mxu0 %v6421
    %v6423 = vand.u32 %v148, 4294901760
    %6424 = vmatpush.msra.mxu0 %v6423
    %v6425 = vand.u32 %v146, 4294901760
    %6426 = vmatpush.msra.mxu0 %v6425
    %v6427 = vand.u32 %v6120, 4294901760
    %v6428 = vsub.f32 %v6120, %v6427
    %v6429 = vand.u32 %v6428, 4294901760
    %6430 = vmatmul.f32.gmra.mxu0 %v6429
    %v6431 = vpop.f32.mrf.mxu0
    %v6432 = vadd.f32 %v6405, %v6431
    %6433 = vdwg.mxu0
    %6434 = vmatpush.msra.mxu0 0.0
    %6435 = vmatpush.msra.mxu0 0.0
    %6436 = vmatpush.msra.mxu0 0.0
    %6437 = vmatpush.msra.mxu0 0.0
    %6438 = vmatpush.msra.mxu0 0.0
    %6439 = vmatpush.msra.mxu0 0.0
    %6440 = vmatpush.msra.mxu0 0.0
    %6441 = vmatpush.msra.mxu0 0.0
    %6442 = vmatpush.msra.mxu0 0.0
    %6443 = vmatpush.msra.mxu0 0.0
    %6444 = vmatpush.msra.mxu0 0.0
    %6445 = vmatpush.msra.mxu0 0.0
    %v6446 = vand.u32 %v152, 4294901760
    %v6447 = vsub.f32 %v152, %v6446
    %v6448 = vand.u32 %v6447, 4294901760
    %6449 = vmatpush.msra.mxu0 %v6448
    %v6450 = vand.u32 %v150, 4294901760
    %v6451 = vsub.f32 %v150, %v6450
    %v6452 = vand.u32 %v6451, 4294901760
    %6453 = vmatpush.msra.mxu0 %v6452
    %v6454 = vand.u32 %v148, 4294901760
    %v6455 = vsub.f32 %v148, %v6454
    %v6456 = vand.u32 %v6455, 4294901760
    %6457 = vmatpush.msra.mxu0 %v6456
    %v6458 = vand.u32 %v146, 4294901760
    %v6459 = vsub.f32 %v146, %v6458
    %v6460 = vand.u32 %v6459, 4294901760
    %6461 = vmatpush.msra.mxu0 %v6460
    %v6462 = vand.u32 %v6120, 4294901760
    %6463 = vmatmul.f32.gmra.mxu0 %v6462
    %v6464 = vpop.f32.mrf.mxu0
    %v6465 = vadd.f32 %v6432, %v6464
    %6466 = vdwg.mxu0
    %6467 = vmatpush.msra.mxu0 0.0
    %6468 = vmatpush.msra.mxu0 0.0
    %6469 = vmatpush.msra.mxu0 0.0
    %6470 = vmatpush.msra.mxu0 0.0
    %6471 = vmatpush.msra.mxu0 0.0
    %6472 = vmatpush.msra.mxu0 0.0
    %6473 = vmatpush.msra.mxu0 0.0
    %6474 = vmatpush.msra.mxu0 0.0
    %6475 = vmatpush.msra.mxu0 0.0
    %6476 = vmatpush.msra.mxu0 0.0
    %6477 = vmatpush.msra.mxu0 0.0
    %6478 = vmatpush.msra.mxu0 0.0
    %v6479 = vand.u32 %v152, 4294901760
    %6480 = vmatpush.msra.mxu0 %v6479
    %v6481 = vand.u32 %v150, 4294901760
    %6482 = vmatpush.msra.mxu0 %v6481
    %v6483 = vand.u32 %v148, 4294901760
    %6484 = vmatpush.msra.mxu0 %v6483
    %v6485 = vand.u32 %v146, 4294901760
    %6486 = vmatpush.msra.mxu0 %v6485
    %v6487 = vand.u32 %v6120, 4294901760
    %6488 = vmatmul.f32.gmra.mxu0 %v6487
    %v6489 = vpop.f32.mrf.mxu0
    %v6490 = vadd.f32 %v6465, %v6489
    %6491 = vdwg.mxu0
    %6493 = vrot.lane.b32.xlu0 %v6110, 96
    %v6494 = vpop.permute.xlu0 %6493
    %v6495 = vsel %vm210, %v6494, 0
    %6497 = vmatpush.msra.mxu0 0.0
    %6498 = vmatpush.msra.mxu0 0.0
    %6499 = vmatpush.msra.mxu0 0.0
    %6500 = vmatpush.msra.mxu0 0.0
    %6501 = vmatpush.msra.mxu0 0.0
    %6502 = vmatpush.msra.mxu0 0.0
    %6503 = vmatpush.msra.mxu0 0.0
    %6504 = vmatpush.msra.mxu0 0.0
    %6505 = vmatpush.msra.mxu0 0.0
    %6506 = vmatpush.msra.mxu0 0.0
    %6507 = vmatpush.msra.mxu0 0.0
    %6508 = vmatpush.msra.mxu0 0.0
    %v6509 = vand.u32 %v156, 4294901760
    %6510 = vmatpush.msra.mxu0 %v6509
    %v6511 = vand.u32 %v155, 4294901760
    %6512 = vmatpush.msra.mxu0 %v6511
    %v6513 = vand.u32 %v154, 4294901760
    %6514 = vmatpush.msra.mxu0 %v6513
    %v6515 = vand.u32 %v153, 4294901760
    %6516 = vmatpush.msra.mxu0 %v6515
    %v6517 = vand.u32 %v6495, 4294901760
    %v6518 = vsub.f32 %v6495, %v6517
    %v6519 = vand.u32 %v6518, 4294901760
    %v6520 = vsub.f32 %v6518, %v6519
    %v6521 = vand.u32 %v6520, 4294901760
    %6522 = vmatmul.f32.gmra.mxu0 %v6521
    %v6523 = vpop.f32.mrf.mxu0
    %v6524 = vadd.f32 0.0, %v6523
    %6525 = vdwg.mxu0
    %6526 = vmatpush.msra.mxu0 0.0
    %6527 = vmatpush.msra.mxu0 0.0
    %6528 = vmatpush.msra.mxu0 0.0
    %6529 = vmatpush.msra.mxu0 0.0
    %6530 = vmatpush.msra.mxu0 0.0
    %6531 = vmatpush.msra.mxu0 0.0
    %6532 = vmatpush.msra.mxu0 0.0
    %6533 = vmatpush.msra.mxu0 0.0
    %6534 = vmatpush.msra.mxu0 0.0
    %6535 = vmatpush.msra.mxu0 0.0
    %6536 = vmatpush.msra.mxu0 0.0
    %6537 = vmatpush.msra.mxu0 0.0
    %v6538 = vand.u32 %v156, 4294901760
    %v6539 = vsub.f32 %v156, %v6538
    %v6540 = vand.u32 %v6539, 4294901760
    %v6541 = vsub.f32 %v6539, %v6540
    %v6542 = vand.u32 %v6541, 4294901760
    %6543 = vmatpush.msra.mxu0 %v6542
    %v6544 = vand.u32 %v155, 4294901760
    %v6545 = vsub.f32 %v155, %v6544
    %v6546 = vand.u32 %v6545, 4294901760
    %v6547 = vsub.f32 %v6545, %v6546
    %v6548 = vand.u32 %v6547, 4294901760
    %6549 = vmatpush.msra.mxu0 %v6548
    %v6550 = vand.u32 %v154, 4294901760
    %v6551 = vsub.f32 %v154, %v6550
    %v6552 = vand.u32 %v6551, 4294901760
    %v6553 = vsub.f32 %v6551, %v6552
    %v6554 = vand.u32 %v6553, 4294901760
    %6555 = vmatpush.msra.mxu0 %v6554
    %v6556 = vand.u32 %v153, 4294901760
    %v6557 = vsub.f32 %v153, %v6556
    %v6558 = vand.u32 %v6557, 4294901760
    %v6559 = vsub.f32 %v6557, %v6558
    %v6560 = vand.u32 %v6559, 4294901760
    %6561 = vmatpush.msra.mxu0 %v6560
    %v6562 = vand.u32 %v6495, 4294901760
    %6563 = vmatmul.f32.gmra.mxu0 %v6562
    %v6564 = vpop.f32.mrf.mxu0
    %v6565 = vadd.f32 %v6524, %v6564
    %6566 = vdwg.mxu0
    %6567 = vmatpush.msra.mxu0 0.0
    %6568 = vmatpush.msra.mxu0 0.0
    %6569 = vmatpush.msra.mxu0 0.0
    %6570 = vmatpush.msra.mxu0 0.0
    %6571 = vmatpush.msra.mxu0 0.0
    %6572 = vmatpush.msra.mxu0 0.0
    %6573 = vmatpush.msra.mxu0 0.0
    %6574 = vmatpush.msra.mxu0 0.0
    %6575 = vmatpush.msra.mxu0 0.0
    %6576 = vmatpush.msra.mxu0 0.0
    %6577 = vmatpush.msra.mxu0 0.0
    %6578 = vmatpush.msra.mxu0 0.0
    %v6579 = vand.u32 %v156, 4294901760
    %v6580 = vsub.f32 %v156, %v6579
    %6581 = vmatpush.msra.mxu0 %v6580
    %v6582 = vand.u32 %v155, 4294901760
    %v6583 = vsub.f32 %v155, %v6582
    %6584 = vmatpush.msra.mxu0 %v6583
    %v6585 = vand.u32 %v154, 4294901760
    %v6586 = vsub.f32 %v154, %v6585
    %6587 = vmatpush.msra.mxu0 %v6586
    %v6588 = vand.u32 %v153, 4294901760
    %v6589 = vsub.f32 %v153, %v6588
    %6590 = vmatpush.msra.mxu0 %v6589
    %v6591 = vand.u32 %v6495, 4294901760
    %v6592 = vsub.f32 %v6495, %v6591
    %6593 = vmatmul.f32.gmra.mxu0 %v6592
    %v6594 = vpop.f32.mrf.mxu0
    %v6595 = vadd.f32 %v6565, %v6594
    %6596 = vdwg.mxu0
    %6597 = vmatpush.msra.mxu0 0.0
    %6598 = vmatpush.msra.mxu0 0.0
    %6599 = vmatpush.msra.mxu0 0.0
    %6600 = vmatpush.msra.mxu0 0.0
    %6601 = vmatpush.msra.mxu0 0.0
    %6602 = vmatpush.msra.mxu0 0.0
    %6603 = vmatpush.msra.mxu0 0.0
    %6604 = vmatpush.msra.mxu0 0.0
    %6605 = vmatpush.msra.mxu0 0.0
    %6606 = vmatpush.msra.mxu0 0.0
    %6607 = vmatpush.msra.mxu0 0.0
    %6608 = vmatpush.msra.mxu0 0.0
    %v6609 = vand.u32 %v156, 4294901760
    %6610 = vmatpush.msra.mxu0 %v6609
    %v6611 = vand.u32 %v155, 4294901760
    %6612 = vmatpush.msra.mxu0 %v6611
    %v6613 = vand.u32 %v154, 4294901760
    %6614 = vmatpush.msra.mxu0 %v6613
    %v6615 = vand.u32 %v153, 4294901760
    %6616 = vmatpush.msra.mxu0 %v6615
    %v6617 = vand.u32 %v6495, 4294901760
    %v6618 = vsub.f32 %v6495, %v6617
    %v6619 = vand.u32 %v6618, 4294901760
    %6620 = vmatmul.f32.gmra.mxu0 %v6619
    %v6621 = vpop.f32.mrf.mxu0
    %v6622 = vadd.f32 %v6595, %v6621
    %6623 = vdwg.mxu0
    %6624 = vmatpush.msra.mxu0 0.0
    %6625 = vmatpush.msra.mxu0 0.0
    %6626 = vmatpush.msra.mxu0 0.0
    %6627 = vmatpush.msra.mxu0 0.0
    %6628 = vmatpush.msra.mxu0 0.0
    %6629 = vmatpush.msra.mxu0 0.0
    %6630 = vmatpush.msra.mxu0 0.0
    %6631 = vmatpush.msra.mxu0 0.0
    %6632 = vmatpush.msra.mxu0 0.0
    %6633 = vmatpush.msra.mxu0 0.0
    %6634 = vmatpush.msra.mxu0 0.0
    %6635 = vmatpush.msra.mxu0 0.0
    %v6636 = vand.u32 %v156, 4294901760
    %v6637 = vsub.f32 %v156, %v6636
    %v6638 = vand.u32 %v6637, 4294901760
    %6639 = vmatpush.msra.mxu0 %v6638
    %v6640 = vand.u32 %v155, 4294901760
    %v6641 = vsub.f32 %v155, %v6640
    %v6642 = vand.u32 %v6641, 4294901760
    %6643 = vmatpush.msra.mxu0 %v6642
    %v6644 = vand.u32 %v154, 4294901760
    %v6645 = vsub.f32 %v154, %v6644
    %v6646 = vand.u32 %v6645, 4294901760
    %6647 = vmatpush.msra.mxu0 %v6646
    %v6648 = vand.u32 %v153, 4294901760
    %v6649 = vsub.f32 %v153, %v6648
    %v6650 = vand.u32 %v6649, 4294901760
    %6651 = vmatpush.msra.mxu0 %v6650
    %v6652 = vand.u32 %v6495, 4294901760
    %6653 = vmatmul.f32.gmra.mxu0 %v6652
    %v6654 = vpop.f32.mrf.mxu0
    %v6655 = vadd.f32 %v6622, %v6654
    %6656 = vdwg.mxu0
    %6657 = vmatpush.msra.mxu0 0.0
    %6658 = vmatpush.msra.mxu0 0.0
    %6659 = vmatpush.msra.mxu0 0.0
    %6660 = vmatpush.msra.mxu0 0.0
    %6661 = vmatpush.msra.mxu0 0.0
    %6662 = vmatpush.msra.mxu0 0.0
    %6663 = vmatpush.msra.mxu0 0.0
    %6664 = vmatpush.msra.mxu0 0.0
    %6665 = vmatpush.msra.mxu0 0.0
    %6666 = vmatpush.msra.mxu0 0.0
    %6667 = vmatpush.msra.mxu0 0.0
    %6668 = vmatpush.msra.mxu0 0.0
    %v6669 = vand.u32 %v156, 4294901760
    %6670 = vmatpush.msra.mxu0 %v6669
    %v6671 = vand.u32 %v155, 4294901760
    %6672 = vmatpush.msra.mxu0 %v6671
    %v6673 = vand.u32 %v154, 4294901760
    %6674 = vmatpush.msra.mxu0 %v6673
    %v6675 = vand.u32 %v153, 4294901760
    %6676 = vmatpush.msra.mxu0 %v6675
    %v6677 = vand.u32 %v6495, 4294901760
    %6678 = vmatmul.f32.gmra.mxu0 %v6677
    %v6679 = vpop.f32.mrf.mxu0
    %v6680 = vadd.f32 %v6655, %v6679
    %6681 = vdwg.mxu0
    %v6682 = vadd.f32 %v6490, %v6680
    %v6683 = vadd.f32 %v6682, %v3723
    %v6685 = vrot.slane %v6683, 1
    %v6686 = vperm.slane %v6683, 0
    %v6687 = vperm.slane %v6685, 0
    %v6690 = vadd.f32 %v3160, %v6686
    %v6691 = vadd.f32 %v3164, %v6687
    %v6692 = vtanh.pop %v6690
    %v6693 = vtanh.pop %v6691
    %v6694 = vmul.f32 %v6692, %v3737
    %v6695 = vmul.f32 %v6693, %v3737
    %v6696 = vsel %vm210, %v6694, 0.0
    %6697 = vadd.xlane.f32.xlu0 %v6696
    %v6698 = vpop.xlane.xlu0 %6697
    %v6699 = vsel %vm210, %v6695, 0.0
    %6700 = vadd.xlane.f32.xlu0 %v6699
    %v6701 = vpop.xlane.xlu0 %6700
    %v6702 = vadd.f32 %v6698, %v3751
    %v6703 = vadd.f32 %v6701, %v3751
    %v6706 = vperm.slane %v6702, %v3758
    %v6707 = vperm.slane %v6703, %v3758
    %v6708 = vsel %vm218, %v6707, %v6706
    %v6710 = vsel %vm3763, %v6708, -inf
    %6711 = vmax.xlane.f32.xlu0 %v6710
    %v6712 = vpop.xlane.xlu0 %6711
    %v6714 = vperm.slane %v6712, 0
    %v6715 = vperm.slane %v6712, 1
    %v6718 = vsub.f32 %v6702, %v6714
    %v6719 = vsub.f32 %v6703, %v6715
    %v6720 = vmul.f32 %v6718, 1.442695
    %v6721 = vpow.pop %v6720
    %v6722 = vmul.f32 %v6719, 1.442695
    %v6723 = vpow.pop %v6722
    %6726 = vset.pattern.permute.xlu0 0
    %6727 = vperm.xlu0 %6726, %v6721
    %v6728 = vpop.permute.xlu0 %6727
    %6729 = vset.pattern.permute.xlu0 0
    %6730 = vperm.xlu0 %6729, %v6723
    %v6731 = vpop.permute.xlu0 %6730
    %v6732 = vperm.slane %v6728, %v3758
    %v6733 = vperm.slane %v6731, %v3758
    %v6734 = vsel %vm218, %v6733, %v6732
    %v6736 = vsel %vm3763, %v6734, 0.0
    %6737 = vadd.xlane.f32.xlu0 %v6736
    %v6738 = vpop.xlane.xlu0 %6737
    %v6740 = vperm.slane %v6738, 0
    %v6741 = vperm.slane %v6738, 1
    %v6744 = vrcp.pop %v6740
    %v6745 = vmul.f32 %v6740, %v6744
    %v6746 = vsub.f32 1.0, %v6745
    %v6747 = vmul.f32 %v6744, %v6746
    %v6748 = vadd.f32 %v6744, %v6747
    %vm6749 = vweird.f32 %v6740
    %vm6750 = vweird.f32 %v6744
    %vm6751 = vmor %vm6749, %vm6750
    %v6752 = vsel %vm6751, %v6744, %v6748
    %v6753 = vand.u32 2147483647, %v6740
    %vm6754 = vcmp.eq.f32.partialorder %v6753, 8.507059e+37
    %v6755 = vand.u32 %v6740, 2147483648
    %v6756 = vor.u32 1.1754944e-38, %v6755
    %v6757 = vsel %vm6754, %v6756, %v6752
    %v6758 = vmul.f32 %v6721, %v6757
    %v6759 = vrcp.pop %v6741
    %v6760 = vmul.f32 %v6741, %v6759
    %v6761 = vsub.f32 1.0, %v6760
    %v6762 = vmul.f32 %v6759, %v6761
    %v6763 = vadd.f32 %v6759, %v6762
    %vm6764 = vweird.f32 %v6741
    %vm6765 = vweird.f32 %v6759
    %vm6766 = vmor %vm6764, %vm6765
    %v6767 = vsel %vm6766, %v6759, %v6763
    %v6768 = vand.u32 2147483647, %v6741
    %vm6769 = vcmp.eq.f32.partialorder %v6768, 8.507059e+37
    %v6770 = vand.u32 %v6741, 2147483648
    %v6771 = vor.u32 1.1754944e-38, %v6770
    %v6772 = vsel %vm6769, %v6771, %v6767
    %v6773 = vmul.f32 %v6723, %v6772
    %6775 = vset.pattern.permute.xlu0 0
    %6776 = vperm.xlu0 %6775, %v6758
    %v6777 = vpop.permute.xlu0 %6776
    %6780 = vset.pattern.permute.xlu0 0
    %6781 = vperm.xlu0 %6780, %v6773
    %v6782 = vpop.permute.xlu0 %6781
    %v6784 = vmul.f32 %v6777, %v2938
    %v6785 = vmul.f32 %v6782, %v2939
    %v6786 = vsel %vm3840, %v6784, 0.0
    %v6787 = vrot.slane %v6786, 4
    %v6788 = vadd.f32 %v6786, %v6787
    %v6789 = vrot.slane %v6788, 2
    %v6790 = vadd.f32 %v6788, %v6789
    %v6791 = vrot.slane %v6790, 1
    %v6792 = vadd.f32 %v6790, %v6791
    %v6793 = vsel %vm3840, %v6785, 0.0
    %v6794 = vrot.slane %v6793, 4
    %v6795 = vadd.f32 %v6793, %v6794
    %v6796 = vrot.slane %v6795, 2
    %v6797 = vadd.f32 %v6795, %v6796
    %v6798 = vrot.slane %v6797, 1
    %v6799 = vadd.f32 %v6797, %v6798
    %v6800 = vmul.f32 %v6792, %v3858
    %v6801 = vmul.f32 %v6799, %v3858
    %v6804 = vrot.slane %v6801, 7
    %v6805 = vsel %vm218, %v6804, %v6800
    %6806 = vrot.lane.b32.xlu0 %v6805, 32
    %v6807 = vpop.permute.xlu0 %6806
    %v6809 = vsel %vm589, %v6807, 0.0
    %6810 = vadd.xlane.f32.xlu0 %v6809
    %v6811 = vpop.xlane.xlu0 %6810
    %v6812 = vrot.slane %v3877, 4
    %v6813 = vrot.slane %v3878, 3
    %v6814 = vsel %vm218, %v6813, %v6812
    %v6816 = vadd.f32 %v6811, %v6814
    %v6817 = vadd.f32 %v6816, %v3886
    %6819 = vset.pattern.permute.xlu0 0
    %6820 = vperm.xlu0 %6819, %v6817
    %v6821 = vpop.permute.xlu0 %6820
    %v6823 = vmul.f32 %v6821, %v3895
    %v6824 = vadd.f32 %v6823, %v6305
    %v6825 = vadd.f32 %v6824, %v3900
    %v6826 = vmul.f32 %v6825, 0.5
    %v6827 = vtanh.pop %v6826
    %v6828 = vmul.f32 %v6827, 0.5
    %v6829 = vadd.f32 %v6828, 0.5
    %v6830 = vtanh.pop %v6825
    %v6831 = vmul.f32 %v6829, %v6110
    %6833 = vrot.lane.b32.xlu0 %v6830, 64
    %v6834 = vpop.permute.xlu0 %6833
    %v6836 = vmul.f32 %v6829, %v6834
    %6838 = vrot.lane.b32.xlu0 %v6836, 32
    %v6839 = vpop.permute.xlu0 %6838
    %v6841 = vadd.f32 %v6831, %v6839
    %v6842 = vtanh.pop %v6841
    %6844 = vrot.lane.b32.xlu0 %v6842, 64
    %v6845 = vpop.permute.xlu0 %6844
    %v6847 = vmul.f32 %v6829, %v6845
    %6849 = vrot.lane.b32.xlu0 %v6847, 32
    %v6850 = vpop.permute.xlu0 %6849
    %v6851 = vsel %vm210, %v6850, 0
    %6853 = vmatpush.msra.mxu0 0.0
    %6854 = vmatpush.msra.mxu0 0.0
    %6855 = vmatpush.msra.mxu0 0.0
    %6856 = vmatpush.msra.mxu0 0.0
    %6857 = vmatpush.msra.mxu0 0.0
    %6858 = vmatpush.msra.mxu0 0.0
    %6859 = vmatpush.msra.mxu0 0.0
    %6860 = vmatpush.msra.mxu0 0.0
    %6861 = vmatpush.msra.mxu0 0.0
    %6862 = vmatpush.msra.mxu0 0.0
    %6863 = vmatpush.msra.mxu0 0.0
    %6864 = vmatpush.msra.mxu0 0.0
    %v6865 = vand.u32 %v151, 4294901760
    %6866 = vmatpush.msra.mxu0 %v6865
    %v6867 = vand.u32 %v149, 4294901760
    %6868 = vmatpush.msra.mxu0 %v6867
    %v6869 = vand.u32 %v147, 4294901760
    %6870 = vmatpush.msra.mxu0 %v6869
    %v6871 = vand.u32 %v145, 4294901760
    %6872 = vmatpush.msra.mxu0 %v6871
    %v6873 = vand.u32 %v6851, 4294901760
    %v6874 = vsub.f32 %v6851, %v6873
    %v6875 = vand.u32 %v6874, 4294901760
    %v6876 = vsub.f32 %v6874, %v6875
    %v6877 = vand.u32 %v6876, 4294901760
    %6878 = vmatmul.f32.gmra.mxu0 %v6877
    %v6879 = vpop.f32.mrf.mxu0
    %v6880 = vadd.f32 0.0, %v6879
    %6881 = vdwg.mxu0
    %6882 = vmatpush.msra.mxu0 0.0
    %6883 = vmatpush.msra.mxu0 0.0
    %6884 = vmatpush.msra.mxu0 0.0
    %6885 = vmatpush.msra.mxu0 0.0
    %6886 = vmatpush.msra.mxu0 0.0
    %6887 = vmatpush.msra.mxu0 0.0
    %6888 = vmatpush.msra.mxu0 0.0
    %6889 = vmatpush.msra.mxu0 0.0
    %6890 = vmatpush.msra.mxu0 0.0
    %6891 = vmatpush.msra.mxu0 0.0
    %6892 = vmatpush.msra.mxu0 0.0
    %6893 = vmatpush.msra.mxu0 0.0
    %v6894 = vand.u32 %v151, 4294901760
    %v6895 = vsub.f32 %v151, %v6894
    %v6896 = vand.u32 %v6895, 4294901760
    %v6897 = vsub.f32 %v6895, %v6896
    %v6898 = vand.u32 %v6897, 4294901760
    %6899 = vmatpush.msra.mxu0 %v6898
    %v6900 = vand.u32 %v149, 4294901760
    %v6901 = vsub.f32 %v149, %v6900
    %v6902 = vand.u32 %v6901, 4294901760
    %v6903 = vsub.f32 %v6901, %v6902
    %v6904 = vand.u32 %v6903, 4294901760
    %6905 = vmatpush.msra.mxu0 %v6904
    %v6906 = vand.u32 %v147, 4294901760
    %v6907 = vsub.f32 %v147, %v6906
    %v6908 = vand.u32 %v6907, 4294901760
    %v6909 = vsub.f32 %v6907, %v6908
    %v6910 = vand.u32 %v6909, 4294901760
    %6911 = vmatpush.msra.mxu0 %v6910
    %v6912 = vand.u32 %v145, 4294901760
    %v6913 = vsub.f32 %v145, %v6912
    %v6914 = vand.u32 %v6913, 4294901760
    %v6915 = vsub.f32 %v6913, %v6914
    %v6916 = vand.u32 %v6915, 4294901760
    %6917 = vmatpush.msra.mxu0 %v6916
    %v6918 = vand.u32 %v6851, 4294901760
    %6919 = vmatmul.f32.gmra.mxu0 %v6918
    %v6920 = vpop.f32.mrf.mxu0
    %v6921 = vadd.f32 %v6880, %v6920
    %6922 = vdwg.mxu0
    %6923 = vmatpush.msra.mxu0 0.0
    %6924 = vmatpush.msra.mxu0 0.0
    %6925 = vmatpush.msra.mxu0 0.0
    %6926 = vmatpush.msra.mxu0 0.0
    %6927 = vmatpush.msra.mxu0 0.0
    %6928 = vmatpush.msra.mxu0 0.0
    %6929 = vmatpush.msra.mxu0 0.0
    %6930 = vmatpush.msra.mxu0 0.0
    %6931 = vmatpush.msra.mxu0 0.0
    %6932 = vmatpush.msra.mxu0 0.0
    %6933 = vmatpush.msra.mxu0 0.0
    %6934 = vmatpush.msra.mxu0 0.0
    %v6935 = vand.u32 %v151, 4294901760
    %v6936 = vsub.f32 %v151, %v6935
    %6937 = vmatpush.msra.mxu0 %v6936
    %v6938 = vand.u32 %v149, 4294901760
    %v6939 = vsub.f32 %v149, %v6938
    %6940 = vmatpush.msra.mxu0 %v6939
    %v6941 = vand.u32 %v147, 4294901760
    %v6942 = vsub.f32 %v147, %v6941
    %6943 = vmatpush.msra.mxu0 %v6942
    %v6944 = vand.u32 %v145, 4294901760
    %v6945 = vsub.f32 %v145, %v6944
    %6946 = vmatpush.msra.mxu0 %v6945
    %v6947 = vand.u32 %v6851, 4294901760
    %v6948 = vsub.f32 %v6851, %v6947
    %6949 = vmatmul.f32.gmra.mxu0 %v6948
    %v6950 = vpop.f32.mrf.mxu0
    %v6951 = vadd.f32 %v6921, %v6950
    %6952 = vdwg.mxu0
    %6953 = vmatpush.msra.mxu0 0.0
    %6954 = vmatpush.msra.mxu0 0.0
    %6955 = vmatpush.msra.mxu0 0.0
    %6956 = vmatpush.msra.mxu0 0.0
    %6957 = vmatpush.msra.mxu0 0.0
    %6958 = vmatpush.msra.mxu0 0.0
    %6959 = vmatpush.msra.mxu0 0.0
    %6960 = vmatpush.msra.mxu0 0.0
    %6961 = vmatpush.msra.mxu0 0.0
    %6962 = vmatpush.msra.mxu0 0.0
    %6963 = vmatpush.msra.mxu0 0.0
    %6964 = vmatpush.msra.mxu0 0.0
    %v6965 = vand.u32 %v151, 4294901760
    %6966 = vmatpush.msra.mxu0 %v6965
    %v6967 = vand.u32 %v149, 4294901760
    %6968 = vmatpush.msra.mxu0 %v6967
    %v6969 = vand.u32 %v147, 4294901760
    %6970 = vmatpush.msra.mxu0 %v6969
    %v6971 = vand.u32 %v145, 4294901760
    %6972 = vmatpush.msra.mxu0 %v6971
    %v6973 = vand.u32 %v6851, 4294901760
    %v6974 = vsub.f32 %v6851, %v6973
    %v6975 = vand.u32 %v6974, 4294901760
    %6976 = vmatmul.f32.gmra.mxu0 %v6975
    %v6977 = vpop.f32.mrf.mxu0
    %v6978 = vadd.f32 %v6951, %v6977
    %6979 = vdwg.mxu0
    %6980 = vmatpush.msra.mxu0 0.0
    %6981 = vmatpush.msra.mxu0 0.0
    %6982 = vmatpush.msra.mxu0 0.0
    %6983 = vmatpush.msra.mxu0 0.0
    %6984 = vmatpush.msra.mxu0 0.0
    %6985 = vmatpush.msra.mxu0 0.0
    %6986 = vmatpush.msra.mxu0 0.0
    %6987 = vmatpush.msra.mxu0 0.0
    %6988 = vmatpush.msra.mxu0 0.0
    %6989 = vmatpush.msra.mxu0 0.0
    %6990 = vmatpush.msra.mxu0 0.0
    %6991 = vmatpush.msra.mxu0 0.0
    %v6992 = vand.u32 %v151, 4294901760
    %v6993 = vsub.f32 %v151, %v6992
    %v6994 = vand.u32 %v6993, 4294901760
    %6995 = vmatpush.msra.mxu0 %v6994
    %v6996 = vand.u32 %v149, 4294901760
    %v6997 = vsub.f32 %v149, %v6996
    %v6998 = vand.u32 %v6997, 4294901760
    %6999 = vmatpush.msra.mxu0 %v6998
    %v7000 = vand.u32 %v147, 4294901760
    %v7001 = vsub.f32 %v147, %v7000
    %v7002 = vand.u32 %v7001, 4294901760
    %7003 = vmatpush.msra.mxu0 %v7002
    %v7004 = vand.u32 %v145, 4294901760
    %v7005 = vsub.f32 %v145, %v7004
    %v7006 = vand.u32 %v7005, 4294901760
    %7007 = vmatpush.msra.mxu0 %v7006
    %v7008 = vand.u32 %v6851, 4294901760
    %7009 = vmatmul.f32.gmra.mxu0 %v7008
    %v7010 = vpop.f32.mrf.mxu0
    %v7011 = vadd.f32 %v6978, %v7010
    %7012 = vdwg.mxu0
    %7013 = vmatpush.msra.mxu0 0.0
    %7014 = vmatpush.msra.mxu0 0.0
    %7015 = vmatpush.msra.mxu0 0.0
    %7016 = vmatpush.msra.mxu0 0.0
    %7017 = vmatpush.msra.mxu0 0.0
    %7018 = vmatpush.msra.mxu0 0.0
    %7019 = vmatpush.msra.mxu0 0.0
    %7020 = vmatpush.msra.mxu0 0.0
    %7021 = vmatpush.msra.mxu0 0.0
    %7022 = vmatpush.msra.mxu0 0.0
    %7023 = vmatpush.msra.mxu0 0.0
    %7024 = vmatpush.msra.mxu0 0.0
    %v7025 = vand.u32 %v151, 4294901760
    %7026 = vmatpush.msra.mxu0 %v7025
    %v7027 = vand.u32 %v149, 4294901760
    %7028 = vmatpush.msra.mxu0 %v7027
    %v7029 = vand.u32 %v147, 4294901760
    %7030 = vmatpush.msra.mxu0 %v7029
    %v7031 = vand.u32 %v145, 4294901760
    %7032 = vmatpush.msra.mxu0 %v7031
    %v7033 = vand.u32 %v6851, 4294901760
    %7034 = vmatmul.f32.gmra.mxu0 %v7033
    %v7035 = vpop.f32.mrf.mxu0
    %v7036 = vadd.f32 %v7011, %v7035
    %7037 = vdwg.mxu0
    %7038 = vmatpush.msra.mxu0 0.0
    %7039 = vmatpush.msra.mxu0 0.0
    %7040 = vmatpush.msra.mxu0 0.0
    %7041 = vmatpush.msra.mxu0 0.0
    %7042 = vmatpush.msra.mxu0 0.0
    %7043 = vmatpush.msra.mxu0 0.0
    %7044 = vmatpush.msra.mxu0 0.0
    %7045 = vmatpush.msra.mxu0 0.0
    %7046 = vmatpush.msra.mxu0 0.0
    %7047 = vmatpush.msra.mxu0 0.0
    %7048 = vmatpush.msra.mxu0 0.0
    %7049 = vmatpush.msra.mxu0 0.0
    %v7050 = vand.u32 %v152, 4294901760
    %7051 = vmatpush.msra.mxu0 %v7050
    %v7052 = vand.u32 %v150, 4294901760
    %7053 = vmatpush.msra.mxu0 %v7052
    %v7054 = vand.u32 %v148, 4294901760
    %7055 = vmatpush.msra.mxu0 %v7054
    %v7056 = vand.u32 %v146, 4294901760
    %7057 = vmatpush.msra.mxu0 %v7056
    %v7058 = vand.u32 %v6851, 4294901760
    %v7059 = vsub.f32 %v6851, %v7058
    %v7060 = vand.u32 %v7059, 4294901760
    %v7061 = vsub.f32 %v7059, %v7060
    %v7062 = vand.u32 %v7061, 4294901760
    %7063 = vmatmul.f32.gmra.mxu0 %v7062
    %v7064 = vpop.f32.mrf.mxu0
    %v7065 = vadd.f32 0.0, %v7064
    %7066 = vdwg.mxu0
    %7067 = vmatpush.msra.mxu0 0.0
    %7068 = vmatpush.msra.mxu0 0.0
    %7069 = vmatpush.msra.mxu0 0.0
    %7070 = vmatpush.msra.mxu0 0.0
    %7071 = vmatpush.msra.mxu0 0.0
    %7072 = vmatpush.msra.mxu0 0.0
    %7073 = vmatpush.msra.mxu0 0.0
    %7074 = vmatpush.msra.mxu0 0.0
    %7075 = vmatpush.msra.mxu0 0.0
    %7076 = vmatpush.msra.mxu0 0.0
    %7077 = vmatpush.msra.mxu0 0.0
    %7078 = vmatpush.msra.mxu0 0.0
    %v7079 = vand.u32 %v152, 4294901760
    %v7080 = vsub.f32 %v152, %v7079
    %v7081 = vand.u32 %v7080, 4294901760
    %v7082 = vsub.f32 %v7080, %v7081
    %v7083 = vand.u32 %v7082, 4294901760
    %7084 = vmatpush.msra.mxu0 %v7083
    %v7085 = vand.u32 %v150, 4294901760
    %v7086 = vsub.f32 %v150, %v7085
    %v7087 = vand.u32 %v7086, 4294901760
    %v7088 = vsub.f32 %v7086, %v7087
    %v7089 = vand.u32 %v7088, 4294901760
    %7090 = vmatpush.msra.mxu0 %v7089
    %v7091 = vand.u32 %v148, 4294901760
    %v7092 = vsub.f32 %v148, %v7091
    %v7093 = vand.u32 %v7092, 4294901760
    %v7094 = vsub.f32 %v7092, %v7093
    %v7095 = vand.u32 %v7094, 4294901760
    %7096 = vmatpush.msra.mxu0 %v7095
    %v7097 = vand.u32 %v146, 4294901760
    %v7098 = vsub.f32 %v146, %v7097
    %v7099 = vand.u32 %v7098, 4294901760
    %v7100 = vsub.f32 %v7098, %v7099
    %v7101 = vand.u32 %v7100, 4294901760
    %7102 = vmatpush.msra.mxu0 %v7101
    %v7103 = vand.u32 %v6851, 4294901760
    %7104 = vmatmul.f32.gmra.mxu0 %v7103
    %v7105 = vpop.f32.mrf.mxu0
    %v7106 = vadd.f32 %v7065, %v7105
    %7107 = vdwg.mxu0
    %7108 = vmatpush.msra.mxu0 0.0
    %7109 = vmatpush.msra.mxu0 0.0
    %7110 = vmatpush.msra.mxu0 0.0
    %7111 = vmatpush.msra.mxu0 0.0
    %7112 = vmatpush.msra.mxu0 0.0
    %7113 = vmatpush.msra.mxu0 0.0
    %7114 = vmatpush.msra.mxu0 0.0
    %7115 = vmatpush.msra.mxu0 0.0
    %7116 = vmatpush.msra.mxu0 0.0
    %7117 = vmatpush.msra.mxu0 0.0
    %7118 = vmatpush.msra.mxu0 0.0
    %7119 = vmatpush.msra.mxu0 0.0
    %v7120 = vand.u32 %v152, 4294901760
    %v7121 = vsub.f32 %v152, %v7120
    %7122 = vmatpush.msra.mxu0 %v7121
    %v7123 = vand.u32 %v150, 4294901760
    %v7124 = vsub.f32 %v150, %v7123
    %7125 = vmatpush.msra.mxu0 %v7124
    %v7126 = vand.u32 %v148, 4294901760
    %v7127 = vsub.f32 %v148, %v7126
    %7128 = vmatpush.msra.mxu0 %v7127
    %v7129 = vand.u32 %v146, 4294901760
    %v7130 = vsub.f32 %v146, %v7129
    %7131 = vmatpush.msra.mxu0 %v7130
    %v7132 = vand.u32 %v6851, 4294901760
    %v7133 = vsub.f32 %v6851, %v7132
    %7134 = vmatmul.f32.gmra.mxu0 %v7133
    %v7135 = vpop.f32.mrf.mxu0
    %v7136 = vadd.f32 %v7106, %v7135
    %7137 = vdwg.mxu0
    %7138 = vmatpush.msra.mxu0 0.0
    %7139 = vmatpush.msra.mxu0 0.0
    %7140 = vmatpush.msra.mxu0 0.0
    %7141 = vmatpush.msra.mxu0 0.0
    %7142 = vmatpush.msra.mxu0 0.0
    %7143 = vmatpush.msra.mxu0 0.0
    %7144 = vmatpush.msra.mxu0 0.0
    %7145 = vmatpush.msra.mxu0 0.0
    %7146 = vmatpush.msra.mxu0 0.0
    %7147 = vmatpush.msra.mxu0 0.0
    %7148 = vmatpush.msra.mxu0 0.0
    %7149 = vmatpush.msra.mxu0 0.0
    %v7150 = vand.u32 %v152, 4294901760
    %7151 = vmatpush.msra.mxu0 %v7150
    %v7152 = vand.u32 %v150, 4294901760
    %7153 = vmatpush.msra.mxu0 %v7152
    %v7154 = vand.u32 %v148, 4294901760
    %7155 = vmatpush.msra.mxu0 %v7154
    %v7156 = vand.u32 %v146, 4294901760
    %7157 = vmatpush.msra.mxu0 %v7156
    %v7158 = vand.u32 %v6851, 4294901760
    %v7159 = vsub.f32 %v6851, %v7158
    %v7160 = vand.u32 %v7159, 4294901760
    %7161 = vmatmul.f32.gmra.mxu0 %v7160
    %v7162 = vpop.f32.mrf.mxu0
    %v7163 = vadd.f32 %v7136, %v7162
    %7164 = vdwg.mxu0
    %7165 = vmatpush.msra.mxu0 0.0
    %7166 = vmatpush.msra.mxu0 0.0
    %7167 = vmatpush.msra.mxu0 0.0
    %7168 = vmatpush.msra.mxu0 0.0
    %7169 = vmatpush.msra.mxu0 0.0
    %7170 = vmatpush.msra.mxu0 0.0
    %7171 = vmatpush.msra.mxu0 0.0
    %7172 = vmatpush.msra.mxu0 0.0
    %7173 = vmatpush.msra.mxu0 0.0
    %7174 = vmatpush.msra.mxu0 0.0
    %7175 = vmatpush.msra.mxu0 0.0
    %7176 = vmatpush.msra.mxu0 0.0
    %v7177 = vand.u32 %v152, 4294901760
    %v7178 = vsub.f32 %v152, %v7177
    %v7179 = vand.u32 %v7178, 4294901760
    %7180 = vmatpush.msra.mxu0 %v7179
    %v7181 = vand.u32 %v150, 4294901760
    %v7182 = vsub.f32 %v150, %v7181
    %v7183 = vand.u32 %v7182, 4294901760
    %7184 = vmatpush.msra.mxu0 %v7183
    %v7185 = vand.u32 %v148, 4294901760
    %v7186 = vsub.f32 %v148, %v7185
    %v7187 = vand.u32 %v7186, 4294901760
    %7188 = vmatpush.msra.mxu0 %v7187
    %v7189 = vand.u32 %v146, 4294901760
    %v7190 = vsub.f32 %v146, %v7189
    %v7191 = vand.u32 %v7190, 4294901760
    %7192 = vmatpush.msra.mxu0 %v7191
    %v7193 = vand.u32 %v6851, 4294901760
    %7194 = vmatmul.f32.gmra.mxu0 %v7193
    %v7195 = vpop.f32.mrf.mxu0
    %v7196 = vadd.f32 %v7163, %v7195
    %7197 = vdwg.mxu0
    %7198 = vmatpush.msra.mxu0 0.0
    %7199 = vmatpush.msra.mxu0 0.0
    %7200 = vmatpush.msra.mxu0 0.0
    %7201 = vmatpush.msra.mxu0 0.0
    %7202 = vmatpush.msra.mxu0 0.0
    %7203 = vmatpush.msra.mxu0 0.0
    %7204 = vmatpush.msra.mxu0 0.0
    %7205 = vmatpush.msra.mxu0 0.0
    %7206 = vmatpush.msra.mxu0 0.0
    %7207 = vmatpush.msra.mxu0 0.0
    %7208 = vmatpush.msra.mxu0 0.0
    %7209 = vmatpush.msra.mxu0 0.0
    %v7210 = vand.u32 %v152, 4294901760
    %7211 = vmatpush.msra.mxu0 %v7210
    %v7212 = vand.u32 %v150, 4294901760
    %7213 = vmatpush.msra.mxu0 %v7212
    %v7214 = vand.u32 %v148, 4294901760
    %7215 = vmatpush.msra.mxu0 %v7214
    %v7216 = vand.u32 %v146, 4294901760
    %7217 = vmatpush.msra.mxu0 %v7216
    %v7218 = vand.u32 %v6851, 4294901760
    %7219 = vmatmul.f32.gmra.mxu0 %v7218
    %v7220 = vpop.f32.mrf.mxu0
    %v7221 = vadd.f32 %v7196, %v7220
    %7222 = vdwg.mxu0
    %7224 = vrot.lane.b32.xlu0 %v6841, 96
    %v7225 = vpop.permute.xlu0 %7224
    %v7226 = vsel %vm210, %v7225, 0
    %7228 = vmatpush.msra.mxu0 0.0
    %7229 = vmatpush.msra.mxu0 0.0
    %7230 = vmatpush.msra.mxu0 0.0
    %7231 = vmatpush.msra.mxu0 0.0
    %7232 = vmatpush.msra.mxu0 0.0
    %7233 = vmatpush.msra.mxu0 0.0
    %7234 = vmatpush.msra.mxu0 0.0
    %7235 = vmatpush.msra.mxu0 0.0
    %7236 = vmatpush.msra.mxu0 0.0
    %7237 = vmatpush.msra.mxu0 0.0
    %7238 = vmatpush.msra.mxu0 0.0
    %7239 = vmatpush.msra.mxu0 0.0
    %v7240 = vand.u32 %v156, 4294901760
    %7241 = vmatpush.msra.mxu0 %v7240
    %v7242 = vand.u32 %v155, 4294901760
    %7243 = vmatpush.msra.mxu0 %v7242
    %v7244 = vand.u32 %v154, 4294901760
    %7245 = vmatpush.msra.mxu0 %v7244
    %v7246 = vand.u32 %v153, 4294901760
    %7247 = vmatpush.msra.mxu0 %v7246
    %v7248 = vand.u32 %v7226, 4294901760
    %v7249 = vsub.f32 %v7226, %v7248
    %v7250 = vand.u32 %v7249, 4294901760
    %v7251 = vsub.f32 %v7249, %v7250
    %v7252 = vand.u32 %v7251, 4294901760
    %7253 = vmatmul.f32.gmra.mxu0 %v7252
    %v7254 = vpop.f32.mrf.mxu0
    %v7255 = vadd.f32 0.0, %v7254
    %7256 = vdwg.mxu0
    %7257 = vmatpush.msra.mxu0 0.0
    %7258 = vmatpush.msra.mxu0 0.0
    %7259 = vmatpush.msra.mxu0 0.0
    %7260 = vmatpush.msra.mxu0 0.0
    %7261 = vmatpush.msra.mxu0 0.0
    %7262 = vmatpush.msra.mxu0 0.0
    %7263 = vmatpush.msra.mxu0 0.0
    %7264 = vmatpush.msra.mxu0 0.0
    %7265 = vmatpush.msra.mxu0 0.0
    %7266 = vmatpush.msra.mxu0 0.0
    %7267 = vmatpush.msra.mxu0 0.0
    %7268 = vmatpush.msra.mxu0 0.0
    %v7269 = vand.u32 %v156, 4294901760
    %v7270 = vsub.f32 %v156, %v7269
    %v7271 = vand.u32 %v7270, 4294901760
    %v7272 = vsub.f32 %v7270, %v7271
    %v7273 = vand.u32 %v7272, 4294901760
    %7274 = vmatpush.msra.mxu0 %v7273
    %v7275 = vand.u32 %v155, 4294901760
    %v7276 = vsub.f32 %v155, %v7275
    %v7277 = vand.u32 %v7276, 4294901760
    %v7278 = vsub.f32 %v7276, %v7277
    %v7279 = vand.u32 %v7278, 4294901760
    %7280 = vmatpush.msra.mxu0 %v7279
    %v7281 = vand.u32 %v154, 4294901760
    %v7282 = vsub.f32 %v154, %v7281
    %v7283 = vand.u32 %v7282, 4294901760
    %v7284 = vsub.f32 %v7282, %v7283
    %v7285 = vand.u32 %v7284, 4294901760
    %7286 = vmatpush.msra.mxu0 %v7285
    %v7287 = vand.u32 %v153, 4294901760
    %v7288 = vsub.f32 %v153, %v7287
    %v7289 = vand.u32 %v7288, 4294901760
    %v7290 = vsub.f32 %v7288, %v7289
    %v7291 = vand.u32 %v7290, 4294901760
    %7292 = vmatpush.msra.mxu0 %v7291
    %v7293 = vand.u32 %v7226, 4294901760
    %7294 = vmatmul.f32.gmra.mxu0 %v7293
    %v7295 = vpop.f32.mrf.mxu0
    %v7296 = vadd.f32 %v7255, %v7295
    %7297 = vdwg.mxu0
    %7298 = vmatpush.msra.mxu0 0.0
    %7299 = vmatpush.msra.mxu0 0.0
    %7300 = vmatpush.msra.mxu0 0.0
    %7301 = vmatpush.msra.mxu0 0.0
    %7302 = vmatpush.msra.mxu0 0.0
    %7303 = vmatpush.msra.mxu0 0.0
    %7304 = vmatpush.msra.mxu0 0.0
    %7305 = vmatpush.msra.mxu0 0.0
    %7306 = vmatpush.msra.mxu0 0.0
    %7307 = vmatpush.msra.mxu0 0.0
    %7308 = vmatpush.msra.mxu0 0.0
    %7309 = vmatpush.msra.mxu0 0.0
    %v7310 = vand.u32 %v156, 4294901760
    %v7311 = vsub.f32 %v156, %v7310
    %7312 = vmatpush.msra.mxu0 %v7311
    %v7313 = vand.u32 %v155, 4294901760
    %v7314 = vsub.f32 %v155, %v7313
    %7315 = vmatpush.msra.mxu0 %v7314
    %v7316 = vand.u32 %v154, 4294901760
    %v7317 = vsub.f32 %v154, %v7316
    %7318 = vmatpush.msra.mxu0 %v7317
    %v7319 = vand.u32 %v153, 4294901760
    %v7320 = vsub.f32 %v153, %v7319
    %7321 = vmatpush.msra.mxu0 %v7320
    %v7322 = vand.u32 %v7226, 4294901760
    %v7323 = vsub.f32 %v7226, %v7322
    %7324 = vmatmul.f32.gmra.mxu0 %v7323
    %v7325 = vpop.f32.mrf.mxu0
    %v7326 = vadd.f32 %v7296, %v7325
    %7327 = vdwg.mxu0
    %7328 = vmatpush.msra.mxu0 0.0
    %7329 = vmatpush.msra.mxu0 0.0
    %7330 = vmatpush.msra.mxu0 0.0
    %7331 = vmatpush.msra.mxu0 0.0
    %7332 = vmatpush.msra.mxu0 0.0
    %7333 = vmatpush.msra.mxu0 0.0
    %7334 = vmatpush.msra.mxu0 0.0
    %7335 = vmatpush.msra.mxu0 0.0
    %7336 = vmatpush.msra.mxu0 0.0
    %7337 = vmatpush.msra.mxu0 0.0
    %7338 = vmatpush.msra.mxu0 0.0
    %7339 = vmatpush.msra.mxu0 0.0
    %v7340 = vand.u32 %v156, 4294901760
    %7341 = vmatpush.msra.mxu0 %v7340
    %v7342 = vand.u32 %v155, 4294901760
    %7343 = vmatpush.msra.mxu0 %v7342
    %v7344 = vand.u32 %v154, 4294901760
    %7345 = vmatpush.msra.mxu0 %v7344
    %v7346 = vand.u32 %v153, 4294901760
    %7347 = vmatpush.msra.mxu0 %v7346
    %v7348 = vand.u32 %v7226, 4294901760
    %v7349 = vsub.f32 %v7226, %v7348
    %v7350 = vand.u32 %v7349, 4294901760
    %7351 = vmatmul.f32.gmra.mxu0 %v7350
    %v7352 = vpop.f32.mrf.mxu0
    %v7353 = vadd.f32 %v7326, %v7352
    %7354 = vdwg.mxu0
    %7355 = vmatpush.msra.mxu0 0.0
    %7356 = vmatpush.msra.mxu0 0.0
    %7357 = vmatpush.msra.mxu0 0.0
    %7358 = vmatpush.msra.mxu0 0.0
    %7359 = vmatpush.msra.mxu0 0.0
    %7360 = vmatpush.msra.mxu0 0.0
    %7361 = vmatpush.msra.mxu0 0.0
    %7362 = vmatpush.msra.mxu0 0.0
    %7363 = vmatpush.msra.mxu0 0.0
    %7364 = vmatpush.msra.mxu0 0.0
    %7365 = vmatpush.msra.mxu0 0.0
    %7366 = vmatpush.msra.mxu0 0.0
    %v7367 = vand.u32 %v156, 4294901760
    %v7368 = vsub.f32 %v156, %v7367
    %v7369 = vand.u32 %v7368, 4294901760
    %7370 = vmatpush.msra.mxu0 %v7369
    %v7371 = vand.u32 %v155, 4294901760
    %v7372 = vsub.f32 %v155, %v7371
    %v7373 = vand.u32 %v7372, 4294901760
    %7374 = vmatpush.msra.mxu0 %v7373
    %v7375 = vand.u32 %v154, 4294901760
    %v7376 = vsub.f32 %v154, %v7375
    %v7377 = vand.u32 %v7376, 4294901760
    %7378 = vmatpush.msra.mxu0 %v7377
    %v7379 = vand.u32 %v153, 4294901760
    %v7380 = vsub.f32 %v153, %v7379
    %v7381 = vand.u32 %v7380, 4294901760
    %7382 = vmatpush.msra.mxu0 %v7381
    %v7383 = vand.u32 %v7226, 4294901760
    %7384 = vmatmul.f32.gmra.mxu0 %v7383
    %v7385 = vpop.f32.mrf.mxu0
    %v7386 = vadd.f32 %v7353, %v7385
    %7387 = vdwg.mxu0
    %7388 = vmatpush.msra.mxu0 0.0
    %7389 = vmatpush.msra.mxu0 0.0
    %7390 = vmatpush.msra.mxu0 0.0
    %7391 = vmatpush.msra.mxu0 0.0
    %7392 = vmatpush.msra.mxu0 0.0
    %7393 = vmatpush.msra.mxu0 0.0
    %7394 = vmatpush.msra.mxu0 0.0
    %7395 = vmatpush.msra.mxu0 0.0
    %7396 = vmatpush.msra.mxu0 0.0
    %7397 = vmatpush.msra.mxu0 0.0
    %7398 = vmatpush.msra.mxu0 0.0
    %7399 = vmatpush.msra.mxu0 0.0
    %v7400 = vand.u32 %v156, 4294901760
    %7401 = vmatpush.msra.mxu0 %v7400
    %v7402 = vand.u32 %v155, 4294901760
    %7403 = vmatpush.msra.mxu0 %v7402
    %v7404 = vand.u32 %v154, 4294901760
    %7405 = vmatpush.msra.mxu0 %v7404
    %v7406 = vand.u32 %v153, 4294901760
    %7407 = vmatpush.msra.mxu0 %v7406
    %v7408 = vand.u32 %v7226, 4294901760
    %7409 = vmatmul.f32.gmra.mxu0 %v7408
    %v7410 = vpop.f32.mrf.mxu0
    %v7411 = vadd.f32 %v7386, %v7410
    %7412 = vdwg.mxu0
    %v7413 = vadd.f32 %v7221, %v7411
    %v7414 = vadd.f32 %v7413, %v3723
    %v7416 = vrot.slane %v7414, 1
    %v7417 = vperm.slane %v7414, 0
    %v7418 = vperm.slane %v7416, 0
    %v7421 = vadd.f32 %v3160, %v7417
    %v7422 = vadd.f32 %v3164, %v7418
    %v7423 = vtanh.pop %v7421
    %v7424 = vtanh.pop %v7422
    %v7425 = vmul.f32 %v7423, %v3737
    %v7426 = vmul.f32 %v7424, %v3737
    %v7427 = vsel %vm210, %v7425, 0.0
    %7428 = vadd.xlane.f32.xlu0 %v7427
    %v7429 = vpop.xlane.xlu0 %7428
    %v7430 = vsel %vm210, %v7426, 0.0
    %7431 = vadd.xlane.f32.xlu0 %v7430
    %v7432 = vpop.xlane.xlu0 %7431
    %v7433 = vadd.f32 %v7429, %v3751
    %v7434 = vadd.f32 %v7432, %v3751
    %v7437 = vperm.slane %v7433, %v3758
    %v7438 = vperm.slane %v7434, %v3758
    %v7439 = vsel %vm218, %v7438, %v7437
    %v7441 = vsel %vm3763, %v7439, -inf
    %7442 = vmax.xlane.f32.xlu0 %v7441
    %v7443 = vpop.xlane.xlu0 %7442
    %v7445 = vperm.slane %v7443, 0
    %v7446 = vperm.slane %v7443, 1
    %v7449 = vsub.f32 %v7433, %v7445
    %v7450 = vsub.f32 %v7434, %v7446
    %v7451 = vmul.f32 %v7449, 1.442695
    %v7452 = vpow.pop %v7451
    %v7453 = vmul.f32 %v7450, 1.442695
    %v7454 = vpow.pop %v7453
    %7457 = vset.pattern.permute.xlu0 0
    %7458 = vperm.xlu0 %7457, %v7452
    %v7459 = vpop.permute.xlu0 %7458
    %7460 = vset.pattern.permute.xlu0 0
    %7461 = vperm.xlu0 %7460, %v7454
    %v7462 = vpop.permute.xlu0 %7461
    %v7463 = vperm.slane %v7459, %v3758
    %v7464 = vperm.slane %v7462, %v3758
    %v7465 = vsel %vm218, %v7464, %v7463
    %v7467 = vsel %vm3763, %v7465, 0.0
    %7468 = vadd.xlane.f32.xlu0 %v7467
    %v7469 = vpop.xlane.xlu0 %7468
    %v7471 = vperm.slane %v7469, 0
    %v7472 = vperm.slane %v7469, 1
    %v7475 = vrcp.pop %v7471
    %v7476 = vmul.f32 %v7471, %v7475
    %v7477 = vsub.f32 1.0, %v7476
    %v7478 = vmul.f32 %v7475, %v7477
    %v7479 = vadd.f32 %v7475, %v7478
    %vm7480 = vweird.f32 %v7471
    %vm7481 = vweird.f32 %v7475
    %vm7482 = vmor %vm7480, %vm7481
    %v7483 = vsel %vm7482, %v7475, %v7479
    %v7484 = vand.u32 2147483647, %v7471
    %vm7485 = vcmp.eq.f32.partialorder %v7484, 8.507059e+37
    %v7486 = vand.u32 %v7471, 2147483648
    %v7487 = vor.u32 1.1754944e-38, %v7486
    %v7488 = vsel %vm7485, %v7487, %v7483
    %v7489 = vmul.f32 %v7452, %v7488
    %v7490 = vrcp.pop %v7472
    %v7491 = vmul.f32 %v7472, %v7490
    %v7492 = vsub.f32 1.0, %v7491
    %v7493 = vmul.f32 %v7490, %v7492
    %v7494 = vadd.f32 %v7490, %v7493
    %vm7495 = vweird.f32 %v7472
    %vm7496 = vweird.f32 %v7490
    %vm7497 = vmor %vm7495, %vm7496
    %v7498 = vsel %vm7497, %v7490, %v7494
    %v7499 = vand.u32 2147483647, %v7472
    %vm7500 = vcmp.eq.f32.partialorder %v7499, 8.507059e+37
    %v7501 = vand.u32 %v7472, 2147483648
    %v7502 = vor.u32 1.1754944e-38, %v7501
    %v7503 = vsel %vm7500, %v7502, %v7498
    %v7504 = vmul.f32 %v7454, %v7503
    %7506 = vset.pattern.permute.xlu0 0
    %7507 = vperm.xlu0 %7506, %v7489
    %v7508 = vpop.permute.xlu0 %7507
    %7511 = vset.pattern.permute.xlu0 0
    %7512 = vperm.xlu0 %7511, %v7504
    %v7513 = vpop.permute.xlu0 %7512
    %v7515 = vmul.f32 %v7508, %v2938
    %v7516 = vmul.f32 %v7513, %v2939
    %v7517 = vsel %vm3840, %v7515, 0.0
    %v7518 = vrot.slane %v7517, 4
    %v7519 = vadd.f32 %v7517, %v7518
    %v7520 = vrot.slane %v7519, 2
    %v7521 = vadd.f32 %v7519, %v7520
    %v7522 = vrot.slane %v7521, 1
    %v7523 = vadd.f32 %v7521, %v7522
    %v7524 = vsel %vm3840, %v7516, 0.0
    %v7525 = vrot.slane %v7524, 4
    %v7526 = vadd.f32 %v7524, %v7525
    %v7527 = vrot.slane %v7526, 2
    %v7528 = vadd.f32 %v7526, %v7527
    %v7529 = vrot.slane %v7528, 1
    %v7530 = vadd.f32 %v7528, %v7529
    %v7531 = vmul.f32 %v7523, %v3858
    %v7532 = vmul.f32 %v7530, %v3858
    %v7535 = vrot.slane %v7532, 7
    %v7536 = vsel %vm218, %v7535, %v7531
    %7537 = vrot.lane.b32.xlu0 %v7536, 32
    %v7538 = vpop.permute.xlu0 %7537
    %v7540 = vsel %vm589, %v7538, 0.0
    %7541 = vadd.xlane.f32.xlu0 %v7540
    %v7542 = vpop.xlane.xlu0 %7541
    %v7543 = vrot.slane %v3877, 5
    %v7544 = vrot.slane %v3878, 4
    %v7545 = vsel %vm218, %v7544, %v7543
    %v7547 = vadd.f32 %v7542, %v7545
    %v7548 = vadd.f32 %v7547, %v3886
    %7550 = vset.pattern.permute.xlu0 0
    %7551 = vperm.xlu0 %7550, %v7548
    %v7552 = vpop.permute.xlu0 %7551
    %v7554 = vmul.f32 %v7552, %v3895
    %v7555 = vadd.f32 %v7554, %v7036
    %v7556 = vadd.f32 %v7555, %v3900
    %v7557 = vmul.f32 %v7556, 0.5
    %v7558 = vtanh.pop %v7557
    %v7559 = vmul.f32 %v7558, 0.5
    %v7560 = vadd.f32 %v7559, 0.5
    %v7561 = vtanh.pop %v7556
    %v7562 = vmul.f32 %v7560, %v6841
    %7564 = vrot.lane.b32.xlu0 %v7561, 64
    %v7565 = vpop.permute.xlu0 %7564
    %v7567 = vmul.f32 %v7560, %v7565
    %7569 = vrot.lane.b32.xlu0 %v7567, 32
    %v7570 = vpop.permute.xlu0 %7569
    %v7572 = vadd.f32 %v7562, %v7570
    %v7573 = vtanh.pop %v7572
    %7575 = vrot.lane.b32.xlu0 %v7573, 64
    %v7576 = vpop.permute.xlu0 %7575
    %v7578 = vmul.f32 %v7560, %v7576
    %7580 = vrot.lane.b32.xlu0 %v7578, 32
    %v7581 = vpop.permute.xlu0 %7580
    %v7582 = vsel %vm210, %v7581, 0
    %7584 = vmatpush.msra.mxu0 0.0
    %7585 = vmatpush.msra.mxu0 0.0
    %7586 = vmatpush.msra.mxu0 0.0
    %7587 = vmatpush.msra.mxu0 0.0
    %7588 = vmatpush.msra.mxu0 0.0
    %7589 = vmatpush.msra.mxu0 0.0
    %7590 = vmatpush.msra.mxu0 0.0
    %7591 = vmatpush.msra.mxu0 0.0
    %7592 = vmatpush.msra.mxu0 0.0
    %7593 = vmatpush.msra.mxu0 0.0
    %7594 = vmatpush.msra.mxu0 0.0
    %7595 = vmatpush.msra.mxu0 0.0
    %v7596 = vand.u32 %v151, 4294901760
    %7597 = vmatpush.msra.mxu0 %v7596
    %v7598 = vand.u32 %v149, 4294901760
    %7599 = vmatpush.msra.mxu0 %v7598
    %v7600 = vand.u32 %v147, 4294901760
    %7601 = vmatpush.msra.mxu0 %v7600
    %v7602 = vand.u32 %v145, 4294901760
    %7603 = vmatpush.msra.mxu0 %v7602
    %v7604 = vand.u32 %v7582, 4294901760
    %v7605 = vsub.f32 %v7582, %v7604
    %v7606 = vand.u32 %v7605, 4294901760
    %v7607 = vsub.f32 %v7605, %v7606
    %v7608 = vand.u32 %v7607, 4294901760
    %7609 = vmatmul.f32.gmra.mxu0 %v7608
    %v7610 = vpop.f32.mrf.mxu0
    %v7611 = vadd.f32 0.0, %v7610
    %7612 = vdwg.mxu0
    %7613 = vmatpush.msra.mxu0 0.0
    %7614 = vmatpush.msra.mxu0 0.0
    %7615 = vmatpush.msra.mxu0 0.0
    %7616 = vmatpush.msra.mxu0 0.0
    %7617 = vmatpush.msra.mxu0 0.0
    %7618 = vmatpush.msra.mxu0 0.0
    %7619 = vmatpush.msra.mxu0 0.0
    %7620 = vmatpush.msra.mxu0 0.0
    %7621 = vmatpush.msra.mxu0 0.0
    %7622 = vmatpush.msra.mxu0 0.0
    %7623 = vmatpush.msra.mxu0 0.0
    %7624 = vmatpush.msra.mxu0 0.0
    %v7625 = vand.u32 %v151, 4294901760
    %v7626 = vsub.f32 %v151, %v7625
    %v7627 = vand.u32 %v7626, 4294901760
    %v7628 = vsub.f32 %v7626, %v7627
    %v7629 = vand.u32 %v7628, 4294901760
    %7630 = vmatpush.msra.mxu0 %v7629
    %v7631 = vand.u32 %v149, 4294901760
    %v7632 = vsub.f32 %v149, %v7631
    %v7633 = vand.u32 %v7632, 4294901760
    %v7634 = vsub.f32 %v7632, %v7633
    %v7635 = vand.u32 %v7634, 4294901760
    %7636 = vmatpush.msra.mxu0 %v7635
    %v7637 = vand.u32 %v147, 4294901760
    %v7638 = vsub.f32 %v147, %v7637
    %v7639 = vand.u32 %v7638, 4294901760
    %v7640 = vsub.f32 %v7638, %v7639
    %v7641 = vand.u32 %v7640, 4294901760
    %7642 = vmatpush.msra.mxu0 %v7641
    %v7643 = vand.u32 %v145, 4294901760
    %v7644 = vsub.f32 %v145, %v7643
    %v7645 = vand.u32 %v7644, 4294901760
    %v7646 = vsub.f32 %v7644, %v7645
    %v7647 = vand.u32 %v7646, 4294901760
    %7648 = vmatpush.msra.mxu0 %v7647
    %v7649 = vand.u32 %v7582, 4294901760
    %7650 = vmatmul.f32.gmra.mxu0 %v7649
    %v7651 = vpop.f32.mrf.mxu0
    %v7652 = vadd.f32 %v7611, %v7651
    %7653 = vdwg.mxu0
    %7654 = vmatpush.msra.mxu0 0.0
    %7655 = vmatpush.msra.mxu0 0.0
    %7656 = vmatpush.msra.mxu0 0.0
    %7657 = vmatpush.msra.mxu0 0.0
    %7658 = vmatpush.msra.mxu0 0.0
    %7659 = vmatpush.msra.mxu0 0.0
    %7660 = vmatpush.msra.mxu0 0.0
    %7661 = vmatpush.msra.mxu0 0.0
    %7662 = vmatpush.msra.mxu0 0.0
    %7663 = vmatpush.msra.mxu0 0.0
    %7664 = vmatpush.msra.mxu0 0.0
    %7665 = vmatpush.msra.mxu0 0.0
    %v7666 = vand.u32 %v151, 4294901760
    %v7667 = vsub.f32 %v151, %v7666
    %7668 = vmatpush.msra.mxu0 %v7667
    %v7669 = vand.u32 %v149, 4294901760
    %v7670 = vsub.f32 %v149, %v7669
    %7671 = vmatpush.msra.mxu0 %v7670
    %v7672 = vand.u32 %v147, 4294901760
    %v7673 = vsub.f32 %v147, %v7672
    %7674 = vmatpush.msra.mxu0 %v7673
    %v7675 = vand.u32 %v145, 4294901760
    %v7676 = vsub.f32 %v145, %v7675
    %7677 = vmatpush.msra.mxu0 %v7676
    %v7678 = vand.u32 %v7582, 4294901760
    %v7679 = vsub.f32 %v7582, %v7678
    %7680 = vmatmul.f32.gmra.mxu0 %v7679
    %v7681 = vpop.f32.mrf.mxu0
    %v7682 = vadd.f32 %v7652, %v7681
    %7683 = vdwg.mxu0
    %7684 = vmatpush.msra.mxu0 0.0
    %7685 = vmatpush.msra.mxu0 0.0
    %7686 = vmatpush.msra.mxu0 0.0
    %7687 = vmatpush.msra.mxu0 0.0
    %7688 = vmatpush.msra.mxu0 0.0
    %7689 = vmatpush.msra.mxu0 0.0
    %7690 = vmatpush.msra.mxu0 0.0
    %7691 = vmatpush.msra.mxu0 0.0
    %7692 = vmatpush.msra.mxu0 0.0
    %7693 = vmatpush.msra.mxu0 0.0
    %7694 = vmatpush.msra.mxu0 0.0
    %7695 = vmatpush.msra.mxu0 0.0
    %v7696 = vand.u32 %v151, 4294901760
    %7697 = vmatpush.msra.mxu0 %v7696
    %v7698 = vand.u32 %v149, 4294901760
    %7699 = vmatpush.msra.mxu0 %v7698
    %v7700 = vand.u32 %v147, 4294901760
    %7701 = vmatpush.msra.mxu0 %v7700
    %v7702 = vand.u32 %v145, 4294901760
    %7703 = vmatpush.msra.mxu0 %v7702
    %v7704 = vand.u32 %v7582, 4294901760
    %v7705 = vsub.f32 %v7582, %v7704
    %v7706 = vand.u32 %v7705, 4294901760
    %7707 = vmatmul.f32.gmra.mxu0 %v7706
    %v7708 = vpop.f32.mrf.mxu0
    %v7709 = vadd.f32 %v7682, %v7708
    %7710 = vdwg.mxu0
    %7711 = vmatpush.msra.mxu0 0.0
    %7712 = vmatpush.msra.mxu0 0.0
    %7713 = vmatpush.msra.mxu0 0.0
    %7714 = vmatpush.msra.mxu0 0.0
    %7715 = vmatpush.msra.mxu0 0.0
    %7716 = vmatpush.msra.mxu0 0.0
    %7717 = vmatpush.msra.mxu0 0.0
    %7718 = vmatpush.msra.mxu0 0.0
    %7719 = vmatpush.msra.mxu0 0.0
    %7720 = vmatpush.msra.mxu0 0.0
    %7721 = vmatpush.msra.mxu0 0.0
    %7722 = vmatpush.msra.mxu0 0.0
    %v7723 = vand.u32 %v151, 4294901760
    %v7724 = vsub.f32 %v151, %v7723
    %v7725 = vand.u32 %v7724, 4294901760
    %7726 = vmatpush.msra.mxu0 %v7725
    %v7727 = vand.u32 %v149, 4294901760
    %v7728 = vsub.f32 %v149, %v7727
    %v7729 = vand.u32 %v7728, 4294901760
    %7730 = vmatpush.msra.mxu0 %v7729
    %v7731 = vand.u32 %v147, 4294901760
    %v7732 = vsub.f32 %v147, %v7731
    %v7733 = vand.u32 %v7732, 4294901760
    %7734 = vmatpush.msra.mxu0 %v7733
    %v7735 = vand.u32 %v145, 4294901760
    %v7736 = vsub.f32 %v145, %v7735
    %v7737 = vand.u32 %v7736, 4294901760
    %7738 = vmatpush.msra.mxu0 %v7737
    %v7739 = vand.u32 %v7582, 4294901760
    %7740 = vmatmul.f32.gmra.mxu0 %v7739
    %v7741 = vpop.f32.mrf.mxu0
    %v7742 = vadd.f32 %v7709, %v7741
    %7743 = vdwg.mxu0
    %7744 = vmatpush.msra.mxu0 0.0
    %7745 = vmatpush.msra.mxu0 0.0
    %7746 = vmatpush.msra.mxu0 0.0
    %7747 = vmatpush.msra.mxu0 0.0
    %7748 = vmatpush.msra.mxu0 0.0
    %7749 = vmatpush.msra.mxu0 0.0
    %7750 = vmatpush.msra.mxu0 0.0
    %7751 = vmatpush.msra.mxu0 0.0
    %7752 = vmatpush.msra.mxu0 0.0
    %7753 = vmatpush.msra.mxu0 0.0
    %7754 = vmatpush.msra.mxu0 0.0
    %7755 = vmatpush.msra.mxu0 0.0
    %v7756 = vand.u32 %v151, 4294901760
    %7757 = vmatpush.msra.mxu0 %v7756
    %v7758 = vand.u32 %v149, 4294901760
    %7759 = vmatpush.msra.mxu0 %v7758
    %v7760 = vand.u32 %v147, 4294901760
    %7761 = vmatpush.msra.mxu0 %v7760
    %v7762 = vand.u32 %v145, 4294901760
    %7763 = vmatpush.msra.mxu0 %v7762
    %v7764 = vand.u32 %v7582, 4294901760
    %7765 = vmatmul.f32.gmra.mxu0 %v7764
    %v7766 = vpop.f32.mrf.mxu0
    %v7767 = vadd.f32 %v7742, %v7766
    %7768 = vdwg.mxu0
    %7769 = vmatpush.msra.mxu0 0.0
    %7770 = vmatpush.msra.mxu0 0.0
    %7771 = vmatpush.msra.mxu0 0.0
    %7772 = vmatpush.msra.mxu0 0.0
    %7773 = vmatpush.msra.mxu0 0.0
    %7774 = vmatpush.msra.mxu0 0.0
    %7775 = vmatpush.msra.mxu0 0.0
    %7776 = vmatpush.msra.mxu0 0.0
    %7777 = vmatpush.msra.mxu0 0.0
    %7778 = vmatpush.msra.mxu0 0.0
    %7779 = vmatpush.msra.mxu0 0.0
    %7780 = vmatpush.msra.mxu0 0.0
    %v7781 = vand.u32 %v152, 4294901760
    %7782 = vmatpush.msra.mxu0 %v7781
    %v7783 = vand.u32 %v150, 4294901760
    %7784 = vmatpush.msra.mxu0 %v7783
    %v7785 = vand.u32 %v148, 4294901760
    %7786 = vmatpush.msra.mxu0 %v7785
    %v7787 = vand.u32 %v146, 4294901760
    %7788 = vmatpush.msra.mxu0 %v7787
    %v7789 = vand.u32 %v7582, 4294901760
    %v7790 = vsub.f32 %v7582, %v7789
    %v7791 = vand.u32 %v7790, 4294901760
    %v7792 = vsub.f32 %v7790, %v7791
    %v7793 = vand.u32 %v7792, 4294901760
    %7794 = vmatmul.f32.gmra.mxu0 %v7793
    %v7795 = vpop.f32.mrf.mxu0
    %v7796 = vadd.f32 0.0, %v7795
    %7797 = vdwg.mxu0
    %7798 = vmatpush.msra.mxu0 0.0
    %7799 = vmatpush.msra.mxu0 0.0
    %7800 = vmatpush.msra.mxu0 0.0
    %7801 = vmatpush.msra.mxu0 0.0
    %7802 = vmatpush.msra.mxu0 0.0
    %7803 = vmatpush.msra.mxu0 0.0
    %7804 = vmatpush.msra.mxu0 0.0
    %7805 = vmatpush.msra.mxu0 0.0
    %7806 = vmatpush.msra.mxu0 0.0
    %7807 = vmatpush.msra.mxu0 0.0
    %7808 = vmatpush.msra.mxu0 0.0
    %7809 = vmatpush.msra.mxu0 0.0
    %v7810 = vand.u32 %v152, 4294901760
    %v7811 = vsub.f32 %v152, %v7810
    %v7812 = vand.u32 %v7811, 4294901760
    %v7813 = vsub.f32 %v7811, %v7812
    %v7814 = vand.u32 %v7813, 4294901760
    %7815 = vmatpush.msra.mxu0 %v7814
    %v7816 = vand.u32 %v150, 4294901760
    %v7817 = vsub.f32 %v150, %v7816
    %v7818 = vand.u32 %v7817, 4294901760
    %v7819 = vsub.f32 %v7817, %v7818
    %v7820 = vand.u32 %v7819, 4294901760
    %7821 = vmatpush.msra.mxu0 %v7820
    %v7822 = vand.u32 %v148, 4294901760
    %v7823 = vsub.f32 %v148, %v7822
    %v7824 = vand.u32 %v7823, 4294901760
    %v7825 = vsub.f32 %v7823, %v7824
    %v7826 = vand.u32 %v7825, 4294901760
    %7827 = vmatpush.msra.mxu0 %v7826
    %v7828 = vand.u32 %v146, 4294901760
    %v7829 = vsub.f32 %v146, %v7828
    %v7830 = vand.u32 %v7829, 4294901760
    %v7831 = vsub.f32 %v7829, %v7830
    %v7832 = vand.u32 %v7831, 4294901760
    %7833 = vmatpush.msra.mxu0 %v7832
    %v7834 = vand.u32 %v7582, 4294901760
    %7835 = vmatmul.f32.gmra.mxu0 %v7834
    %v7836 = vpop.f32.mrf.mxu0
    %v7837 = vadd.f32 %v7796, %v7836
    %7838 = vdwg.mxu0
    %7839 = vmatpush.msra.mxu0 0.0
    %7840 = vmatpush.msra.mxu0 0.0
    %7841 = vmatpush.msra.mxu0 0.0
    %7842 = vmatpush.msra.mxu0 0.0
    %7843 = vmatpush.msra.mxu0 0.0
    %7844 = vmatpush.msra.mxu0 0.0
    %7845 = vmatpush.msra.mxu0 0.0
    %7846 = vmatpush.msra.mxu0 0.0
    %7847 = vmatpush.msra.mxu0 0.0
    %7848 = vmatpush.msra.mxu0 0.0
    %7849 = vmatpush.msra.mxu0 0.0
    %7850 = vmatpush.msra.mxu0 0.0
    %v7851 = vand.u32 %v152, 4294901760
    %v7852 = vsub.f32 %v152, %v7851
    %7853 = vmatpush.msra.mxu0 %v7852
    %v7854 = vand.u32 %v150, 4294901760
    %v7855 = vsub.f32 %v150, %v7854
    %7856 = vmatpush.msra.mxu0 %v7855
    %v7857 = vand.u32 %v148, 4294901760
    %v7858 = vsub.f32 %v148, %v7857
    %7859 = vmatpush.msra.mxu0 %v7858
    %v7860 = vand.u32 %v146, 4294901760
    %v7861 = vsub.f32 %v146, %v7860
    %7862 = vmatpush.msra.mxu0 %v7861
    %v7863 = vand.u32 %v7582, 4294901760
    %v7864 = vsub.f32 %v7582, %v7863
    %7865 = vmatmul.f32.gmra.mxu0 %v7864
    %v7866 = vpop.f32.mrf.mxu0
    %v7867 = vadd.f32 %v7837, %v7866
    %7868 = vdwg.mxu0
    %7869 = vmatpush.msra.mxu0 0.0
    %7870 = vmatpush.msra.mxu0 0.0
    %7871 = vmatpush.msra.mxu0 0.0
    %7872 = vmatpush.msra.mxu0 0.0
    %7873 = vmatpush.msra.mxu0 0.0
    %7874 = vmatpush.msra.mxu0 0.0
    %7875 = vmatpush.msra.mxu0 0.0
    %7876 = vmatpush.msra.mxu0 0.0
    %7877 = vmatpush.msra.mxu0 0.0
    %7878 = vmatpush.msra.mxu0 0.0
    %7879 = vmatpush.msra.mxu0 0.0
    %7880 = vmatpush.msra.mxu0 0.0
    %v7881 = vand.u32 %v152, 4294901760
    %7882 = vmatpush.msra.mxu0 %v7881
    %v7883 = vand.u32 %v150, 4294901760
    %7884 = vmatpush.msra.mxu0 %v7883
    %v7885 = vand.u32 %v148, 4294901760
    %7886 = vmatpush.msra.mxu0 %v7885
    %v7887 = vand.u32 %v146, 4294901760
    %7888 = vmatpush.msra.mxu0 %v7887
    %v7889 = vand.u32 %v7582, 4294901760
    %v7890 = vsub.f32 %v7582, %v7889
    %v7891 = vand.u32 %v7890, 4294901760
    %7892 = vmatmul.f32.gmra.mxu0 %v7891
    %v7893 = vpop.f32.mrf.mxu0
    %v7894 = vadd.f32 %v7867, %v7893
    %7895 = vdwg.mxu0
    %7896 = vmatpush.msra.mxu0 0.0
    %7897 = vmatpush.msra.mxu0 0.0
    %7898 = vmatpush.msra.mxu0 0.0
    %7899 = vmatpush.msra.mxu0 0.0
    %7900 = vmatpush.msra.mxu0 0.0
    %7901 = vmatpush.msra.mxu0 0.0
    %7902 = vmatpush.msra.mxu0 0.0
    %7903 = vmatpush.msra.mxu0 0.0
    %7904 = vmatpush.msra.mxu0 0.0
    %7905 = vmatpush.msra.mxu0 0.0
    %7906 = vmatpush.msra.mxu0 0.0
    %7907 = vmatpush.msra.mxu0 0.0
    %v7908 = vand.u32 %v152, 4294901760
    %v7909 = vsub.f32 %v152, %v7908
    %v7910 = vand.u32 %v7909, 4294901760
    %7911 = vmatpush.msra.mxu0 %v7910
    %v7912 = vand.u32 %v150, 4294901760
    %v7913 = vsub.f32 %v150, %v7912
    %v7914 = vand.u32 %v7913, 4294901760
    %7915 = vmatpush.msra.mxu0 %v7914
    %v7916 = vand.u32 %v148, 4294901760
    %v7917 = vsub.f32 %v148, %v7916
    %v7918 = vand.u32 %v7917, 4294901760
    %7919 = vmatpush.msra.mxu0 %v7918
    %v7920 = vand.u32 %v146, 4294901760
    %v7921 = vsub.f32 %v146, %v7920
    %v7922 = vand.u32 %v7921, 4294901760
    %7923 = vmatpush.msra.mxu0 %v7922
    %v7924 = vand.u32 %v7582, 4294901760
    %7925 = vmatmul.f32.gmra.mxu0 %v7924
    %v7926 = vpop.f32.mrf.mxu0
    %v7927 = vadd.f32 %v7894, %v7926
    %7928 = vdwg.mxu0
    %7929 = vmatpush.msra.mxu0 0.0
    %7930 = vmatpush.msra.mxu0 0.0
    %7931 = vmatpush.msra.mxu0 0.0
    %7932 = vmatpush.msra.mxu0 0.0
    %7933 = vmatpush.msra.mxu0 0.0
    %7934 = vmatpush.msra.mxu0 0.0
    %7935 = vmatpush.msra.mxu0 0.0
    %7936 = vmatpush.msra.mxu0 0.0
    %7937 = vmatpush.msra.mxu0 0.0
    %7938 = vmatpush.msra.mxu0 0.0
    %7939 = vmatpush.msra.mxu0 0.0
    %7940 = vmatpush.msra.mxu0 0.0
    %v7941 = vand.u32 %v152, 4294901760
    %7942 = vmatpush.msra.mxu0 %v7941
    %v7943 = vand.u32 %v150, 4294901760
    %7944 = vmatpush.msra.mxu0 %v7943
    %v7945 = vand.u32 %v148, 4294901760
    %7946 = vmatpush.msra.mxu0 %v7945
    %v7947 = vand.u32 %v146, 4294901760
    %7948 = vmatpush.msra.mxu0 %v7947
    %v7949 = vand.u32 %v7582, 4294901760
    %7950 = vmatmul.f32.gmra.mxu0 %v7949
    %v7951 = vpop.f32.mrf.mxu0
    %v7952 = vadd.f32 %v7927, %v7951
    %7953 = vdwg.mxu0
    %7955 = vrot.lane.b32.xlu0 %v7572, 96
    %v7956 = vpop.permute.xlu0 %7955
    %v7957 = vsel %vm210, %v7956, 0
    %7959 = vmatpush.msra.mxu0 0.0
    %7960 = vmatpush.msra.mxu0 0.0
    %7961 = vmatpush.msra.mxu0 0.0
    %7962 = vmatpush.msra.mxu0 0.0
    %7963 = vmatpush.msra.mxu0 0.0
    %7964 = vmatpush.msra.mxu0 0.0
    %7965 = vmatpush.msra.mxu0 0.0
    %7966 = vmatpush.msra.mxu0 0.0
    %7967 = vmatpush.msra.mxu0 0.0
    %7968 = vmatpush.msra.mxu0 0.0
    %7969 = vmatpush.msra.mxu0 0.0
    %7970 = vmatpush.msra.mxu0 0.0
    %v7971 = vand.u32 %v156, 4294901760
    %7972 = vmatpush.msra.mxu0 %v7971
    %v7973 = vand.u32 %v155, 4294901760
    %7974 = vmatpush.msra.mxu0 %v7973
    %v7975 = vand.u32 %v154, 4294901760
    %7976 = vmatpush.msra.mxu0 %v7975
    %v7977 = vand.u32 %v153, 4294901760
    %7978 = vmatpush.msra.mxu0 %v7977
    %v7979 = vand.u32 %v7957, 4294901760
    %v7980 = vsub.f32 %v7957, %v7979
    %v7981 = vand.u32 %v7980, 4294901760
    %v7982 = vsub.f32 %v7980, %v7981
    %v7983 = vand.u32 %v7982, 4294901760
    %7984 = vmatmul.f32.gmra.mxu0 %v7983
    %v7985 = vpop.f32.mrf.mxu0
    %v7986 = vadd.f32 0.0, %v7985
    %7987 = vdwg.mxu0
    %7988 = vmatpush.msra.mxu0 0.0
    %7989 = vmatpush.msra.mxu0 0.0
    %7990 = vmatpush.msra.mxu0 0.0
    %7991 = vmatpush.msra.mxu0 0.0
    %7992 = vmatpush.msra.mxu0 0.0
    %7993 = vmatpush.msra.mxu0 0.0
    %7994 = vmatpush.msra.mxu0 0.0
    %7995 = vmatpush.msra.mxu0 0.0
    %7996 = vmatpush.msra.mxu0 0.0
    %7997 = vmatpush.msra.mxu0 0.0
    %7998 = vmatpush.msra.mxu0 0.0
    %7999 = vmatpush.msra.mxu0 0.0
    %v8000 = vand.u32 %v156, 4294901760
    %v8001 = vsub.f32 %v156, %v8000
    %v8002 = vand.u32 %v8001, 4294901760
    %v8003 = vsub.f32 %v8001, %v8002
    %v8004 = vand.u32 %v8003, 4294901760
    %8005 = vmatpush.msra.mxu0 %v8004
    %v8006 = vand.u32 %v155, 4294901760
    %v8007 = vsub.f32 %v155, %v8006
    %v8008 = vand.u32 %v8007, 4294901760
    %v8009 = vsub.f32 %v8007, %v8008
    %v8010 = vand.u32 %v8009, 4294901760
    %8011 = vmatpush.msra.mxu0 %v8010
    %v8012 = vand.u32 %v154, 4294901760
    %v8013 = vsub.f32 %v154, %v8012
    %v8014 = vand.u32 %v8013, 4294901760
    %v8015 = vsub.f32 %v8013, %v8014
    %v8016 = vand.u32 %v8015, 4294901760
    %8017 = vmatpush.msra.mxu0 %v8016
    %v8018 = vand.u32 %v153, 4294901760
    %v8019 = vsub.f32 %v153, %v8018
    %v8020 = vand.u32 %v8019, 4294901760
    %v8021 = vsub.f32 %v8019, %v8020
    %v8022 = vand.u32 %v8021, 4294901760
    %8023 = vmatpush.msra.mxu0 %v8022
    %v8024 = vand.u32 %v7957, 4294901760
    %8025 = vmatmul.f32.gmra.mxu0 %v8024
    %v8026 = vpop.f32.mrf.mxu0
    %v8027 = vadd.f32 %v7986, %v8026
    %8028 = vdwg.mxu0
    %8029 = vmatpush.msra.mxu0 0.0
    %8030 = vmatpush.msra.mxu0 0.0
    %8031 = vmatpush.msra.mxu0 0.0
    %8032 = vmatpush.msra.mxu0 0.0
    %8033 = vmatpush.msra.mxu0 0.0
    %8034 = vmatpush.msra.mxu0 0.0
    %8035 = vmatpush.msra.mxu0 0.0
    %8036 = vmatpush.msra.mxu0 0.0
    %8037 = vmatpush.msra.mxu0 0.0
    %8038 = vmatpush.msra.mxu0 0.0
    %8039 = vmatpush.msra.mxu0 0.0
    %8040 = vmatpush.msra.mxu0 0.0
    %v8041 = vand.u32 %v156, 4294901760
    %v8042 = vsub.f32 %v156, %v8041
    %8043 = vmatpush.msra.mxu0 %v8042
    %v8044 = vand.u32 %v155, 4294901760
    %v8045 = vsub.f32 %v155, %v8044
    %8046 = vmatpush.msra.mxu0 %v8045
    %v8047 = vand.u32 %v154, 4294901760
    %v8048 = vsub.f32 %v154, %v8047
    %8049 = vmatpush.msra.mxu0 %v8048
    %v8050 = vand.u32 %v153, 4294901760
    %v8051 = vsub.f32 %v153, %v8050
    %8052 = vmatpush.msra.mxu0 %v8051
    %v8053 = vand.u32 %v7957, 4294901760
    %v8054 = vsub.f32 %v7957, %v8053
    %8055 = vmatmul.f32.gmra.mxu0 %v8054
    %v8056 = vpop.f32.mrf.mxu0
    %v8057 = vadd.f32 %v8027, %v8056
    %8058 = vdwg.mxu0
    %8059 = vmatpush.msra.mxu0 0.0
    %8060 = vmatpush.msra.mxu0 0.0
    %8061 = vmatpush.msra.mxu0 0.0
    %8062 = vmatpush.msra.mxu0 0.0
    %8063 = vmatpush.msra.mxu0 0.0
    %8064 = vmatpush.msra.mxu0 0.0
    %8065 = vmatpush.msra.mxu0 0.0
    %8066 = vmatpush.msra.mxu0 0.0
    %8067 = vmatpush.msra.mxu0 0.0
    %8068 = vmatpush.msra.mxu0 0.0
    %8069 = vmatpush.msra.mxu0 0.0
    %8070 = vmatpush.msra.mxu0 0.0
    %v8071 = vand.u32 %v156, 4294901760
    %8072 = vmatpush.msra.mxu0 %v8071
    %v8073 = vand.u32 %v155, 4294901760
    %8074 = vmatpush.msra.mxu0 %v8073
    %v8075 = vand.u32 %v154, 4294901760
    %8076 = vmatpush.msra.mxu0 %v8075
    %v8077 = vand.u32 %v153, 4294901760
    %8078 = vmatpush.msra.mxu0 %v8077
    %v8079 = vand.u32 %v7957, 4294901760
    %v8080 = vsub.f32 %v7957, %v8079
    %v8081 = vand.u32 %v8080, 4294901760
    %8082 = vmatmul.f32.gmra.mxu0 %v8081
    %v8083 = vpop.f32.mrf.mxu0
    %v8084 = vadd.f32 %v8057, %v8083
    %8085 = vdwg.mxu0
    %8086 = vmatpush.msra.mxu0 0.0
    %8087 = vmatpush.msra.mxu0 0.0
    %8088 = vmatpush.msra.mxu0 0.0
    %8089 = vmatpush.msra.mxu0 0.0
    %8090 = vmatpush.msra.mxu0 0.0
    %8091 = vmatpush.msra.mxu0 0.0
    %8092 = vmatpush.msra.mxu0 0.0
    %8093 = vmatpush.msra.mxu0 0.0
    %8094 = vmatpush.msra.mxu0 0.0
    %8095 = vmatpush.msra.mxu0 0.0
    %8096 = vmatpush.msra.mxu0 0.0
    %8097 = vmatpush.msra.mxu0 0.0
    %v8098 = vand.u32 %v156, 4294901760
    %v8099 = vsub.f32 %v156, %v8098
    %v8100 = vand.u32 %v8099, 4294901760
    %8101 = vmatpush.msra.mxu0 %v8100
    %v8102 = vand.u32 %v155, 4294901760
    %v8103 = vsub.f32 %v155, %v8102
    %v8104 = vand.u32 %v8103, 4294901760
    %8105 = vmatpush.msra.mxu0 %v8104
    %v8106 = vand.u32 %v154, 4294901760
    %v8107 = vsub.f32 %v154, %v8106
    %v8108 = vand.u32 %v8107, 4294901760
    %8109 = vmatpush.msra.mxu0 %v8108
    %v8110 = vand.u32 %v153, 4294901760
    %v8111 = vsub.f32 %v153, %v8110
    %v8112 = vand.u32 %v8111, 4294901760
    %8113 = vmatpush.msra.mxu0 %v8112
    %v8114 = vand.u32 %v7957, 4294901760
    %8115 = vmatmul.f32.gmra.mxu0 %v8114
    %v8116 = vpop.f32.mrf.mxu0
    %v8117 = vadd.f32 %v8084, %v8116
    %8118 = vdwg.mxu0
    %8119 = vmatpush.msra.mxu0 0.0
    %8120 = vmatpush.msra.mxu0 0.0
    %8121 = vmatpush.msra.mxu0 0.0
    %8122 = vmatpush.msra.mxu0 0.0
    %8123 = vmatpush.msra.mxu0 0.0
    %8124 = vmatpush.msra.mxu0 0.0
    %8125 = vmatpush.msra.mxu0 0.0
    %8126 = vmatpush.msra.mxu0 0.0
    %8127 = vmatpush.msra.mxu0 0.0
    %8128 = vmatpush.msra.mxu0 0.0
    %8129 = vmatpush.msra.mxu0 0.0
    %8130 = vmatpush.msra.mxu0 0.0
    %v8131 = vand.u32 %v156, 4294901760
    %8132 = vmatpush.msra.mxu0 %v8131
    %v8133 = vand.u32 %v155, 4294901760
    %8134 = vmatpush.msra.mxu0 %v8133
    %v8135 = vand.u32 %v154, 4294901760
    %8136 = vmatpush.msra.mxu0 %v8135
    %v8137 = vand.u32 %v153, 4294901760
    %8138 = vmatpush.msra.mxu0 %v8137
    %v8139 = vand.u32 %v7957, 4294901760
    %8140 = vmatmul.f32.gmra.mxu0 %v8139
    %v8141 = vpop.f32.mrf.mxu0
    %v8142 = vadd.f32 %v8117, %v8141
    %8143 = vdwg.mxu0
    %v8144 = vadd.f32 %v7952, %v8142
    %v8145 = vadd.f32 %v8144, %v3723
    %v8147 = vrot.slane %v8145, 1
    %v8148 = vperm.slane %v8145, 0
    %v8149 = vperm.slane %v8147, 0
    %v8152 = vadd.f32 %v3160, %v8148
    %v8153 = vadd.f32 %v3164, %v8149
    %v8154 = vtanh.pop %v8152
    %v8155 = vtanh.pop %v8153
    %v8156 = vmul.f32 %v8154, %v3737
    %v8157 = vmul.f32 %v8155, %v3737
    %v8158 = vsel %vm210, %v8156, 0.0
    %8159 = vadd.xlane.f32.xlu0 %v8158
    %v8160 = vpop.xlane.xlu0 %8159
    %v8161 = vsel %vm210, %v8157, 0.0
    %8162 = vadd.xlane.f32.xlu0 %v8161
    %v8163 = vpop.xlane.xlu0 %8162
    %v8164 = vadd.f32 %v8160, %v3751
    %v8165 = vadd.f32 %v8163, %v3751
    %v8168 = vperm.slane %v8164, %v3758
    %v8169 = vperm.slane %v8165, %v3758
    %v8170 = vsel %vm218, %v8169, %v8168
    %v8172 = vsel %vm3763, %v8170, -inf
    %8173 = vmax.xlane.f32.xlu0 %v8172
    %v8174 = vpop.xlane.xlu0 %8173
    %v8176 = vperm.slane %v8174, 0
    %v8177 = vperm.slane %v8174, 1
    %v8180 = vsub.f32 %v8164, %v8176
    %v8181 = vsub.f32 %v8165, %v8177
    %v8182 = vmul.f32 %v8180, 1.442695
    %v8183 = vpow.pop %v8182
    %v8184 = vmul.f32 %v8181, 1.442695
    %v8185 = vpow.pop %v8184
    %8188 = vset.pattern.permute.xlu0 0
    %8189 = vperm.xlu0 %8188, %v8183
    %v8190 = vpop.permute.xlu0 %8189
    %8191 = vset.pattern.permute.xlu0 0
    %8192 = vperm.xlu0 %8191, %v8185
    %v8193 = vpop.permute.xlu0 %8192
    %v8194 = vperm.slane %v8190, %v3758
    %v8195 = vperm.slane %v8193, %v3758
    %v8196 = vsel %vm218, %v8195, %v8194
    %v8198 = vsel %vm3763, %v8196, 0.0
    %8199 = vadd.xlane.f32.xlu0 %v8198
    %v8200 = vpop.xlane.xlu0 %8199
    %v8202 = vperm.slane %v8200, 0
    %v8203 = vperm.slane %v8200, 1
    %v8206 = vrcp.pop %v8202
    %v8207 = vmul.f32 %v8202, %v8206
    %v8208 = vsub.f32 1.0, %v8207
    %v8209 = vmul.f32 %v8206, %v8208
    %v8210 = vadd.f32 %v8206, %v8209
    %vm8211 = vweird.f32 %v8202
    %vm8212 = vweird.f32 %v8206
    %vm8213 = vmor %vm8211, %vm8212
    %v8214 = vsel %vm8213, %v8206, %v8210
    %v8215 = vand.u32 2147483647, %v8202
    %vm8216 = vcmp.eq.f32.partialorder %v8215, 8.507059e+37
    %v8217 = vand.u32 %v8202, 2147483648
    %v8218 = vor.u32 1.1754944e-38, %v8217
    %v8219 = vsel %vm8216, %v8218, %v8214
    %v8220 = vmul.f32 %v8183, %v8219
    %v8221 = vrcp.pop %v8203
    %v8222 = vmul.f32 %v8203, %v8221
    %v8223 = vsub.f32 1.0, %v8222
    %v8224 = vmul.f32 %v8221, %v8223
    %v8225 = vadd.f32 %v8221, %v8224
    %vm8226 = vweird.f32 %v8203
    %vm8227 = vweird.f32 %v8221
    %vm8228 = vmor %vm8226, %vm8227
    %v8229 = vsel %vm8228, %v8221, %v8225
    %v8230 = vand.u32 2147483647, %v8203
    %vm8231 = vcmp.eq.f32.partialorder %v8230, 8.507059e+37
    %v8232 = vand.u32 %v8203, 2147483648
    %v8233 = vor.u32 1.1754944e-38, %v8232
    %v8234 = vsel %vm8231, %v8233, %v8229
    %v8235 = vmul.f32 %v8185, %v8234
    %8237 = vset.pattern.permute.xlu0 0
    %8238 = vperm.xlu0 %8237, %v8220
    %v8239 = vpop.permute.xlu0 %8238
    %8242 = vset.pattern.permute.xlu0 0
    %8243 = vperm.xlu0 %8242, %v8235
    %v8244 = vpop.permute.xlu0 %8243
    %v8246 = vmul.f32 %v8239, %v2938
    %v8247 = vmul.f32 %v8244, %v2939
    %v8248 = vsel %vm3840, %v8246, 0.0
    %v8249 = vrot.slane %v8248, 4
    %v8250 = vadd.f32 %v8248, %v8249
    %v8251 = vrot.slane %v8250, 2
    %v8252 = vadd.f32 %v8250, %v8251
    %v8253 = vrot.slane %v8252, 1
    %v8254 = vadd.f32 %v8252, %v8253
    %v8255 = vsel %vm3840, %v8247, 0.0
    %v8256 = vrot.slane %v8255, 4
    %v8257 = vadd.f32 %v8255, %v8256
    %v8258 = vrot.slane %v8257, 2
    %v8259 = vadd.f32 %v8257, %v8258
    %v8260 = vrot.slane %v8259, 1
    %v8261 = vadd.f32 %v8259, %v8260
    %v8262 = vmul.f32 %v8254, %v3858
    %v8263 = vmul.f32 %v8261, %v3858
    %v8266 = vrot.slane %v8263, 7
    %v8267 = vsel %vm218, %v8266, %v8262
    %8268 = vrot.lane.b32.xlu0 %v8267, 32
    %v8269 = vpop.permute.xlu0 %8268
    %v8271 = vsel %vm589, %v8269, 0.0
    %8272 = vadd.xlane.f32.xlu0 %v8271
    %v8273 = vpop.xlane.xlu0 %8272
    %v8274 = vrot.slane %v3877, 6
    %v8275 = vrot.slane %v3878, 5
    %v8276 = vsel %vm218, %v8275, %v8274
    %v8278 = vadd.f32 %v8273, %v8276
    %v8279 = vadd.f32 %v8278, %v3886
    %8281 = vset.pattern.permute.xlu0 0
    %8282 = vperm.xlu0 %8281, %v8279
    %v8283 = vpop.permute.xlu0 %8282
    %v8285 = vmul.f32 %v8283, %v3895
    %v8286 = vadd.f32 %v8285, %v7767
    %v8287 = vadd.f32 %v8286, %v3900
    %v8288 = vmul.f32 %v8287, 0.5
    %v8289 = vtanh.pop %v8288
    %v8290 = vmul.f32 %v8289, 0.5
    %v8291 = vadd.f32 %v8290, 0.5
    %v8292 = vtanh.pop %v8287
    %v8293 = vmul.f32 %v8291, %v7572
    %8295 = vrot.lane.b32.xlu0 %v8292, 64
    %v8296 = vpop.permute.xlu0 %8295
    %v8298 = vmul.f32 %v8291, %v8296
    %8300 = vrot.lane.b32.xlu0 %v8298, 32
    %v8301 = vpop.permute.xlu0 %8300
    %v8303 = vadd.f32 %v8293, %v8301
    %v8304 = vtanh.pop %v8303
    %8306 = vrot.lane.b32.xlu0 %v8304, 64
    %v8307 = vpop.permute.xlu0 %8306
    %v8309 = vmul.f32 %v8291, %v8307
    %8311 = vrot.lane.b32.xlu0 %v8309, 32
    %v8312 = vpop.permute.xlu0 %8311
    %v8313 = vsel %vm210, %v8312, 0
    %8315 = vmatpush.msra.mxu0 0.0
    %8316 = vmatpush.msra.mxu0 0.0
    %8317 = vmatpush.msra.mxu0 0.0
    %8318 = vmatpush.msra.mxu0 0.0
    %8319 = vmatpush.msra.mxu0 0.0
    %8320 = vmatpush.msra.mxu0 0.0
    %8321 = vmatpush.msra.mxu0 0.0
    %8322 = vmatpush.msra.mxu0 0.0
    %8323 = vmatpush.msra.mxu0 0.0
    %8324 = vmatpush.msra.mxu0 0.0
    %8325 = vmatpush.msra.mxu0 0.0
    %8326 = vmatpush.msra.mxu0 0.0
    %v8327 = vand.u32 %v151, 4294901760
    %8328 = vmatpush.msra.mxu0 %v8327
    %v8329 = vand.u32 %v149, 4294901760
    %8330 = vmatpush.msra.mxu0 %v8329
    %v8331 = vand.u32 %v147, 4294901760
    %8332 = vmatpush.msra.mxu0 %v8331
    %v8333 = vand.u32 %v145, 4294901760
    %8334 = vmatpush.msra.mxu0 %v8333
    %v8335 = vand.u32 %v8313, 4294901760
    %v8336 = vsub.f32 %v8313, %v8335
    %v8337 = vand.u32 %v8336, 4294901760
    %v8338 = vsub.f32 %v8336, %v8337
    %v8339 = vand.u32 %v8338, 4294901760
    %8340 = vmatmul.f32.gmra.mxu0 %v8339
    %v8341 = vpop.f32.mrf.mxu0
    %v8342 = vadd.f32 0.0, %v8341
    %8343 = vdwg.mxu0
    %8344 = vmatpush.msra.mxu0 0.0
    %8345 = vmatpush.msra.mxu0 0.0
    %8346 = vmatpush.msra.mxu0 0.0
    %8347 = vmatpush.msra.mxu0 0.0
    %8348 = vmatpush.msra.mxu0 0.0
    %8349 = vmatpush.msra.mxu0 0.0
    %8350 = vmatpush.msra.mxu0 0.0
    %8351 = vmatpush.msra.mxu0 0.0
    %8352 = vmatpush.msra.mxu0 0.0
    %8353 = vmatpush.msra.mxu0 0.0
    %8354 = vmatpush.msra.mxu0 0.0
    %8355 = vmatpush.msra.mxu0 0.0
    %v8356 = vand.u32 %v151, 4294901760
    %v8357 = vsub.f32 %v151, %v8356
    %v8358 = vand.u32 %v8357, 4294901760
    %v8359 = vsub.f32 %v8357, %v8358
    %v8360 = vand.u32 %v8359, 4294901760
    %8361 = vmatpush.msra.mxu0 %v8360
    %v8362 = vand.u32 %v149, 4294901760
    %v8363 = vsub.f32 %v149, %v8362
    %v8364 = vand.u32 %v8363, 4294901760
    %v8365 = vsub.f32 %v8363, %v8364
    %v8366 = vand.u32 %v8365, 4294901760
    %8367 = vmatpush.msra.mxu0 %v8366
    %v8368 = vand.u32 %v147, 4294901760
    %v8369 = vsub.f32 %v147, %v8368
    %v8370 = vand.u32 %v8369, 4294901760
    %v8371 = vsub.f32 %v8369, %v8370
    %v8372 = vand.u32 %v8371, 4294901760
    %8373 = vmatpush.msra.mxu0 %v8372
    %v8374 = vand.u32 %v145, 4294901760
    %v8375 = vsub.f32 %v145, %v8374
    %v8376 = vand.u32 %v8375, 4294901760
    %v8377 = vsub.f32 %v8375, %v8376
    %v8378 = vand.u32 %v8377, 4294901760
    %8379 = vmatpush.msra.mxu0 %v8378
    %v8380 = vand.u32 %v8313, 4294901760
    %8381 = vmatmul.f32.gmra.mxu0 %v8380
    %v8382 = vpop.f32.mrf.mxu0
    %v8383 = vadd.f32 %v8342, %v8382
    %8384 = vdwg.mxu0
    %8385 = vmatpush.msra.mxu0 0.0
    %8386 = vmatpush.msra.mxu0 0.0
    %8387 = vmatpush.msra.mxu0 0.0
    %8388 = vmatpush.msra.mxu0 0.0
    %8389 = vmatpush.msra.mxu0 0.0
    %8390 = vmatpush.msra.mxu0 0.0
    %8391 = vmatpush.msra.mxu0 0.0
    %8392 = vmatpush.msra.mxu0 0.0
    %8393 = vmatpush.msra.mxu0 0.0
    %8394 = vmatpush.msra.mxu0 0.0
    %8395 = vmatpush.msra.mxu0 0.0
    %8396 = vmatpush.msra.mxu0 0.0
    %v8397 = vand.u32 %v151, 4294901760
    %v8398 = vsub.f32 %v151, %v8397
    %8399 = vmatpush.msra.mxu0 %v8398
    %v8400 = vand.u32 %v149, 4294901760
    %v8401 = vsub.f32 %v149, %v8400
    %8402 = vmatpush.msra.mxu0 %v8401
    %v8403 = vand.u32 %v147, 4294901760
    %v8404 = vsub.f32 %v147, %v8403
    %8405 = vmatpush.msra.mxu0 %v8404
    %v8406 = vand.u32 %v145, 4294901760
    %v8407 = vsub.f32 %v145, %v8406
    %8408 = vmatpush.msra.mxu0 %v8407
    %v8409 = vand.u32 %v8313, 4294901760
    %v8410 = vsub.f32 %v8313, %v8409
    %8411 = vmatmul.f32.gmra.mxu0 %v8410
    %v8412 = vpop.f32.mrf.mxu0
    %v8413 = vadd.f32 %v8383, %v8412
    %8414 = vdwg.mxu0
    %8415 = vmatpush.msra.mxu0 0.0
    %8416 = vmatpush.msra.mxu0 0.0
    %8417 = vmatpush.msra.mxu0 0.0
    %8418 = vmatpush.msra.mxu0 0.0
    %8419 = vmatpush.msra.mxu0 0.0
    %8420 = vmatpush.msra.mxu0 0.0
    %8421 = vmatpush.msra.mxu0 0.0
    %8422 = vmatpush.msra.mxu0 0.0
    %8423 = vmatpush.msra.mxu0 0.0
    %8424 = vmatpush.msra.mxu0 0.0
    %8425 = vmatpush.msra.mxu0 0.0
    %8426 = vmatpush.msra.mxu0 0.0
    %v8427 = vand.u32 %v151, 4294901760
    %8428 = vmatpush.msra.mxu0 %v8427
    %v8429 = vand.u32 %v149, 4294901760
    %8430 = vmatpush.msra.mxu0 %v8429
    %v8431 = vand.u32 %v147, 4294901760
    %8432 = vmatpush.msra.mxu0 %v8431
    %v8433 = vand.u32 %v145, 4294901760
    %8434 = vmatpush.msra.mxu0 %v8433
    %v8435 = vand.u32 %v8313, 4294901760
    %v8436 = vsub.f32 %v8313, %v8435
    %v8437 = vand.u32 %v8436, 4294901760
    %8438 = vmatmul.f32.gmra.mxu0 %v8437
    %v8439 = vpop.f32.mrf.mxu0
    %v8440 = vadd.f32 %v8413, %v8439
    %8441 = vdwg.mxu0
    %8442 = vmatpush.msra.mxu0 0.0
    %8443 = vmatpush.msra.mxu0 0.0
    %8444 = vmatpush.msra.mxu0 0.0
    %8445 = vmatpush.msra.mxu0 0.0
    %8446 = vmatpush.msra.mxu0 0.0
    %8447 = vmatpush.msra.mxu0 0.0
    %8448 = vmatpush.msra.mxu0 0.0
    %8449 = vmatpush.msra.mxu0 0.0
    %8450 = vmatpush.msra.mxu0 0.0
    %8451 = vmatpush.msra.mxu0 0.0
    %8452 = vmatpush.msra.mxu0 0.0
    %8453 = vmatpush.msra.mxu0 0.0
    %v8454 = vand.u32 %v151, 4294901760
    %v8455 = vsub.f32 %v151, %v8454
    %v8456 = vand.u32 %v8455, 4294901760
    %8457 = vmatpush.msra.mxu0 %v8456
    %v8458 = vand.u32 %v149, 4294901760
    %v8459 = vsub.f32 %v149, %v8458
    %v8460 = vand.u32 %v8459, 4294901760
    %8461 = vmatpush.msra.mxu0 %v8460
    %v8462 = vand.u32 %v147, 4294901760
    %v8463 = vsub.f32 %v147, %v8462
    %v8464 = vand.u32 %v8463, 4294901760
    %8465 = vmatpush.msra.mxu0 %v8464
    %v8466 = vand.u32 %v145, 4294901760
    %v8467 = vsub.f32 %v145, %v8466
    %v8468 = vand.u32 %v8467, 4294901760
    %8469 = vmatpush.msra.mxu0 %v8468
    %v8470 = vand.u32 %v8313, 4294901760
    %8471 = vmatmul.f32.gmra.mxu0 %v8470
    %v8472 = vpop.f32.mrf.mxu0
    %v8473 = vadd.f32 %v8440, %v8472
    %8474 = vdwg.mxu0
    %8475 = vmatpush.msra.mxu0 0.0
    %8476 = vmatpush.msra.mxu0 0.0
    %8477 = vmatpush.msra.mxu0 0.0
    %8478 = vmatpush.msra.mxu0 0.0
    %8479 = vmatpush.msra.mxu0 0.0
    %8480 = vmatpush.msra.mxu0 0.0
    %8481 = vmatpush.msra.mxu0 0.0
    %8482 = vmatpush.msra.mxu0 0.0
    %8483 = vmatpush.msra.mxu0 0.0
    %8484 = vmatpush.msra.mxu0 0.0
    %8485 = vmatpush.msra.mxu0 0.0
    %8486 = vmatpush.msra.mxu0 0.0
    %v8487 = vand.u32 %v151, 4294901760
    %8488 = vmatpush.msra.mxu0 %v8487
    %v8489 = vand.u32 %v149, 4294901760
    %8490 = vmatpush.msra.mxu0 %v8489
    %v8491 = vand.u32 %v147, 4294901760
    %8492 = vmatpush.msra.mxu0 %v8491
    %v8493 = vand.u32 %v145, 4294901760
    %8494 = vmatpush.msra.mxu0 %v8493
    %v8495 = vand.u32 %v8313, 4294901760
    %8496 = vmatmul.f32.gmra.mxu0 %v8495
    %v8497 = vpop.f32.mrf.mxu0
    %v8498 = vadd.f32 %v8473, %v8497
    %8499 = vdwg.mxu0
    %8500 = vmatpush.msra.mxu0 0.0
    %8501 = vmatpush.msra.mxu0 0.0
    %8502 = vmatpush.msra.mxu0 0.0
    %8503 = vmatpush.msra.mxu0 0.0
    %8504 = vmatpush.msra.mxu0 0.0
    %8505 = vmatpush.msra.mxu0 0.0
    %8506 = vmatpush.msra.mxu0 0.0
    %8507 = vmatpush.msra.mxu0 0.0
    %8508 = vmatpush.msra.mxu0 0.0
    %8509 = vmatpush.msra.mxu0 0.0
    %8510 = vmatpush.msra.mxu0 0.0
    %8511 = vmatpush.msra.mxu0 0.0
    %v8512 = vand.u32 %v152, 4294901760
    %8513 = vmatpush.msra.mxu0 %v8512
    %v8514 = vand.u32 %v150, 4294901760
    %8515 = vmatpush.msra.mxu0 %v8514
    %v8516 = vand.u32 %v148, 4294901760
    %8517 = vmatpush.msra.mxu0 %v8516
    %v8518 = vand.u32 %v146, 4294901760
    %8519 = vmatpush.msra.mxu0 %v8518
    %v8520 = vand.u32 %v8313, 4294901760
    %v8521 = vsub.f32 %v8313, %v8520
    %v8522 = vand.u32 %v8521, 4294901760
    %v8523 = vsub.f32 %v8521, %v8522
    %v8524 = vand.u32 %v8523, 4294901760
    %8525 = vmatmul.f32.gmra.mxu0 %v8524
    %v8526 = vpop.f32.mrf.mxu0
    %v8527 = vadd.f32 0.0, %v8526
    %8528 = vdwg.mxu0
    %8529 = vmatpush.msra.mxu0 0.0
    %8530 = vmatpush.msra.mxu0 0.0
    %8531 = vmatpush.msra.mxu0 0.0
    %8532 = vmatpush.msra.mxu0 0.0
    %8533 = vmatpush.msra.mxu0 0.0
    %8534 = vmatpush.msra.mxu0 0.0
    %8535 = vmatpush.msra.mxu0 0.0
    %8536 = vmatpush.msra.mxu0 0.0
    %8537 = vmatpush.msra.mxu0 0.0
    %8538 = vmatpush.msra.mxu0 0.0
    %8539 = vmatpush.msra.mxu0 0.0
    %8540 = vmatpush.msra.mxu0 0.0
    %v8541 = vand.u32 %v152, 4294901760
    %v8542 = vsub.f32 %v152, %v8541
    %v8543 = vand.u32 %v8542, 4294901760
    %v8544 = vsub.f32 %v8542, %v8543
    %v8545 = vand.u32 %v8544, 4294901760
    %8546 = vmatpush.msra.mxu0 %v8545
    %v8547 = vand.u32 %v150, 4294901760
    %v8548 = vsub.f32 %v150, %v8547
    %v8549 = vand.u32 %v8548, 4294901760
    %v8550 = vsub.f32 %v8548, %v8549
    %v8551 = vand.u32 %v8550, 4294901760
    %8552 = vmatpush.msra.mxu0 %v8551
    %v8553 = vand.u32 %v148, 4294901760
    %v8554 = vsub.f32 %v148, %v8553
    %v8555 = vand.u32 %v8554, 4294901760
    %v8556 = vsub.f32 %v8554, %v8555
    %v8557 = vand.u32 %v8556, 4294901760
    %8558 = vmatpush.msra.mxu0 %v8557
    %v8559 = vand.u32 %v146, 4294901760
    %v8560 = vsub.f32 %v146, %v8559
    %v8561 = vand.u32 %v8560, 4294901760
    %v8562 = vsub.f32 %v8560, %v8561
    %v8563 = vand.u32 %v8562, 4294901760
    %8564 = vmatpush.msra.mxu0 %v8563
    %v8565 = vand.u32 %v8313, 4294901760
    %8566 = vmatmul.f32.gmra.mxu0 %v8565
    %v8567 = vpop.f32.mrf.mxu0
    %v8568 = vadd.f32 %v8527, %v8567
    %8569 = vdwg.mxu0
    %8570 = vmatpush.msra.mxu0 0.0
    %8571 = vmatpush.msra.mxu0 0.0
    %8572 = vmatpush.msra.mxu0 0.0
    %8573 = vmatpush.msra.mxu0 0.0
    %8574 = vmatpush.msra.mxu0 0.0
    %8575 = vmatpush.msra.mxu0 0.0
    %8576 = vmatpush.msra.mxu0 0.0
    %8577 = vmatpush.msra.mxu0 0.0
    %8578 = vmatpush.msra.mxu0 0.0
    %8579 = vmatpush.msra.mxu0 0.0
    %8580 = vmatpush.msra.mxu0 0.0
    %8581 = vmatpush.msra.mxu0 0.0
    %v8582 = vand.u32 %v152, 4294901760
    %v8583 = vsub.f32 %v152, %v8582
    %8584 = vmatpush.msra.mxu0 %v8583
    %v8585 = vand.u32 %v150, 4294901760
    %v8586 = vsub.f32 %v150, %v8585
    %8587 = vmatpush.msra.mxu0 %v8586
    %v8588 = vand.u32 %v148, 4294901760
    %v8589 = vsub.f32 %v148, %v8588
    %8590 = vmatpush.msra.mxu0 %v8589
    %v8591 = vand.u32 %v146, 4294901760
    %v8592 = vsub.f32 %v146, %v8591
    %8593 = vmatpush.msra.mxu0 %v8592
    %v8594 = vand.u32 %v8313, 4294901760
    %v8595 = vsub.f32 %v8313, %v8594
    %8596 = vmatmul.f32.gmra.mxu0 %v8595
    %v8597 = vpop.f32.mrf.mxu0
    %v8598 = vadd.f32 %v8568, %v8597
    %8599 = vdwg.mxu0
    %8600 = vmatpush.msra.mxu0 0.0
    %8601 = vmatpush.msra.mxu0 0.0
    %8602 = vmatpush.msra.mxu0 0.0
    %8603 = vmatpush.msra.mxu0 0.0
    %8604 = vmatpush.msra.mxu0 0.0
    %8605 = vmatpush.msra.mxu0 0.0
    %8606 = vmatpush.msra.mxu0 0.0
    %8607 = vmatpush.msra.mxu0 0.0
    %8608 = vmatpush.msra.mxu0 0.0
    %8609 = vmatpush.msra.mxu0 0.0
    %8610 = vmatpush.msra.mxu0 0.0
    %8611 = vmatpush.msra.mxu0 0.0
    %v8612 = vand.u32 %v152, 4294901760
    %8613 = vmatpush.msra.mxu0 %v8612
    %v8614 = vand.u32 %v150, 4294901760
    %8615 = vmatpush.msra.mxu0 %v8614
    %v8616 = vand.u32 %v148, 4294901760
    %8617 = vmatpush.msra.mxu0 %v8616
    %v8618 = vand.u32 %v146, 4294901760
    %8619 = vmatpush.msra.mxu0 %v8618
    %v8620 = vand.u32 %v8313, 4294901760
    %v8621 = vsub.f32 %v8313, %v8620
    %v8622 = vand.u32 %v8621, 4294901760
    %8623 = vmatmul.f32.gmra.mxu0 %v8622
    %v8624 = vpop.f32.mrf.mxu0
    %v8625 = vadd.f32 %v8598, %v8624
    %8626 = vdwg.mxu0
    %8627 = vmatpush.msra.mxu0 0.0
    %8628 = vmatpush.msra.mxu0 0.0
    %8629 = vmatpush.msra.mxu0 0.0
    %8630 = vmatpush.msra.mxu0 0.0
    %8631 = vmatpush.msra.mxu0 0.0
    %8632 = vmatpush.msra.mxu0 0.0
    %8633 = vmatpush.msra.mxu0 0.0
    %8634 = vmatpush.msra.mxu0 0.0
    %8635 = vmatpush.msra.mxu0 0.0
    %8636 = vmatpush.msra.mxu0 0.0
    %8637 = vmatpush.msra.mxu0 0.0
    %8638 = vmatpush.msra.mxu0 0.0
    %v8639 = vand.u32 %v152, 4294901760
    %v8640 = vsub.f32 %v152, %v8639
    %v8641 = vand.u32 %v8640, 4294901760
    %8642 = vmatpush.msra.mxu0 %v8641
    %v8643 = vand.u32 %v150, 4294901760
    %v8644 = vsub.f32 %v150, %v8643
    %v8645 = vand.u32 %v8644, 4294901760
    %8646 = vmatpush.msra.mxu0 %v8645
    %v8647 = vand.u32 %v148, 4294901760
    %v8648 = vsub.f32 %v148, %v8647
    %v8649 = vand.u32 %v8648, 4294901760
    %8650 = vmatpush.msra.mxu0 %v8649
    %v8651 = vand.u32 %v146, 4294901760
    %v8652 = vsub.f32 %v146, %v8651
    %v8653 = vand.u32 %v8652, 4294901760
    %8654 = vmatpush.msra.mxu0 %v8653
    %v8655 = vand.u32 %v8313, 4294901760
    %8656 = vmatmul.f32.gmra.mxu0 %v8655
    %v8657 = vpop.f32.mrf.mxu0
    %v8658 = vadd.f32 %v8625, %v8657
    %8659 = vdwg.mxu0
    %8660 = vmatpush.msra.mxu0 0.0
    %8661 = vmatpush.msra.mxu0 0.0
    %8662 = vmatpush.msra.mxu0 0.0
    %8663 = vmatpush.msra.mxu0 0.0
    %8664 = vmatpush.msra.mxu0 0.0
    %8665 = vmatpush.msra.mxu0 0.0
    %8666 = vmatpush.msra.mxu0 0.0
    %8667 = vmatpush.msra.mxu0 0.0
    %8668 = vmatpush.msra.mxu0 0.0
    %8669 = vmatpush.msra.mxu0 0.0
    %8670 = vmatpush.msra.mxu0 0.0
    %8671 = vmatpush.msra.mxu0 0.0
    %v8672 = vand.u32 %v152, 4294901760
    %8673 = vmatpush.msra.mxu0 %v8672
    %v8674 = vand.u32 %v150, 4294901760
    %8675 = vmatpush.msra.mxu0 %v8674
    %v8676 = vand.u32 %v148, 4294901760
    %8677 = vmatpush.msra.mxu0 %v8676
    %v8678 = vand.u32 %v146, 4294901760
    %8679 = vmatpush.msra.mxu0 %v8678
    %v8680 = vand.u32 %v8313, 4294901760
    %8681 = vmatmul.f32.gmra.mxu0 %v8680
    %v8682 = vpop.f32.mrf.mxu0
    %v8683 = vadd.f32 %v8658, %v8682
    %8684 = vdwg.mxu0
    %8686 = vrot.lane.b32.xlu0 %v8303, 96
    %v8687 = vpop.permute.xlu0 %8686
    %v8688 = vsel %vm210, %v8687, 0
    %8690 = vmatpush.msra.mxu0 0.0
    %8691 = vmatpush.msra.mxu0 0.0
    %8692 = vmatpush.msra.mxu0 0.0
    %8693 = vmatpush.msra.mxu0 0.0
    %8694 = vmatpush.msra.mxu0 0.0
    %8695 = vmatpush.msra.mxu0 0.0
    %8696 = vmatpush.msra.mxu0 0.0
    %8697 = vmatpush.msra.mxu0 0.0
    %8698 = vmatpush.msra.mxu0 0.0
    %8699 = vmatpush.msra.mxu0 0.0
    %8700 = vmatpush.msra.mxu0 0.0
    %8701 = vmatpush.msra.mxu0 0.0
    %v8702 = vand.u32 %v156, 4294901760
    %8703 = vmatpush.msra.mxu0 %v8702
    %v8704 = vand.u32 %v155, 4294901760
    %8705 = vmatpush.msra.mxu0 %v8704
    %v8706 = vand.u32 %v154, 4294901760
    %8707 = vmatpush.msra.mxu0 %v8706
    %v8708 = vand.u32 %v153, 4294901760
    %8709 = vmatpush.msra.mxu0 %v8708
    %v8710 = vand.u32 %v8688, 4294901760
    %v8711 = vsub.f32 %v8688, %v8710
    %v8712 = vand.u32 %v8711, 4294901760
    %v8713 = vsub.f32 %v8711, %v8712
    %v8714 = vand.u32 %v8713, 4294901760
    %8715 = vmatmul.f32.gmra.mxu0 %v8714
    %v8716 = vpop.f32.mrf.mxu0
    %v8717 = vadd.f32 0.0, %v8716
    %8718 = vdwg.mxu0
    %8719 = vmatpush.msra.mxu0 0.0
    %8720 = vmatpush.msra.mxu0 0.0
    %8721 = vmatpush.msra.mxu0 0.0
    %8722 = vmatpush.msra.mxu0 0.0
    %8723 = vmatpush.msra.mxu0 0.0
    %8724 = vmatpush.msra.mxu0 0.0
    %8725 = vmatpush.msra.mxu0 0.0
    %8726 = vmatpush.msra.mxu0 0.0
    %8727 = vmatpush.msra.mxu0 0.0
    %8728 = vmatpush.msra.mxu0 0.0
    %8729 = vmatpush.msra.mxu0 0.0
    %8730 = vmatpush.msra.mxu0 0.0
    %v8731 = vand.u32 %v156, 4294901760
    %v8732 = vsub.f32 %v156, %v8731
    %v8733 = vand.u32 %v8732, 4294901760
    %v8734 = vsub.f32 %v8732, %v8733
    %v8735 = vand.u32 %v8734, 4294901760
    %8736 = vmatpush.msra.mxu0 %v8735
    %v8737 = vand.u32 %v155, 4294901760
    %v8738 = vsub.f32 %v155, %v8737
    %v8739 = vand.u32 %v8738, 4294901760
    %v8740 = vsub.f32 %v8738, %v8739
    %v8741 = vand.u32 %v8740, 4294901760
    %8742 = vmatpush.msra.mxu0 %v8741
    %v8743 = vand.u32 %v154, 4294901760
    %v8744 = vsub.f32 %v154, %v8743
    %v8745 = vand.u32 %v8744, 4294901760
    %v8746 = vsub.f32 %v8744, %v8745
    %v8747 = vand.u32 %v8746, 4294901760
    %8748 = vmatpush.msra.mxu0 %v8747
    %v8749 = vand.u32 %v153, 4294901760
    %v8750 = vsub.f32 %v153, %v8749
    %v8751 = vand.u32 %v8750, 4294901760
    %v8752 = vsub.f32 %v8750, %v8751
    %v8753 = vand.u32 %v8752, 4294901760
    %8754 = vmatpush.msra.mxu0 %v8753
    %v8755 = vand.u32 %v8688, 4294901760
    %8756 = vmatmul.f32.gmra.mxu0 %v8755
    %v8757 = vpop.f32.mrf.mxu0
    %v8758 = vadd.f32 %v8717, %v8757
    %8759 = vdwg.mxu0
    %8760 = vmatpush.msra.mxu0 0.0
    %8761 = vmatpush.msra.mxu0 0.0
    %8762 = vmatpush.msra.mxu0 0.0
    %8763 = vmatpush.msra.mxu0 0.0
    %8764 = vmatpush.msra.mxu0 0.0
    %8765 = vmatpush.msra.mxu0 0.0
    %8766 = vmatpush.msra.mxu0 0.0
    %8767 = vmatpush.msra.mxu0 0.0
    %8768 = vmatpush.msra.mxu0 0.0
    %8769 = vmatpush.msra.mxu0 0.0
    %8770 = vmatpush.msra.mxu0 0.0
    %8771 = vmatpush.msra.mxu0 0.0
    %v8772 = vand.u32 %v156, 4294901760
    %v8773 = vsub.f32 %v156, %v8772
    %8774 = vmatpush.msra.mxu0 %v8773
    %v8775 = vand.u32 %v155, 4294901760
    %v8776 = vsub.f32 %v155, %v8775
    %8777 = vmatpush.msra.mxu0 %v8776
    %v8778 = vand.u32 %v154, 4294901760
    %v8779 = vsub.f32 %v154, %v8778
    %8780 = vmatpush.msra.mxu0 %v8779
    %v8781 = vand.u32 %v153, 4294901760
    %v8782 = vsub.f32 %v153, %v8781
    %8783 = vmatpush.msra.mxu0 %v8782
    %v8784 = vand.u32 %v8688, 4294901760
    %v8785 = vsub.f32 %v8688, %v8784
    %8786 = vmatmul.f32.gmra.mxu0 %v8785
    %v8787 = vpop.f32.mrf.mxu0
    %v8788 = vadd.f32 %v8758, %v8787
    %8789 = vdwg.mxu0
    %8790 = vmatpush.msra.mxu0 0.0
    %8791 = vmatpush.msra.mxu0 0.0
    %8792 = vmatpush.msra.mxu0 0.0
    %8793 = vmatpush.msra.mxu0 0.0
    %8794 = vmatpush.msra.mxu0 0.0
    %8795 = vmatpush.msra.mxu0 0.0
    %8796 = vmatpush.msra.mxu0 0.0
    %8797 = vmatpush.msra.mxu0 0.0
    %8798 = vmatpush.msra.mxu0 0.0
    %8799 = vmatpush.msra.mxu0 0.0
    %8800 = vmatpush.msra.mxu0 0.0
    %8801 = vmatpush.msra.mxu0 0.0
    %v8802 = vand.u32 %v156, 4294901760
    %8803 = vmatpush.msra.mxu0 %v8802
    %v8804 = vand.u32 %v155, 4294901760
    %8805 = vmatpush.msra.mxu0 %v8804
    %v8806 = vand.u32 %v154, 4294901760
    %8807 = vmatpush.msra.mxu0 %v8806
    %v8808 = vand.u32 %v153, 4294901760
    %8809 = vmatpush.msra.mxu0 %v8808
    %v8810 = vand.u32 %v8688, 4294901760
    %v8811 = vsub.f32 %v8688, %v8810
    %v8812 = vand.u32 %v8811, 4294901760
    %8813 = vmatmul.f32.gmra.mxu0 %v8812
    %v8814 = vpop.f32.mrf.mxu0
    %v8815 = vadd.f32 %v8788, %v8814
    %8816 = vdwg.mxu0
    %8817 = vmatpush.msra.mxu0 0.0
    %8818 = vmatpush.msra.mxu0 0.0
    %8819 = vmatpush.msra.mxu0 0.0
    %8820 = vmatpush.msra.mxu0 0.0
    %8821 = vmatpush.msra.mxu0 0.0
    %8822 = vmatpush.msra.mxu0 0.0
    %8823 = vmatpush.msra.mxu0 0.0
    %8824 = vmatpush.msra.mxu0 0.0
    %8825 = vmatpush.msra.mxu0 0.0
    %8826 = vmatpush.msra.mxu0 0.0
    %8827 = vmatpush.msra.mxu0 0.0
    %8828 = vmatpush.msra.mxu0 0.0
    %v8829 = vand.u32 %v156, 4294901760
    %v8830 = vsub.f32 %v156, %v8829
    %v8831 = vand.u32 %v8830, 4294901760
    %8832 = vmatpush.msra.mxu0 %v8831
    %v8833 = vand.u32 %v155, 4294901760
    %v8834 = vsub.f32 %v155, %v8833
    %v8835 = vand.u32 %v8834, 4294901760
    %8836 = vmatpush.msra.mxu0 %v8835
    %v8837 = vand.u32 %v154, 4294901760
    %v8838 = vsub.f32 %v154, %v8837
    %v8839 = vand.u32 %v8838, 4294901760
    %8840 = vmatpush.msra.mxu0 %v8839
    %v8841 = vand.u32 %v153, 4294901760
    %v8842 = vsub.f32 %v153, %v8841
    %v8843 = vand.u32 %v8842, 4294901760
    %8844 = vmatpush.msra.mxu0 %v8843
    %v8845 = vand.u32 %v8688, 4294901760
    %8846 = vmatmul.f32.gmra.mxu0 %v8845
    %v8847 = vpop.f32.mrf.mxu0
    %v8848 = vadd.f32 %v8815, %v8847
    %8849 = vdwg.mxu0
    %8850 = vmatpush.msra.mxu0 0.0
    %8851 = vmatpush.msra.mxu0 0.0
    %8852 = vmatpush.msra.mxu0 0.0
    %8853 = vmatpush.msra.mxu0 0.0
    %8854 = vmatpush.msra.mxu0 0.0
    %8855 = vmatpush.msra.mxu0 0.0
    %8856 = vmatpush.msra.mxu0 0.0
    %8857 = vmatpush.msra.mxu0 0.0
    %8858 = vmatpush.msra.mxu0 0.0
    %8859 = vmatpush.msra.mxu0 0.0
    %8860 = vmatpush.msra.mxu0 0.0
    %8861 = vmatpush.msra.mxu0 0.0
    %v8862 = vand.u32 %v156, 4294901760
    %8863 = vmatpush.msra.mxu0 %v8862
    %v8864 = vand.u32 %v155, 4294901760
    %8865 = vmatpush.msra.mxu0 %v8864
    %v8866 = vand.u32 %v154, 4294901760
    %8867 = vmatpush.msra.mxu0 %v8866
    %v8868 = vand.u32 %v153, 4294901760
    %8869 = vmatpush.msra.mxu0 %v8868
    %v8870 = vand.u32 %v8688, 4294901760
    %8871 = vmatmul.f32.gmra.mxu0 %v8870
    %v8872 = vpop.f32.mrf.mxu0
    %v8873 = vadd.f32 %v8848, %v8872
    %8874 = vdwg.mxu0
    %v8875 = vadd.f32 %v8683, %v8873
    %v8876 = vadd.f32 %v8875, %v3723
    %v8878 = vrot.slane %v8876, 1
    %v8879 = vperm.slane %v8876, 0
    %v8880 = vperm.slane %v8878, 0
    %v8883 = vadd.f32 %v3160, %v8879
    %v8884 = vadd.f32 %v3164, %v8880
    %v8885 = vtanh.pop %v8883
    %v8886 = vtanh.pop %v8884
    %v8887 = vmul.f32 %v8885, %v3737
    %v8888 = vmul.f32 %v8886, %v3737
    %v8889 = vsel %vm210, %v8887, 0.0
    %8890 = vadd.xlane.f32.xlu0 %v8889
    %v8891 = vpop.xlane.xlu0 %8890
    %v8892 = vsel %vm210, %v8888, 0.0
    %8893 = vadd.xlane.f32.xlu0 %v8892
    %v8894 = vpop.xlane.xlu0 %8893
    %v8895 = vadd.f32 %v8891, %v3751
    %v8896 = vadd.f32 %v8894, %v3751
    %v8899 = vperm.slane %v8895, %v3758
    %v8900 = vperm.slane %v8896, %v3758
    %v8901 = vsel %vm218, %v8900, %v8899
    %v8903 = vsel %vm3763, %v8901, -inf
    %8904 = vmax.xlane.f32.xlu0 %v8903
    %v8905 = vpop.xlane.xlu0 %8904
    %v8907 = vperm.slane %v8905, 0
    %v8908 = vperm.slane %v8905, 1
    %v8911 = vsub.f32 %v8895, %v8907
    %v8912 = vsub.f32 %v8896, %v8908
    %v8913 = vmul.f32 %v8911, 1.442695
    %v8914 = vpow.pop %v8913
    %v8915 = vmul.f32 %v8912, 1.442695
    %v8916 = vpow.pop %v8915
    %8919 = vset.pattern.permute.xlu0 0
    %8920 = vperm.xlu0 %8919, %v8914
    %v8921 = vpop.permute.xlu0 %8920
    %8922 = vset.pattern.permute.xlu0 0
    %8923 = vperm.xlu0 %8922, %v8916
    %v8924 = vpop.permute.xlu0 %8923
    %v8925 = vperm.slane %v8921, %v3758
    %v8926 = vperm.slane %v8924, %v3758
    %v8927 = vsel %vm218, %v8926, %v8925
    %v8929 = vsel %vm3763, %v8927, 0.0
    %8930 = vadd.xlane.f32.xlu0 %v8929
    %v8931 = vpop.xlane.xlu0 %8930
    %v8933 = vperm.slane %v8931, 0
    %v8934 = vperm.slane %v8931, 1
    %v8937 = vrcp.pop %v8933
    %v8938 = vmul.f32 %v8933, %v8937
    %v8939 = vsub.f32 1.0, %v8938
    %v8940 = vmul.f32 %v8937, %v8939
    %v8941 = vadd.f32 %v8937, %v8940
    %vm8942 = vweird.f32 %v8933
    %vm8943 = vweird.f32 %v8937
    %vm8944 = vmor %vm8942, %vm8943
    %v8945 = vsel %vm8944, %v8937, %v8941
    %v8946 = vand.u32 2147483647, %v8933
    %vm8947 = vcmp.eq.f32.partialorder %v8946, 8.507059e+37
    %v8948 = vand.u32 %v8933, 2147483648
    %v8949 = vor.u32 1.1754944e-38, %v8948
    %v8950 = vsel %vm8947, %v8949, %v8945
    %v8951 = vmul.f32 %v8914, %v8950
    %v8952 = vrcp.pop %v8934
    %v8953 = vmul.f32 %v8934, %v8952
    %v8954 = vsub.f32 1.0, %v8953
    %v8955 = vmul.f32 %v8952, %v8954
    %v8956 = vadd.f32 %v8952, %v8955
    %vm8957 = vweird.f32 %v8934
    %vm8958 = vweird.f32 %v8952
    %vm8959 = vmor %vm8957, %vm8958
    %v8960 = vsel %vm8959, %v8952, %v8956
    %v8961 = vand.u32 2147483647, %v8934
    %vm8962 = vcmp.eq.f32.partialorder %v8961, 8.507059e+37
    %v8963 = vand.u32 %v8934, 2147483648
    %v8964 = vor.u32 1.1754944e-38, %v8963
    %v8965 = vsel %vm8962, %v8964, %v8960
    %v8966 = vmul.f32 %v8916, %v8965
    %8968 = vset.pattern.permute.xlu0 0
    %8969 = vperm.xlu0 %8968, %v8951
    %v8970 = vpop.permute.xlu0 %8969
    %8973 = vset.pattern.permute.xlu0 0
    %8974 = vperm.xlu0 %8973, %v8966
    %v8975 = vpop.permute.xlu0 %8974
    %v8977 = vmul.f32 %v8970, %v2938
    %v8978 = vmul.f32 %v8975, %v2939
    %v8979 = vsel %vm3840, %v8977, 0.0
    %v8980 = vrot.slane %v8979, 4
    %v8981 = vadd.f32 %v8979, %v8980
    %v8982 = vrot.slane %v8981, 2
    %v8983 = vadd.f32 %v8981, %v8982
    %v8984 = vrot.slane %v8983, 1
    %v8985 = vadd.f32 %v8983, %v8984
    %v8986 = vsel %vm3840, %v8978, 0.0
    %v8987 = vrot.slane %v8986, 4
    %v8988 = vadd.f32 %v8986, %v8987
    %v8989 = vrot.slane %v8988, 2
    %v8990 = vadd.f32 %v8988, %v8989
    %v8991 = vrot.slane %v8990, 1
    %v8992 = vadd.f32 %v8990, %v8991
    %v8993 = vmul.f32 %v8985, %v3858
    %v8994 = vmul.f32 %v8992, %v3858
    %v8997 = vrot.slane %v8994, 7
    %v8998 = vsel %vm218, %v8997, %v8993
    %8999 = vrot.lane.b32.xlu0 %v8998, 32
    %v9000 = vpop.permute.xlu0 %8999
    %v9002 = vsel %vm589, %v9000, 0.0
    %9003 = vadd.xlane.f32.xlu0 %v9002
    %v9004 = vpop.xlane.xlu0 %9003
    %v9005 = vrot.slane %v3877, 7
    %v9006 = vrot.slane %v3878, 6
    %v9007 = vsel %vm218, %v9006, %v9005
    %v9009 = vadd.f32 %v9004, %v9007
    %v9010 = vadd.f32 %v9009, %v3886
    %9012 = vset.pattern.permute.xlu0 0
    %9013 = vperm.xlu0 %9012, %v9010
    %v9014 = vpop.permute.xlu0 %9013
    %v9016 = vmul.f32 %v9014, %v3895
    %v9017 = vadd.f32 %v9016, %v8498
    %v9018 = vadd.f32 %v9017, %v3900
    %v9019 = vmul.f32 %v9018, 0.5
    %v9020 = vtanh.pop %v9019
    %v9021 = vmul.f32 %v9020, 0.5
    %v9022 = vadd.f32 %v9021, 0.5
    %v9023 = vtanh.pop %v9018
    %v9024 = vmul.f32 %v9022, %v8303
    %9026 = vrot.lane.b32.xlu0 %v9023, 64
    %v9027 = vpop.permute.xlu0 %9026
    %v9029 = vmul.f32 %v9022, %v9027
    %9031 = vrot.lane.b32.xlu0 %v9029, 32
    %v9032 = vpop.permute.xlu0 %9031
    %v9034 = vadd.f32 %v9024, %v9032
    %v9035 = vtanh.pop %v9034
    %9037 = vrot.lane.b32.xlu0 %v9035, 64
    %v9038 = vpop.permute.xlu0 %9037
    %v9040 = vmul.f32 %v9022, %v9038
    %v9041 = vld [vmem:[%s20] sm:$0x1]
    %v9043 = vperm.slane %v9041, 0
    %9044 = vrot.lane.b32.xlu0 %v9043, 96
    %v9045 = vpop.permute.xlu0 %9044
    %v9047 = vmul.f32 %v9040, %v9045
    %9049 = vrot.lane.b32.xlu0 %v9047, 32
    %v9050 = vpop.permute.xlu0 %9049
    %v9052 = vsel %vm589, %v9050, 0.0
    %9053 = vadd.xlane.f32.xlu0 %v9052
    %v9054 = vpop.xlane.xlu0 %9053
    %v9055 = vld [vmem:[%s21] sm:$0x1]
    %v9057 = vperm.slane %v9055, 0
    %9058 = vrot.lane.b32.xlu0 %v9057, 96
    %v9059 = vpop.permute.xlu0 %9058
    %v9061 = vmul.f32 %v8985, %v9059
    %v9062 = vmul.f32 %v8992, %v9059
    %v9065 = vrot.slane %v9062, 7
    %v9066 = vsel %vm218, %v9065, %v9061
    %9067 = vrot.lane.b32.xlu0 %v9066, 32
    %v9068 = vpop.permute.xlu0 %9067
    %v9070 = vsel %vm589, %v9068, 0.0
    %9071 = vadd.xlane.f32.xlu0 %v9070
    %v9072 = vpop.xlane.xlu0 %9071
    %v9073 = vadd.f32 %v9054, %v9072
    %v9074 = vld [vmem:[#allocation6] sm:$0x1]
    %v9076 = vperm.slane %v9074, 0
    %v9078 = vadd.f32 %v9073, %v9076
    %vm9079 = vcmask 1024
    %9080 = vst.msk [vmem:[%s23] sm:$0x3] %vm9079, %v9078
    // Predicated region
    $region106: #{tpu_custom_call.1} parent=1 // pred_check
      _
    $region107: #{tpu_custom_call.1} parent=1 // pred_check_branch
      %9082 = sbr.rel (0) target = $region109
    $region108: #{tpu_custom_call.1} parent=1 // pred_region
      _
    $region109: #{tpu_custom_call.1} parent=1 // pred_fallthru
      _
    // Predicated region
    $region110: #{tpu_custom_call.1} parent=1 // pred_check
      _
    $region111: #{tpu_custom_call.1} parent=1 // pred_check_branch
      %9084 = sbr.rel (0) target = $region113
    $region112: #{tpu_custom_call.1} parent=1 // pred_region
      _
    $region113: #{tpu_custom_call.1} parent=1 // pred_fallthru
      _
    %9085 = vsyncpa [#allocation8], 1
    %9086 = vsyncpa [#allocation10], 1

</llo_original>
